<compile_context>
chip_gen: v6e
topology: v6e:2x2x1
jax: 0.10.0
libtpu: 0.0.40
codegen_flags: <defaults>
</compile_context>

<pallas_src>
import math
import functools
from types import SimpleNamespace

import numpy as np
import jax
import jax.numpy as jnp
from jax.experimental import pallas as pl
from jax.experimental.pallas import tpu as pltpu


# ----------------------------------------------------------------------------
# Helpers
# ----------------------------------------------------------------------------

def _full_spec(shape):
    """BlockSpec for an array that is fully resident (broadcast over the grid)."""
    nd = len(shape)
    return pl.BlockSpec(shape, lambda b, _nd=nd: (0,) * _nd)


def _ln(z, g, b, eps=1e-6):
    # PyTorch module uses nn.LayerNorm(..., eps=1e-06) explicitly. f32 stats.
    mu = jnp.mean(z, axis=-1, keepdims=True)
    var = jnp.mean((z - mu) ** 2, axis=-1, keepdims=True)
    return (z - mu) * jax.lax.rsqrt(var + eps) * g + b


def _default_batch_blocks(batch):
    """1 grid step on single-TC chips (v5e/v6e); 2 on v7x so both TCs get work."""
    try:
        kind = jax.devices()[0].device_kind.lower()
    except Exception:
        return 1
    n_cores = 2 if ("v7" in kind or "tpu7" in kind) else 1
    return max(math.gcd(batch, n_cores), 1)


# ----------------------------------------------------------------------------
# Single fused encoder kernel (one batch *block* per grid step)
# ----------------------------------------------------------------------------

def _encoder_kernel(cxr_ref, enh_ref, pos_ref,
                    ln1_g, ln1_b, w_qkv, b_qkv, w_proj, b_proj,
                    ln2_g, ln2_b, w1, b1, w2, b2,
                    lnf_g, lnf_b,
                    out_ref, *, n_layer, n_head):
    Bb, C, HW = cxr_ref.shape          # features arrive channels-first (Bb,C,H*W)
    T = 2 * HW                         # image tokens then lidar tokens
    N = Bb * T
    hd = C // n_head
    scale = 1.0 / math.sqrt(hd)
    bf16 = jnp.bfloat16

    # ---- NCHW feature maps -> channels-last tokens, concat inside VMEM ----
    img = jnp.transpose(cxr_ref[...].astype(jnp.float32), (0, 2, 1))   # (Bb,HW,C)
    lid = jnp.transpose(enh_ref[...].astype(jnp.float32), (0, 2, 1))   # (Bb,HW,C)
    tok = jnp.concatenate([img, lid], axis=1)                          # (Bb,T,C)

    # embedding dropout (p=0) is identity; fold batch into the row (sublane) dim
    x = (tok + pos_ref[...].astype(jnp.float32)).reshape(N, C)

    for l in range(n_layer):                       # static unroll over layers
        # ---- attention: LN -> fused QKV matmul -> per-head SDPA -> one proj ----
        xn = _ln(x, ln1_g[l], ln1_b[l])
        qkv = (jnp.dot(xn.astype(bf16), w_qkv[l],
                       preferred_element_type=jnp.float32) + b_qkv[l])  # (N,3C)

        heads = []
        for b in range(Bb):                        # static; Bb is 1 or 2
            row = qkv[b * T:(b + 1) * T]           # (T,3C) sublane-aligned rows
            for h in range(n_head):                # static unroll over heads
                lo = h * hd
                qh = row[:, lo:lo + hd] * scale    # scale folded into q
                kh = row[:, C + lo:C + lo + hd]
                vh = row[:, 2 * C + lo:2 * C + lo + hd]
                att = jnp.dot(qh, kh.T, preferred_element_type=jnp.float32)
                p = jnp.exp(att - jnp.max(att, axis=-1, keepdims=True))
                ctx = jnp.dot(p, vh, preferred_element_type=jnp.float32)
                # exact softmax normalisation, folded into the small (T,hd) ctx
                ctx = ctx / jnp.sum(p, axis=-1, keepdims=True)
                heads.append(ctx)

        # lane-concat heads per batch block, row-concat blocks -> (N,C), then a
        # SINGLE fused output projection (no zeros init / per-head partial dots)
        y = jnp.concatenate(
            [jnp.concatenate(heads[b * n_head:(b + 1) * n_head], axis=-1)
             for b in range(Bb)], axis=0)
        y = (jnp.dot(y.astype(bf16), w_proj[l],
                     preferred_element_type=jnp.float32) + b_proj[l])
        x = x + y                                  # resid dropout (p=0) identity

        # ---- MLP: LN -> fc1 -> relu -> fc2 ----
        xn2 = _ln(x, ln2_g[l], ln2_b[l])
        h1 = jnp.maximum(
            jnp.dot(xn2.astype(bf16), w1[l],
                    preferred_element_type=jnp.float32) + b1[l], 0.0)
        x = x + (jnp.dot(h1.astype(bf16), w2[l],
                         preferred_element_type=jnp.float32) + b2[l])

    xf = _ln(x, lnf_g[0], lnf_b[0])

    # ---- fuse: residual add + relu + global avg pool (1,1) + token sum ----
    # (avgpool is identity here, so the original feature maps ARE the tokens;
    #  mean(img tokens) + mean(lidar tokens) == sum(all T tokens) / HW)
    fused = jnp.maximum(tok.reshape(N, C) + xf, 0.0)
    pooled = fused.reshape(Bb, T, C).sum(axis=1) * (1.0 / HW)          # (Bb,C)
    out_ref[...] = pooled.reshape(1, Bb, C).astype(out_ref.dtype)


def encoder_forward(params, cfg, cxr_features, enh_features, *, num_batch_blocks=None):
    B, C, H, W = cxr_features.shape
    # Shape constraints of the reference code: feature spatial == anchors and
    # n_views * seq_len == 1, so the residual adds / token-sum are well formed
    # and AdaptiveAvgPool2d((va, ha)) is the identity (no kernel launched).
    assert cfg.n_views * cfg.seq_len == 1 and cfg.seq_len == 1
    assert H == cfg.vert_anchors and W == cfg.horz_anchors
    HW = H * W
    T = 2 * HW

    if num_batch_blocks is None:
        num_batch_blocks = _default_batch_blocks(B)
    assert B % num_batch_blocks == 0
    Bb = B // num_batch_blocks

    L = params['w_qkv'].shape[0]
    hidden = params['w1'].shape[2]

    # bf16 weights for the MXU; biases / LN params / pos_emb / features stay f32.
    # (In production these would be stored pre-cast.)
    w_qkv = params['w_qkv'].astype(jnp.bfloat16)
    w_proj = params['w_proj'].astype(jnp.bfloat16)
    w1 = params['w1'].astype(jnp.bfloat16)
    w2 = params['w2'].astype(jnp.bfloat16)

    # Free, layout-preserving reshape (no transpose/concat on the host):
    cxr = cxr_features.reshape(B, C, HW)
    enh = enh_features.reshape(B, C, HW)

    kernel = functools.partial(_encoder_kernel, n_layer=L, n_head=cfg.n_head)

    out = pl.pallas_call(
        kernel,
        out_shape=jax.ShapeDtypeStruct((num_batch_blocks, Bb, C),
                                       cxr_features.dtype),
        grid=(num_batch_blocks,),
        in_specs=[
            pl.BlockSpec((Bb, C, HW), lambda b: (b, 0, 0)),   # cxr features
            pl.BlockSpec((Bb, C, HW), lambda b: (b, 0, 0)),   # enh features
            _full_spec((1, T, C)),                            # pos_emb
            _full_spec((L, C)), _full_spec((L, C)),           # ln1 gamma/beta
            _full_spec((L, C, 3 * C)), _full_spec((L, 3 * C)),  # fused QKV
            _full_spec((L, C, C)), _full_spec((L, C)),        # out proj
            _full_spec((L, C)), _full_spec((L, C)),           # ln2 gamma/beta
            _full_spec((L, C, hidden)), _full_spec((L, hidden)),  # mlp fc1
            _full_spec((L, hidden, C)), _full_spec((L, C)),       # mlp fc2
            _full_spec((1, C)), _full_spec((1, C)),           # ln_f gamma/beta
        ],
        out_specs=pl.BlockSpec((1, Bb, C), lambda b: (b, 0, 0)),
        compiler_params=pltpu.CompilerParams(dimension_semantics=("parallel",)),
    )(cxr, enh, params['pos_emb'],
      params['ln1_g'], params['ln1_b'],
      w_qkv, params['b_qkv'],
      w_proj, params['b_proj'],
      params['ln2_g'], params['ln2_b'],
      w1, params['b1'],
      w2, params['b2'],
      params['lnf_g'], params['lnf_b'])
    return out.reshape(B, C)


# ----------------------------------------------------------------------------
# Deterministic parameter init (mirrors GPT._init_weights: Linear ~ N(0,0.02),
# biases 0, LayerNorm weight=1 bias=0, pos_emb zeros). Linear weights stored
# pre-transposed as (in, out); Q/K/V concatenated along the output dim.
# ----------------------------------------------------------------------------

def init_params(key, cfg):
    C = cfg.n_embd
    hidden = cfg.block_exp * C
    L = cfg.n_layer
    T = (cfg.n_views + 1) * cfg.seq_len * cfg.vert_anchors * cfg.horz_anchors

    def lin(k, fi, fo):
        return 0.02 * jax.random.normal(k, (fi, fo), jnp.float32)

    wqkv, wproj, w1s, w2s = [], [], [], []
    for _ in range(L):
        key, kq, kk, kv, kp, kf1, kf2 = jax.random.split(key, 7)
        wqkv.append(jnp.concatenate([lin(kq, C, C), lin(kk, C, C), lin(kv, C, C)],
                                    axis=1))                        # (C, 3C)
        wproj.append(lin(kp, C, C))
        w1s.append(lin(kf1, C, hidden))
        w2s.append(lin(kf2, hidden, C))

    params = dict(
        pos_emb=jnp.zeros((1, T, C), jnp.float32),
        ln1_g=jnp.ones((L, C), jnp.float32), ln1_b=jnp.zeros((L, C), jnp.float32),
        w_qkv=jnp.stack(wqkv), b_qkv=jnp.zeros((L, 3 * C), jnp.float32),
        w_proj=jnp.stack(wproj), b_proj=jnp.zeros((L, C), jnp.float32),
        ln2_g=jnp.ones((L, C), jnp.float32), ln2_b=jnp.zeros((L, C), jnp.float32),
        w1=jnp.stack(w1s), b1=jnp.zeros((L, hidden), jnp.float32),
        w2=jnp.stack(w2s), b2=jnp.zeros((L, C), jnp.float32),
        lnf_g=jnp.ones((1, C), jnp.float32), lnf_b=jnp.zeros((1, C), jnp.float32))
    return params, key


# ----------------------------------------------------------------------------
# Pure-JAX f32 reference (mirrors the PyTorch forward) for correctness check
# ----------------------------------------------------------------------------

def ref_encoder(params, cfg, cxr_feat, enh_feat):
    bz, C, H, W = cxr_feat.shape
    va, ha = cfg.vert_anchors, cfg.horz_anchors
    hd = C // cfg.n_head

    def apool(t):
        return t.reshape(bz, C, va, H // va, ha, W // ha).mean(axis=(3, 5))

    img_e, lid_e = apool(cxr_feat), apool(enh_feat)
    tok = jnp.concatenate(
        [jnp.transpose(img_e, (0, 2, 3, 1)).reshape(bz, -1, C),
         jnp.transpose(lid_e, (0, 2, 3, 1)).reshape(bz, -1, C)], axis=1)
    x = params['pos_emb'] + tok

    for l in range(cfg.n_layer):
        xn = _ln(x, params['ln1_g'][l], params['ln1_b'][l])
        qkv = xn @ params['w_qkv'][l] + params['b_qkv'][l]
        q, k, v = qkv[..., :C], qkv[..., C:2 * C], qkv[..., 2 * C:]
        split = lambda t: t.reshape(bz, -1, cfg.n_head, hd).transpose(0, 2, 1, 3)
        qh, kh, vh = split(q), split(k), split(v)
        att = jnp.einsum('bhtd,bhsd->bhts', qh, kh) / math.sqrt(hd)
        att = jax.nn.softmax(att, axis=-1)
        y = jnp.einsum('bhts,bhsd->bhtd', att, vh).transpose(0, 2, 1, 3)
        y = y.reshape(bz, -1, C)
        x = x + (y @ params['w_proj'][l] + params['b_proj'][l])
        xn2 = _ln(x, params['ln2_g'][l], params['ln2_b'][l])
        x = x + (jax.nn.relu(xn2 @ params['w1'][l] + params['b1'][l])
                 @ params['w2'][l] + params['b2'][l])

    x = _ln(x, params['lnf_g'][0], params['lnf_b'][0])
    HW = va * ha
    x_img = x[:, :HW].reshape(bz, va, ha, C).transpose(0, 3, 1, 2)
    x_lid = x[:, HW:].reshape(bz, va, ha, C).transpose(0, 3, 1, 2)
    imgf = jax.nn.relu(cxr_feat + x_img).mean(axis=(2, 3))
    lidf = jax.nn.relu(enh_feat + x_lid).mean(axis=(2, 3))
    return imgf + lidf     # concat along token dim then sum (n_views*seq_len==1)


# ----------------------------------------------------------------------------
# Main
# ----------------------------------------------------------------------------

if __name__ == "__main__":
    cfg = SimpleNamespace(
        n_views=1, seq_len=1,
        n_embd=32, n_head=4, block_exp=2, n_layer=2,
        vert_anchors=4, horz_anchors=4,
        embd_pdrop=0.0, attn_pdrop=0.0, resid_pdrop=0.0)

    key = jax.random.PRNGKey(0)
    params, key = init_params(key, cfg)

    key, k1, k2 = jax.random.split(key, 3)
    # Post-backbone feature maps (see TODO(synk) at top): NCHW, C = n_embd.
    cxr_features = jax.random.normal(
        k1, (2, cfg.n_embd, cfg.vert_anchors, cfg.horz_anchors), jnp.float32)
    enh_features = jax.random.normal(
        k2, (2, cfg.n_embd, cfg.vert_anchors, cfg.horz_anchors), jnp.float32)

    fused = jax.block_until_ready(
        encoder_forward(params, cfg, cxr_features, enh_features))
    ref = jax.block_until_ready(
        ref_encoder(params, cfg, cxr_features, enh_features))

    # bf16 MXU inputs vs. the f32 reference: error stays well under 5e-3 here
    # because LN/softmax statistics, residuals and the pooled fuse remain f32.
    np.testing.assert_allclose(np.asarray(fused), np.asarray(ref),
                               rtol=5e-3, atol=5e-3)
    print("KERNEL_OK")
</pallas_src>

<mosaic_0001>
module attributes {stable_mosaic.version = 11 : i64} {
  func.func @_encoder_kernel(%arg0: i32, %arg1: memref<2x32x16xf32, #tpu.memory_space<vmem>>, %arg2: memref<2x32x16xf32, #tpu.memory_space<vmem>>, %arg3: memref<1x32x32xf32, #tpu.memory_space<vmem>>, %arg4: memref<2x32xf32, #tpu.memory_space<vmem>>, %arg5: memref<2x32xf32, #tpu.memory_space<vmem>>, %arg6: memref<2x32x96xbf16, #tpu.memory_space<vmem>>, %arg7: memref<2x96xf32, #tpu.memory_space<vmem>>, %arg8: memref<2x32x32xbf16, #tpu.memory_space<vmem>>, %arg9: memref<2x32xf32, #tpu.memory_space<vmem>>, %arg10: memref<2x32xf32, #tpu.memory_space<vmem>>, %arg11: memref<2x32xf32, #tpu.memory_space<vmem>>, %arg12: memref<2x32x64xbf16, #tpu.memory_space<vmem>>, %arg13: memref<2x64xf32, #tpu.memory_space<vmem>>, %arg14: memref<2x64x32xbf16, #tpu.memory_space<vmem>>, %arg15: memref<2x32xf32, #tpu.memory_space<vmem>>, %arg16: memref<1x32xf32, #tpu.memory_space<vmem>>, %arg17: memref<1x32xf32, #tpu.memory_space<vmem>>, %arg18: memref<1x2x32xf32, #tpu.memory_space<vmem>>) attributes {dimension_semantics = [#tpu.dimension_semantics<parallel>], iteration_bounds = array<i64: 1>, scalar_prefetch = 0 : i64, scratch_operands = 0 : i64, tpu.core_type = #tpu.core_type<tc>, window_params = [{transform_indices = @transform_0, window_bounds = array<i64: 2, 32, 16>}, {transform_indices = @transform_1, window_bounds = array<i64: 2, 32, 16>}, {pipeline_mode = #tpu.pipeline_mode<synchronous>, transform_indices = @transform_2, window_bounds = array<i64: 1, 32, 32>}, {pipeline_mode = #tpu.pipeline_mode<synchronous>, transform_indices = @transform_3, window_bounds = array<i64: 2, 32>}, {pipeline_mode = #tpu.pipeline_mode<synchronous>, transform_indices = @transform_4, window_bounds = array<i64: 2, 32>}, {pipeline_mode = #tpu.pipeline_mode<synchronous>, transform_indices = @transform_5, window_bounds = array<i64: 2, 32, 96>}, {pipeline_mode = #tpu.pipeline_mode<synchronous>, transform_indices = @transform_6, window_bounds = array<i64: 2, 96>}, {pipeline_mode = #tpu.pipeline_mode<synchronous>, transform_indices = @transform_7, window_bounds = array<i64: 2, 32, 32>}, {pipeline_mode = #tpu.pipeline_mode<synchronous>, transform_indices = @transform_8, window_bounds = array<i64: 2, 32>}, {pipeline_mode = #tpu.pipeline_mode<synchronous>, transform_indices = @transform_9, window_bounds = array<i64: 2, 32>}, {pipeline_mode = #tpu.pipeline_mode<synchronous>, transform_indices = @transform_10, window_bounds = array<i64: 2, 32>}, {pipeline_mode = #tpu.pipeline_mode<synchronous>, transform_indices = @transform_11, window_bounds = array<i64: 2, 32, 64>}, {pipeline_mode = #tpu.pipeline_mode<synchronous>, transform_indices = @transform_12, window_bounds = array<i64: 2, 64>}, {pipeline_mode = #tpu.pipeline_mode<synchronous>, transform_indices = @transform_13, window_bounds = array<i64: 2, 64, 32>}, {pipeline_mode = #tpu.pipeline_mode<synchronous>, transform_indices = @transform_14, window_bounds = array<i64: 2, 32>}, {pipeline_mode = #tpu.pipeline_mode<synchronous>, transform_indices = @transform_15, window_bounds = array<i64: 1, 32>}, {pipeline_mode = #tpu.pipeline_mode<synchronous>, transform_indices = @transform_16, window_bounds = array<i64: 1, 32>}, {transform_indices = @transform_17, window_bounds = array<i64: 1, 2, 32>}]} {
    %c0 = arith.constant 0 : index
    %c0_0 = arith.constant 0 : index
    %c0_1 = arith.constant 0 : index
    %0 = vector.load %arg1[%c0, %c0_0, %c0_1] : memref<2x32x16xf32, #tpu.memory_space<vmem>>, vector<2x32x16xf32>
    %1 = tpu.transpose %0, [0, 2, 1] : vector<2x32x16xf32> -> vector<2x16x32xf32>
    %c0_2 = arith.constant 0 : index
    %c0_3 = arith.constant 0 : index
    %c0_4 = arith.constant 0 : index
    %2 = vector.load %arg2[%c0_2, %c0_3, %c0_4] : memref<2x32x16xf32, #tpu.memory_space<vmem>>, vector<2x32x16xf32>
    %3 = tpu.transpose %2, [0, 2, 1] : vector<2x32x16xf32> -> vector<2x16x32xf32>
    %4 = tpu.concatenate %1, %3 in 1 : vector<2x16x32xf32>, vector<2x16x32xf32> -> vector<2x32x32xf32>
    %c0_5 = arith.constant 0 : index
    %c0_6 = arith.constant 0 : index
    %c0_7 = arith.constant 0 : index
    %5 = vector.load %arg3[%c0_5, %c0_6, %c0_7] : memref<1x32x32xf32, #tpu.memory_space<vmem>>, vector<1x32x32xf32>
    %6 = vector.broadcast %5 : vector<1x32x32xf32> to vector<2x32x32xf32>
    %7 = arith.addf %4, %6 : vector<2x32x32xf32>
    %8 = vector.shape_cast %7 : vector<2x32x32xf32> to vector<64x32xf32>
    %c0_8 = arith.constant 0 : index
    %c0_9 = arith.constant 0 : index
    %9 = vector.load %arg4[%c0_8, %c0_9] : memref<2x32xf32, #tpu.memory_space<vmem>>, vector<1x32xf32>
    %10 = vector.shape_cast %9 : vector<1x32xf32> to vector<32xf32>
    %c0_10 = arith.constant 0 : index
    %c0_11 = arith.constant 0 : index
    %11 = vector.load %arg5[%c0_10, %c0_11] : memref<2x32xf32, #tpu.memory_space<vmem>>, vector<1x32xf32>
    %12 = vector.shape_cast %11 : vector<1x32xf32> to vector<32xf32>
    %cst = arith.constant dense<0.000000e+00> : vector<64xf32>
    %13 = vector.multi_reduction <add>, %8, %cst [1] : vector<64x32xf32> to vector<64xf32>
    %14 = vector.shape_cast %13 : vector<64xf32> to vector<64x1xf32>
    %cst_12 = arith.constant 3.200000e+01 : f32
    %15 = vector.broadcast %cst_12 : f32 to vector<64x1xf32>
    %16 = arith.divf %14, %15 : vector<64x1xf32>
    %17 = vector.broadcast %16 : vector<64x1xf32> to vector<64x32xf32>
    %18 = arith.subf %8, %17 : vector<64x32xf32>
    %19 = arith.mulf %18, %18 : vector<64x32xf32>
    %cst_13 = arith.constant dense<0.000000e+00> : vector<64xf32>
    %20 = vector.multi_reduction <add>, %19, %cst_13 [1] : vector<64x32xf32> to vector<64xf32>
    %21 = vector.shape_cast %20 : vector<64xf32> to vector<64x1xf32>
    %cst_14 = arith.constant 3.200000e+01 : f32
    %22 = vector.broadcast %cst_14 : f32 to vector<64x1xf32>
    %23 = arith.divf %21, %22 : vector<64x1xf32>
    %24 = vector.broadcast %16 : vector<64x1xf32> to vector<64x32xf32>
    %25 = arith.subf %8, %24 : vector<64x32xf32>
    %cst_15 = arith.constant 9.99999997E-7 : f32
    %26 = vector.broadcast %cst_15 : f32 to vector<64x1xf32>
    %27 = arith.addf %23, %26 : vector<64x1xf32>
    %28 = math.rsqrt %27 : vector<64x1xf32>
    %29 = vector.broadcast %28 : vector<64x1xf32> to vector<64x32xf32>
    %30 = arith.mulf %25, %29 : vector<64x32xf32>
    %31 = vector.shape_cast %10 : vector<32xf32> to vector<1x32xf32>
    %32 = vector.broadcast %31 : vector<1x32xf32> to vector<64x32xf32>
    %33 = arith.mulf %30, %32 : vector<64x32xf32>
    %34 = vector.shape_cast %12 : vector<32xf32> to vector<1x32xf32>
    %35 = vector.broadcast %34 : vector<1x32xf32> to vector<64x32xf32>
    %36 = arith.addf %33, %35 : vector<64x32xf32>
    %37 = arith.truncf %36 : vector<64x32xf32> to vector<64x32xbf16>
    %c0_16 = arith.constant 0 : index
    %c0_17 = arith.constant 0 : index
    %c0_18 = arith.constant 0 : index
    %38 = vector.load %arg6[%c0_16, %c0_17, %c0_18] : memref<2x32x96xbf16, #tpu.memory_space<vmem>>, vector<1x32x96xbf16>
    %39 = vector.shape_cast %38 : vector<1x32x96xbf16> to vector<32x96xbf16>
    %cst_19 = arith.constant dense<0.000000e+00> : vector<64x96xf32>
    %40 = tpu.matmul %37, %39, %cst_19 {dimension_numbers = #tpu.dot_dimension_numbers<[1], [0], [0], [1], [0, 0, 1, 1], [], []>} : vector<64x32xbf16>, vector<32x96xbf16>, vector<64x96xf32> -> vector<64x96xf32>
    %c0_20 = arith.constant 0 : index
    %c0_21 = arith.constant 0 : index
    %41 = vector.load %arg7[%c0_20, %c0_21] : memref<2x96xf32, #tpu.memory_space<vmem>>, vector<1x96xf32>
    %42 = vector.shape_cast %41 : vector<1x96xf32> to vector<96xf32>
    %43 = vector.shape_cast %42 : vector<96xf32> to vector<1x96xf32>
    %44 = vector.broadcast %43 : vector<1x96xf32> to vector<64x96xf32>
    %45 = arith.addf %40, %44 : vector<64x96xf32>
    %46 = vector.extract_strided_slice %45 {offsets = [0, 0], sizes = [32, 96], strides = [1, 1]} : vector<64x96xf32> to vector<32x96xf32>
    %47 = vector.extract_strided_slice %46 {offsets = [0, 0], sizes = [32, 8], strides = [1, 1]} : vector<32x96xf32> to vector<32x8xf32>
    %cst_22 = arith.constant 0.353553385 : f32
    %48 = vector.broadcast %cst_22 : f32 to vector<32x8xf32>
    %49 = arith.mulf %47, %48 : vector<32x8xf32>
    %50 = vector.extract_strided_slice %46 {offsets = [0, 32], sizes = [32, 8], strides = [1, 1]} : vector<32x96xf32> to vector<32x8xf32>
    %51 = vector.extract_strided_slice %46 {offsets = [0, 64], sizes = [32, 8], strides = [1, 1]} : vector<32x96xf32> to vector<32x8xf32>
    %52 = tpu.transpose %50, [1, 0] : vector<32x8xf32> -> vector<8x32xf32>
    %cst_23 = arith.constant dense<0.000000e+00> : vector<32x32xf32>
    %53 = tpu.matmul %49, %52, %cst_23 {dimension_numbers = #tpu.dot_dimension_numbers<[1], [0], [0], [1], [0, 0, 1, 1], [], []>} : vector<32x8xf32>, vector<8x32xf32>, vector<32x32xf32> -> vector<32x32xf32>
    %cst_24 = arith.constant dense<0xFF800000> : vector<32xf32>
    %54 = vector.multi_reduction <maximumf>, %53, %cst_24 [1] : vector<32x32xf32> to vector<32xf32>
    %55 = vector.shape_cast %54 : vector<32xf32> to vector<32x1xf32>
    %56 = vector.broadcast %55 : vector<32x1xf32> to vector<32x32xf32>
    %57 = arith.subf %53, %56 : vector<32x32xf32>
    %58 = math.exp %57 : vector<32x32xf32>
    %cst_25 = arith.constant dense<0.000000e+00> : vector<32x8xf32>
    %59 = tpu.matmul %58, %51, %cst_25 {dimension_numbers = #tpu.dot_dimension_numbers<[1], [0], [0], [1], [0, 0, 1, 1], [], []>} : vector<32x32xf32>, vector<32x8xf32>, vector<32x8xf32> -> vector<32x8xf32>
    %cst_26 = arith.constant dense<0.000000e+00> : vector<32xf32>
    %60 = vector.multi_reduction <add>, %58, %cst_26 [1] : vector<32x32xf32> to vector<32xf32>
    %61 = vector.shape_cast %60 : vector<32xf32> to vector<32x1xf32>
    %62 = vector.broadcast %61 : vector<32x1xf32> to vector<32x8xf32>
    %63 = arith.divf %59, %62 : vector<32x8xf32>
    %64 = vector.extract_strided_slice %46 {offsets = [0, 8], sizes = [32, 8], strides = [1, 1]} : vector<32x96xf32> to vector<32x8xf32>
    %cst_27 = arith.constant 0.353553385 : f32
    %65 = vector.broadcast %cst_27 : f32 to vector<32x8xf32>
    %66 = arith.mulf %64, %65 : vector<32x8xf32>
    %67 = vector.extract_strided_slice %46 {offsets = [0, 40], sizes = [32, 8], strides = [1, 1]} : vector<32x96xf32> to vector<32x8xf32>
    %68 = vector.extract_strided_slice %46 {offsets = [0, 72], sizes = [32, 8], strides = [1, 1]} : vector<32x96xf32> to vector<32x8xf32>
    %69 = tpu.transpose %67, [1, 0] : vector<32x8xf32> -> vector<8x32xf32>
    %cst_28 = arith.constant dense<0.000000e+00> : vector<32x32xf32>
    %70 = tpu.matmul %66, %69, %cst_28 {dimension_numbers = #tpu.dot_dimension_numbers<[1], [0], [0], [1], [0, 0, 1, 1], [], []>} : vector<32x8xf32>, vector<8x32xf32>, vector<32x32xf32> -> vector<32x32xf32>
    %cst_29 = arith.constant dense<0xFF800000> : vector<32xf32>
    %71 = vector.multi_reduction <maximumf>, %70, %cst_29 [1] : vector<32x32xf32> to vector<32xf32>
    %72 = vector.shape_cast %71 : vector<32xf32> to vector<32x1xf32>
    %73 = vector.broadcast %72 : vector<32x1xf32> to vector<32x32xf32>
    %74 = arith.subf %70, %73 : vector<32x32xf32>
    %75 = math.exp %74 : vector<32x32xf32>
    %cst_30 = arith.constant dense<0.000000e+00> : vector<32x8xf32>
    %76 = tpu.matmul %75, %68, %cst_30 {dimension_numbers = #tpu.dot_dimension_numbers<[1], [0], [0], [1], [0, 0, 1, 1], [], []>} : vector<32x32xf32>, vector<32x8xf32>, vector<32x8xf32> -> vector<32x8xf32>
    %cst_31 = arith.constant dense<0.000000e+00> : vector<32xf32>
    %77 = vector.multi_reduction <add>, %75, %cst_31 [1] : vector<32x32xf32> to vector<32xf32>
    %78 = vector.shape_cast %77 : vector<32xf32> to vector<32x1xf32>
    %79 = vector.broadcast %78 : vector<32x1xf32> to vector<32x8xf32>
    %80 = arith.divf %76, %79 : vector<32x8xf32>
    %81 = vector.extract_strided_slice %46 {offsets = [0, 16], sizes = [32, 8], strides = [1, 1]} : vector<32x96xf32> to vector<32x8xf32>
    %cst_32 = arith.constant 0.353553385 : f32
    %82 = vector.broadcast %cst_32 : f32 to vector<32x8xf32>
    %83 = arith.mulf %81, %82 : vector<32x8xf32>
    %84 = vector.extract_strided_slice %46 {offsets = [0, 48], sizes = [32, 8], strides = [1, 1]} : vector<32x96xf32> to vector<32x8xf32>
    %85 = vector.extract_strided_slice %46 {offsets = [0, 80], sizes = [32, 8], strides = [1, 1]} : vector<32x96xf32> to vector<32x8xf32>
    %86 = tpu.transpose %84, [1, 0] : vector<32x8xf32> -> vector<8x32xf32>
    %cst_33 = arith.constant dense<0.000000e+00> : vector<32x32xf32>
    %87 = tpu.matmul %83, %86, %cst_33 {dimension_numbers = #tpu.dot_dimension_numbers<[1], [0], [0], [1], [0, 0, 1, 1], [], []>} : vector<32x8xf32>, vector<8x32xf32>, vector<32x32xf32> -> vector<32x32xf32>
    %cst_34 = arith.constant dense<0xFF800000> : vector<32xf32>
    %88 = vector.multi_reduction <maximumf>, %87, %cst_34 [1] : vector<32x32xf32> to vector<32xf32>
    %89 = vector.shape_cast %88 : vector<32xf32> to vector<32x1xf32>
    %90 = vector.broadcast %89 : vector<32x1xf32> to vector<32x32xf32>
    %91 = arith.subf %87, %90 : vector<32x32xf32>
    %92 = math.exp %91 : vector<32x32xf32>
    %cst_35 = arith.constant dense<0.000000e+00> : vector<32x8xf32>
    %93 = tpu.matmul %92, %85, %cst_35 {dimension_numbers = #tpu.dot_dimension_numbers<[1], [0], [0], [1], [0, 0, 1, 1], [], []>} : vector<32x32xf32>, vector<32x8xf32>, vector<32x8xf32> -> vector<32x8xf32>
    %cst_36 = arith.constant dense<0.000000e+00> : vector<32xf32>
    %94 = vector.multi_reduction <add>, %92, %cst_36 [1] : vector<32x32xf32> to vector<32xf32>
    %95 = vector.shape_cast %94 : vector<32xf32> to vector<32x1xf32>
    %96 = vector.broadcast %95 : vector<32x1xf32> to vector<32x8xf32>
    %97 = arith.divf %93, %96 : vector<32x8xf32>
    %98 = vector.extract_strided_slice %46 {offsets = [0, 24], sizes = [32, 8], strides = [1, 1]} : vector<32x96xf32> to vector<32x8xf32>
    %cst_37 = arith.constant 0.353553385 : f32
    %99 = vector.broadcast %cst_37 : f32 to vector<32x8xf32>
    %100 = arith.mulf %98, %99 : vector<32x8xf32>
    %101 = vector.extract_strided_slice %46 {offsets = [0, 56], sizes = [32, 8], strides = [1, 1]} : vector<32x96xf32> to vector<32x8xf32>
    %102 = vector.extract_strided_slice %46 {offsets = [0, 88], sizes = [32, 8], strides = [1, 1]} : vector<32x96xf32> to vector<32x8xf32>
    %103 = tpu.transpose %101, [1, 0] : vector<32x8xf32> -> vector<8x32xf32>
    %cst_38 = arith.constant dense<0.000000e+00> : vector<32x32xf32>
    %104 = tpu.matmul %100, %103, %cst_38 {dimension_numbers = #tpu.dot_dimension_numbers<[1], [0], [0], [1], [0, 0, 1, 1], [], []>} : vector<32x8xf32>, vector<8x32xf32>, vector<32x32xf32> -> vector<32x32xf32>
    %cst_39 = arith.constant dense<0xFF800000> : vector<32xf32>
    %105 = vector.multi_reduction <maximumf>, %104, %cst_39 [1] : vector<32x32xf32> to vector<32xf32>
    %106 = vector.shape_cast %105 : vector<32xf32> to vector<32x1xf32>
    %107 = vector.broadcast %106 : vector<32x1xf32> to vector<32x32xf32>
    %108 = arith.subf %104, %107 : vector<32x32xf32>
    %109 = math.exp %108 : vector<32x32xf32>
    %cst_40 = arith.constant dense<0.000000e+00> : vector<32x8xf32>
    %110 = tpu.matmul %109, %102, %cst_40 {dimension_numbers = #tpu.dot_dimension_numbers<[1], [0], [0], [1], [0, 0, 1, 1], [], []>} : vector<32x32xf32>, vector<32x8xf32>, vector<32x8xf32> -> vector<32x8xf32>
    %cst_41 = arith.constant dense<0.000000e+00> : vector<32xf32>
    %111 = vector.multi_reduction <add>, %109, %cst_41 [1] : vector<32x32xf32> to vector<32xf32>
    %112 = vector.shape_cast %111 : vector<32xf32> to vector<32x1xf32>
    %113 = vector.broadcast %112 : vector<32x1xf32> to vector<32x8xf32>
    %114 = arith.divf %110, %113 : vector<32x8xf32>
    %115 = vector.extract_strided_slice %45 {offsets = [32, 0], sizes = [32, 96], strides = [1, 1]} : vector<64x96xf32> to vector<32x96xf32>
    %116 = vector.extract_strided_slice %115 {offsets = [0, 0], sizes = [32, 8], strides = [1, 1]} : vector<32x96xf32> to vector<32x8xf32>
    %cst_42 = arith.constant 0.353553385 : f32
    %117 = vector.broadcast %cst_42 : f32 to vector<32x8xf32>
    %118 = arith.mulf %116, %117 : vector<32x8xf32>
    %119 = vector.extract_strided_slice %115 {offsets = [0, 32], sizes = [32, 8], strides = [1, 1]} : vector<32x96xf32> to vector<32x8xf32>
    %120 = vector.extract_strided_slice %115 {offsets = [0, 64], sizes = [32, 8], strides = [1, 1]} : vector<32x96xf32> to vector<32x8xf32>
    %121 = tpu.transpose %119, [1, 0] : vector<32x8xf32> -> vector<8x32xf32>
    %cst_43 = arith.constant dense<0.000000e+00> : vector<32x32xf32>
    %122 = tpu.matmul %118, %121, %cst_43 {dimension_numbers = #tpu.dot_dimension_numbers<[1], [0], [0], [1], [0, 0, 1, 1], [], []>} : vector<32x8xf32>, vector<8x32xf32>, vector<32x32xf32> -> vector<32x32xf32>
    %cst_44 = arith.constant dense<0xFF800000> : vector<32xf32>
    %123 = vector.multi_reduction <maximumf>, %122, %cst_44 [1] : vector<32x32xf32> to vector<32xf32>
    %124 = vector.shape_cast %123 : vector<32xf32> to vector<32x1xf32>
    %125 = vector.broadcast %124 : vector<32x1xf32> to vector<32x32xf32>
    %126 = arith.subf %122, %125 : vector<32x32xf32>
    %127 = math.exp %126 : vector<32x32xf32>
    %cst_45 = arith.constant dense<0.000000e+00> : vector<32x8xf32>
    %128 = tpu.matmul %127, %120, %cst_45 {dimension_numbers = #tpu.dot_dimension_numbers<[1], [0], [0], [1], [0, 0, 1, 1], [], []>} : vector<32x32xf32>, vector<32x8xf32>, vector<32x8xf32> -> vector<32x8xf32>
    %cst_46 = arith.constant dense<0.000000e+00> : vector<32xf32>
    %129 = vector.multi_reduction <add>, %127, %cst_46 [1] : vector<32x32xf32> to vector<32xf32>
    %130 = vector.shape_cast %129 : vector<32xf32> to vector<32x1xf32>
    %131 = vector.broadcast %130 : vector<32x1xf32> to vector<32x8xf32>
    %132 = arith.divf %128, %131 : vector<32x8xf32>
    %133 = vector.extract_strided_slice %115 {offsets = [0, 8], sizes = [32, 8], strides = [1, 1]} : vector<32x96xf32> to vector<32x8xf32>
    %cst_47 = arith.constant 0.353553385 : f32
    %134 = vector.broadcast %cst_47 : f32 to vector<32x8xf32>
    %135 = arith.mulf %133, %134 : vector<32x8xf32>
    %136 = vector.extract_strided_slice %115 {offsets = [0, 40], sizes = [32, 8], strides = [1, 1]} : vector<32x96xf32> to vector<32x8xf32>
    %137 = vector.extract_strided_slice %115 {offsets = [0, 72], sizes = [32, 8], strides = [1, 1]} : vector<32x96xf32> to vector<32x8xf32>
    %138 = tpu.transpose %136, [1, 0] : vector<32x8xf32> -> vector<8x32xf32>
    %cst_48 = arith.constant dense<0.000000e+00> : vector<32x32xf32>
    %139 = tpu.matmul %135, %138, %cst_48 {dimension_numbers = #tpu.dot_dimension_numbers<[1], [0], [0], [1], [0, 0, 1, 1], [], []>} : vector<32x8xf32>, vector<8x32xf32>, vector<32x32xf32> -> vector<32x32xf32>
    %cst_49 = arith.constant dense<0xFF800000> : vector<32xf32>
    %140 = vector.multi_reduction <maximumf>, %139, %cst_49 [1] : vector<32x32xf32> to vector<32xf32>
    %141 = vector.shape_cast %140 : vector<32xf32> to vector<32x1xf32>
    %142 = vector.broadcast %141 : vector<32x1xf32> to vector<32x32xf32>
    %143 = arith.subf %139, %142 : vector<32x32xf32>
    %144 = math.exp %143 : vector<32x32xf32>
    %cst_50 = arith.constant dense<0.000000e+00> : vector<32x8xf32>
    %145 = tpu.matmul %144, %137, %cst_50 {dimension_numbers = #tpu.dot_dimension_numbers<[1], [0], [0], [1], [0, 0, 1, 1], [], []>} : vector<32x32xf32>, vector<32x8xf32>, vector<32x8xf32> -> vector<32x8xf32>
    %cst_51 = arith.constant dense<0.000000e+00> : vector<32xf32>
    %146 = vector.multi_reduction <add>, %144, %cst_51 [1] : vector<32x32xf32> to vector<32xf32>
    %147 = vector.shape_cast %146 : vector<32xf32> to vector<32x1xf32>
    %148 = vector.broadcast %147 : vector<32x1xf32> to vector<32x8xf32>
    %149 = arith.divf %145, %148 : vector<32x8xf32>
    %150 = vector.extract_strided_slice %115 {offsets = [0, 16], sizes = [32, 8], strides = [1, 1]} : vector<32x96xf32> to vector<32x8xf32>
    %cst_52 = arith.constant 0.353553385 : f32
    %151 = vector.broadcast %cst_52 : f32 to vector<32x8xf32>
    %152 = arith.mulf %150, %151 : vector<32x8xf32>
    %153 = vector.extract_strided_slice %115 {offsets = [0, 48], sizes = [32, 8], strides = [1, 1]} : vector<32x96xf32> to vector<32x8xf32>
    %154 = vector.extract_strided_slice %115 {offsets = [0, 80], sizes = [32, 8], strides = [1, 1]} : vector<32x96xf32> to vector<32x8xf32>
    %155 = tpu.transpose %153, [1, 0] : vector<32x8xf32> -> vector<8x32xf32>
    %cst_53 = arith.constant dense<0.000000e+00> : vector<32x32xf32>
    %156 = tpu.matmul %152, %155, %cst_53 {dimension_numbers = #tpu.dot_dimension_numbers<[1], [0], [0], [1], [0, 0, 1, 1], [], []>} : vector<32x8xf32>, vector<8x32xf32>, vector<32x32xf32> -> vector<32x32xf32>
    %cst_54 = arith.constant dense<0xFF800000> : vector<32xf32>
    %157 = vector.multi_reduction <maximumf>, %156, %cst_54 [1] : vector<32x32xf32> to vector<32xf32>
    %158 = vector.shape_cast %157 : vector<32xf32> to vector<32x1xf32>
    %159 = vector.broadcast %158 : vector<32x1xf32> to vector<32x32xf32>
    %160 = arith.subf %156, %159 : vector<32x32xf32>
    %161 = math.exp %160 : vector<32x32xf32>
    %cst_55 = arith.constant dense<0.000000e+00> : vector<32x8xf32>
    %162 = tpu.matmul %161, %154, %cst_55 {dimension_numbers = #tpu.dot_dimension_numbers<[1], [0], [0], [1], [0, 0, 1, 1], [], []>} : vector<32x32xf32>, vector<32x8xf32>, vector<32x8xf32> -> vector<32x8xf32>
    %cst_56 = arith.constant dense<0.000000e+00> : vector<32xf32>
    %163 = vector.multi_reduction <add>, %161, %cst_56 [1] : vector<32x32xf32> to vector<32xf32>
    %164 = vector.shape_cast %163 : vector<32xf32> to vector<32x1xf32>
    %165 = vector.broadcast %164 : vector<32x1xf32> to vector<32x8xf32>
    %166 = arith.divf %162, %165 : vector<32x8xf32>
    %167 = vector.extract_strided_slice %115 {offsets = [0, 24], sizes = [32, 8], strides = [1, 1]} : vector<32x96xf32> to vector<32x8xf32>
    %cst_57 = arith.constant 0.353553385 : f32
    %168 = vector.broadcast %cst_57 : f32 to vector<32x8xf32>
    %169 = arith.mulf %167, %168 : vector<32x8xf32>
    %170 = vector.extract_strided_slice %115 {offsets = [0, 56], sizes = [32, 8], strides = [1, 1]} : vector<32x96xf32> to vector<32x8xf32>
    %171 = vector.extract_strided_slice %115 {offsets = [0, 88], sizes = [32, 8], strides = [1, 1]} : vector<32x96xf32> to vector<32x8xf32>
    %172 = tpu.transpose %170, [1, 0] : vector<32x8xf32> -> vector<8x32xf32>
    %cst_58 = arith.constant dense<0.000000e+00> : vector<32x32xf32>
    %173 = tpu.matmul %169, %172, %cst_58 {dimension_numbers = #tpu.dot_dimension_numbers<[1], [0], [0], [1], [0, 0, 1, 1], [], []>} : vector<32x8xf32>, vector<8x32xf32>, vector<32x32xf32> -> vector<32x32xf32>
    %cst_59 = arith.constant dense<0xFF800000> : vector<32xf32>
    %174 = vector.multi_reduction <maximumf>, %173, %cst_59 [1] : vector<32x32xf32> to vector<32xf32>
    %175 = vector.shape_cast %174 : vector<32xf32> to vector<32x1xf32>
    %176 = vector.broadcast %175 : vector<32x1xf32> to vector<32x32xf32>
    %177 = arith.subf %173, %176 : vector<32x32xf32>
    %178 = math.exp %177 : vector<32x32xf32>
    %cst_60 = arith.constant dense<0.000000e+00> : vector<32x8xf32>
    %179 = tpu.matmul %178, %171, %cst_60 {dimension_numbers = #tpu.dot_dimension_numbers<[1], [0], [0], [1], [0, 0, 1, 1], [], []>} : vector<32x32xf32>, vector<32x8xf32>, vector<32x8xf32> -> vector<32x8xf32>
    %cst_61 = arith.constant dense<0.000000e+00> : vector<32xf32>
    %180 = vector.multi_reduction <add>, %178, %cst_61 [1] : vector<32x32xf32> to vector<32xf32>
    %181 = vector.shape_cast %180 : vector<32xf32> to vector<32x1xf32>
    %182 = vector.broadcast %181 : vector<32x1xf32> to vector<32x8xf32>
    %183 = arith.divf %179, %182 : vector<32x8xf32>
    %184 = tpu.concatenate %63, %80, %97, %114 in 1 : vector<32x8xf32>, vector<32x8xf32>, vector<32x8xf32>, vector<32x8xf32> -> vector<32x32xf32>
    %185 = tpu.concatenate %132, %149, %166, %183 in 1 : vector<32x8xf32>, vector<32x8xf32>, vector<32x8xf32>, vector<32x8xf32> -> vector<32x32xf32>
    %186 = tpu.concatenate %184, %185 in 0 : vector<32x32xf32>, vector<32x32xf32> -> vector<64x32xf32>
    %187 = arith.truncf %186 : vector<64x32xf32> to vector<64x32xbf16>
    %c0_62 = arith.constant 0 : index
    %c0_63 = arith.constant 0 : index
    %c0_64 = arith.constant 0 : index
    %188 = vector.load %arg8[%c0_62, %c0_63, %c0_64] : memref<2x32x32xbf16, #tpu.memory_space<vmem>>, vector<1x32x32xbf16>
    %189 = vector.shape_cast %188 : vector<1x32x32xbf16> to vector<32x32xbf16>
    %cst_65 = arith.constant dense<0.000000e+00> : vector<64x32xf32>
    %190 = tpu.matmul %187, %189, %cst_65 {dimension_numbers = #tpu.dot_dimension_numbers<[1], [0], [0], [1], [0, 0, 1, 1], [], []>} : vector<64x32xbf16>, vector<32x32xbf16>, vector<64x32xf32> -> vector<64x32xf32>
    %c0_66 = arith.constant 0 : index
    %c0_67 = arith.constant 0 : index
    %191 = vector.load %arg9[%c0_66, %c0_67] : memref<2x32xf32, #tpu.memory_space<vmem>>, vector<1x32xf32>
    %192 = vector.shape_cast %191 : vector<1x32xf32> to vector<32xf32>
    %193 = vector.shape_cast %192 : vector<32xf32> to vector<1x32xf32>
    %194 = vector.broadcast %193 : vector<1x32xf32> to vector<64x32xf32>
    %195 = arith.addf %190, %194 : vector<64x32xf32>
    %196 = arith.addf %8, %195 : vector<64x32xf32>
    %c0_68 = arith.constant 0 : index
    %c0_69 = arith.constant 0 : index
    %197 = vector.load %arg10[%c0_68, %c0_69] : memref<2x32xf32, #tpu.memory_space<vmem>>, vector<1x32xf32>
    %198 = vector.shape_cast %197 : vector<1x32xf32> to vector<32xf32>
    %c0_70 = arith.constant 0 : index
    %c0_71 = arith.constant 0 : index
    %199 = vector.load %arg11[%c0_70, %c0_71] : memref<2x32xf32, #tpu.memory_space<vmem>>, vector<1x32xf32>
    %200 = vector.shape_cast %199 : vector<1x32xf32> to vector<32xf32>
    %cst_72 = arith.constant dense<0.000000e+00> : vector<64xf32>
    %201 = vector.multi_reduction <add>, %196, %cst_72 [1] : vector<64x32xf32> to vector<64xf32>
    %202 = vector.shape_cast %201 : vector<64xf32> to vector<64x1xf32>
    %cst_73 = arith.constant 3.200000e+01 : f32
    %203 = vector.broadcast %cst_73 : f32 to vector<64x1xf32>
    %204 = arith.divf %202, %203 : vector<64x1xf32>
    %205 = vector.broadcast %204 : vector<64x1xf32> to vector<64x32xf32>
    %206 = arith.subf %196, %205 : vector<64x32xf32>
    %207 = arith.mulf %206, %206 : vector<64x32xf32>
    %cst_74 = arith.constant dense<0.000000e+00> : vector<64xf32>
    %208 = vector.multi_reduction <add>, %207, %cst_74 [1] : vector<64x32xf32> to vector<64xf32>
    %209 = vector.shape_cast %208 : vector<64xf32> to vector<64x1xf32>
    %cst_75 = arith.constant 3.200000e+01 : f32
    %210 = vector.broadcast %cst_75 : f32 to vector<64x1xf32>
    %211 = arith.divf %209, %210 : vector<64x1xf32>
    %212 = vector.broadcast %204 : vector<64x1xf32> to vector<64x32xf32>
    %213 = arith.subf %196, %212 : vector<64x32xf32>
    %cst_76 = arith.constant 9.99999997E-7 : f32
    %214 = vector.broadcast %cst_76 : f32 to vector<64x1xf32>
    %215 = arith.addf %211, %214 : vector<64x1xf32>
    %216 = math.rsqrt %215 : vector<64x1xf32>
    %217 = vector.broadcast %216 : vector<64x1xf32> to vector<64x32xf32>
    %218 = arith.mulf %213, %217 : vector<64x32xf32>
    %219 = vector.shape_cast %198 : vector<32xf32> to vector<1x32xf32>
    %220 = vector.broadcast %219 : vector<1x32xf32> to vector<64x32xf32>
    %221 = arith.mulf %218, %220 : vector<64x32xf32>
    %222 = vector.shape_cast %200 : vector<32xf32> to vector<1x32xf32>
    %223 = vector.broadcast %222 : vector<1x32xf32> to vector<64x32xf32>
    %224 = arith.addf %221, %223 : vector<64x32xf32>
    %225 = arith.truncf %224 : vector<64x32xf32> to vector<64x32xbf16>
    %c0_77 = arith.constant 0 : index
    %c0_78 = arith.constant 0 : index
    %c0_79 = arith.constant 0 : index
    %226 = vector.load %arg12[%c0_77, %c0_78, %c0_79] : memref<2x32x64xbf16, #tpu.memory_space<vmem>>, vector<1x32x64xbf16>
    %227 = vector.shape_cast %226 : vector<1x32x64xbf16> to vector<32x64xbf16>
    %cst_80 = arith.constant dense<0.000000e+00> : vector<64x64xf32>
    %228 = tpu.matmul %225, %227, %cst_80 {dimension_numbers = #tpu.dot_dimension_numbers<[1], [0], [0], [1], [0, 0, 1, 1], [], []>} : vector<64x32xbf16>, vector<32x64xbf16>, vector<64x64xf32> -> vector<64x64xf32>
    %c0_81 = arith.constant 0 : index
    %c0_82 = arith.constant 0 : index
    %229 = vector.load %arg13[%c0_81, %c0_82] : memref<2x64xf32, #tpu.memory_space<vmem>>, vector<1x64xf32>
    %230 = vector.shape_cast %229 : vector<1x64xf32> to vector<64xf32>
    %231 = vector.shape_cast %230 : vector<64xf32> to vector<1x64xf32>
    %232 = vector.broadcast %231 : vector<1x64xf32> to vector<64x64xf32>
    %233 = arith.addf %228, %232 : vector<64x64xf32>
    %cst_83 = arith.constant 0.000000e+00 : f32
    %234 = vector.broadcast %cst_83 : f32 to vector<64x64xf32>
    %235 = arith.maximumf %233, %234 : vector<64x64xf32>
    %236 = arith.truncf %235 : vector<64x64xf32> to vector<64x64xbf16>
    %c0_84 = arith.constant 0 : index
    %c0_85 = arith.constant 0 : index
    %c0_86 = arith.constant 0 : index
    %237 = vector.load %arg14[%c0_84, %c0_85, %c0_86] : memref<2x64x32xbf16, #tpu.memory_space<vmem>>, vector<1x64x32xbf16>
    %238 = vector.shape_cast %237 : vector<1x64x32xbf16> to vector<64x32xbf16>
    %cst_87 = arith.constant dense<0.000000e+00> : vector<64x32xf32>
    %239 = tpu.matmul %236, %238, %cst_87 {dimension_numbers = #tpu.dot_dimension_numbers<[1], [0], [0], [1], [0, 0, 1, 1], [], []>} : vector<64x64xbf16>, vector<64x32xbf16>, vector<64x32xf32> -> vector<64x32xf32>
    %c0_88 = arith.constant 0 : index
    %c0_89 = arith.constant 0 : index
    %240 = vector.load %arg15[%c0_88, %c0_89] : memref<2x32xf32, #tpu.memory_space<vmem>>, vector<1x32xf32>
    %241 = vector.shape_cast %240 : vector<1x32xf32> to vector<32xf32>
    %242 = vector.shape_cast %241 : vector<32xf32> to vector<1x32xf32>
    %243 = vector.broadcast %242 : vector<1x32xf32> to vector<64x32xf32>
    %244 = arith.addf %239, %243 : vector<64x32xf32>
    %245 = arith.addf %196, %244 : vector<64x32xf32>
    %c1 = arith.constant 1 : index
    %c0_90 = arith.constant 0 : index
    %246 = vector.load %arg4[%c1, %c0_90] : memref<2x32xf32, #tpu.memory_space<vmem>>, vector<1x32xf32>
    %247 = vector.shape_cast %246 : vector<1x32xf32> to vector<32xf32>
    %c1_91 = arith.constant 1 : index
    %c0_92 = arith.constant 0 : index
    %248 = vector.load %arg5[%c1_91, %c0_92] : memref<2x32xf32, #tpu.memory_space<vmem>>, vector<1x32xf32>
    %249 = vector.shape_cast %248 : vector<1x32xf32> to vector<32xf32>
    %cst_93 = arith.constant dense<0.000000e+00> : vector<64xf32>
    %250 = vector.multi_reduction <add>, %245, %cst_93 [1] : vector<64x32xf32> to vector<64xf32>
    %251 = vector.shape_cast %250 : vector<64xf32> to vector<64x1xf32>
    %cst_94 = arith.constant 3.200000e+01 : f32
    %252 = vector.broadcast %cst_94 : f32 to vector<64x1xf32>
    %253 = arith.divf %251, %252 : vector<64x1xf32>
    %254 = vector.broadcast %253 : vector<64x1xf32> to vector<64x32xf32>
    %255 = arith.subf %245, %254 : vector<64x32xf32>
    %256 = arith.mulf %255, %255 : vector<64x32xf32>
    %cst_95 = arith.constant dense<0.000000e+00> : vector<64xf32>
    %257 = vector.multi_reduction <add>, %256, %cst_95 [1] : vector<64x32xf32> to vector<64xf32>
    %258 = vector.shape_cast %257 : vector<64xf32> to vector<64x1xf32>
    %cst_96 = arith.constant 3.200000e+01 : f32
    %259 = vector.broadcast %cst_96 : f32 to vector<64x1xf32>
    %260 = arith.divf %258, %259 : vector<64x1xf32>
    %261 = vector.broadcast %253 : vector<64x1xf32> to vector<64x32xf32>
    %262 = arith.subf %245, %261 : vector<64x32xf32>
    %cst_97 = arith.constant 9.99999997E-7 : f32
    %263 = vector.broadcast %cst_97 : f32 to vector<64x1xf32>
    %264 = arith.addf %260, %263 : vector<64x1xf32>
    %265 = math.rsqrt %264 : vector<64x1xf32>
    %266 = vector.broadcast %265 : vector<64x1xf32> to vector<64x32xf32>
    %267 = arith.mulf %262, %266 : vector<64x32xf32>
    %268 = vector.shape_cast %247 : vector<32xf32> to vector<1x32xf32>
    %269 = vector.broadcast %268 : vector<1x32xf32> to vector<64x32xf32>
    %270 = arith.mulf %267, %269 : vector<64x32xf32>
    %271 = vector.shape_cast %249 : vector<32xf32> to vector<1x32xf32>
    %272 = vector.broadcast %271 : vector<1x32xf32> to vector<64x32xf32>
    %273 = arith.addf %270, %272 : vector<64x32xf32>
    %274 = arith.truncf %273 : vector<64x32xf32> to vector<64x32xbf16>
    %c1_98 = arith.constant 1 : index
    %c0_99 = arith.constant 0 : index
    %c0_100 = arith.constant 0 : index
    %275 = vector.load %arg6[%c1_98, %c0_99, %c0_100] : memref<2x32x96xbf16, #tpu.memory_space<vmem>>, vector<1x32x96xbf16>
    %276 = vector.shape_cast %275 : vector<1x32x96xbf16> to vector<32x96xbf16>
    %cst_101 = arith.constant dense<0.000000e+00> : vector<64x96xf32>
    %277 = tpu.matmul %274, %276, %cst_101 {dimension_numbers = #tpu.dot_dimension_numbers<[1], [0], [0], [1], [0, 0, 1, 1], [], []>} : vector<64x32xbf16>, vector<32x96xbf16>, vector<64x96xf32> -> vector<64x96xf32>
    %c1_102 = arith.constant 1 : index
    %c0_103 = arith.constant 0 : index
    %278 = vector.load %arg7[%c1_102, %c0_103] : memref<2x96xf32, #tpu.memory_space<vmem>>, vector<1x96xf32>
    %279 = vector.shape_cast %278 : vector<1x96xf32> to vector<96xf32>
    %280 = vector.shape_cast %279 : vector<96xf32> to vector<1x96xf32>
    %281 = vector.broadcast %280 : vector<1x96xf32> to vector<64x96xf32>
    %282 = arith.addf %277, %281 : vector<64x96xf32>
    %283 = vector.extract_strided_slice %282 {offsets = [0, 0], sizes = [32, 96], strides = [1, 1]} : vector<64x96xf32> to vector<32x96xf32>
    %284 = vector.extract_strided_slice %283 {offsets = [0, 0], sizes = [32, 8], strides = [1, 1]} : vector<32x96xf32> to vector<32x8xf32>
    %cst_104 = arith.constant 0.353553385 : f32
    %285 = vector.broadcast %cst_104 : f32 to vector<32x8xf32>
    %286 = arith.mulf %284, %285 : vector<32x8xf32>
    %287 = vector.extract_strided_slice %283 {offsets = [0, 32], sizes = [32, 8], strides = [1, 1]} : vector<32x96xf32> to vector<32x8xf32>
    %288 = vector.extract_strided_slice %283 {offsets = [0, 64], sizes = [32, 8], strides = [1, 1]} : vector<32x96xf32> to vector<32x8xf32>
    %289 = tpu.transpose %287, [1, 0] : vector<32x8xf32> -> vector<8x32xf32>
    %cst_105 = arith.constant dense<0.000000e+00> : vector<32x32xf32>
    %290 = tpu.matmul %286, %289, %cst_105 {dimension_numbers = #tpu.dot_dimension_numbers<[1], [0], [0], [1], [0, 0, 1, 1], [], []>} : vector<32x8xf32>, vector<8x32xf32>, vector<32x32xf32> -> vector<32x32xf32>
    %cst_106 = arith.constant dense<0xFF800000> : vector<32xf32>
    %291 = vector.multi_reduction <maximumf>, %290, %cst_106 [1] : vector<32x32xf32> to vector<32xf32>
    %292 = vector.shape_cast %291 : vector<32xf32> to vector<32x1xf32>
    %293 = vector.broadcast %292 : vector<32x1xf32> to vector<32x32xf32>
    %294 = arith.subf %290, %293 : vector<32x32xf32>
    %295 = math.exp %294 : vector<32x32xf32>
    %cst_107 = arith.constant dense<0.000000e+00> : vector<32x8xf32>
    %296 = tpu.matmul %295, %288, %cst_107 {dimension_numbers = #tpu.dot_dimension_numbers<[1], [0], [0], [1], [0, 0, 1, 1], [], []>} : vector<32x32xf32>, vector<32x8xf32>, vector<32x8xf32> -> vector<32x8xf32>
    %cst_108 = arith.constant dense<0.000000e+00> : vector<32xf32>
    %297 = vector.multi_reduction <add>, %295, %cst_108 [1] : vector<32x32xf32> to vector<32xf32>
    %298 = vector.shape_cast %297 : vector<32xf32> to vector<32x1xf32>
    %299 = vector.broadcast %298 : vector<32x1xf32> to vector<32x8xf32>
    %300 = arith.divf %296, %299 : vector<32x8xf32>
    %301 = vector.extract_strided_slice %283 {offsets = [0, 8], sizes = [32, 8], strides = [1, 1]} : vector<32x96xf32> to vector<32x8xf32>
    %cst_109 = arith.constant 0.353553385 : f32
    %302 = vector.broadcast %cst_109 : f32 to vector<32x8xf32>
    %303 = arith.mulf %301, %302 : vector<32x8xf32>
    %304 = vector.extract_strided_slice %283 {offsets = [0, 40], sizes = [32, 8], strides = [1, 1]} : vector<32x96xf32> to vector<32x8xf32>
    %305 = vector.extract_strided_slice %283 {offsets = [0, 72], sizes = [32, 8], strides = [1, 1]} : vector<32x96xf32> to vector<32x8xf32>
    %306 = tpu.transpose %304, [1, 0] : vector<32x8xf32> -> vector<8x32xf32>
    %cst_110 = arith.constant dense<0.000000e+00> : vector<32x32xf32>
    %307 = tpu.matmul %303, %306, %cst_110 {dimension_numbers = #tpu.dot_dimension_numbers<[1], [0], [0], [1], [0, 0, 1, 1], [], []>} : vector<32x8xf32>, vector<8x32xf32>, vector<32x32xf32> -> vector<32x32xf32>
    %cst_111 = arith.constant dense<0xFF800000> : vector<32xf32>
    %308 = vector.multi_reduction <maximumf>, %307, %cst_111 [1] : vector<32x32xf32> to vector<32xf32>
    %309 = vector.shape_cast %308 : vector<32xf32> to vector<32x1xf32>
    %310 = vector.broadcast %309 : vector<32x1xf32> to vector<32x32xf32>
    %311 = arith.subf %307, %310 : vector<32x32xf32>
    %312 = math.exp %311 : vector<32x32xf32>
    %cst_112 = arith.constant dense<0.000000e+00> : vector<32x8xf32>
    %313 = tpu.matmul %312, %305, %cst_112 {dimension_numbers = #tpu.dot_dimension_numbers<[1], [0], [0], [1], [0, 0, 1, 1], [], []>} : vector<32x32xf32>, vector<32x8xf32>, vector<32x8xf32> -> vector<32x8xf32>
    %cst_113 = arith.constant dense<0.000000e+00> : vector<32xf32>
    %314 = vector.multi_reduction <add>, %312, %cst_113 [1] : vector<32x32xf32> to vector<32xf32>
    %315 = vector.shape_cast %314 : vector<32xf32> to vector<32x1xf32>
    %316 = vector.broadcast %315 : vector<32x1xf32> to vector<32x8xf32>
    %317 = arith.divf %313, %316 : vector<32x8xf32>
    %318 = vector.extract_strided_slice %283 {offsets = [0, 16], sizes = [32, 8], strides = [1, 1]} : vector<32x96xf32> to vector<32x8xf32>
    %cst_114 = arith.constant 0.353553385 : f32
    %319 = vector.broadcast %cst_114 : f32 to vector<32x8xf32>
    %320 = arith.mulf %318, %319 : vector<32x8xf32>
    %321 = vector.extract_strided_slice %283 {offsets = [0, 48], sizes = [32, 8], strides = [1, 1]} : vector<32x96xf32> to vector<32x8xf32>
    %322 = vector.extract_strided_slice %283 {offsets = [0, 80], sizes = [32, 8], strides = [1, 1]} : vector<32x96xf32> to vector<32x8xf32>
    %323 = tpu.transpose %321, [1, 0] : vector<32x8xf32> -> vector<8x32xf32>
    %cst_115 = arith.constant dense<0.000000e+00> : vector<32x32xf32>
    %324 = tpu.matmul %320, %323, %cst_115 {dimension_numbers = #tpu.dot_dimension_numbers<[1], [0], [0], [1], [0, 0, 1, 1], [], []>} : vector<32x8xf32>, vector<8x32xf32>, vector<32x32xf32> -> vector<32x32xf32>
    %cst_116 = arith.constant dense<0xFF800000> : vector<32xf32>
    %325 = vector.multi_reduction <maximumf>, %324, %cst_116 [1] : vector<32x32xf32> to vector<32xf32>
    %326 = vector.shape_cast %325 : vector<32xf32> to vector<32x1xf32>
    %327 = vector.broadcast %326 : vector<32x1xf32> to vector<32x32xf32>
    %328 = arith.subf %324, %327 : vector<32x32xf32>
    %329 = math.exp %328 : vector<32x32xf32>
    %cst_117 = arith.constant dense<0.000000e+00> : vector<32x8xf32>
    %330 = tpu.matmul %329, %322, %cst_117 {dimension_numbers = #tpu.dot_dimension_numbers<[1], [0], [0], [1], [0, 0, 1, 1], [], []>} : vector<32x32xf32>, vector<32x8xf32>, vector<32x8xf32> -> vector<32x8xf32>
    %cst_118 = arith.constant dense<0.000000e+00> : vector<32xf32>
    %331 = vector.multi_reduction <add>, %329, %cst_118 [1] : vector<32x32xf32> to vector<32xf32>
    %332 = vector.shape_cast %331 : vector<32xf32> to vector<32x1xf32>
    %333 = vector.broadcast %332 : vector<32x1xf32> to vector<32x8xf32>
    %334 = arith.divf %330, %333 : vector<32x8xf32>
    %335 = vector.extract_strided_slice %283 {offsets = [0, 24], sizes = [32, 8], strides = [1, 1]} : vector<32x96xf32> to vector<32x8xf32>
    %cst_119 = arith.constant 0.353553385 : f32
    %336 = vector.broadcast %cst_119 : f32 to vector<32x8xf32>
    %337 = arith.mulf %335, %336 : vector<32x8xf32>
    %338 = vector.extract_strided_slice %283 {offsets = [0, 56], sizes = [32, 8], strides = [1, 1]} : vector<32x96xf32> to vector<32x8xf32>
    %339 = vector.extract_strided_slice %283 {offsets = [0, 88], sizes = [32, 8], strides = [1, 1]} : vector<32x96xf32> to vector<32x8xf32>
    %340 = tpu.transpose %338, [1, 0] : vector<32x8xf32> -> vector<8x32xf32>
    %cst_120 = arith.constant dense<0.000000e+00> : vector<32x32xf32>
    %341 = tpu.matmul %337, %340, %cst_120 {dimension_numbers = #tpu.dot_dimension_numbers<[1], [0], [0], [1], [0, 0, 1, 1], [], []>} : vector<32x8xf32>, vector<8x32xf32>, vector<32x32xf32> -> vector<32x32xf32>
    %cst_121 = arith.constant dense<0xFF800000> : vector<32xf32>
    %342 = vector.multi_reduction <maximumf>, %341, %cst_121 [1] : vector<32x32xf32> to vector<32xf32>
    %343 = vector.shape_cast %342 : vector<32xf32> to vector<32x1xf32>
    %344 = vector.broadcast %343 : vector<32x1xf32> to vector<32x32xf32>
    %345 = arith.subf %341, %344 : vector<32x32xf32>
    %346 = math.exp %345 : vector<32x32xf32>
    %cst_122 = arith.constant dense<0.000000e+00> : vector<32x8xf32>
    %347 = tpu.matmul %346, %339, %cst_122 {dimension_numbers = #tpu.dot_dimension_numbers<[1], [0], [0], [1], [0, 0, 1, 1], [], []>} : vector<32x32xf32>, vector<32x8xf32>, vector<32x8xf32> -> vector<32x8xf32>
    %cst_123 = arith.constant dense<0.000000e+00> : vector<32xf32>
    %348 = vector.multi_reduction <add>, %346, %cst_123 [1] : vector<32x32xf32> to vector<32xf32>
    %349 = vector.shape_cast %348 : vector<32xf32> to vector<32x1xf32>
    %350 = vector.broadcast %349 : vector<32x1xf32> to vector<32x8xf32>
    %351 = arith.divf %347, %350 : vector<32x8xf32>
    %352 = vector.extract_strided_slice %282 {offsets = [32, 0], sizes = [32, 96], strides = [1, 1]} : vector<64x96xf32> to vector<32x96xf32>
    %353 = vector.extract_strided_slice %352 {offsets = [0, 0], sizes = [32, 8], strides = [1, 1]} : vector<32x96xf32> to vector<32x8xf32>
    %cst_124 = arith.constant 0.353553385 : f32
    %354 = vector.broadcast %cst_124 : f32 to vector<32x8xf32>
    %355 = arith.mulf %353, %354 : vector<32x8xf32>
    %356 = vector.extract_strided_slice %352 {offsets = [0, 32], sizes = [32, 8], strides = [1, 1]} : vector<32x96xf32> to vector<32x8xf32>
    %357 = vector.extract_strided_slice %352 {offsets = [0, 64], sizes = [32, 8], strides = [1, 1]} : vector<32x96xf32> to vector<32x8xf32>
    %358 = tpu.transpose %356, [1, 0] : vector<32x8xf32> -> vector<8x32xf32>
    %cst_125 = arith.constant dense<0.000000e+00> : vector<32x32xf32>
    %359 = tpu.matmul %355, %358, %cst_125 {dimension_numbers = #tpu.dot_dimension_numbers<[1], [0], [0], [1], [0, 0, 1, 1], [], []>} : vector<32x8xf32>, vector<8x32xf32>, vector<32x32xf32> -> vector<32x32xf32>
    %cst_126 = arith.constant dense<0xFF800000> : vector<32xf32>
    %360 = vector.multi_reduction <maximumf>, %359, %cst_126 [1] : vector<32x32xf32> to vector<32xf32>
    %361 = vector.shape_cast %360 : vector<32xf32> to vector<32x1xf32>
    %362 = vector.broadcast %361 : vector<32x1xf32> to vector<32x32xf32>
    %363 = arith.subf %359, %362 : vector<32x32xf32>
    %364 = math.exp %363 : vector<32x32xf32>
    %cst_127 = arith.constant dense<0.000000e+00> : vector<32x8xf32>
    %365 = tpu.matmul %364, %357, %cst_127 {dimension_numbers = #tpu.dot_dimension_numbers<[1], [0], [0], [1], [0, 0, 1, 1], [], []>} : vector<32x32xf32>, vector<32x8xf32>, vector<32x8xf32> -> vector<32x8xf32>
    %cst_128 = arith.constant dense<0.000000e+00> : vector<32xf32>
    %366 = vector.multi_reduction <add>, %364, %cst_128 [1] : vector<32x32xf32> to vector<32xf32>
    %367 = vector.shape_cast %366 : vector<32xf32> to vector<32x1xf32>
    %368 = vector.broadcast %367 : vector<32x1xf32> to vector<32x8xf32>
    %369 = arith.divf %365, %368 : vector<32x8xf32>
    %370 = vector.extract_strided_slice %352 {offsets = [0, 8], sizes = [32, 8], strides = [1, 1]} : vector<32x96xf32> to vector<32x8xf32>
    %cst_129 = arith.constant 0.353553385 : f32
    %371 = vector.broadcast %cst_129 : f32 to vector<32x8xf32>
    %372 = arith.mulf %370, %371 : vector<32x8xf32>
    %373 = vector.extract_strided_slice %352 {offsets = [0, 40], sizes = [32, 8], strides = [1, 1]} : vector<32x96xf32> to vector<32x8xf32>
    %374 = vector.extract_strided_slice %352 {offsets = [0, 72], sizes = [32, 8], strides = [1, 1]} : vector<32x96xf32> to vector<32x8xf32>
    %375 = tpu.transpose %373, [1, 0] : vector<32x8xf32> -> vector<8x32xf32>
    %cst_130 = arith.constant dense<0.000000e+00> : vector<32x32xf32>
    %376 = tpu.matmul %372, %375, %cst_130 {dimension_numbers = #tpu.dot_dimension_numbers<[1], [0], [0], [1], [0, 0, 1, 1], [], []>} : vector<32x8xf32>, vector<8x32xf32>, vector<32x32xf32> -> vector<32x32xf32>
    %cst_131 = arith.constant dense<0xFF800000> : vector<32xf32>
    %377 = vector.multi_reduction <maximumf>, %376, %cst_131 [1] : vector<32x32xf32> to vector<32xf32>
    %378 = vector.shape_cast %377 : vector<32xf32> to vector<32x1xf32>
    %379 = vector.broadcast %378 : vector<32x1xf32> to vector<32x32xf32>
    %380 = arith.subf %376, %379 : vector<32x32xf32>
    %381 = math.exp %380 : vector<32x32xf32>
    %cst_132 = arith.constant dense<0.000000e+00> : vector<32x8xf32>
    %382 = tpu.matmul %381, %374, %cst_132 {dimension_numbers = #tpu.dot_dimension_numbers<[1], [0], [0], [1], [0, 0, 1, 1], [], []>} : vector<32x32xf32>, vector<32x8xf32>, vector<32x8xf32> -> vector<32x8xf32>
    %cst_133 = arith.constant dense<0.000000e+00> : vector<32xf32>
    %383 = vector.multi_reduction <add>, %381, %cst_133 [1] : vector<32x32xf32> to vector<32xf32>
    %384 = vector.shape_cast %383 : vector<32xf32> to vector<32x1xf32>
    %385 = vector.broadcast %384 : vector<32x1xf32> to vector<32x8xf32>
    %386 = arith.divf %382, %385 : vector<32x8xf32>
    %387 = vector.extract_strided_slice %352 {offsets = [0, 16], sizes = [32, 8], strides = [1, 1]} : vector<32x96xf32> to vector<32x8xf32>
    %cst_134 = arith.constant 0.353553385 : f32
    %388 = vector.broadcast %cst_134 : f32 to vector<32x8xf32>
    %389 = arith.mulf %387, %388 : vector<32x8xf32>
    %390 = vector.extract_strided_slice %352 {offsets = [0, 48], sizes = [32, 8], strides = [1, 1]} : vector<32x96xf32> to vector<32x8xf32>
    %391 = vector.extract_strided_slice %352 {offsets = [0, 80], sizes = [32, 8], strides = [1, 1]} : vector<32x96xf32> to vector<32x8xf32>
    %392 = tpu.transpose %390, [1, 0] : vector<32x8xf32> -> vector<8x32xf32>
    %cst_135 = arith.constant dense<0.000000e+00> : vector<32x32xf32>
    %393 = tpu.matmul %389, %392, %cst_135 {dimension_numbers = #tpu.dot_dimension_numbers<[1], [0], [0], [1], [0, 0, 1, 1], [], []>} : vector<32x8xf32>, vector<8x32xf32>, vector<32x32xf32> -> vector<32x32xf32>
    %cst_136 = arith.constant dense<0xFF800000> : vector<32xf32>
    %394 = vector.multi_reduction <maximumf>, %393, %cst_136 [1] : vector<32x32xf32> to vector<32xf32>
    %395 = vector.shape_cast %394 : vector<32xf32> to vector<32x1xf32>
    %396 = vector.broadcast %395 : vector<32x1xf32> to vector<32x32xf32>
    %397 = arith.subf %393, %396 : vector<32x32xf32>
    %398 = math.exp %397 : vector<32x32xf32>
    %cst_137 = arith.constant dense<0.000000e+00> : vector<32x8xf32>
    %399 = tpu.matmul %398, %391, %cst_137 {dimension_numbers = #tpu.dot_dimension_numbers<[1], [0], [0], [1], [0, 0, 1, 1], [], []>} : vector<32x32xf32>, vector<32x8xf32>, vector<32x8xf32> -> vector<32x8xf32>
    %cst_138 = arith.constant dense<0.000000e+00> : vector<32xf32>
    %400 = vector.multi_reduction <add>, %398, %cst_138 [1] : vector<32x32xf32> to vector<32xf32>
    %401 = vector.shape_cast %400 : vector<32xf32> to vector<32x1xf32>
    %402 = vector.broadcast %401 : vector<32x1xf32> to vector<32x8xf32>
    %403 = arith.divf %399, %402 : vector<32x8xf32>
    %404 = vector.extract_strided_slice %352 {offsets = [0, 24], sizes = [32, 8], strides = [1, 1]} : vector<32x96xf32> to vector<32x8xf32>
    %cst_139 = arith.constant 0.353553385 : f32
    %405 = vector.broadcast %cst_139 : f32 to vector<32x8xf32>
    %406 = arith.mulf %404, %405 : vector<32x8xf32>
    %407 = vector.extract_strided_slice %352 {offsets = [0, 56], sizes = [32, 8], strides = [1, 1]} : vector<32x96xf32> to vector<32x8xf32>
    %408 = vector.extract_strided_slice %352 {offsets = [0, 88], sizes = [32, 8], strides = [1, 1]} : vector<32x96xf32> to vector<32x8xf32>
    %409 = tpu.transpose %407, [1, 0] : vector<32x8xf32> -> vector<8x32xf32>
    %cst_140 = arith.constant dense<0.000000e+00> : vector<32x32xf32>
    %410 = tpu.matmul %406, %409, %cst_140 {dimension_numbers = #tpu.dot_dimension_numbers<[1], [0], [0], [1], [0, 0, 1, 1], [], []>} : vector<32x8xf32>, vector<8x32xf32>, vector<32x32xf32> -> vector<32x32xf32>
    %cst_141 = arith.constant dense<0xFF800000> : vector<32xf32>
    %411 = vector.multi_reduction <maximumf>, %410, %cst_141 [1] : vector<32x32xf32> to vector<32xf32>
    %412 = vector.shape_cast %411 : vector<32xf32> to vector<32x1xf32>
    %413 = vector.broadcast %412 : vector<32x1xf32> to vector<32x32xf32>
    %414 = arith.subf %410, %413 : vector<32x32xf32>
    %415 = math.exp %414 : vector<32x32xf32>
    %cst_142 = arith.constant dense<0.000000e+00> : vector<32x8xf32>
    %416 = tpu.matmul %415, %408, %cst_142 {dimension_numbers = #tpu.dot_dimension_numbers<[1], [0], [0], [1], [0, 0, 1, 1], [], []>} : vector<32x32xf32>, vector<32x8xf32>, vector<32x8xf32> -> vector<32x8xf32>
    %cst_143 = arith.constant dense<0.000000e+00> : vector<32xf32>
    %417 = vector.multi_reduction <add>, %415, %cst_143 [1] : vector<32x32xf32> to vector<32xf32>
    %418 = vector.shape_cast %417 : vector<32xf32> to vector<32x1xf32>
    %419 = vector.broadcast %418 : vector<32x1xf32> to vector<32x8xf32>
    %420 = arith.divf %416, %419 : vector<32x8xf32>
    %421 = tpu.concatenate %300, %317, %334, %351 in 1 : vector<32x8xf32>, vector<32x8xf32>, vector<32x8xf32>, vector<32x8xf32> -> vector<32x32xf32>
    %422 = tpu.concatenate %369, %386, %403, %420 in 1 : vector<32x8xf32>, vector<32x8xf32>, vector<32x8xf32>, vector<32x8xf32> -> vector<32x32xf32>
    %423 = tpu.concatenate %421, %422 in 0 : vector<32x32xf32>, vector<32x32xf32> -> vector<64x32xf32>
    %424 = arith.truncf %423 : vector<64x32xf32> to vector<64x32xbf16>
    %c1_144 = arith.constant 1 : index
    %c0_145 = arith.constant 0 : index
    %c0_146 = arith.constant 0 : index
    %425 = vector.load %arg8[%c1_144, %c0_145, %c0_146] : memref<2x32x32xbf16, #tpu.memory_space<vmem>>, vector<1x32x32xbf16>
    %426 = vector.shape_cast %425 : vector<1x32x32xbf16> to vector<32x32xbf16>
    %cst_147 = arith.constant dense<0.000000e+00> : vector<64x32xf32>
    %427 = tpu.matmul %424, %426, %cst_147 {dimension_numbers = #tpu.dot_dimension_numbers<[1], [0], [0], [1], [0, 0, 1, 1], [], []>} : vector<64x32xbf16>, vector<32x32xbf16>, vector<64x32xf32> -> vector<64x32xf32>
    %c1_148 = arith.constant 1 : index
    %c0_149 = arith.constant 0 : index
    %428 = vector.load %arg9[%c1_148, %c0_149] : memref<2x32xf32, #tpu.memory_space<vmem>>, vector<1x32xf32>
    %429 = vector.shape_cast %428 : vector<1x32xf32> to vector<32xf32>
    %430 = vector.shape_cast %429 : vector<32xf32> to vector<1x32xf32>
    %431 = vector.broadcast %430 : vector<1x32xf32> to vector<64x32xf32>
    %432 = arith.addf %427, %431 : vector<64x32xf32>
    %433 = arith.addf %245, %432 : vector<64x32xf32>
    %c1_150 = arith.constant 1 : index
    %c0_151 = arith.constant 0 : index
    %434 = vector.load %arg10[%c1_150, %c0_151] : memref<2x32xf32, #tpu.memory_space<vmem>>, vector<1x32xf32>
    %435 = vector.shape_cast %434 : vector<1x32xf32> to vector<32xf32>
    %c1_152 = arith.constant 1 : index
    %c0_153 = arith.constant 0 : index
    %436 = vector.load %arg11[%c1_152, %c0_153] : memref<2x32xf32, #tpu.memory_space<vmem>>, vector<1x32xf32>
    %437 = vector.shape_cast %436 : vector<1x32xf32> to vector<32xf32>
    %cst_154 = arith.constant dense<0.000000e+00> : vector<64xf32>
    %438 = vector.multi_reduction <add>, %433, %cst_154 [1] : vector<64x32xf32> to vector<64xf32>
    %439 = vector.shape_cast %438 : vector<64xf32> to vector<64x1xf32>
    %cst_155 = arith.constant 3.200000e+01 : f32
    %440 = vector.broadcast %cst_155 : f32 to vector<64x1xf32>
    %441 = arith.divf %439, %440 : vector<64x1xf32>
    %442 = vector.broadcast %441 : vector<64x1xf32> to vector<64x32xf32>
    %443 = arith.subf %433, %442 : vector<64x32xf32>
    %444 = arith.mulf %443, %443 : vector<64x32xf32>
    %cst_156 = arith.constant dense<0.000000e+00> : vector<64xf32>
    %445 = vector.multi_reduction <add>, %444, %cst_156 [1] : vector<64x32xf32> to vector<64xf32>
    %446 = vector.shape_cast %445 : vector<64xf32> to vector<64x1xf32>
    %cst_157 = arith.constant 3.200000e+01 : f32
    %447 = vector.broadcast %cst_157 : f32 to vector<64x1xf32>
    %448 = arith.divf %446, %447 : vector<64x1xf32>
    %449 = vector.broadcast %441 : vector<64x1xf32> to vector<64x32xf32>
    %450 = arith.subf %433, %449 : vector<64x32xf32>
    %cst_158 = arith.constant 9.99999997E-7 : f32
    %451 = vector.broadcast %cst_158 : f32 to vector<64x1xf32>
    %452 = arith.addf %448, %451 : vector<64x1xf32>
    %453 = math.rsqrt %452 : vector<64x1xf32>
    %454 = vector.broadcast %453 : vector<64x1xf32> to vector<64x32xf32>
    %455 = arith.mulf %450, %454 : vector<64x32xf32>
    %456 = vector.shape_cast %435 : vector<32xf32> to vector<1x32xf32>
    %457 = vector.broadcast %456 : vector<1x32xf32> to vector<64x32xf32>
    %458 = arith.mulf %455, %457 : vector<64x32xf32>
    %459 = vector.shape_cast %437 : vector<32xf32> to vector<1x32xf32>
    %460 = vector.broadcast %459 : vector<1x32xf32> to vector<64x32xf32>
    %461 = arith.addf %458, %460 : vector<64x32xf32>
    %462 = arith.truncf %461 : vector<64x32xf32> to vector<64x32xbf16>
    %c1_159 = arith.constant 1 : index
    %c0_160 = arith.constant 0 : index
    %c0_161 = arith.constant 0 : index
    %463 = vector.load %arg12[%c1_159, %c0_160, %c0_161] : memref<2x32x64xbf16, #tpu.memory_space<vmem>>, vector<1x32x64xbf16>
    %464 = vector.shape_cast %463 : vector<1x32x64xbf16> to vector<32x64xbf16>
    %cst_162 = arith.constant dense<0.000000e+00> : vector<64x64xf32>
    %465 = tpu.matmul %462, %464, %cst_162 {dimension_numbers = #tpu.dot_dimension_numbers<[1], [0], [0], [1], [0, 0, 1, 1], [], []>} : vector<64x32xbf16>, vector<32x64xbf16>, vector<64x64xf32> -> vector<64x64xf32>
    %c1_163 = arith.constant 1 : index
    %c0_164 = arith.constant 0 : index
    %466 = vector.load %arg13[%c1_163, %c0_164] : memref<2x64xf32, #tpu.memory_space<vmem>>, vector<1x64xf32>
    %467 = vector.shape_cast %466 : vector<1x64xf32> to vector<64xf32>
    %468 = vector.shape_cast %467 : vector<64xf32> to vector<1x64xf32>
    %469 = vector.broadcast %468 : vector<1x64xf32> to vector<64x64xf32>
    %470 = arith.addf %465, %469 : vector<64x64xf32>
    %cst_165 = arith.constant 0.000000e+00 : f32
    %471 = vector.broadcast %cst_165 : f32 to vector<64x64xf32>
    %472 = arith.maximumf %470, %471 : vector<64x64xf32>
    %473 = arith.truncf %472 : vector<64x64xf32> to vector<64x64xbf16>
    %c1_166 = arith.constant 1 : index
    %c0_167 = arith.constant 0 : index
    %c0_168 = arith.constant 0 : index
    %474 = vector.load %arg14[%c1_166, %c0_167, %c0_168] : memref<2x64x32xbf16, #tpu.memory_space<vmem>>, vector<1x64x32xbf16>
    %475 = vector.shape_cast %474 : vector<1x64x32xbf16> to vector<64x32xbf16>
    %cst_169 = arith.constant dense<0.000000e+00> : vector<64x32xf32>
    %476 = tpu.matmul %473, %475, %cst_169 {dimension_numbers = #tpu.dot_dimension_numbers<[1], [0], [0], [1], [0, 0, 1, 1], [], []>} : vector<64x64xbf16>, vector<64x32xbf16>, vector<64x32xf32> -> vector<64x32xf32>
    %c1_170 = arith.constant 1 : index
    %c0_171 = arith.constant 0 : index
    %477 = vector.load %arg15[%c1_170, %c0_171] : memref<2x32xf32, #tpu.memory_space<vmem>>, vector<1x32xf32>
    %478 = vector.shape_cast %477 : vector<1x32xf32> to vector<32xf32>
    %479 = vector.shape_cast %478 : vector<32xf32> to vector<1x32xf32>
    %480 = vector.broadcast %479 : vector<1x32xf32> to vector<64x32xf32>
    %481 = arith.addf %476, %480 : vector<64x32xf32>
    %482 = arith.addf %433, %481 : vector<64x32xf32>
    %c0_172 = arith.constant 0 : index
    %c0_173 = arith.constant 0 : index
    %483 = vector.load %arg16[%c0_172, %c0_173] : memref<1x32xf32, #tpu.memory_space<vmem>>, vector<1x32xf32>
    %484 = vector.shape_cast %483 : vector<1x32xf32> to vector<32xf32>
    %c0_174 = arith.constant 0 : index
    %c0_175 = arith.constant 0 : index
    %485 = vector.load %arg17[%c0_174, %c0_175] : memref<1x32xf32, #tpu.memory_space<vmem>>, vector<1x32xf32>
    %486 = vector.shape_cast %485 : vector<1x32xf32> to vector<32xf32>
    %cst_176 = arith.constant dense<0.000000e+00> : vector<64xf32>
    %487 = vector.multi_reduction <add>, %482, %cst_176 [1] : vector<64x32xf32> to vector<64xf32>
    %488 = vector.shape_cast %487 : vector<64xf32> to vector<64x1xf32>
    %cst_177 = arith.constant 3.200000e+01 : f32
    %489 = vector.broadcast %cst_177 : f32 to vector<64x1xf32>
    %490 = arith.divf %488, %489 : vector<64x1xf32>
    %491 = vector.broadcast %490 : vector<64x1xf32> to vector<64x32xf32>
    %492 = arith.subf %482, %491 : vector<64x32xf32>
    %493 = arith.mulf %492, %492 : vector<64x32xf32>
    %cst_178 = arith.constant dense<0.000000e+00> : vector<64xf32>
    %494 = vector.multi_reduction <add>, %493, %cst_178 [1] : vector<64x32xf32> to vector<64xf32>
    %495 = vector.shape_cast %494 : vector<64xf32> to vector<64x1xf32>
    %cst_179 = arith.constant 3.200000e+01 : f32
    %496 = vector.broadcast %cst_179 : f32 to vector<64x1xf32>
    %497 = arith.divf %495, %496 : vector<64x1xf32>
    %498 = vector.broadcast %490 : vector<64x1xf32> to vector<64x32xf32>
    %499 = arith.subf %482, %498 : vector<64x32xf32>
    %cst_180 = arith.constant 9.99999997E-7 : f32
    %500 = vector.broadcast %cst_180 : f32 to vector<64x1xf32>
    %501 = arith.addf %497, %500 : vector<64x1xf32>
    %502 = math.rsqrt %501 : vector<64x1xf32>
    %503 = vector.broadcast %502 : vector<64x1xf32> to vector<64x32xf32>
    %504 = arith.mulf %499, %503 : vector<64x32xf32>
    %505 = vector.shape_cast %484 : vector<32xf32> to vector<1x32xf32>
    %506 = vector.broadcast %505 : vector<1x32xf32> to vector<64x32xf32>
    %507 = arith.mulf %504, %506 : vector<64x32xf32>
    %508 = vector.shape_cast %486 : vector<32xf32> to vector<1x32xf32>
    %509 = vector.broadcast %508 : vector<1x32xf32> to vector<64x32xf32>
    %510 = arith.addf %507, %509 : vector<64x32xf32>
    %511 = vector.shape_cast %4 : vector<2x32x32xf32> to vector<64x32xf32>
    %512 = arith.addf %511, %510 : vector<64x32xf32>
    %cst_181 = arith.constant 0.000000e+00 : f32
    %513 = vector.broadcast %cst_181 : f32 to vector<64x32xf32>
    %514 = arith.maximumf %512, %513 : vector<64x32xf32>
    %515 = vector.shape_cast %514 : vector<64x32xf32> to vector<2x32x32xf32>
    %cst_182 = arith.constant dense<0.000000e+00> : vector<2x32xf32>
    %516 = vector.multi_reduction <add>, %515, %cst_182 [1] : vector<2x32x32xf32> to vector<2x32xf32>
    %cst_183 = arith.constant 6.250000e-02 : f32
    %517 = vector.broadcast %cst_183 : f32 to vector<2x32xf32>
    %518 = arith.mulf %516, %517 : vector<2x32xf32>
    %519 = vector.shape_cast %518 : vector<2x32xf32> to vector<1x2x32xf32>
    %c0_184 = arith.constant 0 : index
    %c0_185 = arith.constant 0 : index
    %c0_186 = arith.constant 0 : index
    %520 = vector.load %arg18[%c0_184, %c0_185, %c0_186] : memref<1x2x32xf32, #tpu.memory_space<vmem>>, vector<1x2x32xf32>
    tpu.vector_store %arg18[%c0_184, %c0_185, %c0_186], %519 {strides = array<i32>} : memref<1x2x32xf32, #tpu.memory_space<vmem>>, vector<1x2x32xf32>,
    return
  }
  func.func @transform_0(%arg0: i32) -> (i32, i32, i32) {
    %c0_i32 = arith.constant 0 : i32
    %c0_i32_0 = arith.constant 0 : i32
    %c0_i32_1 = arith.constant 0 : i32
    return %arg0, %c0_i32, %c0_i32_0 : i32, i32, i32
  }
  func.func @transform_1(%arg0: i32) -> (i32, i32, i32) {
    %c0_i32 = arith.constant 0 : i32
    %c0_i32_0 = arith.constant 0 : i32
    %c0_i32_1 = arith.constant 0 : i32
    return %arg0, %c0_i32, %c0_i32_0 : i32, i32, i32
  }
  func.func @transform_2(%arg0: i32) -> (i32, i32, i32) {
    %c0_i32 = arith.constant 0 : i32
    %c0_i32_0 = arith.constant 0 : i32
    %c0_i32_1 = arith.constant 0 : i32
    %c0_i32_2 = arith.constant 0 : i32
    return %c0_i32, %c0_i32_0, %c0_i32_1 : i32, i32, i32
  }
  func.func @transform_3(%arg0: i32) -> (i32, i32) {
    %c0_i32 = arith.constant 0 : i32
    %c0_i32_0 = arith.constant 0 : i32
    %c0_i32_1 = arith.constant 0 : i32
    return %c0_i32, %c0_i32_0 : i32, i32
  }
  func.func @transform_4(%arg0: i32) -> (i32, i32) {
    %c0_i32 = arith.constant 0 : i32
    %c0_i32_0 = arith.constant 0 : i32
    %c0_i32_1 = arith.constant 0 : i32
    return %c0_i32, %c0_i32_0 : i32, i32
  }
  func.func @transform_5(%arg0: i32) -> (i32, i32, i32) {
    %c0_i32 = arith.constant 0 : i32
    %c0_i32_0 = arith.constant 0 : i32
    %c0_i32_1 = arith.constant 0 : i32
    %c0_i32_2 = arith.constant 0 : i32
    return %c0_i32, %c0_i32_0, %c0_i32_1 : i32, i32, i32
  }
  func.func @transform_6(%arg0: i32) -> (i32, i32) {
    %c0_i32 = arith.constant 0 : i32
    %c0_i32_0 = arith.constant 0 : i32
    %c0_i32_1 = arith.constant 0 : i32
    return %c0_i32, %c0_i32_0 : i32, i32
  }
  func.func @transform_7(%arg0: i32) -> (i32, i32, i32) {
    %c0_i32 = arith.constant 0 : i32
    %c0_i32_0 = arith.constant 0 : i32
    %c0_i32_1 = arith.constant 0 : i32
    %c0_i32_2 = arith.constant 0 : i32
    return %c0_i32, %c0_i32_0, %c0_i32_1 : i32, i32, i32
  }
  func.func @transform_8(%arg0: i32) -> (i32, i32) {
    %c0_i32 = arith.constant 0 : i32
    %c0_i32_0 = arith.constant 0 : i32
    %c0_i32_1 = arith.constant 0 : i32
    return %c0_i32, %c0_i32_0 : i32, i32
  }
  func.func @transform_9(%arg0: i32) -> (i32, i32) {
    %c0_i32 = arith.constant 0 : i32
    %c0_i32_0 = arith.constant 0 : i32
    %c0_i32_1 = arith.constant 0 : i32
    return %c0_i32, %c0_i32_0 : i32, i32
  }
  func.func @transform_10(%arg0: i32) -> (i32, i32) {
    %c0_i32 = arith.constant 0 : i32
    %c0_i32_0 = arith.constant 0 : i32
    %c0_i32_1 = arith.constant 0 : i32
    return %c0_i32, %c0_i32_0 : i32, i32
  }
  func.func @transform_11(%arg0: i32) -> (i32, i32, i32) {
    %c0_i32 = arith.constant 0 : i32
    %c0_i32_0 = arith.constant 0 : i32
    %c0_i32_1 = arith.constant 0 : i32
    %c0_i32_2 = arith.constant 0 : i32
    return %c0_i32, %c0_i32_0, %c0_i32_1 : i32, i32, i32
  }
  func.func @transform_12(%arg0: i32) -> (i32, i32) {
    %c0_i32 = arith.constant 0 : i32
    %c0_i32_0 = arith.constant 0 : i32
    %c0_i32_1 = arith.constant 0 : i32
    return %c0_i32, %c0_i32_0 : i32, i32
  }
  func.func @transform_13(%arg0: i32) -> (i32, i32, i32) {
    %c0_i32 = arith.constant 0 : i32
    %c0_i32_0 = arith.constant 0 : i32
    %c0_i32_1 = arith.constant 0 : i32
    %c0_i32_2 = arith.constant 0 : i32
    return %c0_i32, %c0_i32_0, %c0_i32_1 : i32, i32, i32
  }
  func.func @transform_14(%arg0: i32) -> (i32, i32) {
    %c0_i32 = arith.constant 0 : i32
    %c0_i32_0 = arith.constant 0 : i32
    %c0_i32_1 = arith.constant 0 : i32
    return %c0_i32, %c0_i32_0 : i32, i32
  }
  func.func @transform_15(%arg0: i32) -> (i32, i32) {
    %c0_i32 = arith.constant 0 : i32
    %c0_i32_0 = arith.constant 0 : i32
    %c0_i32_1 = arith.constant 0 : i32
    return %c0_i32, %c0_i32_0 : i32, i32
  }
  func.func @transform_16(%arg0: i32) -> (i32, i32) {
    %c0_i32 = arith.constant 0 : i32
    %c0_i32_0 = arith.constant 0 : i32
    %c0_i32_1 = arith.constant 0 : i32
    return %c0_i32, %c0_i32_0 : i32, i32
  }
  func.func @transform_17(%arg0: i32) -> (i32, i32, i32) {
    %c0_i32 = arith.constant 0 : i32
    %c0_i32_0 = arith.constant 0 : i32
    %c0_i32_1 = arith.constant 0 : i32
    return %arg0, %c0_i32, %c0_i32_0 : i32, i32, i32
  }
}

</mosaic_0001>

<llo_original>
// kernel: tpu_custom_call.1
$region0: #{tpu_custom_call.1}
  #allocation0 [shape = 'u32[]', space=smem, size = 0x4, offset = 0x4, fixed_abs, tag = 'smem constant byte address 0x4 - core index']
  #allocation1 [shape = 'u32[144,128]{1,0:T(1,128)}', space=vmem, size = 0x12000, scoped, tag = 'internal scratch']
  %s0 = inlined_call_operand.vmem [shape: f32[2,32,16], index: 0, kind: input, shape index: {}]
  %s1 = inlined_call_operand.vmem [shape: f32[2,32,16], index: 1, kind: input, shape index: {}]
  %s2 = inlined_call_operand.vmem [shape: f32[1,32,32], index: 2, kind: input, shape index: {}]
  %s3 = inlined_call_operand.vmem [shape: f32[2,32], index: 3, kind: input, shape index: {}]
  %s4 = inlined_call_operand.vmem [shape: f32[2,32], index: 4, kind: input, shape index: {}]
  %s5 = inlined_call_operand.vmem [shape: bf16[2,32,96], index: 5, kind: input, shape index: {}]
  %s6 = inlined_call_operand.vmem [shape: f32[2,96], index: 6, kind: input, shape index: {}]
  %s7 = inlined_call_operand.vmem [shape: bf16[2,32,32], index: 7, kind: input, shape index: {}]
  %s8 = inlined_call_operand.vmem [shape: f32[2,32], index: 8, kind: input, shape index: {}]
  %s9 = inlined_call_operand.vmem [shape: f32[2,32], index: 9, kind: input, shape index: {}]
  %s10 = inlined_call_operand.vmem [shape: f32[2,32], index: 10, kind: input, shape index: {}]
  %s11 = inlined_call_operand.vmem [shape: bf16[2,32,64], index: 11, kind: input, shape index: {}]
  %s12 = inlined_call_operand.vmem [shape: f32[2,64], index: 12, kind: input, shape index: {}]
  %s13 = inlined_call_operand.vmem [shape: bf16[2,64,32], index: 13, kind: input, shape index: {}]
  %s14 = inlined_call_operand.vmem [shape: f32[2,32], index: 14, kind: input, shape index: {}]
  %s15 = inlined_call_operand.vmem [shape: f32[1,32], index: 15, kind: input, shape index: {}]
  %s16 = inlined_call_operand.vmem [shape: f32[1,32], index: 16, kind: input, shape index: {}]
  %s17 = inlined_call_operand.hbm [shape: f32[1,2,32], index: 17, kind: output, shape index: {}]
  %s18 = sld [smem:[#allocation0]]
  $region78: #{tpu_custom_call.1} parent=0
    _
  %s20 = ssub.s32 1, %s18
  %s21 = scalar_select 0, %s20, %s18
  $region1: #{tpu_custom_call.1} parent=0
    #allocation2 [shape = 'u8[1024]{0}', space=vmem, size = 0x400, scoped, tag = 'output window, operand 0, single buffered']
    #allocation3 [shape = 's32[1]{0}', space=sflag, size = 0x4, scoped, tag = 'scoped memory for tpu_custom_call.1']
    %22 = vsyncpa [#allocation3], 0
    // Predicated region
    $region2: #{tpu_custom_call.1} parent=1 // pred_check
      _
    $region3: #{tpu_custom_call.1} parent=1 // pred_check_branch
      %24 = sbr.rel (0) target = $region5
    $region4: #{tpu_custom_call.1} parent=1 // pred_region
      _
    $region5: #{tpu_custom_call.1} parent=1 // pred_fallthru
      _
    // Predicated region
    $region6: #{tpu_custom_call.1} parent=1 // pred_check
      _
    $region7: #{tpu_custom_call.1} parent=1 // pred_check_branch
      %26 = sbr.rel (0) target = $region9
    $region8: #{tpu_custom_call.1} parent=1 // pred_region
      _
    $region9: #{tpu_custom_call.1} parent=1 // pred_fallthru
      _
    // Predicated region
    $region10: #{tpu_custom_call.1} parent=1 // pred_check
      _
    $region11: #{tpu_custom_call.1} parent=1 // pred_check_branch
      %28 = sbr.rel (0) target = $region13
    $region12: #{tpu_custom_call.1} parent=1 // pred_region
      _
    $region13: #{tpu_custom_call.1} parent=1 // pred_fallthru
      _
    // Predicated region
    $region14: #{tpu_custom_call.1} parent=1 // pred_check
      _
    $region15: #{tpu_custom_call.1} parent=1 // pred_check_branch
      %30 = sbr.rel (0) target = $region17
    $region16: #{tpu_custom_call.1} parent=1 // pred_region
      _
    $region17: #{tpu_custom_call.1} parent=1 // pred_fallthru
      _
    // Predicated region
    $region18: #{tpu_custom_call.1} parent=1 // pred_check
      _
    $region19: #{tpu_custom_call.1} parent=1 // pred_check_branch
      %32 = sbr.rel (0) target = $region21
    $region20: #{tpu_custom_call.1} parent=1 // pred_region
      _
    $region21: #{tpu_custom_call.1} parent=1 // pred_fallthru
      _
    // Predicated region
    $region22: #{tpu_custom_call.1} parent=1 // pred_check
      _
    $region23: #{tpu_custom_call.1} parent=1 // pred_check_branch
      %34 = sbr.rel (0) target = $region25
    $region24: #{tpu_custom_call.1} parent=1 // pred_region
      _
    $region25: #{tpu_custom_call.1} parent=1 // pred_fallthru
      _
    // Predicated region
    $region26: #{tpu_custom_call.1} parent=1 // pred_check
      _
    $region27: #{tpu_custom_call.1} parent=1 // pred_check_branch
      %36 = sbr.rel (0) target = $region29
    $region28: #{tpu_custom_call.1} parent=1 // pred_region
      _
    $region29: #{tpu_custom_call.1} parent=1 // pred_fallthru
      _
    // Predicated region
    $region30: #{tpu_custom_call.1} parent=1 // pred_check
      _
    $region31: #{tpu_custom_call.1} parent=1 // pred_check_branch
      %38 = sbr.rel (0) target = $region33
    $region32: #{tpu_custom_call.1} parent=1 // pred_region
      _
    $region33: #{tpu_custom_call.1} parent=1 // pred_fallthru
      _
    // Predicated region
    $region34: #{tpu_custom_call.1} parent=1 // pred_check
      _
    $region35: #{tpu_custom_call.1} parent=1 // pred_check_branch
      %40 = sbr.rel (0) target = $region37
    $region36: #{tpu_custom_call.1} parent=1 // pred_region
      _
    $region37: #{tpu_custom_call.1} parent=1 // pred_fallthru
      _
    // Predicated region
    $region38: #{tpu_custom_call.1} parent=1 // pred_check
      _
    $region39: #{tpu_custom_call.1} parent=1 // pred_check_branch
      %42 = sbr.rel (0) target = $region41
    $region40: #{tpu_custom_call.1} parent=1 // pred_region
      _
    $region41: #{tpu_custom_call.1} parent=1 // pred_fallthru
      _
    // Predicated region
    $region42: #{tpu_custom_call.1} parent=1 // pred_check
      _
    $region43: #{tpu_custom_call.1} parent=1 // pred_check_branch
      %44 = sbr.rel (0) target = $region45
    $region44: #{tpu_custom_call.1} parent=1 // pred_region
      _
    $region45: #{tpu_custom_call.1} parent=1 // pred_fallthru
      _
    // Predicated region
    $region46: #{tpu_custom_call.1} parent=1 // pred_check
      _
    $region47: #{tpu_custom_call.1} parent=1 // pred_check_branch
      %46 = sbr.rel (0) target = $region49
    $region48: #{tpu_custom_call.1} parent=1 // pred_region
      _
    $region49: #{tpu_custom_call.1} parent=1 // pred_fallthru
      _
    // Predicated region
    $region50: #{tpu_custom_call.1} parent=1 // pred_check
      _
    $region51: #{tpu_custom_call.1} parent=1 // pred_check_branch
      %48 = sbr.rel (0) target = $region53
    $region52: #{tpu_custom_call.1} parent=1 // pred_region
      _
    $region53: #{tpu_custom_call.1} parent=1 // pred_fallthru
      _
    // Predicated region
    $region54: #{tpu_custom_call.1} parent=1 // pred_check
      _
    $region55: #{tpu_custom_call.1} parent=1 // pred_check_branch
      %50 = sbr.rel (0) target = $region57
    $region56: #{tpu_custom_call.1} parent=1 // pred_region
      _
    $region57: #{tpu_custom_call.1} parent=1 // pred_fallthru
      _
    // Predicated region
    $region58: #{tpu_custom_call.1} parent=1 // pred_check
      _
    $region59: #{tpu_custom_call.1} parent=1 // pred_check_branch
      %52 = sbr.rel (0) target = $region61
    $region60: #{tpu_custom_call.1} parent=1 // pred_region
      _
    $region61: #{tpu_custom_call.1} parent=1 // pred_fallthru
      _
    // Predicated region
    $region62: #{tpu_custom_call.1} parent=1 // pred_check
      _
    $region63: #{tpu_custom_call.1} parent=1 // pred_check_branch
      %54 = sbr.rel (0) target = $region65
    $region64: #{tpu_custom_call.1} parent=1 // pred_region
      _
    $region65: #{tpu_custom_call.1} parent=1 // pred_fallthru
      _
    // Predicated region
    $region66: #{tpu_custom_call.1} parent=1 // pred_check
      _
    $region67: #{tpu_custom_call.1} parent=1 // pred_check_branch
      %56 = sbr.rel (0) target = $region69
    $region68: #{tpu_custom_call.1} parent=1 // pred_region
      _
    $region69: #{tpu_custom_call.1} parent=1 // pred_fallthru
      _
    %v58 = vld [vmem:[%s0] sm:$0xff]
    %v59 = vld [vmem:[%s0 + $0x8] sm:$0xff]
    %v60 = vld [vmem:[%s0 + $0x10] sm:$0xff]
    %v61 = vld [vmem:[%s0 + $0x18] sm:$0xff]
    %v62 = vld [vmem:[%s0 + $0x20] sm:$0xff]
    %v63 = vld [vmem:[%s0 + $0x28] sm:$0xff]
    %v64 = vld [vmem:[%s0 + $0x30] sm:$0xff]
    %v65 = vld [vmem:[%s0 + $0x38] sm:$0xff]
    %66 = vxpose.xlu0.b32.start [1/16] %v58, 128
    %67 = vxpose.xlu0.b32.cont [2/16] %v59, 128
    %68 = vxpose.xlu0.b32.cont [3/16] %v60, 128
    %69 = vxpose.xlu0.b32.cont [4/16] %v61, 128
    %70 = vxpose.xlu0.b32.cont [5/16] 0.0, 128
    %71 = vxpose.xlu0.b32.cont [6/16] 0.0, 128
    %72 = vxpose.xlu0.b32.cont [7/16] 0.0, 128
    %73 = vxpose.xlu0.b32.cont [8/16] 0.0, 128
    %74 = vxpose.xlu0.b32.cont [9/16] 0.0, 128
    %75 = vxpose.xlu0.b32.cont [10/16] 0.0, 128
    %76 = vxpose.xlu0.b32.cont [11/16] 0.0, 128
    %77 = vxpose.xlu0.b32.cont [12/16] 0.0, 128
    %78 = vxpose.xlu0.b32.cont [13/16] 0.0, 128
    %79 = vxpose.xlu0.b32.cont [14/16] 0.0, 128
    %80 = vxpose.xlu0.b32.cont [15/16] 0.0, 128
    %81 = vxpose.xlu0.b32.end [16/16] 0.0, 128
    %v82 = vpop.trf.xlu0
    %v83 = vpop.trf.xlu0
    %v84 = vpop.trf.xlu0
    %v85 = vpop.trf.xlu0
    %v86 = vpop.trf.xlu0
    %v87 = vpop.trf.xlu0
    %v88 = vpop.trf.xlu0
    %v89 = vpop.trf.xlu0
    %v90 = vpop.trf.xlu0
    %v91 = vpop.trf.xlu0
    %v92 = vpop.trf.xlu0
    %v93 = vpop.trf.xlu0
    %v94 = vpop.trf.xlu0
    %v95 = vpop.trf.xlu0
    %v96 = vpop.trf.xlu0
    %v97 = vpop.trf.xlu0
    %98 = vxpose.xlu0.b32.start [1/16] %v62, 128
    %99 = vxpose.xlu0.b32.cont [2/16] %v63, 128
    %100 = vxpose.xlu0.b32.cont [3/16] %v64, 128
    %101 = vxpose.xlu0.b32.cont [4/16] %v65, 128
    %102 = vxpose.xlu0.b32.cont [5/16] 0.0, 128
    %103 = vxpose.xlu0.b32.cont [6/16] 0.0, 128
    %104 = vxpose.xlu0.b32.cont [7/16] 0.0, 128
    %105 = vxpose.xlu0.b32.cont [8/16] 0.0, 128
    %106 = vxpose.xlu0.b32.cont [9/16] 0.0, 128
    %107 = vxpose.xlu0.b32.cont [10/16] 0.0, 128
    %108 = vxpose.xlu0.b32.cont [11/16] 0.0, 128
    %109 = vxpose.xlu0.b32.cont [12/16] 0.0, 128
    %110 = vxpose.xlu0.b32.cont [13/16] 0.0, 128
    %111 = vxpose.xlu0.b32.cont [14/16] 0.0, 128
    %112 = vxpose.xlu0.b32.cont [15/16] 0.0, 128
    %113 = vxpose.xlu0.b32.end [16/16] 0.0, 128
    %v114 = vpop.trf.xlu0
    %v115 = vpop.trf.xlu0
    %v116 = vpop.trf.xlu0
    %v117 = vpop.trf.xlu0
    %v118 = vpop.trf.xlu0
    %v119 = vpop.trf.xlu0
    %v120 = vpop.trf.xlu0
    %v121 = vpop.trf.xlu0
    %v122 = vpop.trf.xlu0
    %v123 = vpop.trf.xlu0
    %v124 = vpop.trf.xlu0
    %v125 = vpop.trf.xlu0
    %v126 = vpop.trf.xlu0
    %v127 = vpop.trf.xlu0
    %v128 = vpop.trf.xlu0
    %v129 = vpop.trf.xlu0
    %v130 = vld [vmem:[%s1] sm:$0xff]
    %v131 = vld [vmem:[%s1 + $0x8] sm:$0xff]
    %v132 = vld [vmem:[%s1 + $0x10] sm:$0xff]
    %v133 = vld [vmem:[%s1 + $0x18] sm:$0xff]
    %v134 = vld [vmem:[%s1 + $0x20] sm:$0xff]
    %v135 = vld [vmem:[%s1 + $0x28] sm:$0xff]
    %v136 = vld [vmem:[%s1 + $0x30] sm:$0xff]
    %v137 = vld [vmem:[%s1 + $0x38] sm:$0xff]
    %138 = vxpose.xlu0.b32.start [1/16] %v130, 128
    %139 = vxpose.xlu0.b32.cont [2/16] %v131, 128
    %140 = vxpose.xlu0.b32.cont [3/16] %v132, 128
    %141 = vxpose.xlu0.b32.cont [4/16] %v133, 128
    %142 = vxpose.xlu0.b32.cont [5/16] 0.0, 128
    %143 = vxpose.xlu0.b32.cont [6/16] 0.0, 128
    %144 = vxpose.xlu0.b32.cont [7/16] 0.0, 128
    %145 = vxpose.xlu0.b32.cont [8/16] 0.0, 128
    %146 = vxpose.xlu0.b32.cont [9/16] 0.0, 128
    %147 = vxpose.xlu0.b32.cont [10/16] 0.0, 128
    %148 = vxpose.xlu0.b32.cont [11/16] 0.0, 128
    %149 = vxpose.xlu0.b32.cont [12/16] 0.0, 128
    %150 = vxpose.xlu0.b32.cont [13/16] 0.0, 128
    %151 = vxpose.xlu0.b32.cont [14/16] 0.0, 128
    %152 = vxpose.xlu0.b32.cont [15/16] 0.0, 128
    %153 = vxpose.xlu0.b32.end [16/16] 0.0, 128
    %v154 = vpop.trf.xlu0
    %v155 = vpop.trf.xlu0
    %v156 = vpop.trf.xlu0
    %v157 = vpop.trf.xlu0
    %v158 = vpop.trf.xlu0
    %v159 = vpop.trf.xlu0
    %v160 = vpop.trf.xlu0
    %v161 = vpop.trf.xlu0
    %v162 = vpop.trf.xlu0
    %v163 = vpop.trf.xlu0
    %v164 = vpop.trf.xlu0
    %v165 = vpop.trf.xlu0
    %v166 = vpop.trf.xlu0
    %v167 = vpop.trf.xlu0
    %v168 = vpop.trf.xlu0
    %v169 = vpop.trf.xlu0
    %170 = vxpose.xlu0.b32.start [1/16] %v134, 128
    %171 = vxpose.xlu0.b32.cont [2/16] %v135, 128
    %172 = vxpose.xlu0.b32.cont [3/16] %v136, 128
    %173 = vxpose.xlu0.b32.cont [4/16] %v137, 128
    %174 = vxpose.xlu0.b32.cont [5/16] 0.0, 128
    %175 = vxpose.xlu0.b32.cont [6/16] 0.0, 128
    %176 = vxpose.xlu0.b32.cont [7/16] 0.0, 128
    %177 = vxpose.xlu0.b32.cont [8/16] 0.0, 128
    %178 = vxpose.xlu0.b32.cont [9/16] 0.0, 128
    %179 = vxpose.xlu0.b32.cont [10/16] 0.0, 128
    %180 = vxpose.xlu0.b32.cont [11/16] 0.0, 128
    %181 = vxpose.xlu0.b32.cont [12/16] 0.0, 128
    %182 = vxpose.xlu0.b32.cont [13/16] 0.0, 128
    %183 = vxpose.xlu0.b32.cont [14/16] 0.0, 128
    %184 = vxpose.xlu0.b32.cont [15/16] 0.0, 128
    %185 = vxpose.xlu0.b32.end [16/16] 0.0, 128
    %v186 = vpop.trf.xlu0
    %v187 = vpop.trf.xlu0
    %v188 = vpop.trf.xlu0
    %v189 = vpop.trf.xlu0
    %v190 = vpop.trf.xlu0
    %v191 = vpop.trf.xlu0
    %v192 = vpop.trf.xlu0
    %v193 = vpop.trf.xlu0
    %v194 = vpop.trf.xlu0
    %v195 = vpop.trf.xlu0
    %v196 = vpop.trf.xlu0
    %v197 = vpop.trf.xlu0
    %v198 = vpop.trf.xlu0
    %v199 = vpop.trf.xlu0
    %v200 = vpop.trf.xlu0
    %v201 = vpop.trf.xlu0
    %v202 = vld [vmem:[%s2] sm:$0xff]
    %v203 = vld [vmem:[%s2 + $0x8] sm:$0xff]
    %v204 = vld [vmem:[%s2 + $0x10] sm:$0xff]
    %v205 = vld [vmem:[%s2 + $0x18] sm:$0xff]
    %v206 = vadd.f32 %v82, %v202
    %v207 = vadd.f32 %v83, %v203
    %v208 = vadd.f32 %v154, %v204
    %v209 = vadd.f32 %v155, %v205
    %v210 = vadd.f32 %v114, %v202
    %v211 = vadd.f32 %v115, %v203
    %v212 = vadd.f32 %v186, %v204
    %v213 = vadd.f32 %v187, %v205
    %v214 = vld [vmem:[%s3] sm:$0x1]
    %v215 = vld [vmem:[%s4] sm:$0x1]
    %vm216 = vcmask 261120
    %v217 = vsel %vm216, %v206, 0.0
    %218 = vadd.xlane.f32.xlu0 %v217
    %v219 = vpop.xlane.xlu0 %218
    %v220 = vsel %vm216, %v207, 0.0
    %221 = vadd.xlane.f32.xlu0 %v220
    %v222 = vpop.xlane.xlu0 %221
    %v223 = vsel %vm216, %v208, 0.0
    %224 = vadd.xlane.f32.xlu0 %v223
    %v225 = vpop.xlane.xlu0 %224
    %v226 = vsel %vm216, %v209, 0.0
    %227 = vadd.xlane.f32.xlu0 %v226
    %v228 = vpop.xlane.xlu0 %227
    %v229 = vsel %vm216, %v210, 0.0
    %230 = vadd.xlane.f32.xlu0 %v229
    %v231 = vpop.xlane.xlu0 %230
    %v232 = vsel %vm216, %v211, 0.0
    %233 = vadd.xlane.f32.xlu0 %v232
    %v234 = vpop.xlane.xlu0 %233
    %v235 = vsel %vm216, %v212, 0.0
    %236 = vadd.xlane.f32.xlu0 %v235
    %v237 = vpop.xlane.xlu0 %236
    %v238 = vsel %vm216, %v213, 0.0
    %239 = vadd.xlane.f32.xlu0 %v238
    %v240 = vpop.xlane.xlu0 %239
    %v241 = vrcp.pop 32.0
    %v242 = vmul.f32 %v219, %v241
    %v243 = vmul.f32 %v222, %v241
    %v244 = vmul.f32 %v225, %v241
    %v245 = vmul.f32 %v228, %v241
    %v246 = vmul.f32 %v231, %v241
    %v247 = vmul.f32 %v234, %v241
    %v248 = vmul.f32 %v237, %v241
    %v249 = vmul.f32 %v240, %v241
    %v250 = vsub.f32 %v206, %v242
    %v251 = vsub.f32 %v207, %v243
    %v252 = vsub.f32 %v208, %v244
    %v253 = vsub.f32 %v209, %v245
    %v254 = vsub.f32 %v210, %v246
    %v255 = vsub.f32 %v211, %v247
    %v256 = vsub.f32 %v212, %v248
    %v257 = vsub.f32 %v213, %v249
    %v258 = vmul.f32 %v250, %v250
    %v259 = vmul.f32 %v251, %v251
    %v260 = vmul.f32 %v252, %v252
    %v261 = vmul.f32 %v253, %v253
    %v262 = vmul.f32 %v254, %v254
    %v263 = vmul.f32 %v255, %v255
    %v264 = vmul.f32 %v256, %v256
    %v265 = vmul.f32 %v257, %v257
    %v266 = vsel %vm216, %v258, 0.0
    %267 = vadd.xlane.f32.xlu0 %v266
    %v268 = vpop.xlane.xlu0 %267
    %v269 = vsel %vm216, %v259, 0.0
    %270 = vadd.xlane.f32.xlu0 %v269
    %v271 = vpop.xlane.xlu0 %270
    %v272 = vsel %vm216, %v260, 0.0
    %273 = vadd.xlane.f32.xlu0 %v272
    %v274 = vpop.xlane.xlu0 %273
    %v275 = vsel %vm216, %v261, 0.0
    %276 = vadd.xlane.f32.xlu0 %v275
    %v277 = vpop.xlane.xlu0 %276
    %v278 = vsel %vm216, %v262, 0.0
    %279 = vadd.xlane.f32.xlu0 %v278
    %v280 = vpop.xlane.xlu0 %279
    %v281 = vsel %vm216, %v263, 0.0
    %282 = vadd.xlane.f32.xlu0 %v281
    %v283 = vpop.xlane.xlu0 %282
    %v284 = vsel %vm216, %v264, 0.0
    %285 = vadd.xlane.f32.xlu0 %v284
    %v286 = vpop.xlane.xlu0 %285
    %v287 = vsel %vm216, %v265, 0.0
    %288 = vadd.xlane.f32.xlu0 %v287
    %v289 = vpop.xlane.xlu0 %288
    %v290 = vmul.f32 %v268, %v241
    %v291 = vmul.f32 %v271, %v241
    %v292 = vmul.f32 %v274, %v241
    %v293 = vmul.f32 %v277, %v241
    %v294 = vmul.f32 %v280, %v241
    %v295 = vmul.f32 %v283, %v241
    %v296 = vmul.f32 %v286, %v241
    %v297 = vmul.f32 %v289, %v241
    %v298 = vadd.f32 %v290, 1e-06
    %v299 = vadd.f32 %v291, 1e-06
    %v300 = vadd.f32 %v292, 1e-06
    %v301 = vadd.f32 %v293, 1e-06
    %v302 = vadd.f32 %v294, 1e-06
    %v303 = vadd.f32 %v295, 1e-06
    %v304 = vadd.f32 %v296, 1e-06
    %v305 = vadd.f32 %v297, 1e-06
    %v306 = vrsqrt.pop %v298
    %v307 = vrsqrt.pop %v299
    %v308 = vrsqrt.pop %v300
    %v309 = vrsqrt.pop %v301
    %v310 = vrsqrt.pop %v302
    %v311 = vrsqrt.pop %v303
    %v312 = vrsqrt.pop %v304
    %v313 = vrsqrt.pop %v305
    %v314 = vmul.f32 %v250, %v306
    %v315 = vmul.f32 %v251, %v307
    %v316 = vmul.f32 %v252, %v308
    %v317 = vmul.f32 %v253, %v309
    %v318 = vmul.f32 %v254, %v310
    %v319 = vmul.f32 %v255, %v311
    %v320 = vmul.f32 %v256, %v312
    %v321 = vmul.f32 %v257, %v313
    %v322 = vlaneseq
    %v323 = vshrl.u32 %v322, 7
    %v324 = vsub.s32 0, %v323
    %v325 = vrot.slane %v214, %v324
    %v326 = vmul.f32 %v314, %v325
    %v327 = vmul.f32 %v315, %v325
    %v328 = vmul.f32 %v316, %v325
    %v329 = vmul.f32 %v317, %v325
    %v330 = vmul.f32 %v318, %v325
    %v331 = vmul.f32 %v319, %v325
    %v332 = vmul.f32 %v320, %v325
    %v333 = vmul.f32 %v321, %v325
    %v334 = vlaneseq
    %v335 = vshrl.u32 %v334, 7
    %v336 = vsub.s32 0, %v335
    %v337 = vrot.slane %v215, %v336
    %v338 = vadd.f32 %v326, %v337
    %v339 = vadd.f32 %v327, %v337
    %v340 = vadd.f32 %v328, %v337
    %v341 = vadd.f32 %v329, %v337
    %v342 = vadd.f32 %v330, %v337
    %v343 = vadd.f32 %v331, %v337
    %v344 = vadd.f32 %v332, %v337
    %v345 = vadd.f32 %v333, %v337
    %v346 = vpack.c.bf16 %v339, %v338
    %v347 = vpack.c.bf16 %v341, %v340
    %v348 = vpack.c.bf16 %v343, %v342
    %v349 = vpack.c.bf16 %v345, %v344
    %v350 = vld [vmem:[%s5] sm:$0xf]
    %v351 = vld [vmem:[%s5 + $0x4] sm:$0xf]
    %v352 = vld [vmem:[%s5 + $0x8] sm:$0xf]
    %v353 = vld [vmem:[%s5 + $0xc] sm:$0xf]
    %v354 = vld [vmem:[%s6] sm:$0x1]
    %v355 = vlaneseq
    %v356 = vshrl.u32 %v355, 7
    %v357 = vsub.s32 0, %v356
    %v358 = vrot.slane %v354, %v357
    %v363 = vunpack.c.l.b16 %v350
    %v364 = vunpack.c.l.b16 %v351
    %v365 = vunpack.c.l.b16 %v352
    %v366 = vunpack.c.l.b16 %v353
    %v367 = vpack.c.b16 %v364, %v363
    %v368 = vpack.c.b16 %v366, %v365
    %v372 = vsel %vm216, %v346, 0
    %v375 = vsel %vm216, %v347, 0
    %v378 = vsel %vm216, %v348, 0
    %v381 = vsel %vm216, %v349, 0
    %383 = vmatprep.subr.bf16.mxu0 0
    %384 = vmatpush1.bf16.msra.mxu0 0
    %385 = vmatprep.subr.bf16.mxu0 0
    %386 = vmatpush1.bf16.msra.mxu0 0
    %387 = vmatprep.subr.bf16.mxu0 0
    %388 = vmatpush1.bf16.msra.mxu0 0
    %389 = vmatprep.subr.bf16.mxu0 0
    %390 = vmatpush1.bf16.msra.mxu0 0
    %391 = vmatprep.subr.bf16.mxu0 0
    %392 = vmatpush1.bf16.msra.mxu0 0
    %393 = vmatprep.subr.bf16.mxu0 0
    %394 = vmatpush1.bf16.msra.mxu0 0
    %395 = vmatprep.subr.bf16.mxu0 0
    %396 = vmatpush1.bf16.msra.mxu0 %v368
    %397 = vmatprep.subr.bf16.mxu0 0
    %398 = vmatpush1.bf16.msra.mxu0 %v367
    %399 = vmatprep.subr.bf16.mxu0 0
    %400 = vmatpush2.bf16.msra.mxu0 0
    %401 = vmatprep.subr.bf16.mxu0 0
    %402 = vmatpush2.bf16.msra.mxu0 0
    %403 = vmatprep.subr.bf16.mxu0 0
    %404 = vmatpush2.bf16.msra.mxu0 0
    %405 = vmatprep.subr.bf16.mxu0 0
    %406 = vmatpush2.bf16.msra.mxu0 0
    %407 = vmatprep.subr.bf16.mxu0 0
    %408 = vmatpush2.bf16.msra.mxu0 0
    %409 = vmatprep.subr.bf16.mxu0 0
    %410 = vmatpush2.bf16.msra.mxu0 0
    %411 = vmatprep.subr.bf16.mxu0 0
    %412 = vmatpush2.bf16.msra.mxu0 0
    %413 = vmatprep.subr.bf16.mxu0 0
    %414 = vmatpush2.bf16.msra.mxu0 0
    %415 = vmatprep.mubr.bf16.mxu0 0
    %416 = vmatmul.mubr.bf16.gmra.mxu0 %v372
    %v417 = vpop.f32.mrf.mxu0
    %v418 = vadd.f32 %v358, %v417
    %v419 = vpop.f32.mrf.mxu0
    %v420 = vpop.f32.mrf.mxu0
    %v421 = vadd.f32 %v358, %v420
    %v422 = vpop.f32.mrf.mxu0
    %423 = vmatprep.mubr.bf16.mxu0 0
    %424 = vmatmul.mubr.bf16.gmra.mxu0 %v375
    %v425 = vpop.f32.mrf.mxu0
    %v426 = vadd.f32 %v358, %v425
    %v427 = vpop.f32.mrf.mxu0
    %v428 = vpop.f32.mrf.mxu0
    %v429 = vadd.f32 %v358, %v428
    %v430 = vpop.f32.mrf.mxu0
    %431 = vmatprep.mubr.bf16.mxu0 0
    %432 = vmatmul.mubr.bf16.gmra.mxu0 %v378
    %v433 = vpop.f32.mrf.mxu0
    %v434 = vadd.f32 %v358, %v433
    %v435 = vpop.f32.mrf.mxu0
    %v436 = vpop.f32.mrf.mxu0
    %v437 = vadd.f32 %v358, %v436
    %v438 = vpop.f32.mrf.mxu0
    %439 = vmatprep.mubr.bf16.mxu0 0
    %440 = vmatmul.mubr.bf16.gmra.mxu0 %v381
    %v441 = vpop.f32.mrf.mxu0
    %v442 = vadd.f32 %v358, %v441
    %v443 = vpop.f32.mrf.mxu0
    %v444 = vpop.f32.mrf.mxu0
    %v445 = vadd.f32 %v358, %v444
    %v446 = vpop.f32.mrf.mxu0
    %447 = vdwg.mxu0
    %v448 = vmul.f32 %v418, 0.35355338
    %v449 = vmul.f32 %v421, 0.35355338
    %v450 = vmul.f32 %v426, 0.35355338
    %v451 = vmul.f32 %v429, 0.35355338
    %456 = vrot.lane.b32.xlu0 %v418, 96
    %v457 = vpop.permute.xlu0 %456
    %458 = vrot.lane.b32.xlu0 %v421, 96
    %v459 = vpop.permute.xlu0 %458
    %460 = vrot.lane.b32.xlu0 %v426, 96
    %v461 = vpop.permute.xlu0 %460
    %462 = vrot.lane.b32.xlu0 %v429, 96
    %v463 = vpop.permute.xlu0 %462
    %vm464 = vcmask 64512
    %v466 = vsel %vm464, %v448, 0
    %v469 = vsel %vm464, %v449, 0
    %v472 = vsel %vm464, %v450, 0
    %v475 = vsel %vm464, %v451, 0
    %v477 = vsel %vm464, %v457, 0
    %v479 = vsel %vm464, %v459, 0
    %v481 = vsel %vm464, %v461, 0
    %v483 = vsel %vm464, %v463, 0
    %485 = vmatprep.subr.mxu0 0.0
    %486 = vmatpush1.xpose.msra.mxu0 0.0
    %487 = vmatprep.subr.mxu0 0.0
    %488 = vmatpush1.xpose.msra.mxu0 0.0
    %489 = vmatprep.subr.mxu0 0.0
    %490 = vmatpush1.xpose.msra.mxu0 0.0
    %491 = vmatprep.subr.mxu0 0.0
    %492 = vmatpush1.xpose.msra.mxu0 0.0
    %493 = vmatprep.subr.mxu0 0.0
    %494 = vmatpush1.xpose.msra.mxu0 0.0
    %495 = vmatprep.subr.mxu0 0.0
    %496 = vmatpush1.xpose.msra.mxu0 0.0
    %497 = vmatprep.subr.mxu0 0.0
    %498 = vmatpush1.xpose.msra.mxu0 0.0
    %499 = vmatprep.subr.mxu0 0.0
    %500 = vmatpush1.xpose.msra.mxu0 0.0
    %501 = vmatprep.subr.mxu0 0.0
    %502 = vmatpush1.xpose.msra.mxu0 0.0
    %503 = vmatprep.subr.mxu0 0.0
    %504 = vmatpush1.xpose.msra.mxu0 0.0
    %505 = vmatprep.subr.mxu0 0.0
    %506 = vmatpush1.xpose.msra.mxu0 0.0
    %507 = vmatprep.subr.mxu0 0.0
    %508 = vmatpush1.xpose.msra.mxu0 0.0
    %509 = vmatprep.subr.mxu0 0.0
    %510 = vmatpush1.xpose.msra.mxu0 %v483
    %511 = vmatprep.subr.mxu0 0.0
    %512 = vmatpush1.xpose.msra.mxu0 %v481
    %513 = vmatprep.subr.mxu0 0.0
    %514 = vmatpush1.xpose.msra.mxu0 %v479
    %515 = vmatprep.subr.mxu0 0.0
    %516 = vmatpush1.xpose.msra.mxu0 %v477
    %517 = vmatprep.subr.mxu0 0.0
    %518 = vmatpush2.xpose.msra.mxu0 0.0
    %519 = vmatprep.subr.mxu0 0.0
    %520 = vmatpush2.xpose.msra.mxu0 0.0
    %521 = vmatprep.subr.mxu0 0.0
    %522 = vmatpush2.xpose.msra.mxu0 0.0
    %523 = vmatprep.subr.mxu0 0.0
    %524 = vmatpush2.xpose.msra.mxu0 0.0
    %525 = vmatprep.subr.mxu0 0.0
    %526 = vmatpush2.xpose.msra.mxu0 0.0
    %527 = vmatprep.subr.mxu0 0.0
    %528 = vmatpush2.xpose.msra.mxu0 0.0
    %529 = vmatprep.subr.mxu0 0.0
    %530 = vmatpush2.xpose.msra.mxu0 0.0
    %531 = vmatprep.subr.mxu0 0.0
    %532 = vmatpush2.xpose.msra.mxu0 0.0
    %533 = vmatprep.subr.mxu0 0.0
    %534 = vmatpush2.xpose.msra.mxu0 0.0
    %535 = vmatprep.subr.mxu0 0.0
    %536 = vmatpush2.xpose.msra.mxu0 0.0
    %537 = vmatprep.subr.mxu0 0.0
    %538 = vmatpush2.xpose.msra.mxu0 0.0
    %539 = vmatprep.subr.mxu0 0.0
    %540 = vmatpush2.xpose.msra.mxu0 0.0
    %541 = vmatprep.subr.mxu0 0.0
    %542 = vmatpush2.xpose.msra.mxu0 0.0
    %543 = vmatprep.subr.mxu0 0.0
    %544 = vmatpush2.xpose.msra.mxu0 0.0
    %545 = vmatprep.subr.mxu0 0.0
    %546 = vmatpush2.xpose.msra.mxu0 0.0
    %547 = vmatprep.subr.mxu0 0.0
    %548 = vmatpush2.xpose.msra.mxu0 0.0
    %549 = vmatprep.mubr.f32.mxu0 0.0
    %550 = vmatmul.mubr.f32.gmra.mxu0 %v466
    %v551 = vpop.f32.mrf.mxu0
    %v552 = vadd.f32 0.0, %v551
    %v553 = vpop.f32.mrf.mxu0
    %554 = vmatprep.mubr.f32.mxu0 0.0
    %555 = vmatmul.mubr.f32.gmra.mxu0 %v469
    %v556 = vpop.f32.mrf.mxu0
    %v557 = vadd.f32 0.0, %v556
    %v558 = vpop.f32.mrf.mxu0
    %559 = vmatprep.mubr.f32.mxu0 0.0
    %560 = vmatmul.mubr.f32.gmra.mxu0 %v472
    %v561 = vpop.f32.mrf.mxu0
    %v562 = vadd.f32 0.0, %v561
    %v563 = vpop.f32.mrf.mxu0
    %564 = vmatprep.mubr.f32.mxu0 0.0
    %565 = vmatmul.mubr.f32.gmra.mxu0 %v475
    %v566 = vpop.f32.mrf.mxu0
    %v567 = vadd.f32 0.0, %v566
    %v568 = vpop.f32.mrf.mxu0
    %569 = vdwg.mxu0
    %v570 = vsel %vm216, %v552, -inf
    %571 = vmax.xlane.f32.xlu0 %v570
    %v572 = vpop.xlane.xlu0 %571
    %v573 = vsel %vm216, %v557, -inf
    %574 = vmax.xlane.f32.xlu0 %v573
    %v575 = vpop.xlane.xlu0 %574
    %v576 = vsel %vm216, %v562, -inf
    %577 = vmax.xlane.f32.xlu0 %v576
    %v578 = vpop.xlane.xlu0 %577
    %v579 = vsel %vm216, %v567, -inf
    %580 = vmax.xlane.f32.xlu0 %v579
    %v581 = vpop.xlane.xlu0 %580
    %v582 = vsub.f32 %v552, %v572
    %v583 = vsub.f32 %v557, %v575
    %v584 = vsub.f32 %v562, %v578
    %v585 = vsub.f32 %v567, %v581
    %v586 = vmul.f32 %v582, 1.442695
    %v587 = vpow.pop %v586
    %v588 = vmul.f32 %v583, 1.442695
    %v589 = vpow.pop %v588
    %v590 = vmul.f32 %v584, 1.442695
    %v591 = vpow.pop %v590
    %v592 = vmul.f32 %v585, 1.442695
    %v593 = vpow.pop %v592
    %594 = vrot.lane.b32.xlu0 %v418, 64
    %v595 = vpop.permute.xlu0 %594
    %596 = vrot.lane.b32.xlu0 %v421, 64
    %v597 = vpop.permute.xlu0 %596
    %598 = vrot.lane.b32.xlu0 %v426, 64
    %v599 = vpop.permute.xlu0 %598
    %600 = vrot.lane.b32.xlu0 %v429, 64
    %v601 = vpop.permute.xlu0 %600
    %v607 = vsel %vm216, %v587, 0
    %v610 = vsel %vm216, %v589, 0
    %v613 = vsel %vm216, %v591, 0
    %v616 = vsel %vm216, %v593, 0
    %618 = vmatprep.subr.mxu0 0.0
    %619 = vmatpush1.msra.mxu0 0.0
    %620 = vmatprep.subr.mxu0 0.0
    %621 = vmatpush1.msra.mxu0 0.0
    %622 = vmatprep.subr.mxu0 0.0
    %623 = vmatpush1.msra.mxu0 0.0
    %624 = vmatprep.subr.mxu0 0.0
    %625 = vmatpush1.msra.mxu0 0.0
    %626 = vmatprep.subr.mxu0 0.0
    %627 = vmatpush1.msra.mxu0 0.0
    %628 = vmatprep.subr.mxu0 0.0
    %629 = vmatpush1.msra.mxu0 0.0
    %630 = vmatprep.subr.mxu0 0.0
    %631 = vmatpush1.msra.mxu0 0.0
    %632 = vmatprep.subr.mxu0 0.0
    %633 = vmatpush1.msra.mxu0 0.0
    %634 = vmatprep.subr.mxu0 0.0
    %635 = vmatpush1.msra.mxu0 0.0
    %636 = vmatprep.subr.mxu0 0.0
    %637 = vmatpush1.msra.mxu0 0.0
    %638 = vmatprep.subr.mxu0 0.0
    %639 = vmatpush1.msra.mxu0 0.0
    %640 = vmatprep.subr.mxu0 0.0
    %641 = vmatpush1.msra.mxu0 0.0
    %642 = vmatprep.subr.mxu0 0.0
    %643 = vmatpush1.msra.mxu0 %v601
    %644 = vmatprep.subr.mxu0 0.0
    %645 = vmatpush1.msra.mxu0 %v599
    %646 = vmatprep.subr.mxu0 0.0
    %647 = vmatpush1.msra.mxu0 %v597
    %648 = vmatprep.subr.mxu0 0.0
    %649 = vmatpush1.msra.mxu0 %v595
    %650 = vmatprep.subr.mxu0 0.0
    %651 = vmatpush2.msra.mxu0 0.0
    %652 = vmatprep.subr.mxu0 0.0
    %653 = vmatpush2.msra.mxu0 0.0
    %654 = vmatprep.subr.mxu0 0.0
    %655 = vmatpush2.msra.mxu0 0.0
    %656 = vmatprep.subr.mxu0 0.0
    %657 = vmatpush2.msra.mxu0 0.0
    %658 = vmatprep.subr.mxu0 0.0
    %659 = vmatpush2.msra.mxu0 0.0
    %660 = vmatprep.subr.mxu0 0.0
    %661 = vmatpush2.msra.mxu0 0.0
    %662 = vmatprep.subr.mxu0 0.0
    %663 = vmatpush2.msra.mxu0 0.0
    %664 = vmatprep.subr.mxu0 0.0
    %665 = vmatpush2.msra.mxu0 0.0
    %666 = vmatprep.subr.mxu0 0.0
    %667 = vmatpush2.msra.mxu0 0.0
    %668 = vmatprep.subr.mxu0 0.0
    %669 = vmatpush2.msra.mxu0 0.0
    %670 = vmatprep.subr.mxu0 0.0
    %671 = vmatpush2.msra.mxu0 0.0
    %672 = vmatprep.subr.mxu0 0.0
    %673 = vmatpush2.msra.mxu0 0.0
    %674 = vmatprep.subr.mxu0 0.0
    %675 = vmatpush2.msra.mxu0 0.0
    %676 = vmatprep.subr.mxu0 0.0
    %677 = vmatpush2.msra.mxu0 0.0
    %678 = vmatprep.subr.mxu0 0.0
    %679 = vmatpush2.msra.mxu0 0.0
    %680 = vmatprep.subr.mxu0 0.0
    %681 = vmatpush2.msra.mxu0 0.0
    %682 = vmatprep.mubr.f32.mxu0 0.0
    %683 = vmatmul.mubr.f32.gmra.mxu0 %v607
    %v684 = vpop.f32.mrf.mxu0
    %v685 = vadd.f32 0.0, %v684
    %v686 = vpop.f32.mrf.mxu0
    %687 = vmatprep.mubr.f32.mxu0 0.0
    %688 = vmatmul.mubr.f32.gmra.mxu0 %v610
    %v689 = vpop.f32.mrf.mxu0
    %v690 = vadd.f32 0.0, %v689
    %v691 = vpop.f32.mrf.mxu0
    %692 = vmatprep.mubr.f32.mxu0 0.0
    %693 = vmatmul.mubr.f32.gmra.mxu0 %v613
    %v694 = vpop.f32.mrf.mxu0
    %v695 = vadd.f32 0.0, %v694
    %v696 = vpop.f32.mrf.mxu0
    %697 = vmatprep.mubr.f32.mxu0 0.0
    %698 = vmatmul.mubr.f32.gmra.mxu0 %v616
    %v699 = vpop.f32.mrf.mxu0
    %v700 = vadd.f32 0.0, %v699
    %v701 = vpop.f32.mrf.mxu0
    %702 = vdwg.mxu0
    %v703 = vsel %vm216, %v587, 0.0
    %704 = vadd.xlane.f32.xlu0 %v703
    %v705 = vpop.xlane.xlu0 %704
    %v706 = vsel %vm216, %v589, 0.0
    %707 = vadd.xlane.f32.xlu0 %v706
    %v708 = vpop.xlane.xlu0 %707
    %v709 = vsel %vm216, %v591, 0.0
    %710 = vadd.xlane.f32.xlu0 %v709
    %v711 = vpop.xlane.xlu0 %710
    %v712 = vsel %vm216, %v593, 0.0
    %713 = vadd.xlane.f32.xlu0 %v712
    %v714 = vpop.xlane.xlu0 %713
    %v715 = vrcp.pop %v705
    %v716 = vmul.f32 %v685, %v715
    %v717 = vrcp.pop %v708
    %v718 = vmul.f32 %v690, %v717
    %v719 = vrcp.pop %v711
    %v720 = vmul.f32 %v695, %v719
    %v721 = vrcp.pop %v714
    %v722 = vmul.f32 %v700, %v721
    %723 = vrot.lane.b32.xlu0 %v448, 120
    %v724 = vpop.permute.xlu0 %723
    %725 = vrot.lane.b32.xlu0 %v449, 120
    %v726 = vpop.permute.xlu0 %725
    %727 = vrot.lane.b32.xlu0 %v450, 120
    %v728 = vpop.permute.xlu0 %727
    %729 = vrot.lane.b32.xlu0 %v451, 120
    %v730 = vpop.permute.xlu0 %729
    %731 = vrot.lane.b32.xlu0 %v418, 88
    %v732 = vpop.permute.xlu0 %731
    %733 = vrot.lane.b32.xlu0 %v421, 88
    %v734 = vpop.permute.xlu0 %733
    %735 = vrot.lane.b32.xlu0 %v426, 88
    %v736 = vpop.permute.xlu0 %735
    %737 = vrot.lane.b32.xlu0 %v429, 88
    %v738 = vpop.permute.xlu0 %737
    %v739 = vsel %vm464, %v724, 0
    %v741 = vsel %vm464, %v726, 0
    %v743 = vsel %vm464, %v728, 0
    %v745 = vsel %vm464, %v730, 0
    %v747 = vsel %vm464, %v732, 0
    %v749 = vsel %vm464, %v734, 0
    %v751 = vsel %vm464, %v736, 0
    %v753 = vsel %vm464, %v738, 0
    %755 = vmatprep.subr.mxu0 0.0
    %756 = vmatpush1.xpose.msra.mxu0 0.0
    %757 = vmatprep.subr.mxu0 0.0
    %758 = vmatpush1.xpose.msra.mxu0 0.0
    %759 = vmatprep.subr.mxu0 0.0
    %760 = vmatpush1.xpose.msra.mxu0 0.0
    %761 = vmatprep.subr.mxu0 0.0
    %762 = vmatpush1.xpose.msra.mxu0 0.0
    %763 = vmatprep.subr.mxu0 0.0
    %764 = vmatpush1.xpose.msra.mxu0 0.0
    %765 = vmatprep.subr.mxu0 0.0
    %766 = vmatpush1.xpose.msra.mxu0 0.0
    %767 = vmatprep.subr.mxu0 0.0
    %768 = vmatpush1.xpose.msra.mxu0 0.0
    %769 = vmatprep.subr.mxu0 0.0
    %770 = vmatpush1.xpose.msra.mxu0 0.0
    %771 = vmatprep.subr.mxu0 0.0
    %772 = vmatpush1.xpose.msra.mxu0 0.0
    %773 = vmatprep.subr.mxu0 0.0
    %774 = vmatpush1.xpose.msra.mxu0 0.0
    %775 = vmatprep.subr.mxu0 0.0
    %776 = vmatpush1.xpose.msra.mxu0 0.0
    %777 = vmatprep.subr.mxu0 0.0
    %778 = vmatpush1.xpose.msra.mxu0 0.0
    %779 = vmatprep.subr.mxu0 0.0
    %780 = vmatpush1.xpose.msra.mxu0 %v753
    %781 = vmatprep.subr.mxu0 0.0
    %782 = vmatpush1.xpose.msra.mxu0 %v751
    %783 = vmatprep.subr.mxu0 0.0
    %784 = vmatpush1.xpose.msra.mxu0 %v749
    %785 = vmatprep.subr.mxu0 0.0
    %786 = vmatpush1.xpose.msra.mxu0 %v747
    %787 = vmatprep.subr.mxu0 0.0
    %788 = vmatpush2.xpose.msra.mxu0 0.0
    %789 = vmatprep.subr.mxu0 0.0
    %790 = vmatpush2.xpose.msra.mxu0 0.0
    %791 = vmatprep.subr.mxu0 0.0
    %792 = vmatpush2.xpose.msra.mxu0 0.0
    %793 = vmatprep.subr.mxu0 0.0
    %794 = vmatpush2.xpose.msra.mxu0 0.0
    %795 = vmatprep.subr.mxu0 0.0
    %796 = vmatpush2.xpose.msra.mxu0 0.0
    %797 = vmatprep.subr.mxu0 0.0
    %798 = vmatpush2.xpose.msra.mxu0 0.0
    %799 = vmatprep.subr.mxu0 0.0
    %800 = vmatpush2.xpose.msra.mxu0 0.0
    %801 = vmatprep.subr.mxu0 0.0
    %802 = vmatpush2.xpose.msra.mxu0 0.0
    %803 = vmatprep.subr.mxu0 0.0
    %804 = vmatpush2.xpose.msra.mxu0 0.0
    %805 = vmatprep.subr.mxu0 0.0
    %806 = vmatpush2.xpose.msra.mxu0 0.0
    %807 = vmatprep.subr.mxu0 0.0
    %808 = vmatpush2.xpose.msra.mxu0 0.0
    %809 = vmatprep.subr.mxu0 0.0
    %810 = vmatpush2.xpose.msra.mxu0 0.0
    %811 = vmatprep.subr.mxu0 0.0
    %812 = vmatpush2.xpose.msra.mxu0 0.0
    %813 = vmatprep.subr.mxu0 0.0
    %814 = vmatpush2.xpose.msra.mxu0 0.0
    %815 = vmatprep.subr.mxu0 0.0
    %816 = vmatpush2.xpose.msra.mxu0 0.0
    %817 = vmatprep.subr.mxu0 0.0
    %818 = vmatpush2.xpose.msra.mxu0 0.0
    %819 = vmatprep.mubr.f32.mxu0 0.0
    %820 = vmatmul.mubr.f32.gmra.mxu0 %v739
    %v821 = vpop.f32.mrf.mxu0
    %v822 = vadd.f32 0.0, %v821
    %v823 = vpop.f32.mrf.mxu0
    %824 = vmatprep.mubr.f32.mxu0 0.0
    %825 = vmatmul.mubr.f32.gmra.mxu0 %v741
    %v826 = vpop.f32.mrf.mxu0
    %v827 = vadd.f32 0.0, %v826
    %v828 = vpop.f32.mrf.mxu0
    %829 = vmatprep.mubr.f32.mxu0 0.0
    %830 = vmatmul.mubr.f32.gmra.mxu0 %v743
    %v831 = vpop.f32.mrf.mxu0
    %v832 = vadd.f32 0.0, %v831
    %v833 = vpop.f32.mrf.mxu0
    %834 = vmatprep.mubr.f32.mxu0 0.0
    %835 = vmatmul.mubr.f32.gmra.mxu0 %v745
    %v836 = vpop.f32.mrf.mxu0
    %v837 = vadd.f32 0.0, %v836
    %v838 = vpop.f32.mrf.mxu0
    %839 = vdwg.mxu0
    %v840 = vsel %vm216, %v822, -inf
    %841 = vmax.xlane.f32.xlu0 %v840
    %v842 = vpop.xlane.xlu0 %841
    %v843 = vsel %vm216, %v827, -inf
    %844 = vmax.xlane.f32.xlu0 %v843
    %v845 = vpop.xlane.xlu0 %844
    %v846 = vsel %vm216, %v832, -inf
    %847 = vmax.xlane.f32.xlu0 %v846
    %v848 = vpop.xlane.xlu0 %847
    %v849 = vsel %vm216, %v837, -inf
    %850 = vmax.xlane.f32.xlu0 %v849
    %v851 = vpop.xlane.xlu0 %850
    %v852 = vsub.f32 %v822, %v842
    %v853 = vsub.f32 %v827, %v845
    %v854 = vsub.f32 %v832, %v848
    %v855 = vsub.f32 %v837, %v851
    %v856 = vmul.f32 %v852, 1.442695
    %v857 = vpow.pop %v856
    %v858 = vmul.f32 %v853, 1.442695
    %v859 = vpow.pop %v858
    %v860 = vmul.f32 %v854, 1.442695
    %v861 = vpow.pop %v860
    %v862 = vmul.f32 %v855, 1.442695
    %v863 = vpow.pop %v862
    %864 = vrot.lane.b32.xlu0 %v418, 56
    %v865 = vpop.permute.xlu0 %864
    %866 = vrot.lane.b32.xlu0 %v421, 56
    %v867 = vpop.permute.xlu0 %866
    %868 = vrot.lane.b32.xlu0 %v426, 56
    %v869 = vpop.permute.xlu0 %868
    %870 = vrot.lane.b32.xlu0 %v429, 56
    %v871 = vpop.permute.xlu0 %870
    %v877 = vsel %vm216, %v857, 0
    %v880 = vsel %vm216, %v859, 0
    %v883 = vsel %vm216, %v861, 0
    %v886 = vsel %vm216, %v863, 0
    %888 = vmatprep.subr.mxu0 0.0
    %889 = vmatpush1.msra.mxu0 0.0
    %890 = vmatprep.subr.mxu0 0.0
    %891 = vmatpush1.msra.mxu0 0.0
    %892 = vmatprep.subr.mxu0 0.0
    %893 = vmatpush1.msra.mxu0 0.0
    %894 = vmatprep.subr.mxu0 0.0
    %895 = vmatpush1.msra.mxu0 0.0
    %896 = vmatprep.subr.mxu0 0.0
    %897 = vmatpush1.msra.mxu0 0.0
    %898 = vmatprep.subr.mxu0 0.0
    %899 = vmatpush1.msra.mxu0 0.0
    %900 = vmatprep.subr.mxu0 0.0
    %901 = vmatpush1.msra.mxu0 0.0
    %902 = vmatprep.subr.mxu0 0.0
    %903 = vmatpush1.msra.mxu0 0.0
    %904 = vmatprep.subr.mxu0 0.0
    %905 = vmatpush1.msra.mxu0 0.0
    %906 = vmatprep.subr.mxu0 0.0
    %907 = vmatpush1.msra.mxu0 0.0
    %908 = vmatprep.subr.mxu0 0.0
    %909 = vmatpush1.msra.mxu0 0.0
    %910 = vmatprep.subr.mxu0 0.0
    %911 = vmatpush1.msra.mxu0 0.0
    %912 = vmatprep.subr.mxu0 0.0
    %913 = vmatpush1.msra.mxu0 %v871
    %914 = vmatprep.subr.mxu0 0.0
    %915 = vmatpush1.msra.mxu0 %v869
    %916 = vmatprep.subr.mxu0 0.0
    %917 = vmatpush1.msra.mxu0 %v867
    %918 = vmatprep.subr.mxu0 0.0
    %919 = vmatpush1.msra.mxu0 %v865
    %920 = vmatprep.subr.mxu0 0.0
    %921 = vmatpush2.msra.mxu0 0.0
    %922 = vmatprep.subr.mxu0 0.0
    %923 = vmatpush2.msra.mxu0 0.0
    %924 = vmatprep.subr.mxu0 0.0
    %925 = vmatpush2.msra.mxu0 0.0
    %926 = vmatprep.subr.mxu0 0.0
    %927 = vmatpush2.msra.mxu0 0.0
    %928 = vmatprep.subr.mxu0 0.0
    %929 = vmatpush2.msra.mxu0 0.0
    %930 = vmatprep.subr.mxu0 0.0
    %931 = vmatpush2.msra.mxu0 0.0
    %932 = vmatprep.subr.mxu0 0.0
    %933 = vmatpush2.msra.mxu0 0.0
    %934 = vmatprep.subr.mxu0 0.0
    %935 = vmatpush2.msra.mxu0 0.0
    %936 = vmatprep.subr.mxu0 0.0
    %937 = vmatpush2.msra.mxu0 0.0
    %938 = vmatprep.subr.mxu0 0.0
    %939 = vmatpush2.msra.mxu0 0.0
    %940 = vmatprep.subr.mxu0 0.0
    %941 = vmatpush2.msra.mxu0 0.0
    %942 = vmatprep.subr.mxu0 0.0
    %943 = vmatpush2.msra.mxu0 0.0
    %944 = vmatprep.subr.mxu0 0.0
    %945 = vmatpush2.msra.mxu0 0.0
    %946 = vmatprep.subr.mxu0 0.0
    %947 = vmatpush2.msra.mxu0 0.0
    %948 = vmatprep.subr.mxu0 0.0
    %949 = vmatpush2.msra.mxu0 0.0
    %950 = vmatprep.subr.mxu0 0.0
    %951 = vmatpush2.msra.mxu0 0.0
    %952 = vmatprep.mubr.f32.mxu0 0.0
    %953 = vmatmul.mubr.f32.gmra.mxu0 %v877
    %v954 = vpop.f32.mrf.mxu0
    %v955 = vadd.f32 0.0, %v954
    %v956 = vpop.f32.mrf.mxu0
    %957 = vmatprep.mubr.f32.mxu0 0.0
    %958 = vmatmul.mubr.f32.gmra.mxu0 %v880
    %v959 = vpop.f32.mrf.mxu0
    %v960 = vadd.f32 0.0, %v959
    %v961 = vpop.f32.mrf.mxu0
    %962 = vmatprep.mubr.f32.mxu0 0.0
    %963 = vmatmul.mubr.f32.gmra.mxu0 %v883
    %v964 = vpop.f32.mrf.mxu0
    %v965 = vadd.f32 0.0, %v964
    %v966 = vpop.f32.mrf.mxu0
    %967 = vmatprep.mubr.f32.mxu0 0.0
    %968 = vmatmul.mubr.f32.gmra.mxu0 %v886
    %v969 = vpop.f32.mrf.mxu0
    %v970 = vadd.f32 0.0, %v969
    %v971 = vpop.f32.mrf.mxu0
    %972 = vdwg.mxu0
    %v973 = vsel %vm216, %v857, 0.0
    %974 = vadd.xlane.f32.xlu0 %v973
    %v975 = vpop.xlane.xlu0 %974
    %v976 = vsel %vm216, %v859, 0.0
    %977 = vadd.xlane.f32.xlu0 %v976
    %v978 = vpop.xlane.xlu0 %977
    %v979 = vsel %vm216, %v861, 0.0
    %980 = vadd.xlane.f32.xlu0 %v979
    %v981 = vpop.xlane.xlu0 %980
    %v982 = vsel %vm216, %v863, 0.0
    %983 = vadd.xlane.f32.xlu0 %v982
    %v984 = vpop.xlane.xlu0 %983
    %v985 = vrcp.pop %v975
    %v986 = vmul.f32 %v955, %v985
    %v987 = vrcp.pop %v978
    %v988 = vmul.f32 %v960, %v987
    %v989 = vrcp.pop %v981
    %v990 = vmul.f32 %v965, %v989
    %v991 = vrcp.pop %v984
    %v992 = vmul.f32 %v970, %v991
    %993 = vrot.lane.b32.xlu0 %v448, 112
    %v994 = vpop.permute.xlu0 %993
    %995 = vrot.lane.b32.xlu0 %v449, 112
    %v996 = vpop.permute.xlu0 %995
    %997 = vrot.lane.b32.xlu0 %v450, 112
    %v998 = vpop.permute.xlu0 %997
    %999 = vrot.lane.b32.xlu0 %v451, 112
    %v1000 = vpop.permute.xlu0 %999
    %1001 = vrot.lane.b32.xlu0 %v418, 80
    %v1002 = vpop.permute.xlu0 %1001
    %1003 = vrot.lane.b32.xlu0 %v421, 80
    %v1004 = vpop.permute.xlu0 %1003
    %1005 = vrot.lane.b32.xlu0 %v426, 80
    %v1006 = vpop.permute.xlu0 %1005
    %1007 = vrot.lane.b32.xlu0 %v429, 80
    %v1008 = vpop.permute.xlu0 %1007
    %v1009 = vsel %vm464, %v994, 0
    %v1011 = vsel %vm464, %v996, 0
    %v1013 = vsel %vm464, %v998, 0
    %v1015 = vsel %vm464, %v1000, 0
    %v1017 = vsel %vm464, %v1002, 0
    %v1019 = vsel %vm464, %v1004, 0
    %v1021 = vsel %vm464, %v1006, 0
    %v1023 = vsel %vm464, %v1008, 0
    %1025 = vmatprep.subr.mxu0 0.0
    %1026 = vmatpush1.xpose.msra.mxu0 0.0
    %1027 = vmatprep.subr.mxu0 0.0
    %1028 = vmatpush1.xpose.msra.mxu0 0.0
    %1029 = vmatprep.subr.mxu0 0.0
    %1030 = vmatpush1.xpose.msra.mxu0 0.0
    %1031 = vmatprep.subr.mxu0 0.0
    %1032 = vmatpush1.xpose.msra.mxu0 0.0
    %1033 = vmatprep.subr.mxu0 0.0
    %1034 = vmatpush1.xpose.msra.mxu0 0.0
    %1035 = vmatprep.subr.mxu0 0.0
    %1036 = vmatpush1.xpose.msra.mxu0 0.0
    %1037 = vmatprep.subr.mxu0 0.0
    %1038 = vmatpush1.xpose.msra.mxu0 0.0
    %1039 = vmatprep.subr.mxu0 0.0
    %1040 = vmatpush1.xpose.msra.mxu0 0.0
    %1041 = vmatprep.subr.mxu0 0.0
    %1042 = vmatpush1.xpose.msra.mxu0 0.0
    %1043 = vmatprep.subr.mxu0 0.0
    %1044 = vmatpush1.xpose.msra.mxu0 0.0
    %1045 = vmatprep.subr.mxu0 0.0
    %1046 = vmatpush1.xpose.msra.mxu0 0.0
    %1047 = vmatprep.subr.mxu0 0.0
    %1048 = vmatpush1.xpose.msra.mxu0 0.0
    %1049 = vmatprep.subr.mxu0 0.0
    %1050 = vmatpush1.xpose.msra.mxu0 %v1023
    %1051 = vmatprep.subr.mxu0 0.0
    %1052 = vmatpush1.xpose.msra.mxu0 %v1021
    %1053 = vmatprep.subr.mxu0 0.0
    %1054 = vmatpush1.xpose.msra.mxu0 %v1019
    %1055 = vmatprep.subr.mxu0 0.0
    %1056 = vmatpush1.xpose.msra.mxu0 %v1017
    %1057 = vmatprep.subr.mxu0 0.0
    %1058 = vmatpush2.xpose.msra.mxu0 0.0
    %1059 = vmatprep.subr.mxu0 0.0
    %1060 = vmatpush2.xpose.msra.mxu0 0.0
    %1061 = vmatprep.subr.mxu0 0.0
    %1062 = vmatpush2.xpose.msra.mxu0 0.0
    %1063 = vmatprep.subr.mxu0 0.0
    %1064 = vmatpush2.xpose.msra.mxu0 0.0
    %1065 = vmatprep.subr.mxu0 0.0
    %1066 = vmatpush2.xpose.msra.mxu0 0.0
    %1067 = vmatprep.subr.mxu0 0.0
    %1068 = vmatpush2.xpose.msra.mxu0 0.0
    %1069 = vmatprep.subr.mxu0 0.0
    %1070 = vmatpush2.xpose.msra.mxu0 0.0
    %1071 = vmatprep.subr.mxu0 0.0
    %1072 = vmatpush2.xpose.msra.mxu0 0.0
    %1073 = vmatprep.subr.mxu0 0.0
    %1074 = vmatpush2.xpose.msra.mxu0 0.0
    %1075 = vmatprep.subr.mxu0 0.0
    %1076 = vmatpush2.xpose.msra.mxu0 0.0
    %1077 = vmatprep.subr.mxu0 0.0
    %1078 = vmatpush2.xpose.msra.mxu0 0.0
    %1079 = vmatprep.subr.mxu0 0.0
    %1080 = vmatpush2.xpose.msra.mxu0 0.0
    %1081 = vmatprep.subr.mxu0 0.0
    %1082 = vmatpush2.xpose.msra.mxu0 0.0
    %1083 = vmatprep.subr.mxu0 0.0
    %1084 = vmatpush2.xpose.msra.mxu0 0.0
    %1085 = vmatprep.subr.mxu0 0.0
    %1086 = vmatpush2.xpose.msra.mxu0 0.0
    %1087 = vmatprep.subr.mxu0 0.0
    %1088 = vmatpush2.xpose.msra.mxu0 0.0
    %1089 = vmatprep.mubr.f32.mxu0 0.0
    %1090 = vmatmul.mubr.f32.gmra.mxu0 %v1009
    %v1091 = vpop.f32.mrf.mxu0
    %v1092 = vadd.f32 0.0, %v1091
    %v1093 = vpop.f32.mrf.mxu0
    %1094 = vmatprep.mubr.f32.mxu0 0.0
    %1095 = vmatmul.mubr.f32.gmra.mxu0 %v1011
    %v1096 = vpop.f32.mrf.mxu0
    %v1097 = vadd.f32 0.0, %v1096
    %v1098 = vpop.f32.mrf.mxu0
    %1099 = vmatprep.mubr.f32.mxu0 0.0
    %1100 = vmatmul.mubr.f32.gmra.mxu0 %v1013
    %v1101 = vpop.f32.mrf.mxu0
    %v1102 = vadd.f32 0.0, %v1101
    %v1103 = vpop.f32.mrf.mxu0
    %1104 = vmatprep.mubr.f32.mxu0 0.0
    %1105 = vmatmul.mubr.f32.gmra.mxu0 %v1015
    %v1106 = vpop.f32.mrf.mxu0
    %v1107 = vadd.f32 0.0, %v1106
    %v1108 = vpop.f32.mrf.mxu0
    %1109 = vdwg.mxu0
    %v1110 = vsel %vm216, %v1092, -inf
    %1111 = vmax.xlane.f32.xlu0 %v1110
    %v1112 = vpop.xlane.xlu0 %1111
    %v1113 = vsel %vm216, %v1097, -inf
    %1114 = vmax.xlane.f32.xlu0 %v1113
    %v1115 = vpop.xlane.xlu0 %1114
    %v1116 = vsel %vm216, %v1102, -inf
    %1117 = vmax.xlane.f32.xlu0 %v1116
    %v1118 = vpop.xlane.xlu0 %1117
    %v1119 = vsel %vm216, %v1107, -inf
    %1120 = vmax.xlane.f32.xlu0 %v1119
    %v1121 = vpop.xlane.xlu0 %1120
    %v1122 = vsub.f32 %v1092, %v1112
    %v1123 = vsub.f32 %v1097, %v1115
    %v1124 = vsub.f32 %v1102, %v1118
    %v1125 = vsub.f32 %v1107, %v1121
    %v1126 = vmul.f32 %v1122, 1.442695
    %v1127 = vpow.pop %v1126
    %v1128 = vmul.f32 %v1123, 1.442695
    %v1129 = vpow.pop %v1128
    %v1130 = vmul.f32 %v1124, 1.442695
    %v1131 = vpow.pop %v1130
    %v1132 = vmul.f32 %v1125, 1.442695
    %v1133 = vpow.pop %v1132
    %1134 = vrot.lane.b32.xlu0 %v418, 48
    %v1135 = vpop.permute.xlu0 %1134
    %1136 = vrot.lane.b32.xlu0 %v421, 48
    %v1137 = vpop.permute.xlu0 %1136
    %1138 = vrot.lane.b32.xlu0 %v426, 48
    %v1139 = vpop.permute.xlu0 %1138
    %1140 = vrot.lane.b32.xlu0 %v429, 48
    %v1141 = vpop.permute.xlu0 %1140
    %v1147 = vsel %vm216, %v1127, 0
    %v1150 = vsel %vm216, %v1129, 0
    %v1153 = vsel %vm216, %v1131, 0
    %v1156 = vsel %vm216, %v1133, 0
    %1158 = vmatprep.subr.mxu0 0.0
    %1159 = vmatpush1.msra.mxu0 0.0
    %1160 = vmatprep.subr.mxu0 0.0
    %1161 = vmatpush1.msra.mxu0 0.0
    %1162 = vmatprep.subr.mxu0 0.0
    %1163 = vmatpush1.msra.mxu0 0.0
    %1164 = vmatprep.subr.mxu0 0.0
    %1165 = vmatpush1.msra.mxu0 0.0
    %1166 = vmatprep.subr.mxu0 0.0
    %1167 = vmatpush1.msra.mxu0 0.0
    %1168 = vmatprep.subr.mxu0 0.0
    %1169 = vmatpush1.msra.mxu0 0.0
    %1170 = vmatprep.subr.mxu0 0.0
    %1171 = vmatpush1.msra.mxu0 0.0
    %1172 = vmatprep.subr.mxu0 0.0
    %1173 = vmatpush1.msra.mxu0 0.0
    %1174 = vmatprep.subr.mxu0 0.0
    %1175 = vmatpush1.msra.mxu0 0.0
    %1176 = vmatprep.subr.mxu0 0.0
    %1177 = vmatpush1.msra.mxu0 0.0
    %1178 = vmatprep.subr.mxu0 0.0
    %1179 = vmatpush1.msra.mxu0 0.0
    %1180 = vmatprep.subr.mxu0 0.0
    %1181 = vmatpush1.msra.mxu0 0.0
    %1182 = vmatprep.subr.mxu0 0.0
    %1183 = vmatpush1.msra.mxu0 %v1141
    %1184 = vmatprep.subr.mxu0 0.0
    %1185 = vmatpush1.msra.mxu0 %v1139
    %1186 = vmatprep.subr.mxu0 0.0
    %1187 = vmatpush1.msra.mxu0 %v1137
    %1188 = vmatprep.subr.mxu0 0.0
    %1189 = vmatpush1.msra.mxu0 %v1135
    %1190 = vmatprep.subr.mxu0 0.0
    %1191 = vmatpush2.msra.mxu0 0.0
    %1192 = vmatprep.subr.mxu0 0.0
    %1193 = vmatpush2.msra.mxu0 0.0
    %1194 = vmatprep.subr.mxu0 0.0
    %1195 = vmatpush2.msra.mxu0 0.0
    %1196 = vmatprep.subr.mxu0 0.0
    %1197 = vmatpush2.msra.mxu0 0.0
    %1198 = vmatprep.subr.mxu0 0.0
    %1199 = vmatpush2.msra.mxu0 0.0
    %1200 = vmatprep.subr.mxu0 0.0
    %1201 = vmatpush2.msra.mxu0 0.0
    %1202 = vmatprep.subr.mxu0 0.0
    %1203 = vmatpush2.msra.mxu0 0.0
    %1204 = vmatprep.subr.mxu0 0.0
    %1205 = vmatpush2.msra.mxu0 0.0
    %1206 = vmatprep.subr.mxu0 0.0
    %1207 = vmatpush2.msra.mxu0 0.0
    %1208 = vmatprep.subr.mxu0 0.0
    %1209 = vmatpush2.msra.mxu0 0.0
    %1210 = vmatprep.subr.mxu0 0.0
    %1211 = vmatpush2.msra.mxu0 0.0
    %1212 = vmatprep.subr.mxu0 0.0
    %1213 = vmatpush2.msra.mxu0 0.0
    %1214 = vmatprep.subr.mxu0 0.0
    %1215 = vmatpush2.msra.mxu0 0.0
    %1216 = vmatprep.subr.mxu0 0.0
    %1217 = vmatpush2.msra.mxu0 0.0
    %1218 = vmatprep.subr.mxu0 0.0
    %1219 = vmatpush2.msra.mxu0 0.0
    %1220 = vmatprep.subr.mxu0 0.0
    %1221 = vmatpush2.msra.mxu0 0.0
    %1222 = vmatprep.mubr.f32.mxu0 0.0
    %1223 = vmatmul.mubr.f32.gmra.mxu0 %v1147
    %v1224 = vpop.f32.mrf.mxu0
    %v1225 = vadd.f32 0.0, %v1224
    %v1226 = vpop.f32.mrf.mxu0
    %1227 = vmatprep.mubr.f32.mxu0 0.0
    %1228 = vmatmul.mubr.f32.gmra.mxu0 %v1150
    %v1229 = vpop.f32.mrf.mxu0
    %v1230 = vadd.f32 0.0, %v1229
    %v1231 = vpop.f32.mrf.mxu0
    %1232 = vmatprep.mubr.f32.mxu0 0.0
    %1233 = vmatmul.mubr.f32.gmra.mxu0 %v1153
    %v1234 = vpop.f32.mrf.mxu0
    %v1235 = vadd.f32 0.0, %v1234
    %v1236 = vpop.f32.mrf.mxu0
    %1237 = vmatprep.mubr.f32.mxu0 0.0
    %1238 = vmatmul.mubr.f32.gmra.mxu0 %v1156
    %v1239 = vpop.f32.mrf.mxu0
    %v1240 = vadd.f32 0.0, %v1239
    %v1241 = vpop.f32.mrf.mxu0
    %1242 = vdwg.mxu0
    %v1243 = vsel %vm216, %v1127, 0.0
    %1244 = vadd.xlane.f32.xlu0 %v1243
    %v1245 = vpop.xlane.xlu0 %1244
    %v1246 = vsel %vm216, %v1129, 0.0
    %1247 = vadd.xlane.f32.xlu0 %v1246
    %v1248 = vpop.xlane.xlu0 %1247
    %v1249 = vsel %vm216, %v1131, 0.0
    %1250 = vadd.xlane.f32.xlu0 %v1249
    %v1251 = vpop.xlane.xlu0 %1250
    %v1252 = vsel %vm216, %v1133, 0.0
    %1253 = vadd.xlane.f32.xlu0 %v1252
    %v1254 = vpop.xlane.xlu0 %1253
    %v1255 = vrcp.pop %v1245
    %v1256 = vmul.f32 %v1225, %v1255
    %v1257 = vrcp.pop %v1248
    %v1258 = vmul.f32 %v1230, %v1257
    %v1259 = vrcp.pop %v1251
    %v1260 = vmul.f32 %v1235, %v1259
    %v1261 = vrcp.pop %v1254
    %v1262 = vmul.f32 %v1240, %v1261
    %1263 = vrot.lane.b32.xlu0 %v448, 104
    %v1264 = vpop.permute.xlu0 %1263
    %1265 = vrot.lane.b32.xlu0 %v449, 104
    %v1266 = vpop.permute.xlu0 %1265
    %1267 = vrot.lane.b32.xlu0 %v450, 104
    %v1268 = vpop.permute.xlu0 %1267
    %1269 = vrot.lane.b32.xlu0 %v451, 104
    %v1270 = vpop.permute.xlu0 %1269
    %1271 = vrot.lane.b32.xlu0 %v418, 72
    %v1272 = vpop.permute.xlu0 %1271
    %1273 = vrot.lane.b32.xlu0 %v421, 72
    %v1274 = vpop.permute.xlu0 %1273
    %1275 = vrot.lane.b32.xlu0 %v426, 72
    %v1276 = vpop.permute.xlu0 %1275
    %1277 = vrot.lane.b32.xlu0 %v429, 72
    %v1278 = vpop.permute.xlu0 %1277
    %v1279 = vsel %vm464, %v1264, 0
    %v1281 = vsel %vm464, %v1266, 0
    %v1283 = vsel %vm464, %v1268, 0
    %v1285 = vsel %vm464, %v1270, 0
    %v1287 = vsel %vm464, %v1272, 0
    %v1289 = vsel %vm464, %v1274, 0
    %v1291 = vsel %vm464, %v1276, 0
    %v1293 = vsel %vm464, %v1278, 0
    %1295 = vmatprep.subr.mxu0 0.0
    %1296 = vmatpush1.xpose.msra.mxu0 0.0
    %1297 = vmatprep.subr.mxu0 0.0
    %1298 = vmatpush1.xpose.msra.mxu0 0.0
    %1299 = vmatprep.subr.mxu0 0.0
    %1300 = vmatpush1.xpose.msra.mxu0 0.0
    %1301 = vmatprep.subr.mxu0 0.0
    %1302 = vmatpush1.xpose.msra.mxu0 0.0
    %1303 = vmatprep.subr.mxu0 0.0
    %1304 = vmatpush1.xpose.msra.mxu0 0.0
    %1305 = vmatprep.subr.mxu0 0.0
    %1306 = vmatpush1.xpose.msra.mxu0 0.0
    %1307 = vmatprep.subr.mxu0 0.0
    %1308 = vmatpush1.xpose.msra.mxu0 0.0
    %1309 = vmatprep.subr.mxu0 0.0
    %1310 = vmatpush1.xpose.msra.mxu0 0.0
    %1311 = vmatprep.subr.mxu0 0.0
    %1312 = vmatpush1.xpose.msra.mxu0 0.0
    %1313 = vmatprep.subr.mxu0 0.0
    %1314 = vmatpush1.xpose.msra.mxu0 0.0
    %1315 = vmatprep.subr.mxu0 0.0
    %1316 = vmatpush1.xpose.msra.mxu0 0.0
    %1317 = vmatprep.subr.mxu0 0.0
    %1318 = vmatpush1.xpose.msra.mxu0 0.0
    %1319 = vmatprep.subr.mxu0 0.0
    %1320 = vmatpush1.xpose.msra.mxu0 %v1293
    %1321 = vmatprep.subr.mxu0 0.0
    %1322 = vmatpush1.xpose.msra.mxu0 %v1291
    %1323 = vmatprep.subr.mxu0 0.0
    %1324 = vmatpush1.xpose.msra.mxu0 %v1289
    %1325 = vmatprep.subr.mxu0 0.0
    %1326 = vmatpush1.xpose.msra.mxu0 %v1287
    %1327 = vmatprep.subr.mxu0 0.0
    %1328 = vmatpush2.xpose.msra.mxu0 0.0
    %1329 = vmatprep.subr.mxu0 0.0
    %1330 = vmatpush2.xpose.msra.mxu0 0.0
    %1331 = vmatprep.subr.mxu0 0.0
    %1332 = vmatpush2.xpose.msra.mxu0 0.0
    %1333 = vmatprep.subr.mxu0 0.0
    %1334 = vmatpush2.xpose.msra.mxu0 0.0
    %1335 = vmatprep.subr.mxu0 0.0
    %1336 = vmatpush2.xpose.msra.mxu0 0.0
    %1337 = vmatprep.subr.mxu0 0.0
    %1338 = vmatpush2.xpose.msra.mxu0 0.0
    %1339 = vmatprep.subr.mxu0 0.0
    %1340 = vmatpush2.xpose.msra.mxu0 0.0
    %1341 = vmatprep.subr.mxu0 0.0
    %1342 = vmatpush2.xpose.msra.mxu0 0.0
    %1343 = vmatprep.subr.mxu0 0.0
    %1344 = vmatpush2.xpose.msra.mxu0 0.0
    %1345 = vmatprep.subr.mxu0 0.0
    %1346 = vmatpush2.xpose.msra.mxu0 0.0
    %1347 = vmatprep.subr.mxu0 0.0
    %1348 = vmatpush2.xpose.msra.mxu0 0.0
    %1349 = vmatprep.subr.mxu0 0.0
    %1350 = vmatpush2.xpose.msra.mxu0 0.0
    %1351 = vmatprep.subr.mxu0 0.0
    %1352 = vmatpush2.xpose.msra.mxu0 0.0
    %1353 = vmatprep.subr.mxu0 0.0
    %1354 = vmatpush2.xpose.msra.mxu0 0.0
    %1355 = vmatprep.subr.mxu0 0.0
    %1356 = vmatpush2.xpose.msra.mxu0 0.0
    %1357 = vmatprep.subr.mxu0 0.0
    %1358 = vmatpush2.xpose.msra.mxu0 0.0
    %1359 = vmatprep.mubr.f32.mxu0 0.0
    %1360 = vmatmul.mubr.f32.gmra.mxu0 %v1279
    %v1361 = vpop.f32.mrf.mxu0
    %v1362 = vadd.f32 0.0, %v1361
    %v1363 = vpop.f32.mrf.mxu0
    %1364 = vmatprep.mubr.f32.mxu0 0.0
    %1365 = vmatmul.mubr.f32.gmra.mxu0 %v1281
    %v1366 = vpop.f32.mrf.mxu0
    %v1367 = vadd.f32 0.0, %v1366
    %v1368 = vpop.f32.mrf.mxu0
    %1369 = vmatprep.mubr.f32.mxu0 0.0
    %1370 = vmatmul.mubr.f32.gmra.mxu0 %v1283
    %v1371 = vpop.f32.mrf.mxu0
    %v1372 = vadd.f32 0.0, %v1371
    %v1373 = vpop.f32.mrf.mxu0
    %1374 = vmatprep.mubr.f32.mxu0 0.0
    %1375 = vmatmul.mubr.f32.gmra.mxu0 %v1285
    %v1376 = vpop.f32.mrf.mxu0
    %v1377 = vadd.f32 0.0, %v1376
    %v1378 = vpop.f32.mrf.mxu0
    %1379 = vdwg.mxu0
    %v1380 = vsel %vm216, %v1362, -inf
    %1381 = vmax.xlane.f32.xlu0 %v1380
    %v1382 = vpop.xlane.xlu0 %1381
    %v1383 = vsel %vm216, %v1367, -inf
    %1384 = vmax.xlane.f32.xlu0 %v1383
    %v1385 = vpop.xlane.xlu0 %1384
    %v1386 = vsel %vm216, %v1372, -inf
    %1387 = vmax.xlane.f32.xlu0 %v1386
    %v1388 = vpop.xlane.xlu0 %1387
    %v1389 = vsel %vm216, %v1377, -inf
    %1390 = vmax.xlane.f32.xlu0 %v1389
    %v1391 = vpop.xlane.xlu0 %1390
    %v1392 = vsub.f32 %v1362, %v1382
    %v1393 = vsub.f32 %v1367, %v1385
    %v1394 = vsub.f32 %v1372, %v1388
    %v1395 = vsub.f32 %v1377, %v1391
    %v1396 = vmul.f32 %v1392, 1.442695
    %v1397 = vpow.pop %v1396
    %v1398 = vmul.f32 %v1393, 1.442695
    %v1399 = vpow.pop %v1398
    %v1400 = vmul.f32 %v1394, 1.442695
    %v1401 = vpow.pop %v1400
    %v1402 = vmul.f32 %v1395, 1.442695
    %v1403 = vpow.pop %v1402
    %1404 = vrot.lane.b32.xlu0 %v418, 40
    %v1405 = vpop.permute.xlu0 %1404
    %1406 = vrot.lane.b32.xlu0 %v421, 40
    %v1407 = vpop.permute.xlu0 %1406
    %1408 = vrot.lane.b32.xlu0 %v426, 40
    %v1409 = vpop.permute.xlu0 %1408
    %1410 = vrot.lane.b32.xlu0 %v429, 40
    %v1411 = vpop.permute.xlu0 %1410
    %v1417 = vsel %vm216, %v1397, 0
    %v1420 = vsel %vm216, %v1399, 0
    %v1423 = vsel %vm216, %v1401, 0
    %v1426 = vsel %vm216, %v1403, 0
    %1428 = vmatprep.subr.mxu0 0.0
    %1429 = vmatpush1.msra.mxu0 0.0
    %1430 = vmatprep.subr.mxu0 0.0
    %1431 = vmatpush1.msra.mxu0 0.0
    %1432 = vmatprep.subr.mxu0 0.0
    %1433 = vmatpush1.msra.mxu0 0.0
    %1434 = vmatprep.subr.mxu0 0.0
    %1435 = vmatpush1.msra.mxu0 0.0
    %1436 = vmatprep.subr.mxu0 0.0
    %1437 = vmatpush1.msra.mxu0 0.0
    %1438 = vmatprep.subr.mxu0 0.0
    %1439 = vmatpush1.msra.mxu0 0.0
    %1440 = vmatprep.subr.mxu0 0.0
    %1441 = vmatpush1.msra.mxu0 0.0
    %1442 = vmatprep.subr.mxu0 0.0
    %1443 = vmatpush1.msra.mxu0 0.0
    %1444 = vmatprep.subr.mxu0 0.0
    %1445 = vmatpush1.msra.mxu0 0.0
    %1446 = vmatprep.subr.mxu0 0.0
    %1447 = vmatpush1.msra.mxu0 0.0
    %1448 = vmatprep.subr.mxu0 0.0
    %1449 = vmatpush1.msra.mxu0 0.0
    %1450 = vmatprep.subr.mxu0 0.0
    %1451 = vmatpush1.msra.mxu0 0.0
    %1452 = vmatprep.subr.mxu0 0.0
    %1453 = vmatpush1.msra.mxu0 %v1411
    %1454 = vmatprep.subr.mxu0 0.0
    %1455 = vmatpush1.msra.mxu0 %v1409
    %1456 = vmatprep.subr.mxu0 0.0
    %1457 = vmatpush1.msra.mxu0 %v1407
    %1458 = vmatprep.subr.mxu0 0.0
    %1459 = vmatpush1.msra.mxu0 %v1405
    %1460 = vmatprep.subr.mxu0 0.0
    %1461 = vmatpush2.msra.mxu0 0.0
    %1462 = vmatprep.subr.mxu0 0.0
    %1463 = vmatpush2.msra.mxu0 0.0
    %1464 = vmatprep.subr.mxu0 0.0
    %1465 = vmatpush2.msra.mxu0 0.0
    %1466 = vmatprep.subr.mxu0 0.0
    %1467 = vmatpush2.msra.mxu0 0.0
    %1468 = vmatprep.subr.mxu0 0.0
    %1469 = vmatpush2.msra.mxu0 0.0
    %1470 = vmatprep.subr.mxu0 0.0
    %1471 = vmatpush2.msra.mxu0 0.0
    %1472 = vmatprep.subr.mxu0 0.0
    %1473 = vmatpush2.msra.mxu0 0.0
    %1474 = vmatprep.subr.mxu0 0.0
    %1475 = vmatpush2.msra.mxu0 0.0
    %1476 = vmatprep.subr.mxu0 0.0
    %1477 = vmatpush2.msra.mxu0 0.0
    %1478 = vmatprep.subr.mxu0 0.0
    %1479 = vmatpush2.msra.mxu0 0.0
    %1480 = vmatprep.subr.mxu0 0.0
    %1481 = vmatpush2.msra.mxu0 0.0
    %1482 = vmatprep.subr.mxu0 0.0
    %1483 = vmatpush2.msra.mxu0 0.0
    %1484 = vmatprep.subr.mxu0 0.0
    %1485 = vmatpush2.msra.mxu0 0.0
    %1486 = vmatprep.subr.mxu0 0.0
    %1487 = vmatpush2.msra.mxu0 0.0
    %1488 = vmatprep.subr.mxu0 0.0
    %1489 = vmatpush2.msra.mxu0 0.0
    %1490 = vmatprep.subr.mxu0 0.0
    %1491 = vmatpush2.msra.mxu0 0.0
    %1492 = vmatprep.mubr.f32.mxu0 0.0
    %1493 = vmatmul.mubr.f32.gmra.mxu0 %v1417
    %v1494 = vpop.f32.mrf.mxu0
    %v1495 = vadd.f32 0.0, %v1494
    %v1496 = vpop.f32.mrf.mxu0
    %1497 = vmatprep.mubr.f32.mxu0 0.0
    %1498 = vmatmul.mubr.f32.gmra.mxu0 %v1420
    %v1499 = vpop.f32.mrf.mxu0
    %v1500 = vadd.f32 0.0, %v1499
    %v1501 = vpop.f32.mrf.mxu0
    %1502 = vmatprep.mubr.f32.mxu0 0.0
    %1503 = vmatmul.mubr.f32.gmra.mxu0 %v1423
    %v1504 = vpop.f32.mrf.mxu0
    %v1505 = vadd.f32 0.0, %v1504
    %v1506 = vpop.f32.mrf.mxu0
    %1507 = vmatprep.mubr.f32.mxu0 0.0
    %1508 = vmatmul.mubr.f32.gmra.mxu0 %v1426
    %v1509 = vpop.f32.mrf.mxu0
    %v1510 = vadd.f32 0.0, %v1509
    %v1511 = vpop.f32.mrf.mxu0
    %1512 = vdwg.mxu0
    %v1513 = vsel %vm216, %v1397, 0.0
    %1514 = vadd.xlane.f32.xlu0 %v1513
    %v1515 = vpop.xlane.xlu0 %1514
    %v1516 = vsel %vm216, %v1399, 0.0
    %1517 = vadd.xlane.f32.xlu0 %v1516
    %v1518 = vpop.xlane.xlu0 %1517
    %v1519 = vsel %vm216, %v1401, 0.0
    %1520 = vadd.xlane.f32.xlu0 %v1519
    %v1521 = vpop.xlane.xlu0 %1520
    %v1522 = vsel %vm216, %v1403, 0.0
    %1523 = vadd.xlane.f32.xlu0 %v1522
    %v1524 = vpop.xlane.xlu0 %1523
    %v1525 = vrcp.pop %v1515
    %v1526 = vmul.f32 %v1495, %v1525
    %v1527 = vrcp.pop %v1518
    %v1528 = vmul.f32 %v1500, %v1527
    %v1529 = vrcp.pop %v1521
    %v1530 = vmul.f32 %v1505, %v1529
    %v1531 = vrcp.pop %v1524
    %v1532 = vmul.f32 %v1510, %v1531
    %v1533 = vmul.f32 %v434, 0.35355338
    %v1534 = vmul.f32 %v437, 0.35355338
    %v1535 = vmul.f32 %v442, 0.35355338
    %v1536 = vmul.f32 %v445, 0.35355338
    %1541 = vrot.lane.b32.xlu0 %v434, 96
    %v1542 = vpop.permute.xlu0 %1541
    %1543 = vrot.lane.b32.xlu0 %v437, 96
    %v1544 = vpop.permute.xlu0 %1543
    %1545 = vrot.lane.b32.xlu0 %v442, 96
    %v1546 = vpop.permute.xlu0 %1545
    %1547 = vrot.lane.b32.xlu0 %v445, 96
    %v1548 = vpop.permute.xlu0 %1547
    %v1550 = vsel %vm464, %v1533, 0
    %v1553 = vsel %vm464, %v1534, 0
    %v1556 = vsel %vm464, %v1535, 0
    %v1559 = vsel %vm464, %v1536, 0
    %v1561 = vsel %vm464, %v1542, 0
    %v1563 = vsel %vm464, %v1544, 0
    %v1565 = vsel %vm464, %v1546, 0
    %v1567 = vsel %vm464, %v1548, 0
    %1569 = vmatprep.subr.mxu0 0.0
    %1570 = vmatpush1.xpose.msra.mxu0 0.0
    %1571 = vmatprep.subr.mxu0 0.0
    %1572 = vmatpush1.xpose.msra.mxu0 0.0
    %1573 = vmatprep.subr.mxu0 0.0
    %1574 = vmatpush1.xpose.msra.mxu0 0.0
    %1575 = vmatprep.subr.mxu0 0.0
    %1576 = vmatpush1.xpose.msra.mxu0 0.0
    %1577 = vmatprep.subr.mxu0 0.0
    %1578 = vmatpush1.xpose.msra.mxu0 0.0
    %1579 = vmatprep.subr.mxu0 0.0
    %1580 = vmatpush1.xpose.msra.mxu0 0.0
    %1581 = vmatprep.subr.mxu0 0.0
    %1582 = vmatpush1.xpose.msra.mxu0 0.0
    %1583 = vmatprep.subr.mxu0 0.0
    %1584 = vmatpush1.xpose.msra.mxu0 0.0
    %1585 = vmatprep.subr.mxu0 0.0
    %1586 = vmatpush1.xpose.msra.mxu0 0.0
    %1587 = vmatprep.subr.mxu0 0.0
    %1588 = vmatpush1.xpose.msra.mxu0 0.0
    %1589 = vmatprep.subr.mxu0 0.0
    %1590 = vmatpush1.xpose.msra.mxu0 0.0
    %1591 = vmatprep.subr.mxu0 0.0
    %1592 = vmatpush1.xpose.msra.mxu0 0.0
    %1593 = vmatprep.subr.mxu0 0.0
    %1594 = vmatpush1.xpose.msra.mxu0 %v1567
    %1595 = vmatprep.subr.mxu0 0.0
    %1596 = vmatpush1.xpose.msra.mxu0 %v1565
    %1597 = vmatprep.subr.mxu0 0.0
    %1598 = vmatpush1.xpose.msra.mxu0 %v1563
    %1599 = vmatprep.subr.mxu0 0.0
    %1600 = vmatpush1.xpose.msra.mxu0 %v1561
    %1601 = vmatprep.subr.mxu0 0.0
    %1602 = vmatpush2.xpose.msra.mxu0 0.0
    %1603 = vmatprep.subr.mxu0 0.0
    %1604 = vmatpush2.xpose.msra.mxu0 0.0
    %1605 = vmatprep.subr.mxu0 0.0
    %1606 = vmatpush2.xpose.msra.mxu0 0.0
    %1607 = vmatprep.subr.mxu0 0.0
    %1608 = vmatpush2.xpose.msra.mxu0 0.0
    %1609 = vmatprep.subr.mxu0 0.0
    %1610 = vmatpush2.xpose.msra.mxu0 0.0
    %1611 = vmatprep.subr.mxu0 0.0
    %1612 = vmatpush2.xpose.msra.mxu0 0.0
    %1613 = vmatprep.subr.mxu0 0.0
    %1614 = vmatpush2.xpose.msra.mxu0 0.0
    %1615 = vmatprep.subr.mxu0 0.0
    %1616 = vmatpush2.xpose.msra.mxu0 0.0
    %1617 = vmatprep.subr.mxu0 0.0
    %1618 = vmatpush2.xpose.msra.mxu0 0.0
    %1619 = vmatprep.subr.mxu0 0.0
    %1620 = vmatpush2.xpose.msra.mxu0 0.0
    %1621 = vmatprep.subr.mxu0 0.0
    %1622 = vmatpush2.xpose.msra.mxu0 0.0
    %1623 = vmatprep.subr.mxu0 0.0
    %1624 = vmatpush2.xpose.msra.mxu0 0.0
    %1625 = vmatprep.subr.mxu0 0.0
    %1626 = vmatpush2.xpose.msra.mxu0 0.0
    %1627 = vmatprep.subr.mxu0 0.0
    %1628 = vmatpush2.xpose.msra.mxu0 0.0
    %1629 = vmatprep.subr.mxu0 0.0
    %1630 = vmatpush2.xpose.msra.mxu0 0.0
    %1631 = vmatprep.subr.mxu0 0.0
    %1632 = vmatpush2.xpose.msra.mxu0 0.0
    %1633 = vmatprep.mubr.f32.mxu0 0.0
    %1634 = vmatmul.mubr.f32.gmra.mxu0 %v1550
    %v1635 = vpop.f32.mrf.mxu0
    %v1636 = vadd.f32 0.0, %v1635
    %v1637 = vpop.f32.mrf.mxu0
    %1638 = vmatprep.mubr.f32.mxu0 0.0
    %1639 = vmatmul.mubr.f32.gmra.mxu0 %v1553
    %v1640 = vpop.f32.mrf.mxu0
    %v1641 = vadd.f32 0.0, %v1640
    %v1642 = vpop.f32.mrf.mxu0
    %1643 = vmatprep.mubr.f32.mxu0 0.0
    %1644 = vmatmul.mubr.f32.gmra.mxu0 %v1556
    %v1645 = vpop.f32.mrf.mxu0
    %v1646 = vadd.f32 0.0, %v1645
    %v1647 = vpop.f32.mrf.mxu0
    %1648 = vmatprep.mubr.f32.mxu0 0.0
    %1649 = vmatmul.mubr.f32.gmra.mxu0 %v1559
    %v1650 = vpop.f32.mrf.mxu0
    %v1651 = vadd.f32 0.0, %v1650
    %v1652 = vpop.f32.mrf.mxu0
    %1653 = vdwg.mxu0
    %v1654 = vsel %vm216, %v1636, -inf
    %1655 = vmax.xlane.f32.xlu0 %v1654
    %v1656 = vpop.xlane.xlu0 %1655
    %v1657 = vsel %vm216, %v1641, -inf
    %1658 = vmax.xlane.f32.xlu0 %v1657
    %v1659 = vpop.xlane.xlu0 %1658
    %v1660 = vsel %vm216, %v1646, -inf
    %1661 = vmax.xlane.f32.xlu0 %v1660
    %v1662 = vpop.xlane.xlu0 %1661
    %v1663 = vsel %vm216, %v1651, -inf
    %1664 = vmax.xlane.f32.xlu0 %v1663
    %v1665 = vpop.xlane.xlu0 %1664
    %v1666 = vsub.f32 %v1636, %v1656
    %v1667 = vsub.f32 %v1641, %v1659
    %v1668 = vsub.f32 %v1646, %v1662
    %v1669 = vsub.f32 %v1651, %v1665
    %v1670 = vmul.f32 %v1666, 1.442695
    %v1671 = vpow.pop %v1670
    %v1672 = vmul.f32 %v1667, 1.442695
    %v1673 = vpow.pop %v1672
    %v1674 = vmul.f32 %v1668, 1.442695
    %v1675 = vpow.pop %v1674
    %v1676 = vmul.f32 %v1669, 1.442695
    %v1677 = vpow.pop %v1676
    %1678 = vrot.lane.b32.xlu0 %v434, 64
    %v1679 = vpop.permute.xlu0 %1678
    %1680 = vrot.lane.b32.xlu0 %v437, 64
    %v1681 = vpop.permute.xlu0 %1680
    %1682 = vrot.lane.b32.xlu0 %v442, 64
    %v1683 = vpop.permute.xlu0 %1682
    %1684 = vrot.lane.b32.xlu0 %v445, 64
    %v1685 = vpop.permute.xlu0 %1684
    %v1691 = vsel %vm216, %v1671, 0
    %v1694 = vsel %vm216, %v1673, 0
    %v1697 = vsel %vm216, %v1675, 0
    %v1700 = vsel %vm216, %v1677, 0
    %1702 = vmatprep.subr.mxu0 0.0
    %1703 = vmatpush1.msra.mxu0 0.0
    %1704 = vmatprep.subr.mxu0 0.0
    %1705 = vmatpush1.msra.mxu0 0.0
    %1706 = vmatprep.subr.mxu0 0.0
    %1707 = vmatpush1.msra.mxu0 0.0
    %1708 = vmatprep.subr.mxu0 0.0
    %1709 = vmatpush1.msra.mxu0 0.0
    %1710 = vmatprep.subr.mxu0 0.0
    %1711 = vmatpush1.msra.mxu0 0.0
    %1712 = vmatprep.subr.mxu0 0.0
    %1713 = vmatpush1.msra.mxu0 0.0
    %1714 = vmatprep.subr.mxu0 0.0
    %1715 = vmatpush1.msra.mxu0 0.0
    %1716 = vmatprep.subr.mxu0 0.0
    %1717 = vmatpush1.msra.mxu0 0.0
    %1718 = vmatprep.subr.mxu0 0.0
    %1719 = vmatpush1.msra.mxu0 0.0
    %1720 = vmatprep.subr.mxu0 0.0
    %1721 = vmatpush1.msra.mxu0 0.0
    %1722 = vmatprep.subr.mxu0 0.0
    %1723 = vmatpush1.msra.mxu0 0.0
    %1724 = vmatprep.subr.mxu0 0.0
    %1725 = vmatpush1.msra.mxu0 0.0
    %1726 = vmatprep.subr.mxu0 0.0
    %1727 = vmatpush1.msra.mxu0 %v1685
    %1728 = vmatprep.subr.mxu0 0.0
    %1729 = vmatpush1.msra.mxu0 %v1683
    %1730 = vmatprep.subr.mxu0 0.0
    %1731 = vmatpush1.msra.mxu0 %v1681
    %1732 = vmatprep.subr.mxu0 0.0
    %1733 = vmatpush1.msra.mxu0 %v1679
    %1734 = vmatprep.subr.mxu0 0.0
    %1735 = vmatpush2.msra.mxu0 0.0
    %1736 = vmatprep.subr.mxu0 0.0
    %1737 = vmatpush2.msra.mxu0 0.0
    %1738 = vmatprep.subr.mxu0 0.0
    %1739 = vmatpush2.msra.mxu0 0.0
    %1740 = vmatprep.subr.mxu0 0.0
    %1741 = vmatpush2.msra.mxu0 0.0
    %1742 = vmatprep.subr.mxu0 0.0
    %1743 = vmatpush2.msra.mxu0 0.0
    %1744 = vmatprep.subr.mxu0 0.0
    %1745 = vmatpush2.msra.mxu0 0.0
    %1746 = vmatprep.subr.mxu0 0.0
    %1747 = vmatpush2.msra.mxu0 0.0
    %1748 = vmatprep.subr.mxu0 0.0
    %1749 = vmatpush2.msra.mxu0 0.0
    %1750 = vmatprep.subr.mxu0 0.0
    %1751 = vmatpush2.msra.mxu0 0.0
    %1752 = vmatprep.subr.mxu0 0.0
    %1753 = vmatpush2.msra.mxu0 0.0
    %1754 = vmatprep.subr.mxu0 0.0
    %1755 = vmatpush2.msra.mxu0 0.0
    %1756 = vmatprep.subr.mxu0 0.0
    %1757 = vmatpush2.msra.mxu0 0.0
    %1758 = vmatprep.subr.mxu0 0.0
    %1759 = vmatpush2.msra.mxu0 0.0
    %1760 = vmatprep.subr.mxu0 0.0
    %1761 = vmatpush2.msra.mxu0 0.0
    %1762 = vmatprep.subr.mxu0 0.0
    %1763 = vmatpush2.msra.mxu0 0.0
    %1764 = vmatprep.subr.mxu0 0.0
    %1765 = vmatpush2.msra.mxu0 0.0
    %1766 = vmatprep.mubr.f32.mxu0 0.0
    %1767 = vmatmul.mubr.f32.gmra.mxu0 %v1691
    %v1768 = vpop.f32.mrf.mxu0
    %v1769 = vadd.f32 0.0, %v1768
    %v1770 = vpop.f32.mrf.mxu0
    %1771 = vmatprep.mubr.f32.mxu0 0.0
    %1772 = vmatmul.mubr.f32.gmra.mxu0 %v1694
    %v1773 = vpop.f32.mrf.mxu0
    %v1774 = vadd.f32 0.0, %v1773
    %v1775 = vpop.f32.mrf.mxu0
    %1776 = vmatprep.mubr.f32.mxu0 0.0
    %1777 = vmatmul.mubr.f32.gmra.mxu0 %v1697
    %v1778 = vpop.f32.mrf.mxu0
    %v1779 = vadd.f32 0.0, %v1778
    %v1780 = vpop.f32.mrf.mxu0
    %1781 = vmatprep.mubr.f32.mxu0 0.0
    %1782 = vmatmul.mubr.f32.gmra.mxu0 %v1700
    %v1783 = vpop.f32.mrf.mxu0
    %v1784 = vadd.f32 0.0, %v1783
    %v1785 = vpop.f32.mrf.mxu0
    %1786 = vdwg.mxu0
    %v1787 = vsel %vm216, %v1671, 0.0
    %1788 = vadd.xlane.f32.xlu0 %v1787
    %v1789 = vpop.xlane.xlu0 %1788
    %v1790 = vsel %vm216, %v1673, 0.0
    %1791 = vadd.xlane.f32.xlu0 %v1790
    %v1792 = vpop.xlane.xlu0 %1791
    %v1793 = vsel %vm216, %v1675, 0.0
    %1794 = vadd.xlane.f32.xlu0 %v1793
    %v1795 = vpop.xlane.xlu0 %1794
    %v1796 = vsel %vm216, %v1677, 0.0
    %1797 = vadd.xlane.f32.xlu0 %v1796
    %v1798 = vpop.xlane.xlu0 %1797
    %v1799 = vrcp.pop %v1789
    %v1800 = vmul.f32 %v1769, %v1799
    %v1801 = vrcp.pop %v1792
    %v1802 = vmul.f32 %v1774, %v1801
    %v1803 = vrcp.pop %v1795
    %v1804 = vmul.f32 %v1779, %v1803
    %v1805 = vrcp.pop %v1798
    %v1806 = vmul.f32 %v1784, %v1805
    %1807 = vrot.lane.b32.xlu0 %v1533, 120
    %v1808 = vpop.permute.xlu0 %1807
    %1809 = vrot.lane.b32.xlu0 %v1534, 120
    %v1810 = vpop.permute.xlu0 %1809
    %1811 = vrot.lane.b32.xlu0 %v1535, 120
    %v1812 = vpop.permute.xlu0 %1811
    %1813 = vrot.lane.b32.xlu0 %v1536, 120
    %v1814 = vpop.permute.xlu0 %1813
    %1815 = vrot.lane.b32.xlu0 %v434, 88
    %v1816 = vpop.permute.xlu0 %1815
    %1817 = vrot.lane.b32.xlu0 %v437, 88
    %v1818 = vpop.permute.xlu0 %1817
    %1819 = vrot.lane.b32.xlu0 %v442, 88
    %v1820 = vpop.permute.xlu0 %1819
    %1821 = vrot.lane.b32.xlu0 %v445, 88
    %v1822 = vpop.permute.xlu0 %1821
    %v1823 = vsel %vm464, %v1808, 0
    %v1825 = vsel %vm464, %v1810, 0
    %v1827 = vsel %vm464, %v1812, 0
    %v1829 = vsel %vm464, %v1814, 0
    %v1831 = vsel %vm464, %v1816, 0
    %v1833 = vsel %vm464, %v1818, 0
    %v1835 = vsel %vm464, %v1820, 0
    %v1837 = vsel %vm464, %v1822, 0
    %1839 = vmatprep.subr.mxu0 0.0
    %1840 = vmatpush1.xpose.msra.mxu0 0.0
    %1841 = vmatprep.subr.mxu0 0.0
    %1842 = vmatpush1.xpose.msra.mxu0 0.0
    %1843 = vmatprep.subr.mxu0 0.0
    %1844 = vmatpush1.xpose.msra.mxu0 0.0
    %1845 = vmatprep.subr.mxu0 0.0
    %1846 = vmatpush1.xpose.msra.mxu0 0.0
    %1847 = vmatprep.subr.mxu0 0.0
    %1848 = vmatpush1.xpose.msra.mxu0 0.0
    %1849 = vmatprep.subr.mxu0 0.0
    %1850 = vmatpush1.xpose.msra.mxu0 0.0
    %1851 = vmatprep.subr.mxu0 0.0
    %1852 = vmatpush1.xpose.msra.mxu0 0.0
    %1853 = vmatprep.subr.mxu0 0.0
    %1854 = vmatpush1.xpose.msra.mxu0 0.0
    %1855 = vmatprep.subr.mxu0 0.0
    %1856 = vmatpush1.xpose.msra.mxu0 0.0
    %1857 = vmatprep.subr.mxu0 0.0
    %1858 = vmatpush1.xpose.msra.mxu0 0.0
    %1859 = vmatprep.subr.mxu0 0.0
    %1860 = vmatpush1.xpose.msra.mxu0 0.0
    %1861 = vmatprep.subr.mxu0 0.0
    %1862 = vmatpush1.xpose.msra.mxu0 0.0
    %1863 = vmatprep.subr.mxu0 0.0
    %1864 = vmatpush1.xpose.msra.mxu0 %v1837
    %1865 = vmatprep.subr.mxu0 0.0
    %1866 = vmatpush1.xpose.msra.mxu0 %v1835
    %1867 = vmatprep.subr.mxu0 0.0
    %1868 = vmatpush1.xpose.msra.mxu0 %v1833
    %1869 = vmatprep.subr.mxu0 0.0
    %1870 = vmatpush1.xpose.msra.mxu0 %v1831
    %1871 = vmatprep.subr.mxu0 0.0
    %1872 = vmatpush2.xpose.msra.mxu0 0.0
    %1873 = vmatprep.subr.mxu0 0.0
    %1874 = vmatpush2.xpose.msra.mxu0 0.0
    %1875 = vmatprep.subr.mxu0 0.0
    %1876 = vmatpush2.xpose.msra.mxu0 0.0
    %1877 = vmatprep.subr.mxu0 0.0
    %1878 = vmatpush2.xpose.msra.mxu0 0.0
    %1879 = vmatprep.subr.mxu0 0.0
    %1880 = vmatpush2.xpose.msra.mxu0 0.0
    %1881 = vmatprep.subr.mxu0 0.0
    %1882 = vmatpush2.xpose.msra.mxu0 0.0
    %1883 = vmatprep.subr.mxu0 0.0
    %1884 = vmatpush2.xpose.msra.mxu0 0.0
    %1885 = vmatprep.subr.mxu0 0.0
    %1886 = vmatpush2.xpose.msra.mxu0 0.0
    %1887 = vmatprep.subr.mxu0 0.0
    %1888 = vmatpush2.xpose.msra.mxu0 0.0
    %1889 = vmatprep.subr.mxu0 0.0
    %1890 = vmatpush2.xpose.msra.mxu0 0.0
    %1891 = vmatprep.subr.mxu0 0.0
    %1892 = vmatpush2.xpose.msra.mxu0 0.0
    %1893 = vmatprep.subr.mxu0 0.0
    %1894 = vmatpush2.xpose.msra.mxu0 0.0
    %1895 = vmatprep.subr.mxu0 0.0
    %1896 = vmatpush2.xpose.msra.mxu0 0.0
    %1897 = vmatprep.subr.mxu0 0.0
    %1898 = vmatpush2.xpose.msra.mxu0 0.0
    %1899 = vmatprep.subr.mxu0 0.0
    %1900 = vmatpush2.xpose.msra.mxu0 0.0
    %1901 = vmatprep.subr.mxu0 0.0
    %1902 = vmatpush2.xpose.msra.mxu0 0.0
    %1903 = vmatprep.mubr.f32.mxu0 0.0
    %1904 = vmatmul.mubr.f32.gmra.mxu0 %v1823
    %v1905 = vpop.f32.mrf.mxu0
    %v1906 = vadd.f32 0.0, %v1905
    %v1907 = vpop.f32.mrf.mxu0
    %1908 = vmatprep.mubr.f32.mxu0 0.0
    %1909 = vmatmul.mubr.f32.gmra.mxu0 %v1825
    %v1910 = vpop.f32.mrf.mxu0
    %v1911 = vadd.f32 0.0, %v1910
    %v1912 = vpop.f32.mrf.mxu0
    %1913 = vmatprep.mubr.f32.mxu0 0.0
    %1914 = vmatmul.mubr.f32.gmra.mxu0 %v1827
    %v1915 = vpop.f32.mrf.mxu0
    %v1916 = vadd.f32 0.0, %v1915
    %v1917 = vpop.f32.mrf.mxu0
    %1918 = vmatprep.mubr.f32.mxu0 0.0
    %1919 = vmatmul.mubr.f32.gmra.mxu0 %v1829
    %v1920 = vpop.f32.mrf.mxu0
    %v1921 = vadd.f32 0.0, %v1920
    %v1922 = vpop.f32.mrf.mxu0
    %1923 = vdwg.mxu0
    %v1924 = vsel %vm216, %v1906, -inf
    %1925 = vmax.xlane.f32.xlu0 %v1924
    %v1926 = vpop.xlane.xlu0 %1925
    %v1927 = vsel %vm216, %v1911, -inf
    %1928 = vmax.xlane.f32.xlu0 %v1927
    %v1929 = vpop.xlane.xlu0 %1928
    %v1930 = vsel %vm216, %v1916, -inf
    %1931 = vmax.xlane.f32.xlu0 %v1930
    %v1932 = vpop.xlane.xlu0 %1931
    %v1933 = vsel %vm216, %v1921, -inf
    %1934 = vmax.xlane.f32.xlu0 %v1933
    %v1935 = vpop.xlane.xlu0 %1934
    %v1936 = vsub.f32 %v1906, %v1926
    %v1937 = vsub.f32 %v1911, %v1929
    %v1938 = vsub.f32 %v1916, %v1932
    %v1939 = vsub.f32 %v1921, %v1935
    %v1940 = vmul.f32 %v1936, 1.442695
    %v1941 = vpow.pop %v1940
    %v1942 = vmul.f32 %v1937, 1.442695
    %v1943 = vpow.pop %v1942
    %v1944 = vmul.f32 %v1938, 1.442695
    %v1945 = vpow.pop %v1944
    %v1946 = vmul.f32 %v1939, 1.442695
    %v1947 = vpow.pop %v1946
    %1948 = vrot.lane.b32.xlu0 %v434, 56
    %v1949 = vpop.permute.xlu0 %1948
    %1950 = vrot.lane.b32.xlu0 %v437, 56
    %v1951 = vpop.permute.xlu0 %1950
    %1952 = vrot.lane.b32.xlu0 %v442, 56
    %v1953 = vpop.permute.xlu0 %1952
    %1954 = vrot.lane.b32.xlu0 %v445, 56
    %v1955 = vpop.permute.xlu0 %1954
    %v1961 = vsel %vm216, %v1941, 0
    %v1964 = vsel %vm216, %v1943, 0
    %v1967 = vsel %vm216, %v1945, 0
    %v1970 = vsel %vm216, %v1947, 0
    %1972 = vmatprep.subr.mxu0 0.0
    %1973 = vmatpush1.msra.mxu0 0.0
    %1974 = vmatprep.subr.mxu0 0.0
    %1975 = vmatpush1.msra.mxu0 0.0
    %1976 = vmatprep.subr.mxu0 0.0
    %1977 = vmatpush1.msra.mxu0 0.0
    %1978 = vmatprep.subr.mxu0 0.0
    %1979 = vmatpush1.msra.mxu0 0.0
    %1980 = vmatprep.subr.mxu0 0.0
    %1981 = vmatpush1.msra.mxu0 0.0
    %1982 = vmatprep.subr.mxu0 0.0
    %1983 = vmatpush1.msra.mxu0 0.0
    %1984 = vmatprep.subr.mxu0 0.0
    %1985 = vmatpush1.msra.mxu0 0.0
    %1986 = vmatprep.subr.mxu0 0.0
    %1987 = vmatpush1.msra.mxu0 0.0
    %1988 = vmatprep.subr.mxu0 0.0
    %1989 = vmatpush1.msra.mxu0 0.0
    %1990 = vmatprep.subr.mxu0 0.0
    %1991 = vmatpush1.msra.mxu0 0.0
    %1992 = vmatprep.subr.mxu0 0.0
    %1993 = vmatpush1.msra.mxu0 0.0
    %1994 = vmatprep.subr.mxu0 0.0
    %1995 = vmatpush1.msra.mxu0 0.0
    %1996 = vmatprep.subr.mxu0 0.0
    %1997 = vmatpush1.msra.mxu0 %v1955
    %1998 = vmatprep.subr.mxu0 0.0
    %1999 = vmatpush1.msra.mxu0 %v1953
    %2000 = vmatprep.subr.mxu0 0.0
    %2001 = vmatpush1.msra.mxu0 %v1951
    %2002 = vmatprep.subr.mxu0 0.0
    %2003 = vmatpush1.msra.mxu0 %v1949
    %2004 = vmatprep.subr.mxu0 0.0
    %2005 = vmatpush2.msra.mxu0 0.0
    %2006 = vmatprep.subr.mxu0 0.0
    %2007 = vmatpush2.msra.mxu0 0.0
    %2008 = vmatprep.subr.mxu0 0.0
    %2009 = vmatpush2.msra.mxu0 0.0
    %2010 = vmatprep.subr.mxu0 0.0
    %2011 = vmatpush2.msra.mxu0 0.0
    %2012 = vmatprep.subr.mxu0 0.0
    %2013 = vmatpush2.msra.mxu0 0.0
    %2014 = vmatprep.subr.mxu0 0.0
    %2015 = vmatpush2.msra.mxu0 0.0
    %2016 = vmatprep.subr.mxu0 0.0
    %2017 = vmatpush2.msra.mxu0 0.0
    %2018 = vmatprep.subr.mxu0 0.0
    %2019 = vmatpush2.msra.mxu0 0.0
    %2020 = vmatprep.subr.mxu0 0.0
    %2021 = vmatpush2.msra.mxu0 0.0
    %2022 = vmatprep.subr.mxu0 0.0
    %2023 = vmatpush2.msra.mxu0 0.0
    %2024 = vmatprep.subr.mxu0 0.0
    %2025 = vmatpush2.msra.mxu0 0.0
    %2026 = vmatprep.subr.mxu0 0.0
    %2027 = vmatpush2.msra.mxu0 0.0
    %2028 = vmatprep.subr.mxu0 0.0
    %2029 = vmatpush2.msra.mxu0 0.0
    %2030 = vmatprep.subr.mxu0 0.0
    %2031 = vmatpush2.msra.mxu0 0.0
    %2032 = vmatprep.subr.mxu0 0.0
    %2033 = vmatpush2.msra.mxu0 0.0
    %2034 = vmatprep.subr.mxu0 0.0
    %2035 = vmatpush2.msra.mxu0 0.0
    %2036 = vmatprep.mubr.f32.mxu0 0.0
    %2037 = vmatmul.mubr.f32.gmra.mxu0 %v1961
    %v2038 = vpop.f32.mrf.mxu0
    %v2039 = vadd.f32 0.0, %v2038
    %v2040 = vpop.f32.mrf.mxu0
    %2041 = vmatprep.mubr.f32.mxu0 0.0
    %2042 = vmatmul.mubr.f32.gmra.mxu0 %v1964
    %v2043 = vpop.f32.mrf.mxu0
    %v2044 = vadd.f32 0.0, %v2043
    %v2045 = vpop.f32.mrf.mxu0
    %2046 = vmatprep.mubr.f32.mxu0 0.0
    %2047 = vmatmul.mubr.f32.gmra.mxu0 %v1967
    %v2048 = vpop.f32.mrf.mxu0
    %v2049 = vadd.f32 0.0, %v2048
    %v2050 = vpop.f32.mrf.mxu0
    %2051 = vmatprep.mubr.f32.mxu0 0.0
    %2052 = vmatmul.mubr.f32.gmra.mxu0 %v1970
    %v2053 = vpop.f32.mrf.mxu0
    %v2054 = vadd.f32 0.0, %v2053
    %v2055 = vpop.f32.mrf.mxu0
    %2056 = vdwg.mxu0
    %v2057 = vsel %vm216, %v1941, 0.0
    %2058 = vadd.xlane.f32.xlu0 %v2057
    %v2059 = vpop.xlane.xlu0 %2058
    %v2060 = vsel %vm216, %v1943, 0.0
    %2061 = vadd.xlane.f32.xlu0 %v2060
    %v2062 = vpop.xlane.xlu0 %2061
    %v2063 = vsel %vm216, %v1945, 0.0
    %2064 = vadd.xlane.f32.xlu0 %v2063
    %v2065 = vpop.xlane.xlu0 %2064
    %v2066 = vsel %vm216, %v1947, 0.0
    %2067 = vadd.xlane.f32.xlu0 %v2066
    %v2068 = vpop.xlane.xlu0 %2067
    %v2069 = vrcp.pop %v2059
    %v2070 = vmul.f32 %v2039, %v2069
    %v2071 = vrcp.pop %v2062
    %v2072 = vmul.f32 %v2044, %v2071
    %v2073 = vrcp.pop %v2065
    %v2074 = vmul.f32 %v2049, %v2073
    %v2075 = vrcp.pop %v2068
    %v2076 = vmul.f32 %v2054, %v2075
    %2077 = vrot.lane.b32.xlu0 %v1533, 112
    %v2078 = vpop.permute.xlu0 %2077
    %2079 = vrot.lane.b32.xlu0 %v1534, 112
    %v2080 = vpop.permute.xlu0 %2079
    %2081 = vrot.lane.b32.xlu0 %v1535, 112
    %v2082 = vpop.permute.xlu0 %2081
    %2083 = vrot.lane.b32.xlu0 %v1536, 112
    %v2084 = vpop.permute.xlu0 %2083
    %2085 = vrot.lane.b32.xlu0 %v434, 80
    %v2086 = vpop.permute.xlu0 %2085
    %2087 = vrot.lane.b32.xlu0 %v437, 80
    %v2088 = vpop.permute.xlu0 %2087
    %2089 = vrot.lane.b32.xlu0 %v442, 80
    %v2090 = vpop.permute.xlu0 %2089
    %2091 = vrot.lane.b32.xlu0 %v445, 80
    %v2092 = vpop.permute.xlu0 %2091
    %v2093 = vsel %vm464, %v2078, 0
    %v2095 = vsel %vm464, %v2080, 0
    %v2097 = vsel %vm464, %v2082, 0
    %v2099 = vsel %vm464, %v2084, 0
    %v2101 = vsel %vm464, %v2086, 0
    %v2103 = vsel %vm464, %v2088, 0
    %v2105 = vsel %vm464, %v2090, 0
    %v2107 = vsel %vm464, %v2092, 0
    %2109 = vmatprep.subr.mxu0 0.0
    %2110 = vmatpush1.xpose.msra.mxu0 0.0
    %2111 = vmatprep.subr.mxu0 0.0
    %2112 = vmatpush1.xpose.msra.mxu0 0.0
    %2113 = vmatprep.subr.mxu0 0.0
    %2114 = vmatpush1.xpose.msra.mxu0 0.0
    %2115 = vmatprep.subr.mxu0 0.0
    %2116 = vmatpush1.xpose.msra.mxu0 0.0
    %2117 = vmatprep.subr.mxu0 0.0
    %2118 = vmatpush1.xpose.msra.mxu0 0.0
    %2119 = vmatprep.subr.mxu0 0.0
    %2120 = vmatpush1.xpose.msra.mxu0 0.0
    %2121 = vmatprep.subr.mxu0 0.0
    %2122 = vmatpush1.xpose.msra.mxu0 0.0
    %2123 = vmatprep.subr.mxu0 0.0
    %2124 = vmatpush1.xpose.msra.mxu0 0.0
    %2125 = vmatprep.subr.mxu0 0.0
    %2126 = vmatpush1.xpose.msra.mxu0 0.0
    %2127 = vmatprep.subr.mxu0 0.0
    %2128 = vmatpush1.xpose.msra.mxu0 0.0
    %2129 = vmatprep.subr.mxu0 0.0
    %2130 = vmatpush1.xpose.msra.mxu0 0.0
    %2131 = vmatprep.subr.mxu0 0.0
    %2132 = vmatpush1.xpose.msra.mxu0 0.0
    %2133 = vmatprep.subr.mxu0 0.0
    %2134 = vmatpush1.xpose.msra.mxu0 %v2107
    %2135 = vmatprep.subr.mxu0 0.0
    %2136 = vmatpush1.xpose.msra.mxu0 %v2105
    %2137 = vmatprep.subr.mxu0 0.0
    %2138 = vmatpush1.xpose.msra.mxu0 %v2103
    %2139 = vmatprep.subr.mxu0 0.0
    %2140 = vmatpush1.xpose.msra.mxu0 %v2101
    %2141 = vmatprep.subr.mxu0 0.0
    %2142 = vmatpush2.xpose.msra.mxu0 0.0
    %2143 = vmatprep.subr.mxu0 0.0
    %2144 = vmatpush2.xpose.msra.mxu0 0.0
    %2145 = vmatprep.subr.mxu0 0.0
    %2146 = vmatpush2.xpose.msra.mxu0 0.0
    %2147 = vmatprep.subr.mxu0 0.0
    %2148 = vmatpush2.xpose.msra.mxu0 0.0
    %2149 = vmatprep.subr.mxu0 0.0
    %2150 = vmatpush2.xpose.msra.mxu0 0.0
    %2151 = vmatprep.subr.mxu0 0.0
    %2152 = vmatpush2.xpose.msra.mxu0 0.0
    %2153 = vmatprep.subr.mxu0 0.0
    %2154 = vmatpush2.xpose.msra.mxu0 0.0
    %2155 = vmatprep.subr.mxu0 0.0
    %2156 = vmatpush2.xpose.msra.mxu0 0.0
    %2157 = vmatprep.subr.mxu0 0.0
    %2158 = vmatpush2.xpose.msra.mxu0 0.0
    %2159 = vmatprep.subr.mxu0 0.0
    %2160 = vmatpush2.xpose.msra.mxu0 0.0
    %2161 = vmatprep.subr.mxu0 0.0
    %2162 = vmatpush2.xpose.msra.mxu0 0.0
    %2163 = vmatprep.subr.mxu0 0.0
    %2164 = vmatpush2.xpose.msra.mxu0 0.0
    %2165 = vmatprep.subr.mxu0 0.0
    %2166 = vmatpush2.xpose.msra.mxu0 0.0
    %2167 = vmatprep.subr.mxu0 0.0
    %2168 = vmatpush2.xpose.msra.mxu0 0.0
    %2169 = vmatprep.subr.mxu0 0.0
    %2170 = vmatpush2.xpose.msra.mxu0 0.0
    %2171 = vmatprep.subr.mxu0 0.0
    %2172 = vmatpush2.xpose.msra.mxu0 0.0
    %2173 = vmatprep.mubr.f32.mxu0 0.0
    %2174 = vmatmul.mubr.f32.gmra.mxu0 %v2093
    %v2175 = vpop.f32.mrf.mxu0
    %v2176 = vadd.f32 0.0, %v2175
    %v2177 = vpop.f32.mrf.mxu0
    %2178 = vmatprep.mubr.f32.mxu0 0.0
    %2179 = vmatmul.mubr.f32.gmra.mxu0 %v2095
    %v2180 = vpop.f32.mrf.mxu0
    %v2181 = vadd.f32 0.0, %v2180
    %v2182 = vpop.f32.mrf.mxu0
    %2183 = vmatprep.mubr.f32.mxu0 0.0
    %2184 = vmatmul.mubr.f32.gmra.mxu0 %v2097
    %v2185 = vpop.f32.mrf.mxu0
    %v2186 = vadd.f32 0.0, %v2185
    %v2187 = vpop.f32.mrf.mxu0
    %2188 = vmatprep.mubr.f32.mxu0 0.0
    %2189 = vmatmul.mubr.f32.gmra.mxu0 %v2099
    %v2190 = vpop.f32.mrf.mxu0
    %v2191 = vadd.f32 0.0, %v2190
    %v2192 = vpop.f32.mrf.mxu0
    %2193 = vdwg.mxu0
    %v2194 = vsel %vm216, %v2176, -inf
    %2195 = vmax.xlane.f32.xlu0 %v2194
    %v2196 = vpop.xlane.xlu0 %2195
    %v2197 = vsel %vm216, %v2181, -inf
    %2198 = vmax.xlane.f32.xlu0 %v2197
    %v2199 = vpop.xlane.xlu0 %2198
    %v2200 = vsel %vm216, %v2186, -inf
    %2201 = vmax.xlane.f32.xlu0 %v2200
    %v2202 = vpop.xlane.xlu0 %2201
    %v2203 = vsel %vm216, %v2191, -inf
    %2204 = vmax.xlane.f32.xlu0 %v2203
    %v2205 = vpop.xlane.xlu0 %2204
    %v2206 = vsub.f32 %v2176, %v2196
    %v2207 = vsub.f32 %v2181, %v2199
    %v2208 = vsub.f32 %v2186, %v2202
    %v2209 = vsub.f32 %v2191, %v2205
    %v2210 = vmul.f32 %v2206, 1.442695
    %v2211 = vpow.pop %v2210
    %v2212 = vmul.f32 %v2207, 1.442695
    %v2213 = vpow.pop %v2212
    %v2214 = vmul.f32 %v2208, 1.442695
    %v2215 = vpow.pop %v2214
    %v2216 = vmul.f32 %v2209, 1.442695
    %v2217 = vpow.pop %v2216
    %2218 = vrot.lane.b32.xlu0 %v434, 48
    %v2219 = vpop.permute.xlu0 %2218
    %2220 = vrot.lane.b32.xlu0 %v437, 48
    %v2221 = vpop.permute.xlu0 %2220
    %2222 = vrot.lane.b32.xlu0 %v442, 48
    %v2223 = vpop.permute.xlu0 %2222
    %2224 = vrot.lane.b32.xlu0 %v445, 48
    %v2225 = vpop.permute.xlu0 %2224
    %v2231 = vsel %vm216, %v2211, 0
    %v2234 = vsel %vm216, %v2213, 0
    %v2237 = vsel %vm216, %v2215, 0
    %v2240 = vsel %vm216, %v2217, 0
    %2242 = vmatprep.subr.mxu0 0.0
    %2243 = vmatpush1.msra.mxu0 0.0
    %2244 = vmatprep.subr.mxu0 0.0
    %2245 = vmatpush1.msra.mxu0 0.0
    %2246 = vmatprep.subr.mxu0 0.0
    %2247 = vmatpush1.msra.mxu0 0.0
    %2248 = vmatprep.subr.mxu0 0.0
    %2249 = vmatpush1.msra.mxu0 0.0
    %2250 = vmatprep.subr.mxu0 0.0
    %2251 = vmatpush1.msra.mxu0 0.0
    %2252 = vmatprep.subr.mxu0 0.0
    %2253 = vmatpush1.msra.mxu0 0.0
    %2254 = vmatprep.subr.mxu0 0.0
    %2255 = vmatpush1.msra.mxu0 0.0
    %2256 = vmatprep.subr.mxu0 0.0
    %2257 = vmatpush1.msra.mxu0 0.0
    %2258 = vmatprep.subr.mxu0 0.0
    %2259 = vmatpush1.msra.mxu0 0.0
    %2260 = vmatprep.subr.mxu0 0.0
    %2261 = vmatpush1.msra.mxu0 0.0
    %2262 = vmatprep.subr.mxu0 0.0
    %2263 = vmatpush1.msra.mxu0 0.0
    %2264 = vmatprep.subr.mxu0 0.0
    %2265 = vmatpush1.msra.mxu0 0.0
    %2266 = vmatprep.subr.mxu0 0.0
    %2267 = vmatpush1.msra.mxu0 %v2225
    %2268 = vmatprep.subr.mxu0 0.0
    %2269 = vmatpush1.msra.mxu0 %v2223
    %2270 = vmatprep.subr.mxu0 0.0
    %2271 = vmatpush1.msra.mxu0 %v2221
    %2272 = vmatprep.subr.mxu0 0.0
    %2273 = vmatpush1.msra.mxu0 %v2219
    %2274 = vmatprep.subr.mxu0 0.0
    %2275 = vmatpush2.msra.mxu0 0.0
    %2276 = vmatprep.subr.mxu0 0.0
    %2277 = vmatpush2.msra.mxu0 0.0
    %2278 = vmatprep.subr.mxu0 0.0
    %2279 = vmatpush2.msra.mxu0 0.0
    %2280 = vmatprep.subr.mxu0 0.0
    %2281 = vmatpush2.msra.mxu0 0.0
    %2282 = vmatprep.subr.mxu0 0.0
    %2283 = vmatpush2.msra.mxu0 0.0
    %2284 = vmatprep.subr.mxu0 0.0
    %2285 = vmatpush2.msra.mxu0 0.0
    %2286 = vmatprep.subr.mxu0 0.0
    %2287 = vmatpush2.msra.mxu0 0.0
    %2288 = vmatprep.subr.mxu0 0.0
    %2289 = vmatpush2.msra.mxu0 0.0
    %2290 = vmatprep.subr.mxu0 0.0
    %2291 = vmatpush2.msra.mxu0 0.0
    %2292 = vmatprep.subr.mxu0 0.0
    %2293 = vmatpush2.msra.mxu0 0.0
    %2294 = vmatprep.subr.mxu0 0.0
    %2295 = vmatpush2.msra.mxu0 0.0
    %2296 = vmatprep.subr.mxu0 0.0
    %2297 = vmatpush2.msra.mxu0 0.0
    %2298 = vmatprep.subr.mxu0 0.0
    %2299 = vmatpush2.msra.mxu0 0.0
    %2300 = vmatprep.subr.mxu0 0.0
    %2301 = vmatpush2.msra.mxu0 0.0
    %2302 = vmatprep.subr.mxu0 0.0
    %2303 = vmatpush2.msra.mxu0 0.0
    %2304 = vmatprep.subr.mxu0 0.0
    %2305 = vmatpush2.msra.mxu0 0.0
    %2306 = vmatprep.mubr.f32.mxu0 0.0
    %2307 = vmatmul.mubr.f32.gmra.mxu0 %v2231
    %v2308 = vpop.f32.mrf.mxu0
    %v2309 = vadd.f32 0.0, %v2308
    %v2310 = vpop.f32.mrf.mxu0
    %2311 = vmatprep.mubr.f32.mxu0 0.0
    %2312 = vmatmul.mubr.f32.gmra.mxu0 %v2234
    %v2313 = vpop.f32.mrf.mxu0
    %v2314 = vadd.f32 0.0, %v2313
    %v2315 = vpop.f32.mrf.mxu0
    %2316 = vmatprep.mubr.f32.mxu0 0.0
    %2317 = vmatmul.mubr.f32.gmra.mxu0 %v2237
    %v2318 = vpop.f32.mrf.mxu0
    %v2319 = vadd.f32 0.0, %v2318
    %v2320 = vpop.f32.mrf.mxu0
    %2321 = vmatprep.mubr.f32.mxu0 0.0
    %2322 = vmatmul.mubr.f32.gmra.mxu0 %v2240
    %v2323 = vpop.f32.mrf.mxu0
    %v2324 = vadd.f32 0.0, %v2323
    %v2325 = vpop.f32.mrf.mxu0
    %2326 = vdwg.mxu0
    %v2327 = vsel %vm216, %v2211, 0.0
    %2328 = vadd.xlane.f32.xlu0 %v2327
    %v2329 = vpop.xlane.xlu0 %2328
    %v2330 = vsel %vm216, %v2213, 0.0
    %2331 = vadd.xlane.f32.xlu0 %v2330
    %v2332 = vpop.xlane.xlu0 %2331
    %v2333 = vsel %vm216, %v2215, 0.0
    %2334 = vadd.xlane.f32.xlu0 %v2333
    %v2335 = vpop.xlane.xlu0 %2334
    %v2336 = vsel %vm216, %v2217, 0.0
    %2337 = vadd.xlane.f32.xlu0 %v2336
    %v2338 = vpop.xlane.xlu0 %2337
    %v2339 = vrcp.pop %v2329
    %v2340 = vmul.f32 %v2309, %v2339
    %v2341 = vrcp.pop %v2332
    %v2342 = vmul.f32 %v2314, %v2341
    %v2343 = vrcp.pop %v2335
    %v2344 = vmul.f32 %v2319, %v2343
    %v2345 = vrcp.pop %v2338
    %v2346 = vmul.f32 %v2324, %v2345
    %2347 = vrot.lane.b32.xlu0 %v1533, 104
    %v2348 = vpop.permute.xlu0 %2347
    %2349 = vrot.lane.b32.xlu0 %v1534, 104
    %v2350 = vpop.permute.xlu0 %2349
    %2351 = vrot.lane.b32.xlu0 %v1535, 104
    %v2352 = vpop.permute.xlu0 %2351
    %2353 = vrot.lane.b32.xlu0 %v1536, 104
    %v2354 = vpop.permute.xlu0 %2353
    %2355 = vrot.lane.b32.xlu0 %v434, 72
    %v2356 = vpop.permute.xlu0 %2355
    %2357 = vrot.lane.b32.xlu0 %v437, 72
    %v2358 = vpop.permute.xlu0 %2357
    %2359 = vrot.lane.b32.xlu0 %v442, 72
    %v2360 = vpop.permute.xlu0 %2359
    %2361 = vrot.lane.b32.xlu0 %v445, 72
    %v2362 = vpop.permute.xlu0 %2361
    %v2363 = vsel %vm464, %v2348, 0
    %v2365 = vsel %vm464, %v2350, 0
    %v2367 = vsel %vm464, %v2352, 0
    %v2369 = vsel %vm464, %v2354, 0
    %v2371 = vsel %vm464, %v2356, 0
    %v2373 = vsel %vm464, %v2358, 0
    %v2375 = vsel %vm464, %v2360, 0
    %v2377 = vsel %vm464, %v2362, 0
    %2379 = vmatprep.subr.mxu0 0.0
    %2380 = vmatpush1.xpose.msra.mxu0 0.0
    %2381 = vmatprep.subr.mxu0 0.0
    %2382 = vmatpush1.xpose.msra.mxu0 0.0
    %2383 = vmatprep.subr.mxu0 0.0
    %2384 = vmatpush1.xpose.msra.mxu0 0.0
    %2385 = vmatprep.subr.mxu0 0.0
    %2386 = vmatpush1.xpose.msra.mxu0 0.0
    %2387 = vmatprep.subr.mxu0 0.0
    %2388 = vmatpush1.xpose.msra.mxu0 0.0
    %2389 = vmatprep.subr.mxu0 0.0
    %2390 = vmatpush1.xpose.msra.mxu0 0.0
    %2391 = vmatprep.subr.mxu0 0.0
    %2392 = vmatpush1.xpose.msra.mxu0 0.0
    %2393 = vmatprep.subr.mxu0 0.0
    %2394 = vmatpush1.xpose.msra.mxu0 0.0
    %2395 = vmatprep.subr.mxu0 0.0
    %2396 = vmatpush1.xpose.msra.mxu0 0.0
    %2397 = vmatprep.subr.mxu0 0.0
    %2398 = vmatpush1.xpose.msra.mxu0 0.0
    %2399 = vmatprep.subr.mxu0 0.0
    %2400 = vmatpush1.xpose.msra.mxu0 0.0
    %2401 = vmatprep.subr.mxu0 0.0
    %2402 = vmatpush1.xpose.msra.mxu0 0.0
    %2403 = vmatprep.subr.mxu0 0.0
    %2404 = vmatpush1.xpose.msra.mxu0 %v2377
    %2405 = vmatprep.subr.mxu0 0.0
    %2406 = vmatpush1.xpose.msra.mxu0 %v2375
    %2407 = vmatprep.subr.mxu0 0.0
    %2408 = vmatpush1.xpose.msra.mxu0 %v2373
    %2409 = vmatprep.subr.mxu0 0.0
    %2410 = vmatpush1.xpose.msra.mxu0 %v2371
    %2411 = vmatprep.subr.mxu0 0.0
    %2412 = vmatpush2.xpose.msra.mxu0 0.0
    %2413 = vmatprep.subr.mxu0 0.0
    %2414 = vmatpush2.xpose.msra.mxu0 0.0
    %2415 = vmatprep.subr.mxu0 0.0
    %2416 = vmatpush2.xpose.msra.mxu0 0.0
    %2417 = vmatprep.subr.mxu0 0.0
    %2418 = vmatpush2.xpose.msra.mxu0 0.0
    %2419 = vmatprep.subr.mxu0 0.0
    %2420 = vmatpush2.xpose.msra.mxu0 0.0
    %2421 = vmatprep.subr.mxu0 0.0
    %2422 = vmatpush2.xpose.msra.mxu0 0.0
    %2423 = vmatprep.subr.mxu0 0.0
    %2424 = vmatpush2.xpose.msra.mxu0 0.0
    %2425 = vmatprep.subr.mxu0 0.0
    %2426 = vmatpush2.xpose.msra.mxu0 0.0
    %2427 = vmatprep.subr.mxu0 0.0
    %2428 = vmatpush2.xpose.msra.mxu0 0.0
    %2429 = vmatprep.subr.mxu0 0.0
    %2430 = vmatpush2.xpose.msra.mxu0 0.0
    %2431 = vmatprep.subr.mxu0 0.0
    %2432 = vmatpush2.xpose.msra.mxu0 0.0
    %2433 = vmatprep.subr.mxu0 0.0
    %2434 = vmatpush2.xpose.msra.mxu0 0.0
    %2435 = vmatprep.subr.mxu0 0.0
    %2436 = vmatpush2.xpose.msra.mxu0 0.0
    %2437 = vmatprep.subr.mxu0 0.0
    %2438 = vmatpush2.xpose.msra.mxu0 0.0
    %2439 = vmatprep.subr.mxu0 0.0
    %2440 = vmatpush2.xpose.msra.mxu0 0.0
    %2441 = vmatprep.subr.mxu0 0.0
    %2442 = vmatpush2.xpose.msra.mxu0 0.0
    %2443 = vmatprep.mubr.f32.mxu0 0.0
    %2444 = vmatmul.mubr.f32.gmra.mxu0 %v2363
    %v2445 = vpop.f32.mrf.mxu0
    %v2446 = vadd.f32 0.0, %v2445
    %v2447 = vpop.f32.mrf.mxu0
    %2448 = vmatprep.mubr.f32.mxu0 0.0
    %2449 = vmatmul.mubr.f32.gmra.mxu0 %v2365
    %v2450 = vpop.f32.mrf.mxu0
    %v2451 = vadd.f32 0.0, %v2450
    %v2452 = vpop.f32.mrf.mxu0
    %2453 = vmatprep.mubr.f32.mxu0 0.0
    %2454 = vmatmul.mubr.f32.gmra.mxu0 %v2367
    %v2455 = vpop.f32.mrf.mxu0
    %v2456 = vadd.f32 0.0, %v2455
    %v2457 = vpop.f32.mrf.mxu0
    %2458 = vmatprep.mubr.f32.mxu0 0.0
    %2459 = vmatmul.mubr.f32.gmra.mxu0 %v2369
    %v2460 = vpop.f32.mrf.mxu0
    %v2461 = vadd.f32 0.0, %v2460
    %v2462 = vpop.f32.mrf.mxu0
    %2463 = vdwg.mxu0
    %v2464 = vsel %vm216, %v2446, -inf
    %2465 = vmax.xlane.f32.xlu0 %v2464
    %v2466 = vpop.xlane.xlu0 %2465
    %v2467 = vsel %vm216, %v2451, -inf
    %2468 = vmax.xlane.f32.xlu0 %v2467
    %v2469 = vpop.xlane.xlu0 %2468
    %v2470 = vsel %vm216, %v2456, -inf
    %2471 = vmax.xlane.f32.xlu0 %v2470
    %v2472 = vpop.xlane.xlu0 %2471
    %v2473 = vsel %vm216, %v2461, -inf
    %2474 = vmax.xlane.f32.xlu0 %v2473
    %v2475 = vpop.xlane.xlu0 %2474
    %v2476 = vsub.f32 %v2446, %v2466
    %v2477 = vsub.f32 %v2451, %v2469
    %v2478 = vsub.f32 %v2456, %v2472
    %v2479 = vsub.f32 %v2461, %v2475
    %v2480 = vmul.f32 %v2476, 1.442695
    %v2481 = vpow.pop %v2480
    %v2482 = vmul.f32 %v2477, 1.442695
    %v2483 = vpow.pop %v2482
    %v2484 = vmul.f32 %v2478, 1.442695
    %v2485 = vpow.pop %v2484
    %v2486 = vmul.f32 %v2479, 1.442695
    %v2487 = vpow.pop %v2486
    %2488 = vrot.lane.b32.xlu0 %v434, 40
    %v2489 = vpop.permute.xlu0 %2488
    %2490 = vrot.lane.b32.xlu0 %v437, 40
    %v2491 = vpop.permute.xlu0 %2490
    %2492 = vrot.lane.b32.xlu0 %v442, 40
    %v2493 = vpop.permute.xlu0 %2492
    %2494 = vrot.lane.b32.xlu0 %v445, 40
    %v2495 = vpop.permute.xlu0 %2494
    %v2501 = vsel %vm216, %v2481, 0
    %v2504 = vsel %vm216, %v2483, 0
    %v2507 = vsel %vm216, %v2485, 0
    %v2510 = vsel %vm216, %v2487, 0
    %2512 = vmatprep.subr.mxu0 0.0
    %2513 = vmatpush1.msra.mxu0 0.0
    %2514 = vmatprep.subr.mxu0 0.0
    %2515 = vmatpush1.msra.mxu0 0.0
    %2516 = vmatprep.subr.mxu0 0.0
    %2517 = vmatpush1.msra.mxu0 0.0
    %2518 = vmatprep.subr.mxu0 0.0
    %2519 = vmatpush1.msra.mxu0 0.0
    %2520 = vmatprep.subr.mxu0 0.0
    %2521 = vmatpush1.msra.mxu0 0.0
    %2522 = vmatprep.subr.mxu0 0.0
    %2523 = vmatpush1.msra.mxu0 0.0
    %2524 = vmatprep.subr.mxu0 0.0
    %2525 = vmatpush1.msra.mxu0 0.0
    %2526 = vmatprep.subr.mxu0 0.0
    %2527 = vmatpush1.msra.mxu0 0.0
    %2528 = vmatprep.subr.mxu0 0.0
    %2529 = vmatpush1.msra.mxu0 0.0
    %2530 = vmatprep.subr.mxu0 0.0
    %2531 = vmatpush1.msra.mxu0 0.0
    %2532 = vmatprep.subr.mxu0 0.0
    %2533 = vmatpush1.msra.mxu0 0.0
    %2534 = vmatprep.subr.mxu0 0.0
    %2535 = vmatpush1.msra.mxu0 0.0
    %2536 = vmatprep.subr.mxu0 0.0
    %2537 = vmatpush1.msra.mxu0 %v2495
    %2538 = vmatprep.subr.mxu0 0.0
    %2539 = vmatpush1.msra.mxu0 %v2493
    %2540 = vmatprep.subr.mxu0 0.0
    %2541 = vmatpush1.msra.mxu0 %v2491
    %2542 = vmatprep.subr.mxu0 0.0
    %2543 = vmatpush1.msra.mxu0 %v2489
    %2544 = vmatprep.subr.mxu0 0.0
    %2545 = vmatpush2.msra.mxu0 0.0
    %2546 = vmatprep.subr.mxu0 0.0
    %2547 = vmatpush2.msra.mxu0 0.0
    %2548 = vmatprep.subr.mxu0 0.0
    %2549 = vmatpush2.msra.mxu0 0.0
    %2550 = vmatprep.subr.mxu0 0.0
    %2551 = vmatpush2.msra.mxu0 0.0
    %2552 = vmatprep.subr.mxu0 0.0
    %2553 = vmatpush2.msra.mxu0 0.0
    %2554 = vmatprep.subr.mxu0 0.0
    %2555 = vmatpush2.msra.mxu0 0.0
    %2556 = vmatprep.subr.mxu0 0.0
    %2557 = vmatpush2.msra.mxu0 0.0
    %2558 = vmatprep.subr.mxu0 0.0
    %2559 = vmatpush2.msra.mxu0 0.0
    %2560 = vmatprep.subr.mxu0 0.0
    %2561 = vmatpush2.msra.mxu0 0.0
    %2562 = vmatprep.subr.mxu0 0.0
    %2563 = vmatpush2.msra.mxu0 0.0
    %2564 = vmatprep.subr.mxu0 0.0
    %2565 = vmatpush2.msra.mxu0 0.0
    %2566 = vmatprep.subr.mxu0 0.0
    %2567 = vmatpush2.msra.mxu0 0.0
    %2568 = vmatprep.subr.mxu0 0.0
    %2569 = vmatpush2.msra.mxu0 0.0
    %2570 = vmatprep.subr.mxu0 0.0
    %2571 = vmatpush2.msra.mxu0 0.0
    %2572 = vmatprep.subr.mxu0 0.0
    %2573 = vmatpush2.msra.mxu0 0.0
    %2574 = vmatprep.subr.mxu0 0.0
    %2575 = vmatpush2.msra.mxu0 0.0
    %2576 = vmatprep.mubr.f32.mxu0 0.0
    %2577 = vmatmul.mubr.f32.gmra.mxu0 %v2501
    %v2578 = vpop.f32.mrf.mxu0
    %v2579 = vadd.f32 0.0, %v2578
    %v2580 = vpop.f32.mrf.mxu0
    %2581 = vmatprep.mubr.f32.mxu0 0.0
    %2582 = vmatmul.mubr.f32.gmra.mxu0 %v2504
    %v2583 = vpop.f32.mrf.mxu0
    %v2584 = vadd.f32 0.0, %v2583
    %v2585 = vpop.f32.mrf.mxu0
    %2586 = vmatprep.mubr.f32.mxu0 0.0
    %2587 = vmatmul.mubr.f32.gmra.mxu0 %v2507
    %v2588 = vpop.f32.mrf.mxu0
    %v2589 = vadd.f32 0.0, %v2588
    %v2590 = vpop.f32.mrf.mxu0
    %2591 = vmatprep.mubr.f32.mxu0 0.0
    %2592 = vmatmul.mubr.f32.gmra.mxu0 %v2510
    %v2593 = vpop.f32.mrf.mxu0
    %v2594 = vadd.f32 0.0, %v2593
    %v2595 = vpop.f32.mrf.mxu0
    %2596 = vdwg.mxu0
    %v2597 = vsel %vm216, %v2481, 0.0
    %2598 = vadd.xlane.f32.xlu0 %v2597
    %v2599 = vpop.xlane.xlu0 %2598
    %v2600 = vsel %vm216, %v2483, 0.0
    %2601 = vadd.xlane.f32.xlu0 %v2600
    %v2602 = vpop.xlane.xlu0 %2601
    %v2603 = vsel %vm216, %v2485, 0.0
    %2604 = vadd.xlane.f32.xlu0 %v2603
    %v2605 = vpop.xlane.xlu0 %2604
    %v2606 = vsel %vm216, %v2487, 0.0
    %2607 = vadd.xlane.f32.xlu0 %v2606
    %v2608 = vpop.xlane.xlu0 %2607
    %v2609 = vrcp.pop %v2599
    %v2610 = vmul.f32 %v2579, %v2609
    %v2611 = vrcp.pop %v2602
    %v2612 = vmul.f32 %v2584, %v2611
    %v2613 = vrcp.pop %v2605
    %v2614 = vmul.f32 %v2589, %v2613
    %v2615 = vrcp.pop %v2608
    %v2616 = vmul.f32 %v2594, %v2615
    %2621 = vrot.lane.b32.xlu0 %v986, 8
    %v2622 = vpop.permute.xlu0 %2621
    %2623 = vrot.lane.b32.xlu0 %v988, 8
    %v2624 = vpop.permute.xlu0 %2623
    %2625 = vrot.lane.b32.xlu0 %v990, 8
    %v2626 = vpop.permute.xlu0 %2625
    %2627 = vrot.lane.b32.xlu0 %v992, 8
    %v2628 = vpop.permute.xlu0 %2627
    %2637 = vrot.lane.b32.xlu0 %v1256, 16
    %v2638 = vpop.permute.xlu0 %2637
    %2639 = vrot.lane.b32.xlu0 %v1258, 16
    %v2640 = vpop.permute.xlu0 %2639
    %2641 = vrot.lane.b32.xlu0 %v1260, 16
    %v2642 = vpop.permute.xlu0 %2641
    %2643 = vrot.lane.b32.xlu0 %v1262, 16
    %v2644 = vpop.permute.xlu0 %2643
    %2653 = vrot.lane.b32.xlu0 %v1526, 24
    %v2654 = vpop.permute.xlu0 %2653
    %2655 = vrot.lane.b32.xlu0 %v1528, 24
    %v2656 = vpop.permute.xlu0 %2655
    %2657 = vrot.lane.b32.xlu0 %v1530, 24
    %v2658 = vpop.permute.xlu0 %2657
    %2659 = vrot.lane.b32.xlu0 %v1532, 24
    %v2660 = vpop.permute.xlu0 %2659
    %v2665 = vsel %vm464, %v716, %v2622
    %v2666 = vsel %vm464, %v718, %v2624
    %v2667 = vsel %vm464, %v720, %v2626
    %v2668 = vsel %vm464, %v722, %v2628
    %vm2669 = vcmask 130048
    %v2670 = vsel %vm2669, %v2665, %v2638
    %v2671 = vsel %vm2669, %v2666, %v2640
    %v2672 = vsel %vm2669, %v2667, %v2642
    %v2673 = vsel %vm2669, %v2668, %v2644
    %vm2674 = vcmask 195584
    %v2675 = vsel %vm2674, %v2670, %v2654
    %v2676 = vsel %vm2674, %v2671, %v2656
    %v2677 = vsel %vm2674, %v2672, %v2658
    %v2678 = vsel %vm2674, %v2673, %v2660
    %2683 = vrot.lane.b32.xlu0 %v2070, 8
    %v2684 = vpop.permute.xlu0 %2683
    %2685 = vrot.lane.b32.xlu0 %v2072, 8
    %v2686 = vpop.permute.xlu0 %2685
    %2687 = vrot.lane.b32.xlu0 %v2074, 8
    %v2688 = vpop.permute.xlu0 %2687
    %2689 = vrot.lane.b32.xlu0 %v2076, 8
    %v2690 = vpop.permute.xlu0 %2689
    %2699 = vrot.lane.b32.xlu0 %v2340, 16
    %v2700 = vpop.permute.xlu0 %2699
    %2701 = vrot.lane.b32.xlu0 %v2342, 16
    %v2702 = vpop.permute.xlu0 %2701
    %2703 = vrot.lane.b32.xlu0 %v2344, 16
    %v2704 = vpop.permute.xlu0 %2703
    %2705 = vrot.lane.b32.xlu0 %v2346, 16
    %v2706 = vpop.permute.xlu0 %2705
    %2715 = vrot.lane.b32.xlu0 %v2610, 24
    %v2716 = vpop.permute.xlu0 %2715
    %2717 = vrot.lane.b32.xlu0 %v2612, 24
    %v2718 = vpop.permute.xlu0 %2717
    %2719 = vrot.lane.b32.xlu0 %v2614, 24
    %v2720 = vpop.permute.xlu0 %2719
    %2721 = vrot.lane.b32.xlu0 %v2616, 24
    %v2722 = vpop.permute.xlu0 %2721
    %v2727 = vsel %vm464, %v1800, %v2684
    %v2728 = vsel %vm464, %v1802, %v2686
    %v2729 = vsel %vm464, %v1804, %v2688
    %v2730 = vsel %vm464, %v1806, %v2690
    %v2731 = vsel %vm2669, %v2727, %v2700
    %v2732 = vsel %vm2669, %v2728, %v2702
    %v2733 = vsel %vm2669, %v2729, %v2704
    %v2734 = vsel %vm2669, %v2730, %v2706
    %v2735 = vsel %vm2674, %v2731, %v2716
    %v2736 = vsel %vm2674, %v2732, %v2718
    %v2737 = vsel %vm2674, %v2733, %v2720
    %v2738 = vsel %vm2674, %v2734, %v2722
    %v2739 = vpack.c.bf16 %v2676, %v2675
    %v2740 = vpack.c.bf16 %v2678, %v2677
    %v2741 = vpack.c.bf16 %v2736, %v2735
    %v2742 = vpack.c.bf16 %v2738, %v2737
    %v2743 = vld [vmem:[%s7] sm:$0xf]
    %v2744 = vld [vmem:[%s7 + $0x4] sm:$0xf]
    %v2745 = vld [vmem:[%s7 + $0x8] sm:$0xf]
    %v2746 = vld [vmem:[%s7 + $0xc] sm:$0xf]
    %v2747 = vld [vmem:[%s8] sm:$0x1]
    %v2748 = vlaneseq
    %v2749 = vshrl.u32 %v2748, 7
    %v2750 = vsub.s32 0, %v2749
    %v2751 = vrot.slane %v2747, %v2750
    %v2756 = vunpack.c.l.b16 %v2743
    %v2757 = vunpack.c.l.b16 %v2744
    %v2758 = vunpack.c.l.b16 %v2745
    %v2759 = vunpack.c.l.b16 %v2746
    %v2760 = vpack.c.b16 %v2757, %v2756
    %v2761 = vpack.c.b16 %v2759, %v2758
    %v2765 = vsel %vm216, %v2739, 0
    %v2768 = vsel %vm216, %v2740, 0
    %v2771 = vsel %vm216, %v2741, 0
    %v2774 = vsel %vm216, %v2742, 0
    %2776 = vmatprep.subr.bf16.mxu0 0
    %2777 = vmatpush1.bf16.msra.mxu0 0
    %2778 = vmatprep.subr.bf16.mxu0 0
    %2779 = vmatpush1.bf16.msra.mxu0 0
    %2780 = vmatprep.subr.bf16.mxu0 0
    %2781 = vmatpush1.bf16.msra.mxu0 0
    %2782 = vmatprep.subr.bf16.mxu0 0
    %2783 = vmatpush1.bf16.msra.mxu0 0
    %2784 = vmatprep.subr.bf16.mxu0 0
    %2785 = vmatpush1.bf16.msra.mxu0 0
    %2786 = vmatprep.subr.bf16.mxu0 0
    %2787 = vmatpush1.bf16.msra.mxu0 0
    %2788 = vmatprep.subr.bf16.mxu0 0
    %2789 = vmatpush1.bf16.msra.mxu0 %v2761
    %2790 = vmatprep.subr.bf16.mxu0 0
    %2791 = vmatpush1.bf16.msra.mxu0 %v2760
    %2792 = vmatprep.subr.bf16.mxu0 0
    %2793 = vmatpush2.bf16.msra.mxu0 0
    %2794 = vmatprep.subr.bf16.mxu0 0
    %2795 = vmatpush2.bf16.msra.mxu0 0
    %2796 = vmatprep.subr.bf16.mxu0 0
    %2797 = vmatpush2.bf16.msra.mxu0 0
    %2798 = vmatprep.subr.bf16.mxu0 0
    %2799 = vmatpush2.bf16.msra.mxu0 0
    %2800 = vmatprep.subr.bf16.mxu0 0
    %2801 = vmatpush2.bf16.msra.mxu0 0
    %2802 = vmatprep.subr.bf16.mxu0 0
    %2803 = vmatpush2.bf16.msra.mxu0 0
    %2804 = vmatprep.subr.bf16.mxu0 0
    %2805 = vmatpush2.bf16.msra.mxu0 0
    %2806 = vmatprep.subr.bf16.mxu0 0
    %2807 = vmatpush2.bf16.msra.mxu0 0
    %2808 = vmatprep.mubr.bf16.mxu0 0
    %2809 = vmatmul.mubr.bf16.gmra.mxu0 %v2765
    %v2810 = vpop.f32.mrf.mxu0
    %v2811 = vadd.f32 %v2751, %v2810
    %v2812 = vpop.f32.mrf.mxu0
    %v2813 = vpop.f32.mrf.mxu0
    %v2814 = vadd.f32 %v2751, %v2813
    %v2815 = vpop.f32.mrf.mxu0
    %2816 = vmatprep.mubr.bf16.mxu0 0
    %2817 = vmatmul.mubr.bf16.gmra.mxu0 %v2768
    %v2818 = vpop.f32.mrf.mxu0
    %v2819 = vadd.f32 %v2751, %v2818
    %v2820 = vpop.f32.mrf.mxu0
    %v2821 = vpop.f32.mrf.mxu0
    %v2822 = vadd.f32 %v2751, %v2821
    %v2823 = vpop.f32.mrf.mxu0
    %2824 = vmatprep.mubr.bf16.mxu0 0
    %2825 = vmatmul.mubr.bf16.gmra.mxu0 %v2771
    %v2826 = vpop.f32.mrf.mxu0
    %v2827 = vadd.f32 %v2751, %v2826
    %v2828 = vpop.f32.mrf.mxu0
    %v2829 = vpop.f32.mrf.mxu0
    %v2830 = vadd.f32 %v2751, %v2829
    %v2831 = vpop.f32.mrf.mxu0
    %2832 = vmatprep.mubr.bf16.mxu0 0
    %2833 = vmatmul.mubr.bf16.gmra.mxu0 %v2774
    %v2834 = vpop.f32.mrf.mxu0
    %v2835 = vadd.f32 %v2751, %v2834
    %v2836 = vpop.f32.mrf.mxu0
    %v2837 = vpop.f32.mrf.mxu0
    %v2838 = vadd.f32 %v2751, %v2837
    %v2839 = vpop.f32.mrf.mxu0
    %2840 = vdwg.mxu0
    %v2841 = vadd.f32 %v206, %v2811
    %v2842 = vadd.f32 %v207, %v2814
    %v2843 = vadd.f32 %v208, %v2819
    %v2844 = vadd.f32 %v209, %v2822
    %v2845 = vadd.f32 %v210, %v2827
    %v2846 = vadd.f32 %v211, %v2830
    %v2847 = vadd.f32 %v212, %v2835
    %v2848 = vadd.f32 %v213, %v2838
    %v2849 = vld [vmem:[%s9] sm:$0x1]
    %v2850 = vld [vmem:[%s10] sm:$0x1]
    %v2851 = vsel %vm216, %v2841, 0.0
    %2852 = vadd.xlane.f32.xlu0 %v2851
    %v2853 = vpop.xlane.xlu0 %2852
    %v2854 = vsel %vm216, %v2842, 0.0
    %2855 = vadd.xlane.f32.xlu0 %v2854
    %v2856 = vpop.xlane.xlu0 %2855
    %v2857 = vsel %vm216, %v2843, 0.0
    %2858 = vadd.xlane.f32.xlu0 %v2857
    %v2859 = vpop.xlane.xlu0 %2858
    %v2860 = vsel %vm216, %v2844, 0.0
    %2861 = vadd.xlane.f32.xlu0 %v2860
    %v2862 = vpop.xlane.xlu0 %2861
    %v2863 = vsel %vm216, %v2845, 0.0
    %2864 = vadd.xlane.f32.xlu0 %v2863
    %v2865 = vpop.xlane.xlu0 %2864
    %v2866 = vsel %vm216, %v2846, 0.0
    %2867 = vadd.xlane.f32.xlu0 %v2866
    %v2868 = vpop.xlane.xlu0 %2867
    %v2869 = vsel %vm216, %v2847, 0.0
    %2870 = vadd.xlane.f32.xlu0 %v2869
    %v2871 = vpop.xlane.xlu0 %2870
    %v2872 = vsel %vm216, %v2848, 0.0
    %2873 = vadd.xlane.f32.xlu0 %v2872
    %v2874 = vpop.xlane.xlu0 %2873
    %v2875 = vmul.f32 %v2853, %v241
    %v2876 = vmul.f32 %v2856, %v241
    %v2877 = vmul.f32 %v2859, %v241
    %v2878 = vmul.f32 %v2862, %v241
    %v2879 = vmul.f32 %v2865, %v241
    %v2880 = vmul.f32 %v2868, %v241
    %v2881 = vmul.f32 %v2871, %v241
    %v2882 = vmul.f32 %v2874, %v241
    %v2883 = vsub.f32 %v2841, %v2875
    %v2884 = vsub.f32 %v2842, %v2876
    %v2885 = vsub.f32 %v2843, %v2877
    %v2886 = vsub.f32 %v2844, %v2878
    %v2887 = vsub.f32 %v2845, %v2879
    %v2888 = vsub.f32 %v2846, %v2880
    %v2889 = vsub.f32 %v2847, %v2881
    %v2890 = vsub.f32 %v2848, %v2882
    %v2891 = vmul.f32 %v2883, %v2883
    %v2892 = vmul.f32 %v2884, %v2884
    %v2893 = vmul.f32 %v2885, %v2885
    %v2894 = vmul.f32 %v2886, %v2886
    %v2895 = vmul.f32 %v2887, %v2887
    %v2896 = vmul.f32 %v2888, %v2888
    %v2897 = vmul.f32 %v2889, %v2889
    %v2898 = vmul.f32 %v2890, %v2890
    %v2899 = vsel %vm216, %v2891, 0.0
    %2900 = vadd.xlane.f32.xlu0 %v2899
    %v2901 = vpop.xlane.xlu0 %2900
    %v2902 = vsel %vm216, %v2892, 0.0
    %2903 = vadd.xlane.f32.xlu0 %v2902
    %v2904 = vpop.xlane.xlu0 %2903
    %v2905 = vsel %vm216, %v2893, 0.0
    %2906 = vadd.xlane.f32.xlu0 %v2905
    %v2907 = vpop.xlane.xlu0 %2906
    %v2908 = vsel %vm216, %v2894, 0.0
    %2909 = vadd.xlane.f32.xlu0 %v2908
    %v2910 = vpop.xlane.xlu0 %2909
    %v2911 = vsel %vm216, %v2895, 0.0
    %2912 = vadd.xlane.f32.xlu0 %v2911
    %v2913 = vpop.xlane.xlu0 %2912
    %v2914 = vsel %vm216, %v2896, 0.0
    %2915 = vadd.xlane.f32.xlu0 %v2914
    %v2916 = vpop.xlane.xlu0 %2915
    %v2917 = vsel %vm216, %v2897, 0.0
    %2918 = vadd.xlane.f32.xlu0 %v2917
    %v2919 = vpop.xlane.xlu0 %2918
    %v2920 = vsel %vm216, %v2898, 0.0
    %2921 = vadd.xlane.f32.xlu0 %v2920
    %v2922 = vpop.xlane.xlu0 %2921
    %v2923 = vmul.f32 %v2901, %v241
    %v2924 = vmul.f32 %v2904, %v241
    %v2925 = vmul.f32 %v2907, %v241
    %v2926 = vmul.f32 %v2910, %v241
    %v2927 = vmul.f32 %v2913, %v241
    %v2928 = vmul.f32 %v2916, %v241
    %v2929 = vmul.f32 %v2919, %v241
    %v2930 = vmul.f32 %v2922, %v241
    %v2931 = vadd.f32 %v2923, 1e-06
    %v2932 = vadd.f32 %v2924, 1e-06
    %v2933 = vadd.f32 %v2925, 1e-06
    %v2934 = vadd.f32 %v2926, 1e-06
    %v2935 = vadd.f32 %v2927, 1e-06
    %v2936 = vadd.f32 %v2928, 1e-06
    %v2937 = vadd.f32 %v2929, 1e-06
    %v2938 = vadd.f32 %v2930, 1e-06
    %v2939 = vrsqrt.pop %v2931
    %v2940 = vrsqrt.pop %v2932
    %v2941 = vrsqrt.pop %v2933
    %v2942 = vrsqrt.pop %v2934
    %v2943 = vrsqrt.pop %v2935
    %v2944 = vrsqrt.pop %v2936
    %v2945 = vrsqrt.pop %v2937
    %v2946 = vrsqrt.pop %v2938
    %v2947 = vmul.f32 %v2883, %v2939
    %v2948 = vmul.f32 %v2884, %v2940
    %v2949 = vmul.f32 %v2885, %v2941
    %v2950 = vmul.f32 %v2886, %v2942
    %v2951 = vmul.f32 %v2887, %v2943
    %v2952 = vmul.f32 %v2888, %v2944
    %v2953 = vmul.f32 %v2889, %v2945
    %v2954 = vmul.f32 %v2890, %v2946
    %v2955 = vlaneseq
    %v2956 = vshrl.u32 %v2955, 7
    %v2957 = vsub.s32 0, %v2956
    %v2958 = vrot.slane %v2849, %v2957
    %v2959 = vmul.f32 %v2947, %v2958
    %v2960 = vmul.f32 %v2948, %v2958
    %v2961 = vmul.f32 %v2949, %v2958
    %v2962 = vmul.f32 %v2950, %v2958
    %v2963 = vmul.f32 %v2951, %v2958
    %v2964 = vmul.f32 %v2952, %v2958
    %v2965 = vmul.f32 %v2953, %v2958
    %v2966 = vmul.f32 %v2954, %v2958
    %v2967 = vlaneseq
    %v2968 = vshrl.u32 %v2967, 7
    %v2969 = vsub.s32 0, %v2968
    %v2970 = vrot.slane %v2850, %v2969
    %v2971 = vadd.f32 %v2959, %v2970
    %v2972 = vadd.f32 %v2960, %v2970
    %v2973 = vadd.f32 %v2961, %v2970
    %v2974 = vadd.f32 %v2962, %v2970
    %v2975 = vadd.f32 %v2963, %v2970
    %v2976 = vadd.f32 %v2964, %v2970
    %v2977 = vadd.f32 %v2965, %v2970
    %v2978 = vadd.f32 %v2966, %v2970
    %v2979 = vpack.c.bf16 %v2972, %v2971
    %v2980 = vpack.c.bf16 %v2974, %v2973
    %v2981 = vpack.c.bf16 %v2976, %v2975
    %v2982 = vpack.c.bf16 %v2978, %v2977
    %v2983 = vld [vmem:[%s11] sm:$0xf]
    %v2984 = vld [vmem:[%s11 + $0x4] sm:$0xf]
    %v2985 = vld [vmem:[%s11 + $0x8] sm:$0xf]
    %v2986 = vld [vmem:[%s11 + $0xc] sm:$0xf]
    %v2987 = vld [vmem:[%s12] sm:$0x1]
    %v2988 = vlaneseq
    %v2989 = vshrl.u32 %v2988, 7
    %v2990 = vsub.s32 0, %v2989
    %v2991 = vrot.slane %v2987, %v2990
    %v2996 = vunpack.c.l.b16 %v2983
    %v2997 = vunpack.c.l.b16 %v2984
    %v2998 = vunpack.c.l.b16 %v2985
    %v2999 = vunpack.c.l.b16 %v2986
    %v3000 = vpack.c.b16 %v2997, %v2996
    %v3001 = vpack.c.b16 %v2999, %v2998
    %v3005 = vsel %vm216, %v2979, 0
    %v3008 = vsel %vm216, %v2980, 0
    %v3011 = vsel %vm216, %v2981, 0
    %v3014 = vsel %vm216, %v2982, 0
    %3016 = vmatprep.subr.bf16.mxu0 0
    %3017 = vmatpush1.bf16.msra.mxu0 0
    %3018 = vmatprep.subr.bf16.mxu0 0
    %3019 = vmatpush1.bf16.msra.mxu0 0
    %3020 = vmatprep.subr.bf16.mxu0 0
    %3021 = vmatpush1.bf16.msra.mxu0 0
    %3022 = vmatprep.subr.bf16.mxu0 0
    %3023 = vmatpush1.bf16.msra.mxu0 0
    %3024 = vmatprep.subr.bf16.mxu0 0
    %3025 = vmatpush1.bf16.msra.mxu0 0
    %3026 = vmatprep.subr.bf16.mxu0 0
    %3027 = vmatpush1.bf16.msra.mxu0 0
    %3028 = vmatprep.subr.bf16.mxu0 0
    %3029 = vmatpush1.bf16.msra.mxu0 %v3001
    %3030 = vmatprep.subr.bf16.mxu0 0
    %3031 = vmatpush1.bf16.msra.mxu0 %v3000
    %3032 = vmatprep.subr.bf16.mxu0 0
    %3033 = vmatpush2.bf16.msra.mxu0 0
    %3034 = vmatprep.subr.bf16.mxu0 0
    %3035 = vmatpush2.bf16.msra.mxu0 0
    %3036 = vmatprep.subr.bf16.mxu0 0
    %3037 = vmatpush2.bf16.msra.mxu0 0
    %3038 = vmatprep.subr.bf16.mxu0 0
    %3039 = vmatpush2.bf16.msra.mxu0 0
    %3040 = vmatprep.subr.bf16.mxu0 0
    %3041 = vmatpush2.bf16.msra.mxu0 0
    %3042 = vmatprep.subr.bf16.mxu0 0
    %3043 = vmatpush2.bf16.msra.mxu0 0
    %3044 = vmatprep.subr.bf16.mxu0 0
    %3045 = vmatpush2.bf16.msra.mxu0 0
    %3046 = vmatprep.subr.bf16.mxu0 0
    %3047 = vmatpush2.bf16.msra.mxu0 0
    %3048 = vmatprep.mubr.bf16.mxu0 0
    %3049 = vmatmul.mubr.bf16.gmra.mxu0 %v3005
    %v3050 = vpop.f32.mrf.mxu0
    %v3051 = vadd.f32 %v2991, %v3050
    %v3052 = vpop.f32.mrf.mxu0
    %v3053 = vpop.f32.mrf.mxu0
    %v3054 = vadd.f32 %v2991, %v3053
    %v3055 = vpop.f32.mrf.mxu0
    %3056 = vmatprep.mubr.bf16.mxu0 0
    %3057 = vmatmul.mubr.bf16.gmra.mxu0 %v3008
    %v3058 = vpop.f32.mrf.mxu0
    %v3059 = vadd.f32 %v2991, %v3058
    %v3060 = vpop.f32.mrf.mxu0
    %v3061 = vpop.f32.mrf.mxu0
    %v3062 = vadd.f32 %v2991, %v3061
    %v3063 = vpop.f32.mrf.mxu0
    %3064 = vmatprep.mubr.bf16.mxu0 0
    %3065 = vmatmul.mubr.bf16.gmra.mxu0 %v3011
    %v3066 = vpop.f32.mrf.mxu0
    %v3067 = vadd.f32 %v2991, %v3066
    %v3068 = vpop.f32.mrf.mxu0
    %v3069 = vpop.f32.mrf.mxu0
    %v3070 = vadd.f32 %v2991, %v3069
    %v3071 = vpop.f32.mrf.mxu0
    %3072 = vmatprep.mubr.bf16.mxu0 0
    %3073 = vmatmul.mubr.bf16.gmra.mxu0 %v3014
    %v3074 = vpop.f32.mrf.mxu0
    %v3075 = vadd.f32 %v2991, %v3074
    %v3076 = vpop.f32.mrf.mxu0
    %v3077 = vpop.f32.mrf.mxu0
    %v3078 = vadd.f32 %v2991, %v3077
    %v3079 = vpop.f32.mrf.mxu0
    %3080 = vdwg.mxu0
    %v3081 = vmax.f32 %v3051, 0.0
    %v3082 = vmax.f32 %v3054, 0.0
    %v3083 = vmax.f32 %v3059, 0.0
    %v3084 = vmax.f32 %v3062, 0.0
    %v3085 = vmax.f32 %v3067, 0.0
    %v3086 = vmax.f32 %v3070, 0.0
    %v3087 = vmax.f32 %v3075, 0.0
    %v3088 = vmax.f32 %v3078, 0.0
    %v3089 = vpack.c.bf16 %v3082, %v3081
    %v3090 = vpack.c.bf16 %v3084, %v3083
    %v3091 = vpack.c.bf16 %v3086, %v3085
    %v3092 = vpack.c.bf16 %v3088, %v3087
    %v3093 = vld [vmem:[%s13] sm:$0xf]
    %v3094 = vld [vmem:[%s13 + $0x4] sm:$0xf]
    %v3095 = vld [vmem:[%s13 + $0x8] sm:$0xf]
    %v3096 = vld [vmem:[%s13 + $0xc] sm:$0xf]
    %v3097 = vld [vmem:[%s13 + $0x10] sm:$0xf]
    %v3098 = vld [vmem:[%s13 + $0x14] sm:$0xf]
    %v3099 = vld [vmem:[%s13 + $0x18] sm:$0xf]
    %v3100 = vld [vmem:[%s13 + $0x1c] sm:$0xf]
    %v3101 = vld [vmem:[%s14] sm:$0x1]
    %v3102 = vlaneseq
    %v3103 = vshrl.u32 %v3102, 7
    %v3104 = vsub.s32 0, %v3103
    %v3105 = vrot.slane %v3101, %v3104
    %v3114 = vunpack.c.l.b16 %v3093
    %v3115 = vunpack.c.l.b16 %v3094
    %v3116 = vunpack.c.l.b16 %v3095
    %v3117 = vunpack.c.l.b16 %v3096
    %v3118 = vunpack.c.l.b16 %v3097
    %v3119 = vunpack.c.l.b16 %v3098
    %v3120 = vunpack.c.l.b16 %v3099
    %v3121 = vunpack.c.l.b16 %v3100
    %v3122 = vpack.c.b16 %v3115, %v3114
    %v3123 = vpack.c.b16 %v3117, %v3116
    %v3124 = vpack.c.b16 %v3119, %v3118
    %v3125 = vpack.c.b16 %v3121, %v3120
    %vm3130 = vcmask 523264
    %v3132 = vsel %vm3130, %v3089, 0
    %v3135 = vsel %vm3130, %v3090, 0
    %v3138 = vsel %vm3130, %v3091, 0
    %v3141 = vsel %vm3130, %v3092, 0
    %3143 = vmatprep.subr.bf16.mxu0 0
    %3144 = vmatpush1.bf16.msra.mxu0 0
    %3145 = vmatprep.subr.bf16.mxu0 0
    %3146 = vmatpush1.bf16.msra.mxu0 0
    %3147 = vmatprep.subr.bf16.mxu0 0
    %3148 = vmatpush1.bf16.msra.mxu0 0
    %3149 = vmatprep.subr.bf16.mxu0 0
    %3150 = vmatpush1.bf16.msra.mxu0 0
    %3151 = vmatprep.subr.bf16.mxu0 0
    %3152 = vmatpush1.bf16.msra.mxu0 %v3125
    %3153 = vmatprep.subr.bf16.mxu0 0
    %3154 = vmatpush1.bf16.msra.mxu0 %v3124
    %3155 = vmatprep.subr.bf16.mxu0 0
    %3156 = vmatpush1.bf16.msra.mxu0 %v3123
    %3157 = vmatprep.subr.bf16.mxu0 0
    %3158 = vmatpush1.bf16.msra.mxu0 %v3122
    %3159 = vmatprep.subr.bf16.mxu0 0
    %3160 = vmatpush2.bf16.msra.mxu0 0
    %3161 = vmatprep.subr.bf16.mxu0 0
    %3162 = vmatpush2.bf16.msra.mxu0 0
    %3163 = vmatprep.subr.bf16.mxu0 0
    %3164 = vmatpush2.bf16.msra.mxu0 0
    %3165 = vmatprep.subr.bf16.mxu0 0
    %3166 = vmatpush2.bf16.msra.mxu0 0
    %3167 = vmatprep.subr.bf16.mxu0 0
    %3168 = vmatpush2.bf16.msra.mxu0 0
    %3169 = vmatprep.subr.bf16.mxu0 0
    %3170 = vmatpush2.bf16.msra.mxu0 0
    %3171 = vmatprep.subr.bf16.mxu0 0
    %3172 = vmatpush2.bf16.msra.mxu0 0
    %3173 = vmatprep.subr.bf16.mxu0 0
    %3174 = vmatpush2.bf16.msra.mxu0 0
    %3175 = vmatprep.mubr.bf16.mxu0 0
    %3176 = vmatmul.mubr.bf16.gmra.mxu0 %v3132
    %v3177 = vpop.f32.mrf.mxu0
    %v3178 = vadd.f32 %v3105, %v3177
    %v3179 = vpop.f32.mrf.mxu0
    %v3180 = vpop.f32.mrf.mxu0
    %v3181 = vadd.f32 %v3105, %v3180
    %v3182 = vpop.f32.mrf.mxu0
    %3183 = vmatprep.mubr.bf16.mxu0 0
    %3184 = vmatmul.mubr.bf16.gmra.mxu0 %v3135
    %v3185 = vpop.f32.mrf.mxu0
    %v3186 = vadd.f32 %v3105, %v3185
    %v3187 = vpop.f32.mrf.mxu0
    %v3188 = vpop.f32.mrf.mxu0
    %v3189 = vadd.f32 %v3105, %v3188
    %v3190 = vpop.f32.mrf.mxu0
    %3191 = vmatprep.mubr.bf16.mxu0 0
    %3192 = vmatmul.mubr.bf16.gmra.mxu0 %v3138
    %v3193 = vpop.f32.mrf.mxu0
    %v3194 = vadd.f32 %v3105, %v3193
    %v3195 = vpop.f32.mrf.mxu0
    %v3196 = vpop.f32.mrf.mxu0
    %v3197 = vadd.f32 %v3105, %v3196
    %v3198 = vpop.f32.mrf.mxu0
    %3199 = vmatprep.mubr.bf16.mxu0 0
    %3200 = vmatmul.mubr.bf16.gmra.mxu0 %v3141
    %v3201 = vpop.f32.mrf.mxu0
    %v3202 = vadd.f32 %v3105, %v3201
    %v3203 = vpop.f32.mrf.mxu0
    %v3204 = vpop.f32.mrf.mxu0
    %v3205 = vadd.f32 %v3105, %v3204
    %v3206 = vpop.f32.mrf.mxu0
    %3207 = vdwg.mxu0
    %v3208 = vadd.f32 %v2841, %v3178
    %v3209 = vadd.f32 %v2842, %v3181
    %v3210 = vadd.f32 %v2843, %v3186
    %v3211 = vadd.f32 %v2844, %v3189
    %v3212 = vadd.f32 %v2845, %v3194
    %v3213 = vadd.f32 %v2846, %v3197
    %v3214 = vadd.f32 %v2847, %v3202
    %v3215 = vadd.f32 %v2848, %v3205
    %v3216 = vld [vmem:[%s3 + $0x1] sm:$0x1]
    %v3217 = vld [vmem:[%s4 + $0x1] sm:$0x1]
    %v3218 = vsel %vm216, %v3208, 0.0
    %3219 = vadd.xlane.f32.xlu0 %v3218
    %v3220 = vpop.xlane.xlu0 %3219
    %v3221 = vsel %vm216, %v3209, 0.0
    %3222 = vadd.xlane.f32.xlu0 %v3221
    %v3223 = vpop.xlane.xlu0 %3222
    %v3224 = vsel %vm216, %v3210, 0.0
    %3225 = vadd.xlane.f32.xlu0 %v3224
    %v3226 = vpop.xlane.xlu0 %3225
    %v3227 = vsel %vm216, %v3211, 0.0
    %3228 = vadd.xlane.f32.xlu0 %v3227
    %v3229 = vpop.xlane.xlu0 %3228
    %v3230 = vsel %vm216, %v3212, 0.0
    %3231 = vadd.xlane.f32.xlu0 %v3230
    %v3232 = vpop.xlane.xlu0 %3231
    %v3233 = vsel %vm216, %v3213, 0.0
    %3234 = vadd.xlane.f32.xlu0 %v3233
    %v3235 = vpop.xlane.xlu0 %3234
    %v3236 = vsel %vm216, %v3214, 0.0
    %3237 = vadd.xlane.f32.xlu0 %v3236
    %v3238 = vpop.xlane.xlu0 %3237
    %v3239 = vsel %vm216, %v3215, 0.0
    %3240 = vadd.xlane.f32.xlu0 %v3239
    %v3241 = vpop.xlane.xlu0 %3240
    %v3242 = vmul.f32 %v3220, %v241
    %v3243 = vmul.f32 %v3223, %v241
    %v3244 = vmul.f32 %v3226, %v241
    %v3245 = vmul.f32 %v3229, %v241
    %v3246 = vmul.f32 %v3232, %v241
    %v3247 = vmul.f32 %v3235, %v241
    %v3248 = vmul.f32 %v3238, %v241
    %v3249 = vmul.f32 %v3241, %v241
    %v3250 = vsub.f32 %v3208, %v3242
    %v3251 = vsub.f32 %v3209, %v3243
    %v3252 = vsub.f32 %v3210, %v3244
    %v3253 = vsub.f32 %v3211, %v3245
    %v3254 = vsub.f32 %v3212, %v3246
    %v3255 = vsub.f32 %v3213, %v3247
    %v3256 = vsub.f32 %v3214, %v3248
    %v3257 = vsub.f32 %v3215, %v3249
    %v3258 = vmul.f32 %v3250, %v3250
    %v3259 = vmul.f32 %v3251, %v3251
    %v3260 = vmul.f32 %v3252, %v3252
    %v3261 = vmul.f32 %v3253, %v3253
    %v3262 = vmul.f32 %v3254, %v3254
    %v3263 = vmul.f32 %v3255, %v3255
    %v3264 = vmul.f32 %v3256, %v3256
    %v3265 = vmul.f32 %v3257, %v3257
    %v3266 = vsel %vm216, %v3258, 0.0
    %3267 = vadd.xlane.f32.xlu0 %v3266
    %v3268 = vpop.xlane.xlu0 %3267
    %v3269 = vsel %vm216, %v3259, 0.0
    %3270 = vadd.xlane.f32.xlu0 %v3269
    %v3271 = vpop.xlane.xlu0 %3270
    %v3272 = vsel %vm216, %v3260, 0.0
    %3273 = vadd.xlane.f32.xlu0 %v3272
    %v3274 = vpop.xlane.xlu0 %3273
    %v3275 = vsel %vm216, %v3261, 0.0
    %3276 = vadd.xlane.f32.xlu0 %v3275
    %v3277 = vpop.xlane.xlu0 %3276
    %v3278 = vsel %vm216, %v3262, 0.0
    %3279 = vadd.xlane.f32.xlu0 %v3278
    %v3280 = vpop.xlane.xlu0 %3279
    %v3281 = vsel %vm216, %v3263, 0.0
    %3282 = vadd.xlane.f32.xlu0 %v3281
    %v3283 = vpop.xlane.xlu0 %3282
    %v3284 = vsel %vm216, %v3264, 0.0
    %3285 = vadd.xlane.f32.xlu0 %v3284
    %v3286 = vpop.xlane.xlu0 %3285
    %v3287 = vsel %vm216, %v3265, 0.0
    %3288 = vadd.xlane.f32.xlu0 %v3287
    %v3289 = vpop.xlane.xlu0 %3288
    %v3290 = vmul.f32 %v3268, %v241
    %v3291 = vmul.f32 %v3271, %v241
    %v3292 = vmul.f32 %v3274, %v241
    %v3293 = vmul.f32 %v3277, %v241
    %v3294 = vmul.f32 %v3280, %v241
    %v3295 = vmul.f32 %v3283, %v241
    %v3296 = vmul.f32 %v3286, %v241
    %v3297 = vmul.f32 %v3289, %v241
    %v3298 = vadd.f32 %v3290, 1e-06
    %v3299 = vadd.f32 %v3291, 1e-06
    %v3300 = vadd.f32 %v3292, 1e-06
    %v3301 = vadd.f32 %v3293, 1e-06
    %v3302 = vadd.f32 %v3294, 1e-06
    %v3303 = vadd.f32 %v3295, 1e-06
    %v3304 = vadd.f32 %v3296, 1e-06
    %v3305 = vadd.f32 %v3297, 1e-06
    %v3306 = vrsqrt.pop %v3298
    %v3307 = vrsqrt.pop %v3299
    %v3308 = vrsqrt.pop %v3300
    %v3309 = vrsqrt.pop %v3301
    %v3310 = vrsqrt.pop %v3302
    %v3311 = vrsqrt.pop %v3303
    %v3312 = vrsqrt.pop %v3304
    %v3313 = vrsqrt.pop %v3305
    %v3314 = vmul.f32 %v3250, %v3306
    %v3315 = vmul.f32 %v3251, %v3307
    %v3316 = vmul.f32 %v3252, %v3308
    %v3317 = vmul.f32 %v3253, %v3309
    %v3318 = vmul.f32 %v3254, %v3310
    %v3319 = vmul.f32 %v3255, %v3311
    %v3320 = vmul.f32 %v3256, %v3312
    %v3321 = vmul.f32 %v3257, %v3313
    %v3322 = vlaneseq
    %v3323 = vshrl.u32 %v3322, 7
    %v3324 = vsub.s32 0, %v3323
    %v3325 = vrot.slane %v3216, %v3324
    %v3326 = vmul.f32 %v3314, %v3325
    %v3327 = vmul.f32 %v3315, %v3325
    %v3328 = vmul.f32 %v3316, %v3325
    %v3329 = vmul.f32 %v3317, %v3325
    %v3330 = vmul.f32 %v3318, %v3325
    %v3331 = vmul.f32 %v3319, %v3325
    %v3332 = vmul.f32 %v3320, %v3325
    %v3333 = vmul.f32 %v3321, %v3325
    %v3334 = vlaneseq
    %v3335 = vshrl.u32 %v3334, 7
    %v3336 = vsub.s32 0, %v3335
    %v3337 = vrot.slane %v3217, %v3336
    %v3338 = vadd.f32 %v3326, %v3337
    %v3339 = vadd.f32 %v3327, %v3337
    %v3340 = vadd.f32 %v3328, %v3337
    %v3341 = vadd.f32 %v3329, %v3337
    %v3342 = vadd.f32 %v3330, %v3337
    %v3343 = vadd.f32 %v3331, %v3337
    %v3344 = vadd.f32 %v3332, %v3337
    %v3345 = vadd.f32 %v3333, %v3337
    %v3346 = vpack.c.bf16 %v3339, %v3338
    %v3347 = vpack.c.bf16 %v3341, %v3340
    %v3348 = vpack.c.bf16 %v3343, %v3342
    %v3349 = vpack.c.bf16 %v3345, %v3344
    %s3350 = scalar_lea.vmem %s5, 16
    %v3351 = vld [vmem:[%s3350] sm:$0xf]
    %v3352 = vld [vmem:[%s3350 + $0x4] sm:$0xf]
    %v3353 = vld [vmem:[%s3350 + $0x8] sm:$0xf]
    %v3354 = vld [vmem:[%s3350 + $0xc] sm:$0xf]
    %v3355 = vld [vmem:[%s6 + $0x1] sm:$0x1]
    %v3356 = vlaneseq
    %v3357 = vshrl.u32 %v3356, 7
    %v3358 = vsub.s32 0, %v3357
    %v3359 = vrot.slane %v3355, %v3358
    %v3364 = vunpack.c.l.b16 %v3351
    %v3365 = vunpack.c.l.b16 %v3352
    %v3366 = vunpack.c.l.b16 %v3353
    %v3367 = vunpack.c.l.b16 %v3354
    %v3368 = vpack.c.b16 %v3365, %v3364
    %v3369 = vpack.c.b16 %v3367, %v3366
    %v3373 = vsel %vm216, %v3346, 0
    %v3376 = vsel %vm216, %v3347, 0
    %v3379 = vsel %vm216, %v3348, 0
    %v3382 = vsel %vm216, %v3349, 0
    %3384 = vmatprep.subr.bf16.mxu0 0
    %3385 = vmatpush1.bf16.msra.mxu0 0
    %3386 = vmatprep.subr.bf16.mxu0 0
    %3387 = vmatpush1.bf16.msra.mxu0 0
    %3388 = vmatprep.subr.bf16.mxu0 0
    %3389 = vmatpush1.bf16.msra.mxu0 0
    %3390 = vmatprep.subr.bf16.mxu0 0
    %3391 = vmatpush1.bf16.msra.mxu0 0
    %3392 = vmatprep.subr.bf16.mxu0 0
    %3393 = vmatpush1.bf16.msra.mxu0 0
    %3394 = vmatprep.subr.bf16.mxu0 0
    %3395 = vmatpush1.bf16.msra.mxu0 0
    %3396 = vmatprep.subr.bf16.mxu0 0
    %3397 = vmatpush1.bf16.msra.mxu0 %v3369
    %3398 = vmatprep.subr.bf16.mxu0 0
    %3399 = vmatpush1.bf16.msra.mxu0 %v3368
    %3400 = vmatprep.subr.bf16.mxu0 0
    %3401 = vmatpush2.bf16.msra.mxu0 0
    %3402 = vmatprep.subr.bf16.mxu0 0
    %3403 = vmatpush2.bf16.msra.mxu0 0
    %3404 = vmatprep.subr.bf16.mxu0 0
    %3405 = vmatpush2.bf16.msra.mxu0 0
    %3406 = vmatprep.subr.bf16.mxu0 0
    %3407 = vmatpush2.bf16.msra.mxu0 0
    %3408 = vmatprep.subr.bf16.mxu0 0
    %3409 = vmatpush2.bf16.msra.mxu0 0
    %3410 = vmatprep.subr.bf16.mxu0 0
    %3411 = vmatpush2.bf16.msra.mxu0 0
    %3412 = vmatprep.subr.bf16.mxu0 0
    %3413 = vmatpush2.bf16.msra.mxu0 0
    %3414 = vmatprep.subr.bf16.mxu0 0
    %3415 = vmatpush2.bf16.msra.mxu0 0
    %3416 = vmatprep.mubr.bf16.mxu0 0
    %3417 = vmatmul.mubr.bf16.gmra.mxu0 %v3373
    %v3418 = vpop.f32.mrf.mxu0
    %v3419 = vadd.f32 %v3359, %v3418
    %v3420 = vpop.f32.mrf.mxu0
    %v3421 = vpop.f32.mrf.mxu0
    %v3422 = vadd.f32 %v3359, %v3421
    %v3423 = vpop.f32.mrf.mxu0
    %3424 = vmatprep.mubr.bf16.mxu0 0
    %3425 = vmatmul.mubr.bf16.gmra.mxu0 %v3376
    %v3426 = vpop.f32.mrf.mxu0
    %v3427 = vadd.f32 %v3359, %v3426
    %v3428 = vpop.f32.mrf.mxu0
    %v3429 = vpop.f32.mrf.mxu0
    %v3430 = vadd.f32 %v3359, %v3429
    %v3431 = vpop.f32.mrf.mxu0
    %3432 = vmatprep.mubr.bf16.mxu0 0
    %3433 = vmatmul.mubr.bf16.gmra.mxu0 %v3379
    %v3434 = vpop.f32.mrf.mxu0
    %v3435 = vadd.f32 %v3359, %v3434
    %v3436 = vpop.f32.mrf.mxu0
    %v3437 = vpop.f32.mrf.mxu0
    %v3438 = vadd.f32 %v3359, %v3437
    %v3439 = vpop.f32.mrf.mxu0
    %3440 = vmatprep.mubr.bf16.mxu0 0
    %3441 = vmatmul.mubr.bf16.gmra.mxu0 %v3382
    %v3442 = vpop.f32.mrf.mxu0
    %v3443 = vadd.f32 %v3359, %v3442
    %v3444 = vpop.f32.mrf.mxu0
    %v3445 = vpop.f32.mrf.mxu0
    %v3446 = vadd.f32 %v3359, %v3445
    %v3447 = vpop.f32.mrf.mxu0
    %3448 = vdwg.mxu0
    %v3449 = vmul.f32 %v3419, 0.35355338
    %v3450 = vmul.f32 %v3422, 0.35355338
    %v3451 = vmul.f32 %v3427, 0.35355338
    %v3452 = vmul.f32 %v3430, 0.35355338
    %3457 = vrot.lane.b32.xlu0 %v3419, 96
    %v3458 = vpop.permute.xlu0 %3457
    %3459 = vrot.lane.b32.xlu0 %v3422, 96
    %v3460 = vpop.permute.xlu0 %3459
    %3461 = vrot.lane.b32.xlu0 %v3427, 96
    %v3462 = vpop.permute.xlu0 %3461
    %3463 = vrot.lane.b32.xlu0 %v3430, 96
    %v3464 = vpop.permute.xlu0 %3463
    %v3466 = vsel %vm464, %v3449, 0
    %v3469 = vsel %vm464, %v3450, 0
    %v3472 = vsel %vm464, %v3451, 0
    %v3475 = vsel %vm464, %v3452, 0
    %v3477 = vsel %vm464, %v3458, 0
    %v3479 = vsel %vm464, %v3460, 0
    %v3481 = vsel %vm464, %v3462, 0
    %v3483 = vsel %vm464, %v3464, 0
    %3485 = vmatprep.subr.mxu0 0.0
    %3486 = vmatpush1.xpose.msra.mxu0 0.0
    %3487 = vmatprep.subr.mxu0 0.0
    %3488 = vmatpush1.xpose.msra.mxu0 0.0
    %3489 = vmatprep.subr.mxu0 0.0
    %3490 = vmatpush1.xpose.msra.mxu0 0.0
    %3491 = vmatprep.subr.mxu0 0.0
    %3492 = vmatpush1.xpose.msra.mxu0 0.0
    %3493 = vmatprep.subr.mxu0 0.0
    %3494 = vmatpush1.xpose.msra.mxu0 0.0
    %3495 = vmatprep.subr.mxu0 0.0
    %3496 = vmatpush1.xpose.msra.mxu0 0.0
    %3497 = vmatprep.subr.mxu0 0.0
    %3498 = vmatpush1.xpose.msra.mxu0 0.0
    %3499 = vmatprep.subr.mxu0 0.0
    %3500 = vmatpush1.xpose.msra.mxu0 0.0
    %3501 = vmatprep.subr.mxu0 0.0
    %3502 = vmatpush1.xpose.msra.mxu0 0.0
    %3503 = vmatprep.subr.mxu0 0.0
    %3504 = vmatpush1.xpose.msra.mxu0 0.0
    %3505 = vmatprep.subr.mxu0 0.0
    %3506 = vmatpush1.xpose.msra.mxu0 0.0
    %3507 = vmatprep.subr.mxu0 0.0
    %3508 = vmatpush1.xpose.msra.mxu0 0.0
    %3509 = vmatprep.subr.mxu0 0.0
    %3510 = vmatpush1.xpose.msra.mxu0 %v3483
    %3511 = vmatprep.subr.mxu0 0.0
    %3512 = vmatpush1.xpose.msra.mxu0 %v3481
    %3513 = vmatprep.subr.mxu0 0.0
    %3514 = vmatpush1.xpose.msra.mxu0 %v3479
    %3515 = vmatprep.subr.mxu0 0.0
    %3516 = vmatpush1.xpose.msra.mxu0 %v3477
    %3517 = vmatprep.subr.mxu0 0.0
    %3518 = vmatpush2.xpose.msra.mxu0 0.0
    %3519 = vmatprep.subr.mxu0 0.0
    %3520 = vmatpush2.xpose.msra.mxu0 0.0
    %3521 = vmatprep.subr.mxu0 0.0
    %3522 = vmatpush2.xpose.msra.mxu0 0.0
    %3523 = vmatprep.subr.mxu0 0.0
    %3524 = vmatpush2.xpose.msra.mxu0 0.0
    %3525 = vmatprep.subr.mxu0 0.0
    %3526 = vmatpush2.xpose.msra.mxu0 0.0
    %3527 = vmatprep.subr.mxu0 0.0
    %3528 = vmatpush2.xpose.msra.mxu0 0.0
    %3529 = vmatprep.subr.mxu0 0.0
    %3530 = vmatpush2.xpose.msra.mxu0 0.0
    %3531 = vmatprep.subr.mxu0 0.0
    %3532 = vmatpush2.xpose.msra.mxu0 0.0
    %3533 = vmatprep.subr.mxu0 0.0
    %3534 = vmatpush2.xpose.msra.mxu0 0.0
    %3535 = vmatprep.subr.mxu0 0.0
    %3536 = vmatpush2.xpose.msra.mxu0 0.0
    %3537 = vmatprep.subr.mxu0 0.0
    %3538 = vmatpush2.xpose.msra.mxu0 0.0
    %3539 = vmatprep.subr.mxu0 0.0
    %3540 = vmatpush2.xpose.msra.mxu0 0.0
    %3541 = vmatprep.subr.mxu0 0.0
    %3542 = vmatpush2.xpose.msra.mxu0 0.0
    %3543 = vmatprep.subr.mxu0 0.0
    %3544 = vmatpush2.xpose.msra.mxu0 0.0
    %3545 = vmatprep.subr.mxu0 0.0
    %3546 = vmatpush2.xpose.msra.mxu0 0.0
    %3547 = vmatprep.subr.mxu0 0.0
    %3548 = vmatpush2.xpose.msra.mxu0 0.0
    %3549 = vmatprep.mubr.f32.mxu0 0.0
    %3550 = vmatmul.mubr.f32.gmra.mxu0 %v3466
    %v3551 = vpop.f32.mrf.mxu0
    %v3552 = vadd.f32 0.0, %v3551
    %v3553 = vpop.f32.mrf.mxu0
    %3554 = vmatprep.mubr.f32.mxu0 0.0
    %3555 = vmatmul.mubr.f32.gmra.mxu0 %v3469
    %v3556 = vpop.f32.mrf.mxu0
    %v3557 = vadd.f32 0.0, %v3556
    %v3558 = vpop.f32.mrf.mxu0
    %3559 = vmatprep.mubr.f32.mxu0 0.0
    %3560 = vmatmul.mubr.f32.gmra.mxu0 %v3472
    %v3561 = vpop.f32.mrf.mxu0
    %v3562 = vadd.f32 0.0, %v3561
    %v3563 = vpop.f32.mrf.mxu0
    %3564 = vmatprep.mubr.f32.mxu0 0.0
    %3565 = vmatmul.mubr.f32.gmra.mxu0 %v3475
    %v3566 = vpop.f32.mrf.mxu0
    %v3567 = vadd.f32 0.0, %v3566
    %v3568 = vpop.f32.mrf.mxu0
    %3569 = vdwg.mxu0
    %v3570 = vsel %vm216, %v3552, -inf
    %3571 = vmax.xlane.f32.xlu0 %v3570
    %v3572 = vpop.xlane.xlu0 %3571
    %v3573 = vsel %vm216, %v3557, -inf
    %3574 = vmax.xlane.f32.xlu0 %v3573
    %v3575 = vpop.xlane.xlu0 %3574
    %v3576 = vsel %vm216, %v3562, -inf
    %3577 = vmax.xlane.f32.xlu0 %v3576
    %v3578 = vpop.xlane.xlu0 %3577
    %v3579 = vsel %vm216, %v3567, -inf
    %3580 = vmax.xlane.f32.xlu0 %v3579
    %v3581 = vpop.xlane.xlu0 %3580
    %v3582 = vsub.f32 %v3552, %v3572
    %v3583 = vsub.f32 %v3557, %v3575
    %v3584 = vsub.f32 %v3562, %v3578
    %v3585 = vsub.f32 %v3567, %v3581
    %v3586 = vmul.f32 %v3582, 1.442695
    %v3587 = vpow.pop %v3586
    %v3588 = vmul.f32 %v3583, 1.442695
    %v3589 = vpow.pop %v3588
    %v3590 = vmul.f32 %v3584, 1.442695
    %v3591 = vpow.pop %v3590
    %v3592 = vmul.f32 %v3585, 1.442695
    %v3593 = vpow.pop %v3592
    %3594 = vrot.lane.b32.xlu0 %v3419, 64
    %v3595 = vpop.permute.xlu0 %3594
    %3596 = vrot.lane.b32.xlu0 %v3422, 64
    %v3597 = vpop.permute.xlu0 %3596
    %3598 = vrot.lane.b32.xlu0 %v3427, 64
    %v3599 = vpop.permute.xlu0 %3598
    %3600 = vrot.lane.b32.xlu0 %v3430, 64
    %v3601 = vpop.permute.xlu0 %3600
    %v3607 = vsel %vm216, %v3587, 0
    %v3610 = vsel %vm216, %v3589, 0
    %v3613 = vsel %vm216, %v3591, 0
    %v3616 = vsel %vm216, %v3593, 0
    %3618 = vmatprep.subr.mxu0 0.0
    %3619 = vmatpush1.msra.mxu0 0.0
    %3620 = vmatprep.subr.mxu0 0.0
    %3621 = vmatpush1.msra.mxu0 0.0
    %3622 = vmatprep.subr.mxu0 0.0
    %3623 = vmatpush1.msra.mxu0 0.0
    %3624 = vmatprep.subr.mxu0 0.0
    %3625 = vmatpush1.msra.mxu0 0.0
    %3626 = vmatprep.subr.mxu0 0.0
    %3627 = vmatpush1.msra.mxu0 0.0
    %3628 = vmatprep.subr.mxu0 0.0
    %3629 = vmatpush1.msra.mxu0 0.0
    %3630 = vmatprep.subr.mxu0 0.0
    %3631 = vmatpush1.msra.mxu0 0.0
    %3632 = vmatprep.subr.mxu0 0.0
    %3633 = vmatpush1.msra.mxu0 0.0
    %3634 = vmatprep.subr.mxu0 0.0
    %3635 = vmatpush1.msra.mxu0 0.0
    %3636 = vmatprep.subr.mxu0 0.0
    %3637 = vmatpush1.msra.mxu0 0.0
    %3638 = vmatprep.subr.mxu0 0.0
    %3639 = vmatpush1.msra.mxu0 0.0
    %3640 = vmatprep.subr.mxu0 0.0
    %3641 = vmatpush1.msra.mxu0 0.0
    %3642 = vmatprep.subr.mxu0 0.0
    %3643 = vmatpush1.msra.mxu0 %v3601
    %3644 = vmatprep.subr.mxu0 0.0
    %3645 = vmatpush1.msra.mxu0 %v3599
    %3646 = vmatprep.subr.mxu0 0.0
    %3647 = vmatpush1.msra.mxu0 %v3597
    %3648 = vmatprep.subr.mxu0 0.0
    %3649 = vmatpush1.msra.mxu0 %v3595
    %3650 = vmatprep.subr.mxu0 0.0
    %3651 = vmatpush2.msra.mxu0 0.0
    %3652 = vmatprep.subr.mxu0 0.0
    %3653 = vmatpush2.msra.mxu0 0.0
    %3654 = vmatprep.subr.mxu0 0.0
    %3655 = vmatpush2.msra.mxu0 0.0
    %3656 = vmatprep.subr.mxu0 0.0
    %3657 = vmatpush2.msra.mxu0 0.0
    %3658 = vmatprep.subr.mxu0 0.0
    %3659 = vmatpush2.msra.mxu0 0.0
    %3660 = vmatprep.subr.mxu0 0.0
    %3661 = vmatpush2.msra.mxu0 0.0
    %3662 = vmatprep.subr.mxu0 0.0
    %3663 = vmatpush2.msra.mxu0 0.0
    %3664 = vmatprep.subr.mxu0 0.0
    %3665 = vmatpush2.msra.mxu0 0.0
    %3666 = vmatprep.subr.mxu0 0.0
    %3667 = vmatpush2.msra.mxu0 0.0
    %3668 = vmatprep.subr.mxu0 0.0
    %3669 = vmatpush2.msra.mxu0 0.0
    %3670 = vmatprep.subr.mxu0 0.0
    %3671 = vmatpush2.msra.mxu0 0.0
    %3672 = vmatprep.subr.mxu0 0.0
    %3673 = vmatpush2.msra.mxu0 0.0
    %3674 = vmatprep.subr.mxu0 0.0
    %3675 = vmatpush2.msra.mxu0 0.0
    %3676 = vmatprep.subr.mxu0 0.0
    %3677 = vmatpush2.msra.mxu0 0.0
    %3678 = vmatprep.subr.mxu0 0.0
    %3679 = vmatpush2.msra.mxu0 0.0
    %3680 = vmatprep.subr.mxu0 0.0
    %3681 = vmatpush2.msra.mxu0 0.0
    %3682 = vmatprep.mubr.f32.mxu0 0.0
    %3683 = vmatmul.mubr.f32.gmra.mxu0 %v3607
    %v3684 = vpop.f32.mrf.mxu0
    %v3685 = vadd.f32 0.0, %v3684
    %v3686 = vpop.f32.mrf.mxu0
    %3687 = vmatprep.mubr.f32.mxu0 0.0
    %3688 = vmatmul.mubr.f32.gmra.mxu0 %v3610
    %v3689 = vpop.f32.mrf.mxu0
    %v3690 = vadd.f32 0.0, %v3689
    %v3691 = vpop.f32.mrf.mxu0
    %3692 = vmatprep.mubr.f32.mxu0 0.0
    %3693 = vmatmul.mubr.f32.gmra.mxu0 %v3613
    %v3694 = vpop.f32.mrf.mxu0
    %v3695 = vadd.f32 0.0, %v3694
    %v3696 = vpop.f32.mrf.mxu0
    %3697 = vmatprep.mubr.f32.mxu0 0.0
    %3698 = vmatmul.mubr.f32.gmra.mxu0 %v3616
    %v3699 = vpop.f32.mrf.mxu0
    %v3700 = vadd.f32 0.0, %v3699
    %v3701 = vpop.f32.mrf.mxu0
    %3702 = vdwg.mxu0
    %v3703 = vsel %vm216, %v3587, 0.0
    %3704 = vadd.xlane.f32.xlu0 %v3703
    %v3705 = vpop.xlane.xlu0 %3704
    %v3706 = vsel %vm216, %v3589, 0.0
    %3707 = vadd.xlane.f32.xlu0 %v3706
    %v3708 = vpop.xlane.xlu0 %3707
    %v3709 = vsel %vm216, %v3591, 0.0
    %3710 = vadd.xlane.f32.xlu0 %v3709
    %v3711 = vpop.xlane.xlu0 %3710
    %v3712 = vsel %vm216, %v3593, 0.0
    %3713 = vadd.xlane.f32.xlu0 %v3712
    %v3714 = vpop.xlane.xlu0 %3713
    %v3715 = vrcp.pop %v3705
    %v3716 = vmul.f32 %v3685, %v3715
    %v3717 = vrcp.pop %v3708
    %v3718 = vmul.f32 %v3690, %v3717
    %v3719 = vrcp.pop %v3711
    %v3720 = vmul.f32 %v3695, %v3719
    %v3721 = vrcp.pop %v3714
    %v3722 = vmul.f32 %v3700, %v3721
    %3723 = vrot.lane.b32.xlu0 %v3449, 120
    %v3724 = vpop.permute.xlu0 %3723
    %3725 = vrot.lane.b32.xlu0 %v3450, 120
    %v3726 = vpop.permute.xlu0 %3725
    %3727 = vrot.lane.b32.xlu0 %v3451, 120
    %v3728 = vpop.permute.xlu0 %3727
    %3729 = vrot.lane.b32.xlu0 %v3452, 120
    %v3730 = vpop.permute.xlu0 %3729
    %3731 = vrot.lane.b32.xlu0 %v3419, 88
    %v3732 = vpop.permute.xlu0 %3731
    %3733 = vrot.lane.b32.xlu0 %v3422, 88
    %v3734 = vpop.permute.xlu0 %3733
    %3735 = vrot.lane.b32.xlu0 %v3427, 88
    %v3736 = vpop.permute.xlu0 %3735
    %3737 = vrot.lane.b32.xlu0 %v3430, 88
    %v3738 = vpop.permute.xlu0 %3737
    %v3739 = vsel %vm464, %v3724, 0
    %v3741 = vsel %vm464, %v3726, 0
    %v3743 = vsel %vm464, %v3728, 0
    %v3745 = vsel %vm464, %v3730, 0
    %v3747 = vsel %vm464, %v3732, 0
    %v3749 = vsel %vm464, %v3734, 0
    %v3751 = vsel %vm464, %v3736, 0
    %v3753 = vsel %vm464, %v3738, 0
    %3755 = vmatprep.subr.mxu0 0.0
    %3756 = vmatpush1.xpose.msra.mxu0 0.0
    %3757 = vmatprep.subr.mxu0 0.0
    %3758 = vmatpush1.xpose.msra.mxu0 0.0
    %3759 = vmatprep.subr.mxu0 0.0
    %3760 = vmatpush1.xpose.msra.mxu0 0.0
    %3761 = vmatprep.subr.mxu0 0.0
    %3762 = vmatpush1.xpose.msra.mxu0 0.0
    %3763 = vmatprep.subr.mxu0 0.0
    %3764 = vmatpush1.xpose.msra.mxu0 0.0
    %3765 = vmatprep.subr.mxu0 0.0
    %3766 = vmatpush1.xpose.msra.mxu0 0.0
    %3767 = vmatprep.subr.mxu0 0.0
    %3768 = vmatpush1.xpose.msra.mxu0 0.0
    %3769 = vmatprep.subr.mxu0 0.0
    %3770 = vmatpush1.xpose.msra.mxu0 0.0
    %3771 = vmatprep.subr.mxu0 0.0
    %3772 = vmatpush1.xpose.msra.mxu0 0.0
    %3773 = vmatprep.subr.mxu0 0.0
    %3774 = vmatpush1.xpose.msra.mxu0 0.0
    %3775 = vmatprep.subr.mxu0 0.0
    %3776 = vmatpush1.xpose.msra.mxu0 0.0
    %3777 = vmatprep.subr.mxu0 0.0
    %3778 = vmatpush1.xpose.msra.mxu0 0.0
    %3779 = vmatprep.subr.mxu0 0.0
    %3780 = vmatpush1.xpose.msra.mxu0 %v3753
    %3781 = vmatprep.subr.mxu0 0.0
    %3782 = vmatpush1.xpose.msra.mxu0 %v3751
    %3783 = vmatprep.subr.mxu0 0.0
    %3784 = vmatpush1.xpose.msra.mxu0 %v3749
    %3785 = vmatprep.subr.mxu0 0.0
    %3786 = vmatpush1.xpose.msra.mxu0 %v3747
    %3787 = vmatprep.subr.mxu0 0.0
    %3788 = vmatpush2.xpose.msra.mxu0 0.0
    %3789 = vmatprep.subr.mxu0 0.0
    %3790 = vmatpush2.xpose.msra.mxu0 0.0
    %3791 = vmatprep.subr.mxu0 0.0
    %3792 = vmatpush2.xpose.msra.mxu0 0.0
    %3793 = vmatprep.subr.mxu0 0.0
    %3794 = vmatpush2.xpose.msra.mxu0 0.0
    %3795 = vmatprep.subr.mxu0 0.0
    %3796 = vmatpush2.xpose.msra.mxu0 0.0
    %3797 = vmatprep.subr.mxu0 0.0
    %3798 = vmatpush2.xpose.msra.mxu0 0.0
    %3799 = vmatprep.subr.mxu0 0.0
    %3800 = vmatpush2.xpose.msra.mxu0 0.0
    %3801 = vmatprep.subr.mxu0 0.0
    %3802 = vmatpush2.xpose.msra.mxu0 0.0
    %3803 = vmatprep.subr.mxu0 0.0
    %3804 = vmatpush2.xpose.msra.mxu0 0.0
    %3805 = vmatprep.subr.mxu0 0.0
    %3806 = vmatpush2.xpose.msra.mxu0 0.0
    %3807 = vmatprep.subr.mxu0 0.0
    %3808 = vmatpush2.xpose.msra.mxu0 0.0
    %3809 = vmatprep.subr.mxu0 0.0
    %3810 = vmatpush2.xpose.msra.mxu0 0.0
    %3811 = vmatprep.subr.mxu0 0.0
    %3812 = vmatpush2.xpose.msra.mxu0 0.0
    %3813 = vmatprep.subr.mxu0 0.0
    %3814 = vmatpush2.xpose.msra.mxu0 0.0
    %3815 = vmatprep.subr.mxu0 0.0
    %3816 = vmatpush2.xpose.msra.mxu0 0.0
    %3817 = vmatprep.subr.mxu0 0.0
    %3818 = vmatpush2.xpose.msra.mxu0 0.0
    %3819 = vmatprep.mubr.f32.mxu0 0.0
    %3820 = vmatmul.mubr.f32.gmra.mxu0 %v3739
    %v3821 = vpop.f32.mrf.mxu0
    %v3822 = vadd.f32 0.0, %v3821
    %v3823 = vpop.f32.mrf.mxu0
    %3824 = vmatprep.mubr.f32.mxu0 0.0
    %3825 = vmatmul.mubr.f32.gmra.mxu0 %v3741
    %v3826 = vpop.f32.mrf.mxu0
    %v3827 = vadd.f32 0.0, %v3826
    %v3828 = vpop.f32.mrf.mxu0
    %3829 = vmatprep.mubr.f32.mxu0 0.0
    %3830 = vmatmul.mubr.f32.gmra.mxu0 %v3743
    %v3831 = vpop.f32.mrf.mxu0
    %v3832 = vadd.f32 0.0, %v3831
    %v3833 = vpop.f32.mrf.mxu0
    %3834 = vmatprep.mubr.f32.mxu0 0.0
    %3835 = vmatmul.mubr.f32.gmra.mxu0 %v3745
    %v3836 = vpop.f32.mrf.mxu0
    %v3837 = vadd.f32 0.0, %v3836
    %v3838 = vpop.f32.mrf.mxu0
    %3839 = vdwg.mxu0
    %v3840 = vsel %vm216, %v3822, -inf
    %3841 = vmax.xlane.f32.xlu0 %v3840
    %v3842 = vpop.xlane.xlu0 %3841
    %v3843 = vsel %vm216, %v3827, -inf
    %3844 = vmax.xlane.f32.xlu0 %v3843
    %v3845 = vpop.xlane.xlu0 %3844
    %v3846 = vsel %vm216, %v3832, -inf
    %3847 = vmax.xlane.f32.xlu0 %v3846
    %v3848 = vpop.xlane.xlu0 %3847
    %v3849 = vsel %vm216, %v3837, -inf
    %3850 = vmax.xlane.f32.xlu0 %v3849
    %v3851 = vpop.xlane.xlu0 %3850
    %v3852 = vsub.f32 %v3822, %v3842
    %v3853 = vsub.f32 %v3827, %v3845
    %v3854 = vsub.f32 %v3832, %v3848
    %v3855 = vsub.f32 %v3837, %v3851
    %v3856 = vmul.f32 %v3852, 1.442695
    %v3857 = vpow.pop %v3856
    %v3858 = vmul.f32 %v3853, 1.442695
    %v3859 = vpow.pop %v3858
    %v3860 = vmul.f32 %v3854, 1.442695
    %v3861 = vpow.pop %v3860
    %v3862 = vmul.f32 %v3855, 1.442695
    %v3863 = vpow.pop %v3862
    %3864 = vrot.lane.b32.xlu0 %v3419, 56
    %v3865 = vpop.permute.xlu0 %3864
    %3866 = vrot.lane.b32.xlu0 %v3422, 56
    %v3867 = vpop.permute.xlu0 %3866
    %3868 = vrot.lane.b32.xlu0 %v3427, 56
    %v3869 = vpop.permute.xlu0 %3868
    %3870 = vrot.lane.b32.xlu0 %v3430, 56
    %v3871 = vpop.permute.xlu0 %3870
    %v3877 = vsel %vm216, %v3857, 0
    %v3880 = vsel %vm216, %v3859, 0
    %v3883 = vsel %vm216, %v3861, 0
    %v3886 = vsel %vm216, %v3863, 0
    %3888 = vmatprep.subr.mxu0 0.0
    %3889 = vmatpush1.msra.mxu0 0.0
    %3890 = vmatprep.subr.mxu0 0.0
    %3891 = vmatpush1.msra.mxu0 0.0
    %3892 = vmatprep.subr.mxu0 0.0
    %3893 = vmatpush1.msra.mxu0 0.0
    %3894 = vmatprep.subr.mxu0 0.0
    %3895 = vmatpush1.msra.mxu0 0.0
    %3896 = vmatprep.subr.mxu0 0.0
    %3897 = vmatpush1.msra.mxu0 0.0
    %3898 = vmatprep.subr.mxu0 0.0
    %3899 = vmatpush1.msra.mxu0 0.0
    %3900 = vmatprep.subr.mxu0 0.0
    %3901 = vmatpush1.msra.mxu0 0.0
    %3902 = vmatprep.subr.mxu0 0.0
    %3903 = vmatpush1.msra.mxu0 0.0
    %3904 = vmatprep.subr.mxu0 0.0
    %3905 = vmatpush1.msra.mxu0 0.0
    %3906 = vmatprep.subr.mxu0 0.0
    %3907 = vmatpush1.msra.mxu0 0.0
    %3908 = vmatprep.subr.mxu0 0.0
    %3909 = vmatpush1.msra.mxu0 0.0
    %3910 = vmatprep.subr.mxu0 0.0
    %3911 = vmatpush1.msra.mxu0 0.0
    %3912 = vmatprep.subr.mxu0 0.0
    %3913 = vmatpush1.msra.mxu0 %v3871
    %3914 = vmatprep.subr.mxu0 0.0
    %3915 = vmatpush1.msra.mxu0 %v3869
    %3916 = vmatprep.subr.mxu0 0.0
    %3917 = vmatpush1.msra.mxu0 %v3867
    %3918 = vmatprep.subr.mxu0 0.0
    %3919 = vmatpush1.msra.mxu0 %v3865
    %3920 = vmatprep.subr.mxu0 0.0
    %3921 = vmatpush2.msra.mxu0 0.0
    %3922 = vmatprep.subr.mxu0 0.0
    %3923 = vmatpush2.msra.mxu0 0.0
    %3924 = vmatprep.subr.mxu0 0.0
    %3925 = vmatpush2.msra.mxu0 0.0
    %3926 = vmatprep.subr.mxu0 0.0
    %3927 = vmatpush2.msra.mxu0 0.0
    %3928 = vmatprep.subr.mxu0 0.0
    %3929 = vmatpush2.msra.mxu0 0.0
    %3930 = vmatprep.subr.mxu0 0.0
    %3931 = vmatpush2.msra.mxu0 0.0
    %3932 = vmatprep.subr.mxu0 0.0
    %3933 = vmatpush2.msra.mxu0 0.0
    %3934 = vmatprep.subr.mxu0 0.0
    %3935 = vmatpush2.msra.mxu0 0.0
    %3936 = vmatprep.subr.mxu0 0.0
    %3937 = vmatpush2.msra.mxu0 0.0
    %3938 = vmatprep.subr.mxu0 0.0
    %3939 = vmatpush2.msra.mxu0 0.0
    %3940 = vmatprep.subr.mxu0 0.0
    %3941 = vmatpush2.msra.mxu0 0.0
    %3942 = vmatprep.subr.mxu0 0.0
    %3943 = vmatpush2.msra.mxu0 0.0
    %3944 = vmatprep.subr.mxu0 0.0
    %3945 = vmatpush2.msra.mxu0 0.0
    %3946 = vmatprep.subr.mxu0 0.0
    %3947 = vmatpush2.msra.mxu0 0.0
    %3948 = vmatprep.subr.mxu0 0.0
    %3949 = vmatpush2.msra.mxu0 0.0
    %3950 = vmatprep.subr.mxu0 0.0
    %3951 = vmatpush2.msra.mxu0 0.0
    %3952 = vmatprep.mubr.f32.mxu0 0.0
    %3953 = vmatmul.mubr.f32.gmra.mxu0 %v3877
    %v3954 = vpop.f32.mrf.mxu0
    %v3955 = vadd.f32 0.0, %v3954
    %v3956 = vpop.f32.mrf.mxu0
    %3957 = vmatprep.mubr.f32.mxu0 0.0
    %3958 = vmatmul.mubr.f32.gmra.mxu0 %v3880
    %v3959 = vpop.f32.mrf.mxu0
    %v3960 = vadd.f32 0.0, %v3959
    %v3961 = vpop.f32.mrf.mxu0
    %3962 = vmatprep.mubr.f32.mxu0 0.0
    %3963 = vmatmul.mubr.f32.gmra.mxu0 %v3883
    %v3964 = vpop.f32.mrf.mxu0
    %v3965 = vadd.f32 0.0, %v3964
    %v3966 = vpop.f32.mrf.mxu0
    %3967 = vmatprep.mubr.f32.mxu0 0.0
    %3968 = vmatmul.mubr.f32.gmra.mxu0 %v3886
    %v3969 = vpop.f32.mrf.mxu0
    %v3970 = vadd.f32 0.0, %v3969
    %v3971 = vpop.f32.mrf.mxu0
    %3972 = vdwg.mxu0
    %v3973 = vsel %vm216, %v3857, 0.0
    %3974 = vadd.xlane.f32.xlu0 %v3973
    %v3975 = vpop.xlane.xlu0 %3974
    %v3976 = vsel %vm216, %v3859, 0.0
    %3977 = vadd.xlane.f32.xlu0 %v3976
    %v3978 = vpop.xlane.xlu0 %3977
    %v3979 = vsel %vm216, %v3861, 0.0
    %3980 = vadd.xlane.f32.xlu0 %v3979
    %v3981 = vpop.xlane.xlu0 %3980
    %v3982 = vsel %vm216, %v3863, 0.0
    %3983 = vadd.xlane.f32.xlu0 %v3982
    %v3984 = vpop.xlane.xlu0 %3983
    %v3985 = vrcp.pop %v3975
    %v3986 = vmul.f32 %v3955, %v3985
    %v3987 = vrcp.pop %v3978
    %v3988 = vmul.f32 %v3960, %v3987
    %v3989 = vrcp.pop %v3981
    %v3990 = vmul.f32 %v3965, %v3989
    %v3991 = vrcp.pop %v3984
    %v3992 = vmul.f32 %v3970, %v3991
    %3993 = vrot.lane.b32.xlu0 %v3449, 112
    %v3994 = vpop.permute.xlu0 %3993
    %3995 = vrot.lane.b32.xlu0 %v3450, 112
    %v3996 = vpop.permute.xlu0 %3995
    %3997 = vrot.lane.b32.xlu0 %v3451, 112
    %v3998 = vpop.permute.xlu0 %3997
    %3999 = vrot.lane.b32.xlu0 %v3452, 112
    %v4000 = vpop.permute.xlu0 %3999
    %4001 = vrot.lane.b32.xlu0 %v3419, 80
    %v4002 = vpop.permute.xlu0 %4001
    %4003 = vrot.lane.b32.xlu0 %v3422, 80
    %v4004 = vpop.permute.xlu0 %4003
    %4005 = vrot.lane.b32.xlu0 %v3427, 80
    %v4006 = vpop.permute.xlu0 %4005
    %4007 = vrot.lane.b32.xlu0 %v3430, 80
    %v4008 = vpop.permute.xlu0 %4007
    %v4009 = vsel %vm464, %v3994, 0
    %v4011 = vsel %vm464, %v3996, 0
    %v4013 = vsel %vm464, %v3998, 0
    %v4015 = vsel %vm464, %v4000, 0
    %v4017 = vsel %vm464, %v4002, 0
    %v4019 = vsel %vm464, %v4004, 0
    %v4021 = vsel %vm464, %v4006, 0
    %v4023 = vsel %vm464, %v4008, 0
    %4025 = vmatprep.subr.mxu0 0.0
    %4026 = vmatpush1.xpose.msra.mxu0 0.0
    %4027 = vmatprep.subr.mxu0 0.0
    %4028 = vmatpush1.xpose.msra.mxu0 0.0
    %4029 = vmatprep.subr.mxu0 0.0
    %4030 = vmatpush1.xpose.msra.mxu0 0.0
    %4031 = vmatprep.subr.mxu0 0.0
    %4032 = vmatpush1.xpose.msra.mxu0 0.0
    %4033 = vmatprep.subr.mxu0 0.0
    %4034 = vmatpush1.xpose.msra.mxu0 0.0
    %4035 = vmatprep.subr.mxu0 0.0
    %4036 = vmatpush1.xpose.msra.mxu0 0.0
    %4037 = vmatprep.subr.mxu0 0.0
    %4038 = vmatpush1.xpose.msra.mxu0 0.0
    %4039 = vmatprep.subr.mxu0 0.0
    %4040 = vmatpush1.xpose.msra.mxu0 0.0
    %4041 = vmatprep.subr.mxu0 0.0
    %4042 = vmatpush1.xpose.msra.mxu0 0.0
    %4043 = vmatprep.subr.mxu0 0.0
    %4044 = vmatpush1.xpose.msra.mxu0 0.0
    %4045 = vmatprep.subr.mxu0 0.0
    %4046 = vmatpush1.xpose.msra.mxu0 0.0
    %4047 = vmatprep.subr.mxu0 0.0
    %4048 = vmatpush1.xpose.msra.mxu0 0.0
    %4049 = vmatprep.subr.mxu0 0.0
    %4050 = vmatpush1.xpose.msra.mxu0 %v4023
    %4051 = vmatprep.subr.mxu0 0.0
    %4052 = vmatpush1.xpose.msra.mxu0 %v4021
    %4053 = vmatprep.subr.mxu0 0.0
    %4054 = vmatpush1.xpose.msra.mxu0 %v4019
    %4055 = vmatprep.subr.mxu0 0.0
    %4056 = vmatpush1.xpose.msra.mxu0 %v4017
    %4057 = vmatprep.subr.mxu0 0.0
    %4058 = vmatpush2.xpose.msra.mxu0 0.0
    %4059 = vmatprep.subr.mxu0 0.0
    %4060 = vmatpush2.xpose.msra.mxu0 0.0
    %4061 = vmatprep.subr.mxu0 0.0
    %4062 = vmatpush2.xpose.msra.mxu0 0.0
    %4063 = vmatprep.subr.mxu0 0.0
    %4064 = vmatpush2.xpose.msra.mxu0 0.0
    %4065 = vmatprep.subr.mxu0 0.0
    %4066 = vmatpush2.xpose.msra.mxu0 0.0
    %4067 = vmatprep.subr.mxu0 0.0
    %4068 = vmatpush2.xpose.msra.mxu0 0.0
    %4069 = vmatprep.subr.mxu0 0.0
    %4070 = vmatpush2.xpose.msra.mxu0 0.0
    %4071 = vmatprep.subr.mxu0 0.0
    %4072 = vmatpush2.xpose.msra.mxu0 0.0
    %4073 = vmatprep.subr.mxu0 0.0
    %4074 = vmatpush2.xpose.msra.mxu0 0.0
    %4075 = vmatprep.subr.mxu0 0.0
    %4076 = vmatpush2.xpose.msra.mxu0 0.0
    %4077 = vmatprep.subr.mxu0 0.0
    %4078 = vmatpush2.xpose.msra.mxu0 0.0
    %4079 = vmatprep.subr.mxu0 0.0
    %4080 = vmatpush2.xpose.msra.mxu0 0.0
    %4081 = vmatprep.subr.mxu0 0.0
    %4082 = vmatpush2.xpose.msra.mxu0 0.0
    %4083 = vmatprep.subr.mxu0 0.0
    %4084 = vmatpush2.xpose.msra.mxu0 0.0
    %4085 = vmatprep.subr.mxu0 0.0
    %4086 = vmatpush2.xpose.msra.mxu0 0.0
    %4087 = vmatprep.subr.mxu0 0.0
    %4088 = vmatpush2.xpose.msra.mxu0 0.0
    %4089 = vmatprep.mubr.f32.mxu0 0.0
    %4090 = vmatmul.mubr.f32.gmra.mxu0 %v4009
    %v4091 = vpop.f32.mrf.mxu0
    %v4092 = vadd.f32 0.0, %v4091
    %v4093 = vpop.f32.mrf.mxu0
    %4094 = vmatprep.mubr.f32.mxu0 0.0
    %4095 = vmatmul.mubr.f32.gmra.mxu0 %v4011
    %v4096 = vpop.f32.mrf.mxu0
    %v4097 = vadd.f32 0.0, %v4096
    %v4098 = vpop.f32.mrf.mxu0
    %4099 = vmatprep.mubr.f32.mxu0 0.0
    %4100 = vmatmul.mubr.f32.gmra.mxu0 %v4013
    %v4101 = vpop.f32.mrf.mxu0
    %v4102 = vadd.f32 0.0, %v4101
    %v4103 = vpop.f32.mrf.mxu0
    %4104 = vmatprep.mubr.f32.mxu0 0.0
    %4105 = vmatmul.mubr.f32.gmra.mxu0 %v4015
    %v4106 = vpop.f32.mrf.mxu0
    %v4107 = vadd.f32 0.0, %v4106
    %v4108 = vpop.f32.mrf.mxu0
    %4109 = vdwg.mxu0
    %v4110 = vsel %vm216, %v4092, -inf
    %4111 = vmax.xlane.f32.xlu0 %v4110
    %v4112 = vpop.xlane.xlu0 %4111
    %v4113 = vsel %vm216, %v4097, -inf
    %4114 = vmax.xlane.f32.xlu0 %v4113
    %v4115 = vpop.xlane.xlu0 %4114
    %v4116 = vsel %vm216, %v4102, -inf
    %4117 = vmax.xlane.f32.xlu0 %v4116
    %v4118 = vpop.xlane.xlu0 %4117
    %v4119 = vsel %vm216, %v4107, -inf
    %4120 = vmax.xlane.f32.xlu0 %v4119
    %v4121 = vpop.xlane.xlu0 %4120
    %v4122 = vsub.f32 %v4092, %v4112
    %v4123 = vsub.f32 %v4097, %v4115
    %v4124 = vsub.f32 %v4102, %v4118
    %v4125 = vsub.f32 %v4107, %v4121
    %v4126 = vmul.f32 %v4122, 1.442695
    %v4127 = vpow.pop %v4126
    %v4128 = vmul.f32 %v4123, 1.442695
    %v4129 = vpow.pop %v4128
    %v4130 = vmul.f32 %v4124, 1.442695
    %v4131 = vpow.pop %v4130
    %v4132 = vmul.f32 %v4125, 1.442695
    %v4133 = vpow.pop %v4132
    %4134 = vrot.lane.b32.xlu0 %v3419, 48
    %v4135 = vpop.permute.xlu0 %4134
    %4136 = vrot.lane.b32.xlu0 %v3422, 48
    %v4137 = vpop.permute.xlu0 %4136
    %4138 = vrot.lane.b32.xlu0 %v3427, 48
    %v4139 = vpop.permute.xlu0 %4138
    %4140 = vrot.lane.b32.xlu0 %v3430, 48
    %v4141 = vpop.permute.xlu0 %4140
    %v4147 = vsel %vm216, %v4127, 0
    %v4150 = vsel %vm216, %v4129, 0
    %v4153 = vsel %vm216, %v4131, 0
    %v4156 = vsel %vm216, %v4133, 0
    %4158 = vmatprep.subr.mxu0 0.0
    %4159 = vmatpush1.msra.mxu0 0.0
    %4160 = vmatprep.subr.mxu0 0.0
    %4161 = vmatpush1.msra.mxu0 0.0
    %4162 = vmatprep.subr.mxu0 0.0
    %4163 = vmatpush1.msra.mxu0 0.0
    %4164 = vmatprep.subr.mxu0 0.0
    %4165 = vmatpush1.msra.mxu0 0.0
    %4166 = vmatprep.subr.mxu0 0.0
    %4167 = vmatpush1.msra.mxu0 0.0
    %4168 = vmatprep.subr.mxu0 0.0
    %4169 = vmatpush1.msra.mxu0 0.0
    %4170 = vmatprep.subr.mxu0 0.0
    %4171 = vmatpush1.msra.mxu0 0.0
    %4172 = vmatprep.subr.mxu0 0.0
    %4173 = vmatpush1.msra.mxu0 0.0
    %4174 = vmatprep.subr.mxu0 0.0
    %4175 = vmatpush1.msra.mxu0 0.0
    %4176 = vmatprep.subr.mxu0 0.0
    %4177 = vmatpush1.msra.mxu0 0.0
    %4178 = vmatprep.subr.mxu0 0.0
    %4179 = vmatpush1.msra.mxu0 0.0
    %4180 = vmatprep.subr.mxu0 0.0
    %4181 = vmatpush1.msra.mxu0 0.0
    %4182 = vmatprep.subr.mxu0 0.0
    %4183 = vmatpush1.msra.mxu0 %v4141
    %4184 = vmatprep.subr.mxu0 0.0
    %4185 = vmatpush1.msra.mxu0 %v4139
    %4186 = vmatprep.subr.mxu0 0.0
    %4187 = vmatpush1.msra.mxu0 %v4137
    %4188 = vmatprep.subr.mxu0 0.0
    %4189 = vmatpush1.msra.mxu0 %v4135
    %4190 = vmatprep.subr.mxu0 0.0
    %4191 = vmatpush2.msra.mxu0 0.0
    %4192 = vmatprep.subr.mxu0 0.0
    %4193 = vmatpush2.msra.mxu0 0.0
    %4194 = vmatprep.subr.mxu0 0.0
    %4195 = vmatpush2.msra.mxu0 0.0
    %4196 = vmatprep.subr.mxu0 0.0
    %4197 = vmatpush2.msra.mxu0 0.0
    %4198 = vmatprep.subr.mxu0 0.0
    %4199 = vmatpush2.msra.mxu0 0.0
    %4200 = vmatprep.subr.mxu0 0.0
    %4201 = vmatpush2.msra.mxu0 0.0
    %4202 = vmatprep.subr.mxu0 0.0
    %4203 = vmatpush2.msra.mxu0 0.0
    %4204 = vmatprep.subr.mxu0 0.0
    %4205 = vmatpush2.msra.mxu0 0.0
    %4206 = vmatprep.subr.mxu0 0.0
    %4207 = vmatpush2.msra.mxu0 0.0
    %4208 = vmatprep.subr.mxu0 0.0
    %4209 = vmatpush2.msra.mxu0 0.0
    %4210 = vmatprep.subr.mxu0 0.0
    %4211 = vmatpush2.msra.mxu0 0.0
    %4212 = vmatprep.subr.mxu0 0.0
    %4213 = vmatpush2.msra.mxu0 0.0
    %4214 = vmatprep.subr.mxu0 0.0
    %4215 = vmatpush2.msra.mxu0 0.0
    %4216 = vmatprep.subr.mxu0 0.0
    %4217 = vmatpush2.msra.mxu0 0.0
    %4218 = vmatprep.subr.mxu0 0.0
    %4219 = vmatpush2.msra.mxu0 0.0
    %4220 = vmatprep.subr.mxu0 0.0
    %4221 = vmatpush2.msra.mxu0 0.0
    %4222 = vmatprep.mubr.f32.mxu0 0.0
    %4223 = vmatmul.mubr.f32.gmra.mxu0 %v4147
    %v4224 = vpop.f32.mrf.mxu0
    %v4225 = vadd.f32 0.0, %v4224
    %v4226 = vpop.f32.mrf.mxu0
    %4227 = vmatprep.mubr.f32.mxu0 0.0
    %4228 = vmatmul.mubr.f32.gmra.mxu0 %v4150
    %v4229 = vpop.f32.mrf.mxu0
    %v4230 = vadd.f32 0.0, %v4229
    %v4231 = vpop.f32.mrf.mxu0
    %4232 = vmatprep.mubr.f32.mxu0 0.0
    %4233 = vmatmul.mubr.f32.gmra.mxu0 %v4153
    %v4234 = vpop.f32.mrf.mxu0
    %v4235 = vadd.f32 0.0, %v4234
    %v4236 = vpop.f32.mrf.mxu0
    %4237 = vmatprep.mubr.f32.mxu0 0.0
    %4238 = vmatmul.mubr.f32.gmra.mxu0 %v4156
    %v4239 = vpop.f32.mrf.mxu0
    %v4240 = vadd.f32 0.0, %v4239
    %v4241 = vpop.f32.mrf.mxu0
    %4242 = vdwg.mxu0
    %v4243 = vsel %vm216, %v4127, 0.0
    %4244 = vadd.xlane.f32.xlu0 %v4243
    %v4245 = vpop.xlane.xlu0 %4244
    %v4246 = vsel %vm216, %v4129, 0.0
    %4247 = vadd.xlane.f32.xlu0 %v4246
    %v4248 = vpop.xlane.xlu0 %4247
    %v4249 = vsel %vm216, %v4131, 0.0
    %4250 = vadd.xlane.f32.xlu0 %v4249
    %v4251 = vpop.xlane.xlu0 %4250
    %v4252 = vsel %vm216, %v4133, 0.0
    %4253 = vadd.xlane.f32.xlu0 %v4252
    %v4254 = vpop.xlane.xlu0 %4253
    %v4255 = vrcp.pop %v4245
    %v4256 = vmul.f32 %v4225, %v4255
    %v4257 = vrcp.pop %v4248
    %v4258 = vmul.f32 %v4230, %v4257
    %v4259 = vrcp.pop %v4251
    %v4260 = vmul.f32 %v4235, %v4259
    %v4261 = vrcp.pop %v4254
    %v4262 = vmul.f32 %v4240, %v4261
    %4263 = vrot.lane.b32.xlu0 %v3449, 104
    %v4264 = vpop.permute.xlu0 %4263
    %4265 = vrot.lane.b32.xlu0 %v3450, 104
    %v4266 = vpop.permute.xlu0 %4265
    %4267 = vrot.lane.b32.xlu0 %v3451, 104
    %v4268 = vpop.permute.xlu0 %4267
    %4269 = vrot.lane.b32.xlu0 %v3452, 104
    %v4270 = vpop.permute.xlu0 %4269
    %4271 = vrot.lane.b32.xlu0 %v3419, 72
    %v4272 = vpop.permute.xlu0 %4271
    %4273 = vrot.lane.b32.xlu0 %v3422, 72
    %v4274 = vpop.permute.xlu0 %4273
    %4275 = vrot.lane.b32.xlu0 %v3427, 72
    %v4276 = vpop.permute.xlu0 %4275
    %4277 = vrot.lane.b32.xlu0 %v3430, 72
    %v4278 = vpop.permute.xlu0 %4277
    %v4279 = vsel %vm464, %v4264, 0
    %v4281 = vsel %vm464, %v4266, 0
    %v4283 = vsel %vm464, %v4268, 0
    %v4285 = vsel %vm464, %v4270, 0
    %v4287 = vsel %vm464, %v4272, 0
    %v4289 = vsel %vm464, %v4274, 0
    %v4291 = vsel %vm464, %v4276, 0
    %v4293 = vsel %vm464, %v4278, 0
    %4295 = vmatprep.subr.mxu0 0.0
    %4296 = vmatpush1.xpose.msra.mxu0 0.0
    %4297 = vmatprep.subr.mxu0 0.0
    %4298 = vmatpush1.xpose.msra.mxu0 0.0
    %4299 = vmatprep.subr.mxu0 0.0
    %4300 = vmatpush1.xpose.msra.mxu0 0.0
    %4301 = vmatprep.subr.mxu0 0.0
    %4302 = vmatpush1.xpose.msra.mxu0 0.0
    %4303 = vmatprep.subr.mxu0 0.0
    %4304 = vmatpush1.xpose.msra.mxu0 0.0
    %4305 = vmatprep.subr.mxu0 0.0
    %4306 = vmatpush1.xpose.msra.mxu0 0.0
    %4307 = vmatprep.subr.mxu0 0.0
    %4308 = vmatpush1.xpose.msra.mxu0 0.0
    %4309 = vmatprep.subr.mxu0 0.0
    %4310 = vmatpush1.xpose.msra.mxu0 0.0
    %4311 = vmatprep.subr.mxu0 0.0
    %4312 = vmatpush1.xpose.msra.mxu0 0.0
    %4313 = vmatprep.subr.mxu0 0.0
    %4314 = vmatpush1.xpose.msra.mxu0 0.0
    %4315 = vmatprep.subr.mxu0 0.0
    %4316 = vmatpush1.xpose.msra.mxu0 0.0
    %4317 = vmatprep.subr.mxu0 0.0
    %4318 = vmatpush1.xpose.msra.mxu0 0.0
    %4319 = vmatprep.subr.mxu0 0.0
    %4320 = vmatpush1.xpose.msra.mxu0 %v4293
    %4321 = vmatprep.subr.mxu0 0.0
    %4322 = vmatpush1.xpose.msra.mxu0 %v4291
    %4323 = vmatprep.subr.mxu0 0.0
    %4324 = vmatpush1.xpose.msra.mxu0 %v4289
    %4325 = vmatprep.subr.mxu0 0.0
    %4326 = vmatpush1.xpose.msra.mxu0 %v4287
    %4327 = vmatprep.subr.mxu0 0.0
    %4328 = vmatpush2.xpose.msra.mxu0 0.0
    %4329 = vmatprep.subr.mxu0 0.0
    %4330 = vmatpush2.xpose.msra.mxu0 0.0
    %4331 = vmatprep.subr.mxu0 0.0
    %4332 = vmatpush2.xpose.msra.mxu0 0.0
    %4333 = vmatprep.subr.mxu0 0.0
    %4334 = vmatpush2.xpose.msra.mxu0 0.0
    %4335 = vmatprep.subr.mxu0 0.0
    %4336 = vmatpush2.xpose.msra.mxu0 0.0
    %4337 = vmatprep.subr.mxu0 0.0
    %4338 = vmatpush2.xpose.msra.mxu0 0.0
    %4339 = vmatprep.subr.mxu0 0.0
    %4340 = vmatpush2.xpose.msra.mxu0 0.0
    %4341 = vmatprep.subr.mxu0 0.0
    %4342 = vmatpush2.xpose.msra.mxu0 0.0
    %4343 = vmatprep.subr.mxu0 0.0
    %4344 = vmatpush2.xpose.msra.mxu0 0.0
    %4345 = vmatprep.subr.mxu0 0.0
    %4346 = vmatpush2.xpose.msra.mxu0 0.0
    %4347 = vmatprep.subr.mxu0 0.0
    %4348 = vmatpush2.xpose.msra.mxu0 0.0
    %4349 = vmatprep.subr.mxu0 0.0
    %4350 = vmatpush2.xpose.msra.mxu0 0.0
    %4351 = vmatprep.subr.mxu0 0.0
    %4352 = vmatpush2.xpose.msra.mxu0 0.0
    %4353 = vmatprep.subr.mxu0 0.0
    %4354 = vmatpush2.xpose.msra.mxu0 0.0
    %4355 = vmatprep.subr.mxu0 0.0
    %4356 = vmatpush2.xpose.msra.mxu0 0.0
    %4357 = vmatprep.subr.mxu0 0.0
    %4358 = vmatpush2.xpose.msra.mxu0 0.0
    %4359 = vmatprep.mubr.f32.mxu0 0.0
    %4360 = vmatmul.mubr.f32.gmra.mxu0 %v4279
    %v4361 = vpop.f32.mrf.mxu0
    %v4362 = vadd.f32 0.0, %v4361
    %v4363 = vpop.f32.mrf.mxu0
    %4364 = vmatprep.mubr.f32.mxu0 0.0
    %4365 = vmatmul.mubr.f32.gmra.mxu0 %v4281
    %v4366 = vpop.f32.mrf.mxu0
    %v4367 = vadd.f32 0.0, %v4366
    %v4368 = vpop.f32.mrf.mxu0
    %4369 = vmatprep.mubr.f32.mxu0 0.0
    %4370 = vmatmul.mubr.f32.gmra.mxu0 %v4283
    %v4371 = vpop.f32.mrf.mxu0
    %v4372 = vadd.f32 0.0, %v4371
    %v4373 = vpop.f32.mrf.mxu0
    %4374 = vmatprep.mubr.f32.mxu0 0.0
    %4375 = vmatmul.mubr.f32.gmra.mxu0 %v4285
    %v4376 = vpop.f32.mrf.mxu0
    %v4377 = vadd.f32 0.0, %v4376
    %v4378 = vpop.f32.mrf.mxu0
    %4379 = vdwg.mxu0
    %v4380 = vsel %vm216, %v4362, -inf
    %4381 = vmax.xlane.f32.xlu0 %v4380
    %v4382 = vpop.xlane.xlu0 %4381
    %v4383 = vsel %vm216, %v4367, -inf
    %4384 = vmax.xlane.f32.xlu0 %v4383
    %v4385 = vpop.xlane.xlu0 %4384
    %v4386 = vsel %vm216, %v4372, -inf
    %4387 = vmax.xlane.f32.xlu0 %v4386
    %v4388 = vpop.xlane.xlu0 %4387
    %v4389 = vsel %vm216, %v4377, -inf
    %4390 = vmax.xlane.f32.xlu0 %v4389
    %v4391 = vpop.xlane.xlu0 %4390
    %v4392 = vsub.f32 %v4362, %v4382
    %v4393 = vsub.f32 %v4367, %v4385
    %v4394 = vsub.f32 %v4372, %v4388
    %v4395 = vsub.f32 %v4377, %v4391
    %v4396 = vmul.f32 %v4392, 1.442695
    %v4397 = vpow.pop %v4396
    %v4398 = vmul.f32 %v4393, 1.442695
    %v4399 = vpow.pop %v4398
    %v4400 = vmul.f32 %v4394, 1.442695
    %v4401 = vpow.pop %v4400
    %v4402 = vmul.f32 %v4395, 1.442695
    %v4403 = vpow.pop %v4402
    %4404 = vrot.lane.b32.xlu0 %v3419, 40
    %v4405 = vpop.permute.xlu0 %4404
    %4406 = vrot.lane.b32.xlu0 %v3422, 40
    %v4407 = vpop.permute.xlu0 %4406
    %4408 = vrot.lane.b32.xlu0 %v3427, 40
    %v4409 = vpop.permute.xlu0 %4408
    %4410 = vrot.lane.b32.xlu0 %v3430, 40
    %v4411 = vpop.permute.xlu0 %4410
    %v4417 = vsel %vm216, %v4397, 0
    %v4420 = vsel %vm216, %v4399, 0
    %v4423 = vsel %vm216, %v4401, 0
    %v4426 = vsel %vm216, %v4403, 0
    %4428 = vmatprep.subr.mxu0 0.0
    %4429 = vmatpush1.msra.mxu0 0.0
    %4430 = vmatprep.subr.mxu0 0.0
    %4431 = vmatpush1.msra.mxu0 0.0
    %4432 = vmatprep.subr.mxu0 0.0
    %4433 = vmatpush1.msra.mxu0 0.0
    %4434 = vmatprep.subr.mxu0 0.0
    %4435 = vmatpush1.msra.mxu0 0.0
    %4436 = vmatprep.subr.mxu0 0.0
    %4437 = vmatpush1.msra.mxu0 0.0
    %4438 = vmatprep.subr.mxu0 0.0
    %4439 = vmatpush1.msra.mxu0 0.0
    %4440 = vmatprep.subr.mxu0 0.0
    %4441 = vmatpush1.msra.mxu0 0.0
    %4442 = vmatprep.subr.mxu0 0.0
    %4443 = vmatpush1.msra.mxu0 0.0
    %4444 = vmatprep.subr.mxu0 0.0
    %4445 = vmatpush1.msra.mxu0 0.0
    %4446 = vmatprep.subr.mxu0 0.0
    %4447 = vmatpush1.msra.mxu0 0.0
    %4448 = vmatprep.subr.mxu0 0.0
    %4449 = vmatpush1.msra.mxu0 0.0
    %4450 = vmatprep.subr.mxu0 0.0
    %4451 = vmatpush1.msra.mxu0 0.0
    %4452 = vmatprep.subr.mxu0 0.0
    %4453 = vmatpush1.msra.mxu0 %v4411
    %4454 = vmatprep.subr.mxu0 0.0
    %4455 = vmatpush1.msra.mxu0 %v4409
    %4456 = vmatprep.subr.mxu0 0.0
    %4457 = vmatpush1.msra.mxu0 %v4407
    %4458 = vmatprep.subr.mxu0 0.0
    %4459 = vmatpush1.msra.mxu0 %v4405
    %4460 = vmatprep.subr.mxu0 0.0
    %4461 = vmatpush2.msra.mxu0 0.0
    %4462 = vmatprep.subr.mxu0 0.0
    %4463 = vmatpush2.msra.mxu0 0.0
    %4464 = vmatprep.subr.mxu0 0.0
    %4465 = vmatpush2.msra.mxu0 0.0
    %4466 = vmatprep.subr.mxu0 0.0
    %4467 = vmatpush2.msra.mxu0 0.0
    %4468 = vmatprep.subr.mxu0 0.0
    %4469 = vmatpush2.msra.mxu0 0.0
    %4470 = vmatprep.subr.mxu0 0.0
    %4471 = vmatpush2.msra.mxu0 0.0
    %4472 = vmatprep.subr.mxu0 0.0
    %4473 = vmatpush2.msra.mxu0 0.0
    %4474 = vmatprep.subr.mxu0 0.0
    %4475 = vmatpush2.msra.mxu0 0.0
    %4476 = vmatprep.subr.mxu0 0.0
    %4477 = vmatpush2.msra.mxu0 0.0
    %4478 = vmatprep.subr.mxu0 0.0
    %4479 = vmatpush2.msra.mxu0 0.0
    %4480 = vmatprep.subr.mxu0 0.0
    %4481 = vmatpush2.msra.mxu0 0.0
    %4482 = vmatprep.subr.mxu0 0.0
    %4483 = vmatpush2.msra.mxu0 0.0
    %4484 = vmatprep.subr.mxu0 0.0
    %4485 = vmatpush2.msra.mxu0 0.0
    %4486 = vmatprep.subr.mxu0 0.0
    %4487 = vmatpush2.msra.mxu0 0.0
    %4488 = vmatprep.subr.mxu0 0.0
    %4489 = vmatpush2.msra.mxu0 0.0
    %4490 = vmatprep.subr.mxu0 0.0
    %4491 = vmatpush2.msra.mxu0 0.0
    %4492 = vmatprep.mubr.f32.mxu0 0.0
    %4493 = vmatmul.mubr.f32.gmra.mxu0 %v4417
    %v4494 = vpop.f32.mrf.mxu0
    %v4495 = vadd.f32 0.0, %v4494
    %v4496 = vpop.f32.mrf.mxu0
    %4497 = vmatprep.mubr.f32.mxu0 0.0
    %4498 = vmatmul.mubr.f32.gmra.mxu0 %v4420
    %v4499 = vpop.f32.mrf.mxu0
    %v4500 = vadd.f32 0.0, %v4499
    %v4501 = vpop.f32.mrf.mxu0
    %4502 = vmatprep.mubr.f32.mxu0 0.0
    %4503 = vmatmul.mubr.f32.gmra.mxu0 %v4423
    %v4504 = vpop.f32.mrf.mxu0
    %v4505 = vadd.f32 0.0, %v4504
    %v4506 = vpop.f32.mrf.mxu0
    %4507 = vmatprep.mubr.f32.mxu0 0.0
    %4508 = vmatmul.mubr.f32.gmra.mxu0 %v4426
    %v4509 = vpop.f32.mrf.mxu0
    %v4510 = vadd.f32 0.0, %v4509
    %v4511 = vpop.f32.mrf.mxu0
    %4512 = vdwg.mxu0
    %v4513 = vsel %vm216, %v4397, 0.0
    %4514 = vadd.xlane.f32.xlu0 %v4513
    %v4515 = vpop.xlane.xlu0 %4514
    %v4516 = vsel %vm216, %v4399, 0.0
    %4517 = vadd.xlane.f32.xlu0 %v4516
    %v4518 = vpop.xlane.xlu0 %4517
    %v4519 = vsel %vm216, %v4401, 0.0
    %4520 = vadd.xlane.f32.xlu0 %v4519
    %v4521 = vpop.xlane.xlu0 %4520
    %v4522 = vsel %vm216, %v4403, 0.0
    %4523 = vadd.xlane.f32.xlu0 %v4522
    %v4524 = vpop.xlane.xlu0 %4523
    %v4525 = vrcp.pop %v4515
    %v4526 = vmul.f32 %v4495, %v4525
    %v4527 = vrcp.pop %v4518
    %v4528 = vmul.f32 %v4500, %v4527
    %v4529 = vrcp.pop %v4521
    %v4530 = vmul.f32 %v4505, %v4529
    %v4531 = vrcp.pop %v4524
    %v4532 = vmul.f32 %v4510, %v4531
    %v4533 = vmul.f32 %v3435, 0.35355338
    %v4534 = vmul.f32 %v3438, 0.35355338
    %v4535 = vmul.f32 %v3443, 0.35355338
    %v4536 = vmul.f32 %v3446, 0.35355338
    %4541 = vrot.lane.b32.xlu0 %v3435, 96
    %v4542 = vpop.permute.xlu0 %4541
    %4543 = vrot.lane.b32.xlu0 %v3438, 96
    %v4544 = vpop.permute.xlu0 %4543
    %4545 = vrot.lane.b32.xlu0 %v3443, 96
    %v4546 = vpop.permute.xlu0 %4545
    %4547 = vrot.lane.b32.xlu0 %v3446, 96
    %v4548 = vpop.permute.xlu0 %4547
    %v4550 = vsel %vm464, %v4533, 0
    %v4553 = vsel %vm464, %v4534, 0
    %v4556 = vsel %vm464, %v4535, 0
    %v4559 = vsel %vm464, %v4536, 0
    %v4561 = vsel %vm464, %v4542, 0
    %v4563 = vsel %vm464, %v4544, 0
    %v4565 = vsel %vm464, %v4546, 0
    %v4567 = vsel %vm464, %v4548, 0
    %4569 = vmatprep.subr.mxu0 0.0
    %4570 = vmatpush1.xpose.msra.mxu0 0.0
    %4571 = vmatprep.subr.mxu0 0.0
    %4572 = vmatpush1.xpose.msra.mxu0 0.0
    %4573 = vmatprep.subr.mxu0 0.0
    %4574 = vmatpush1.xpose.msra.mxu0 0.0
    %4575 = vmatprep.subr.mxu0 0.0
    %4576 = vmatpush1.xpose.msra.mxu0 0.0
    %4577 = vmatprep.subr.mxu0 0.0
    %4578 = vmatpush1.xpose.msra.mxu0 0.0
    %4579 = vmatprep.subr.mxu0 0.0
    %4580 = vmatpush1.xpose.msra.mxu0 0.0
    %4581 = vmatprep.subr.mxu0 0.0
    %4582 = vmatpush1.xpose.msra.mxu0 0.0
    %4583 = vmatprep.subr.mxu0 0.0
    %4584 = vmatpush1.xpose.msra.mxu0 0.0
    %4585 = vmatprep.subr.mxu0 0.0
    %4586 = vmatpush1.xpose.msra.mxu0 0.0
    %4587 = vmatprep.subr.mxu0 0.0
    %4588 = vmatpush1.xpose.msra.mxu0 0.0
    %4589 = vmatprep.subr.mxu0 0.0
    %4590 = vmatpush1.xpose.msra.mxu0 0.0
    %4591 = vmatprep.subr.mxu0 0.0
    %4592 = vmatpush1.xpose.msra.mxu0 0.0
    %4593 = vmatprep.subr.mxu0 0.0
    %4594 = vmatpush1.xpose.msra.mxu0 %v4567
    %4595 = vmatprep.subr.mxu0 0.0
    %4596 = vmatpush1.xpose.msra.mxu0 %v4565
    %4597 = vmatprep.subr.mxu0 0.0
    %4598 = vmatpush1.xpose.msra.mxu0 %v4563
    %4599 = vmatprep.subr.mxu0 0.0
    %4600 = vmatpush1.xpose.msra.mxu0 %v4561
    %4601 = vmatprep.subr.mxu0 0.0
    %4602 = vmatpush2.xpose.msra.mxu0 0.0
    %4603 = vmatprep.subr.mxu0 0.0
    %4604 = vmatpush2.xpose.msra.mxu0 0.0
    %4605 = vmatprep.subr.mxu0 0.0
    %4606 = vmatpush2.xpose.msra.mxu0 0.0
    %4607 = vmatprep.subr.mxu0 0.0
    %4608 = vmatpush2.xpose.msra.mxu0 0.0
    %4609 = vmatprep.subr.mxu0 0.0
    %4610 = vmatpush2.xpose.msra.mxu0 0.0
    %4611 = vmatprep.subr.mxu0 0.0
    %4612 = vmatpush2.xpose.msra.mxu0 0.0
    %4613 = vmatprep.subr.mxu0 0.0
    %4614 = vmatpush2.xpose.msra.mxu0 0.0
    %4615 = vmatprep.subr.mxu0 0.0
    %4616 = vmatpush2.xpose.msra.mxu0 0.0
    %4617 = vmatprep.subr.mxu0 0.0
    %4618 = vmatpush2.xpose.msra.mxu0 0.0
    %4619 = vmatprep.subr.mxu0 0.0
    %4620 = vmatpush2.xpose.msra.mxu0 0.0
    %4621 = vmatprep.subr.mxu0 0.0
    %4622 = vmatpush2.xpose.msra.mxu0 0.0
    %4623 = vmatprep.subr.mxu0 0.0
    %4624 = vmatpush2.xpose.msra.mxu0 0.0
    %4625 = vmatprep.subr.mxu0 0.0
    %4626 = vmatpush2.xpose.msra.mxu0 0.0
    %4627 = vmatprep.subr.mxu0 0.0
    %4628 = vmatpush2.xpose.msra.mxu0 0.0
    %4629 = vmatprep.subr.mxu0 0.0
    %4630 = vmatpush2.xpose.msra.mxu0 0.0
    %4631 = vmatprep.subr.mxu0 0.0
    %4632 = vmatpush2.xpose.msra.mxu0 0.0
    %4633 = vmatprep.mubr.f32.mxu0 0.0
    %4634 = vmatmul.mubr.f32.gmra.mxu0 %v4550
    %v4635 = vpop.f32.mrf.mxu0
    %v4636 = vadd.f32 0.0, %v4635
    %v4637 = vpop.f32.mrf.mxu0
    %4638 = vmatprep.mubr.f32.mxu0 0.0
    %4639 = vmatmul.mubr.f32.gmra.mxu0 %v4553
    %v4640 = vpop.f32.mrf.mxu0
    %v4641 = vadd.f32 0.0, %v4640
    %v4642 = vpop.f32.mrf.mxu0
    %4643 = vmatprep.mubr.f32.mxu0 0.0
    %4644 = vmatmul.mubr.f32.gmra.mxu0 %v4556
    %v4645 = vpop.f32.mrf.mxu0
    %v4646 = vadd.f32 0.0, %v4645
    %v4647 = vpop.f32.mrf.mxu0
    %4648 = vmatprep.mubr.f32.mxu0 0.0
    %4649 = vmatmul.mubr.f32.gmra.mxu0 %v4559
    %v4650 = vpop.f32.mrf.mxu0
    %v4651 = vadd.f32 0.0, %v4650
    %v4652 = vpop.f32.mrf.mxu0
    %4653 = vdwg.mxu0
    %v4654 = vsel %vm216, %v4636, -inf
    %4655 = vmax.xlane.f32.xlu0 %v4654
    %v4656 = vpop.xlane.xlu0 %4655
    %v4657 = vsel %vm216, %v4641, -inf
    %4658 = vmax.xlane.f32.xlu0 %v4657
    %v4659 = vpop.xlane.xlu0 %4658
    %v4660 = vsel %vm216, %v4646, -inf
    %4661 = vmax.xlane.f32.xlu0 %v4660
    %v4662 = vpop.xlane.xlu0 %4661
    %v4663 = vsel %vm216, %v4651, -inf
    %4664 = vmax.xlane.f32.xlu0 %v4663
    %v4665 = vpop.xlane.xlu0 %4664
    %v4666 = vsub.f32 %v4636, %v4656
    %v4667 = vsub.f32 %v4641, %v4659
    %v4668 = vsub.f32 %v4646, %v4662
    %v4669 = vsub.f32 %v4651, %v4665
    %v4670 = vmul.f32 %v4666, 1.442695
    %v4671 = vpow.pop %v4670
    %v4672 = vmul.f32 %v4667, 1.442695
    %v4673 = vpow.pop %v4672
    %v4674 = vmul.f32 %v4668, 1.442695
    %v4675 = vpow.pop %v4674
    %v4676 = vmul.f32 %v4669, 1.442695
    %v4677 = vpow.pop %v4676
    %4678 = vrot.lane.b32.xlu0 %v3435, 64
    %v4679 = vpop.permute.xlu0 %4678
    %4680 = vrot.lane.b32.xlu0 %v3438, 64
    %v4681 = vpop.permute.xlu0 %4680
    %4682 = vrot.lane.b32.xlu0 %v3443, 64
    %v4683 = vpop.permute.xlu0 %4682
    %4684 = vrot.lane.b32.xlu0 %v3446, 64
    %v4685 = vpop.permute.xlu0 %4684
    %v4691 = vsel %vm216, %v4671, 0
    %v4694 = vsel %vm216, %v4673, 0
    %v4697 = vsel %vm216, %v4675, 0
    %v4700 = vsel %vm216, %v4677, 0
    %4702 = vmatprep.subr.mxu0 0.0
    %4703 = vmatpush1.msra.mxu0 0.0
    %4704 = vmatprep.subr.mxu0 0.0
    %4705 = vmatpush1.msra.mxu0 0.0
    %4706 = vmatprep.subr.mxu0 0.0
    %4707 = vmatpush1.msra.mxu0 0.0
    %4708 = vmatprep.subr.mxu0 0.0
    %4709 = vmatpush1.msra.mxu0 0.0
    %4710 = vmatprep.subr.mxu0 0.0
    %4711 = vmatpush1.msra.mxu0 0.0
    %4712 = vmatprep.subr.mxu0 0.0
    %4713 = vmatpush1.msra.mxu0 0.0
    %4714 = vmatprep.subr.mxu0 0.0
    %4715 = vmatpush1.msra.mxu0 0.0
    %4716 = vmatprep.subr.mxu0 0.0
    %4717 = vmatpush1.msra.mxu0 0.0
    %4718 = vmatprep.subr.mxu0 0.0
    %4719 = vmatpush1.msra.mxu0 0.0
    %4720 = vmatprep.subr.mxu0 0.0
    %4721 = vmatpush1.msra.mxu0 0.0
    %4722 = vmatprep.subr.mxu0 0.0
    %4723 = vmatpush1.msra.mxu0 0.0
    %4724 = vmatprep.subr.mxu0 0.0
    %4725 = vmatpush1.msra.mxu0 0.0
    %4726 = vmatprep.subr.mxu0 0.0
    %4727 = vmatpush1.msra.mxu0 %v4685
    %4728 = vmatprep.subr.mxu0 0.0
    %4729 = vmatpush1.msra.mxu0 %v4683
    %4730 = vmatprep.subr.mxu0 0.0
    %4731 = vmatpush1.msra.mxu0 %v4681
    %4732 = vmatprep.subr.mxu0 0.0
    %4733 = vmatpush1.msra.mxu0 %v4679
    %4734 = vmatprep.subr.mxu0 0.0
    %4735 = vmatpush2.msra.mxu0 0.0
    %4736 = vmatprep.subr.mxu0 0.0
    %4737 = vmatpush2.msra.mxu0 0.0
    %4738 = vmatprep.subr.mxu0 0.0
    %4739 = vmatpush2.msra.mxu0 0.0
    %4740 = vmatprep.subr.mxu0 0.0
    %4741 = vmatpush2.msra.mxu0 0.0
    %4742 = vmatprep.subr.mxu0 0.0
    %4743 = vmatpush2.msra.mxu0 0.0
    %4744 = vmatprep.subr.mxu0 0.0
    %4745 = vmatpush2.msra.mxu0 0.0
    %4746 = vmatprep.subr.mxu0 0.0
    %4747 = vmatpush2.msra.mxu0 0.0
    %4748 = vmatprep.subr.mxu0 0.0
    %4749 = vmatpush2.msra.mxu0 0.0
    %4750 = vmatprep.subr.mxu0 0.0
    %4751 = vmatpush2.msra.mxu0 0.0
    %4752 = vmatprep.subr.mxu0 0.0
    %4753 = vmatpush2.msra.mxu0 0.0
    %4754 = vmatprep.subr.mxu0 0.0
    %4755 = vmatpush2.msra.mxu0 0.0
    %4756 = vmatprep.subr.mxu0 0.0
    %4757 = vmatpush2.msra.mxu0 0.0
    %4758 = vmatprep.subr.mxu0 0.0
    %4759 = vmatpush2.msra.mxu0 0.0
    %4760 = vmatprep.subr.mxu0 0.0
    %4761 = vmatpush2.msra.mxu0 0.0
    %4762 = vmatprep.subr.mxu0 0.0
    %4763 = vmatpush2.msra.mxu0 0.0
    %4764 = vmatprep.subr.mxu0 0.0
    %4765 = vmatpush2.msra.mxu0 0.0
    %4766 = vmatprep.mubr.f32.mxu0 0.0
    %4767 = vmatmul.mubr.f32.gmra.mxu0 %v4691
    %v4768 = vpop.f32.mrf.mxu0
    %v4769 = vadd.f32 0.0, %v4768
    %v4770 = vpop.f32.mrf.mxu0
    %4771 = vmatprep.mubr.f32.mxu0 0.0
    %4772 = vmatmul.mubr.f32.gmra.mxu0 %v4694
    %v4773 = vpop.f32.mrf.mxu0
    %v4774 = vadd.f32 0.0, %v4773
    %v4775 = vpop.f32.mrf.mxu0
    %4776 = vmatprep.mubr.f32.mxu0 0.0
    %4777 = vmatmul.mubr.f32.gmra.mxu0 %v4697
    %v4778 = vpop.f32.mrf.mxu0
    %v4779 = vadd.f32 0.0, %v4778
    %v4780 = vpop.f32.mrf.mxu0
    %4781 = vmatprep.mubr.f32.mxu0 0.0
    %4782 = vmatmul.mubr.f32.gmra.mxu0 %v4700
    %v4783 = vpop.f32.mrf.mxu0
    %v4784 = vadd.f32 0.0, %v4783
    %v4785 = vpop.f32.mrf.mxu0
    %4786 = vdwg.mxu0
    %v4787 = vsel %vm216, %v4671, 0.0
    %4788 = vadd.xlane.f32.xlu0 %v4787
    %v4789 = vpop.xlane.xlu0 %4788
    %v4790 = vsel %vm216, %v4673, 0.0
    %4791 = vadd.xlane.f32.xlu0 %v4790
    %v4792 = vpop.xlane.xlu0 %4791
    %v4793 = vsel %vm216, %v4675, 0.0
    %4794 = vadd.xlane.f32.xlu0 %v4793
    %v4795 = vpop.xlane.xlu0 %4794
    %v4796 = vsel %vm216, %v4677, 0.0
    %4797 = vadd.xlane.f32.xlu0 %v4796
    %v4798 = vpop.xlane.xlu0 %4797
    %v4799 = vrcp.pop %v4789
    %v4800 = vmul.f32 %v4769, %v4799
    %v4801 = vrcp.pop %v4792
    %v4802 = vmul.f32 %v4774, %v4801
    %v4803 = vrcp.pop %v4795
    %v4804 = vmul.f32 %v4779, %v4803
    %v4805 = vrcp.pop %v4798
    %v4806 = vmul.f32 %v4784, %v4805
    %4807 = vrot.lane.b32.xlu0 %v4533, 120
    %v4808 = vpop.permute.xlu0 %4807
    %4809 = vrot.lane.b32.xlu0 %v4534, 120
    %v4810 = vpop.permute.xlu0 %4809
    %4811 = vrot.lane.b32.xlu0 %v4535, 120
    %v4812 = vpop.permute.xlu0 %4811
    %4813 = vrot.lane.b32.xlu0 %v4536, 120
    %v4814 = vpop.permute.xlu0 %4813
    %4815 = vrot.lane.b32.xlu0 %v3435, 88
    %v4816 = vpop.permute.xlu0 %4815
    %4817 = vrot.lane.b32.xlu0 %v3438, 88
    %v4818 = vpop.permute.xlu0 %4817
    %4819 = vrot.lane.b32.xlu0 %v3443, 88
    %v4820 = vpop.permute.xlu0 %4819
    %4821 = vrot.lane.b32.xlu0 %v3446, 88
    %v4822 = vpop.permute.xlu0 %4821
    %v4823 = vsel %vm464, %v4808, 0
    %v4825 = vsel %vm464, %v4810, 0
    %v4827 = vsel %vm464, %v4812, 0
    %v4829 = vsel %vm464, %v4814, 0
    %v4831 = vsel %vm464, %v4816, 0
    %v4833 = vsel %vm464, %v4818, 0
    %v4835 = vsel %vm464, %v4820, 0
    %v4837 = vsel %vm464, %v4822, 0
    %4839 = vmatprep.subr.mxu0 0.0
    %4840 = vmatpush1.xpose.msra.mxu0 0.0
    %4841 = vmatprep.subr.mxu0 0.0
    %4842 = vmatpush1.xpose.msra.mxu0 0.0
    %4843 = vmatprep.subr.mxu0 0.0
    %4844 = vmatpush1.xpose.msra.mxu0 0.0
    %4845 = vmatprep.subr.mxu0 0.0
    %4846 = vmatpush1.xpose.msra.mxu0 0.0
    %4847 = vmatprep.subr.mxu0 0.0
    %4848 = vmatpush1.xpose.msra.mxu0 0.0
    %4849 = vmatprep.subr.mxu0 0.0
    %4850 = vmatpush1.xpose.msra.mxu0 0.0
    %4851 = vmatprep.subr.mxu0 0.0
    %4852 = vmatpush1.xpose.msra.mxu0 0.0
    %4853 = vmatprep.subr.mxu0 0.0
    %4854 = vmatpush1.xpose.msra.mxu0 0.0
    %4855 = vmatprep.subr.mxu0 0.0
    %4856 = vmatpush1.xpose.msra.mxu0 0.0
    %4857 = vmatprep.subr.mxu0 0.0
    %4858 = vmatpush1.xpose.msra.mxu0 0.0
    %4859 = vmatprep.subr.mxu0 0.0
    %4860 = vmatpush1.xpose.msra.mxu0 0.0
    %4861 = vmatprep.subr.mxu0 0.0
    %4862 = vmatpush1.xpose.msra.mxu0 0.0
    %4863 = vmatprep.subr.mxu0 0.0
    %4864 = vmatpush1.xpose.msra.mxu0 %v4837
    %4865 = vmatprep.subr.mxu0 0.0
    %4866 = vmatpush1.xpose.msra.mxu0 %v4835
    %4867 = vmatprep.subr.mxu0 0.0
    %4868 = vmatpush1.xpose.msra.mxu0 %v4833
    %4869 = vmatprep.subr.mxu0 0.0
    %4870 = vmatpush1.xpose.msra.mxu0 %v4831
    %4871 = vmatprep.subr.mxu0 0.0
    %4872 = vmatpush2.xpose.msra.mxu0 0.0
    %4873 = vmatprep.subr.mxu0 0.0
    %4874 = vmatpush2.xpose.msra.mxu0 0.0
    %4875 = vmatprep.subr.mxu0 0.0
    %4876 = vmatpush2.xpose.msra.mxu0 0.0
    %4877 = vmatprep.subr.mxu0 0.0
    %4878 = vmatpush2.xpose.msra.mxu0 0.0
    %4879 = vmatprep.subr.mxu0 0.0
    %4880 = vmatpush2.xpose.msra.mxu0 0.0
    %4881 = vmatprep.subr.mxu0 0.0
    %4882 = vmatpush2.xpose.msra.mxu0 0.0
    %4883 = vmatprep.subr.mxu0 0.0
    %4884 = vmatpush2.xpose.msra.mxu0 0.0
    %4885 = vmatprep.subr.mxu0 0.0
    %4886 = vmatpush2.xpose.msra.mxu0 0.0
    %4887 = vmatprep.subr.mxu0 0.0
    %4888 = vmatpush2.xpose.msra.mxu0 0.0
    %4889 = vmatprep.subr.mxu0 0.0
    %4890 = vmatpush2.xpose.msra.mxu0 0.0
    %4891 = vmatprep.subr.mxu0 0.0
    %4892 = vmatpush2.xpose.msra.mxu0 0.0
    %4893 = vmatprep.subr.mxu0 0.0
    %4894 = vmatpush2.xpose.msra.mxu0 0.0
    %4895 = vmatprep.subr.mxu0 0.0
    %4896 = vmatpush2.xpose.msra.mxu0 0.0
    %4897 = vmatprep.subr.mxu0 0.0
    %4898 = vmatpush2.xpose.msra.mxu0 0.0
    %4899 = vmatprep.subr.mxu0 0.0
    %4900 = vmatpush2.xpose.msra.mxu0 0.0
    %4901 = vmatprep.subr.mxu0 0.0
    %4902 = vmatpush2.xpose.msra.mxu0 0.0
    %4903 = vmatprep.mubr.f32.mxu0 0.0
    %4904 = vmatmul.mubr.f32.gmra.mxu0 %v4823
    %v4905 = vpop.f32.mrf.mxu0
    %v4906 = vadd.f32 0.0, %v4905
    %v4907 = vpop.f32.mrf.mxu0
    %4908 = vmatprep.mubr.f32.mxu0 0.0
    %4909 = vmatmul.mubr.f32.gmra.mxu0 %v4825
    %v4910 = vpop.f32.mrf.mxu0
    %v4911 = vadd.f32 0.0, %v4910
    %v4912 = vpop.f32.mrf.mxu0
    %4913 = vmatprep.mubr.f32.mxu0 0.0
    %4914 = vmatmul.mubr.f32.gmra.mxu0 %v4827
    %v4915 = vpop.f32.mrf.mxu0
    %v4916 = vadd.f32 0.0, %v4915
    %v4917 = vpop.f32.mrf.mxu0
    %4918 = vmatprep.mubr.f32.mxu0 0.0
    %4919 = vmatmul.mubr.f32.gmra.mxu0 %v4829
    %v4920 = vpop.f32.mrf.mxu0
    %v4921 = vadd.f32 0.0, %v4920
    %v4922 = vpop.f32.mrf.mxu0
    %4923 = vdwg.mxu0
    %v4924 = vsel %vm216, %v4906, -inf
    %4925 = vmax.xlane.f32.xlu0 %v4924
    %v4926 = vpop.xlane.xlu0 %4925
    %v4927 = vsel %vm216, %v4911, -inf
    %4928 = vmax.xlane.f32.xlu0 %v4927
    %v4929 = vpop.xlane.xlu0 %4928
    %v4930 = vsel %vm216, %v4916, -inf
    %4931 = vmax.xlane.f32.xlu0 %v4930
    %v4932 = vpop.xlane.xlu0 %4931
    %v4933 = vsel %vm216, %v4921, -inf
    %4934 = vmax.xlane.f32.xlu0 %v4933
    %v4935 = vpop.xlane.xlu0 %4934
    %v4936 = vsub.f32 %v4906, %v4926
    %v4937 = vsub.f32 %v4911, %v4929
    %v4938 = vsub.f32 %v4916, %v4932
    %v4939 = vsub.f32 %v4921, %v4935
    %v4940 = vmul.f32 %v4936, 1.442695
    %v4941 = vpow.pop %v4940
    %v4942 = vmul.f32 %v4937, 1.442695
    %v4943 = vpow.pop %v4942
    %v4944 = vmul.f32 %v4938, 1.442695
    %v4945 = vpow.pop %v4944
    %v4946 = vmul.f32 %v4939, 1.442695
    %v4947 = vpow.pop %v4946
    %4948 = vrot.lane.b32.xlu0 %v3435, 56
    %v4949 = vpop.permute.xlu0 %4948
    %4950 = vrot.lane.b32.xlu0 %v3438, 56
    %v4951 = vpop.permute.xlu0 %4950
    %4952 = vrot.lane.b32.xlu0 %v3443, 56
    %v4953 = vpop.permute.xlu0 %4952
    %4954 = vrot.lane.b32.xlu0 %v3446, 56
    %v4955 = vpop.permute.xlu0 %4954
    %v4961 = vsel %vm216, %v4941, 0
    %v4964 = vsel %vm216, %v4943, 0
    %v4967 = vsel %vm216, %v4945, 0
    %v4970 = vsel %vm216, %v4947, 0
    %4972 = vmatprep.subr.mxu0 0.0
    %4973 = vmatpush1.msra.mxu0 0.0
    %4974 = vmatprep.subr.mxu0 0.0
    %4975 = vmatpush1.msra.mxu0 0.0
    %4976 = vmatprep.subr.mxu0 0.0
    %4977 = vmatpush1.msra.mxu0 0.0
    %4978 = vmatprep.subr.mxu0 0.0
    %4979 = vmatpush1.msra.mxu0 0.0
    %4980 = vmatprep.subr.mxu0 0.0
    %4981 = vmatpush1.msra.mxu0 0.0
    %4982 = vmatprep.subr.mxu0 0.0
    %4983 = vmatpush1.msra.mxu0 0.0
    %4984 = vmatprep.subr.mxu0 0.0
    %4985 = vmatpush1.msra.mxu0 0.0
    %4986 = vmatprep.subr.mxu0 0.0
    %4987 = vmatpush1.msra.mxu0 0.0
    %4988 = vmatprep.subr.mxu0 0.0
    %4989 = vmatpush1.msra.mxu0 0.0
    %4990 = vmatprep.subr.mxu0 0.0
    %4991 = vmatpush1.msra.mxu0 0.0
    %4992 = vmatprep.subr.mxu0 0.0
    %4993 = vmatpush1.msra.mxu0 0.0
    %4994 = vmatprep.subr.mxu0 0.0
    %4995 = vmatpush1.msra.mxu0 0.0
    %4996 = vmatprep.subr.mxu0 0.0
    %4997 = vmatpush1.msra.mxu0 %v4955
    %4998 = vmatprep.subr.mxu0 0.0
    %4999 = vmatpush1.msra.mxu0 %v4953
    %5000 = vmatprep.subr.mxu0 0.0
    %5001 = vmatpush1.msra.mxu0 %v4951
    %5002 = vmatprep.subr.mxu0 0.0
    %5003 = vmatpush1.msra.mxu0 %v4949
    %5004 = vmatprep.subr.mxu0 0.0
    %5005 = vmatpush2.msra.mxu0 0.0
    %5006 = vmatprep.subr.mxu0 0.0
    %5007 = vmatpush2.msra.mxu0 0.0
    %5008 = vmatprep.subr.mxu0 0.0
    %5009 = vmatpush2.msra.mxu0 0.0
    %5010 = vmatprep.subr.mxu0 0.0
    %5011 = vmatpush2.msra.mxu0 0.0
    %5012 = vmatprep.subr.mxu0 0.0
    %5013 = vmatpush2.msra.mxu0 0.0
    %5014 = vmatprep.subr.mxu0 0.0
    %5015 = vmatpush2.msra.mxu0 0.0
    %5016 = vmatprep.subr.mxu0 0.0
    %5017 = vmatpush2.msra.mxu0 0.0
    %5018 = vmatprep.subr.mxu0 0.0
    %5019 = vmatpush2.msra.mxu0 0.0
    %5020 = vmatprep.subr.mxu0 0.0
    %5021 = vmatpush2.msra.mxu0 0.0
    %5022 = vmatprep.subr.mxu0 0.0
    %5023 = vmatpush2.msra.mxu0 0.0
    %5024 = vmatprep.subr.mxu0 0.0
    %5025 = vmatpush2.msra.mxu0 0.0
    %5026 = vmatprep.subr.mxu0 0.0
    %5027 = vmatpush2.msra.mxu0 0.0
    %5028 = vmatprep.subr.mxu0 0.0
    %5029 = vmatpush2.msra.mxu0 0.0
    %5030 = vmatprep.subr.mxu0 0.0
    %5031 = vmatpush2.msra.mxu0 0.0
    %5032 = vmatprep.subr.mxu0 0.0
    %5033 = vmatpush2.msra.mxu0 0.0
    %5034 = vmatprep.subr.mxu0 0.0
    %5035 = vmatpush2.msra.mxu0 0.0
    %5036 = vmatprep.mubr.f32.mxu0 0.0
    %5037 = vmatmul.mubr.f32.gmra.mxu0 %v4961
    %v5038 = vpop.f32.mrf.mxu0
    %v5039 = vadd.f32 0.0, %v5038
    %v5040 = vpop.f32.mrf.mxu0
    %5041 = vmatprep.mubr.f32.mxu0 0.0
    %5042 = vmatmul.mubr.f32.gmra.mxu0 %v4964
    %v5043 = vpop.f32.mrf.mxu0
    %v5044 = vadd.f32 0.0, %v5043
    %v5045 = vpop.f32.mrf.mxu0
    %5046 = vmatprep.mubr.f32.mxu0 0.0
    %5047 = vmatmul.mubr.f32.gmra.mxu0 %v4967
    %v5048 = vpop.f32.mrf.mxu0
    %v5049 = vadd.f32 0.0, %v5048
    %v5050 = vpop.f32.mrf.mxu0
    %5051 = vmatprep.mubr.f32.mxu0 0.0
    %5052 = vmatmul.mubr.f32.gmra.mxu0 %v4970
    %v5053 = vpop.f32.mrf.mxu0
    %v5054 = vadd.f32 0.0, %v5053
    %v5055 = vpop.f32.mrf.mxu0
    %5056 = vdwg.mxu0
    %v5057 = vsel %vm216, %v4941, 0.0
    %5058 = vadd.xlane.f32.xlu0 %v5057
    %v5059 = vpop.xlane.xlu0 %5058
    %v5060 = vsel %vm216, %v4943, 0.0
    %5061 = vadd.xlane.f32.xlu0 %v5060
    %v5062 = vpop.xlane.xlu0 %5061
    %v5063 = vsel %vm216, %v4945, 0.0
    %5064 = vadd.xlane.f32.xlu0 %v5063
    %v5065 = vpop.xlane.xlu0 %5064
    %v5066 = vsel %vm216, %v4947, 0.0
    %5067 = vadd.xlane.f32.xlu0 %v5066
    %v5068 = vpop.xlane.xlu0 %5067
    %v5069 = vrcp.pop %v5059
    %v5070 = vmul.f32 %v5039, %v5069
    %v5071 = vrcp.pop %v5062
    %v5072 = vmul.f32 %v5044, %v5071
    %v5073 = vrcp.pop %v5065
    %v5074 = vmul.f32 %v5049, %v5073
    %v5075 = vrcp.pop %v5068
    %v5076 = vmul.f32 %v5054, %v5075
    %5077 = vrot.lane.b32.xlu0 %v4533, 112
    %v5078 = vpop.permute.xlu0 %5077
    %5079 = vrot.lane.b32.xlu0 %v4534, 112
    %v5080 = vpop.permute.xlu0 %5079
    %5081 = vrot.lane.b32.xlu0 %v4535, 112
    %v5082 = vpop.permute.xlu0 %5081
    %5083 = vrot.lane.b32.xlu0 %v4536, 112
    %v5084 = vpop.permute.xlu0 %5083
    %5085 = vrot.lane.b32.xlu0 %v3435, 80
    %v5086 = vpop.permute.xlu0 %5085
    %5087 = vrot.lane.b32.xlu0 %v3438, 80
    %v5088 = vpop.permute.xlu0 %5087
    %5089 = vrot.lane.b32.xlu0 %v3443, 80
    %v5090 = vpop.permute.xlu0 %5089
    %5091 = vrot.lane.b32.xlu0 %v3446, 80
    %v5092 = vpop.permute.xlu0 %5091
    %v5093 = vsel %vm464, %v5078, 0
    %v5095 = vsel %vm464, %v5080, 0
    %v5097 = vsel %vm464, %v5082, 0
    %v5099 = vsel %vm464, %v5084, 0
    %v5101 = vsel %vm464, %v5086, 0
    %v5103 = vsel %vm464, %v5088, 0
    %v5105 = vsel %vm464, %v5090, 0
    %v5107 = vsel %vm464, %v5092, 0
    %5109 = vmatprep.subr.mxu0 0.0
    %5110 = vmatpush1.xpose.msra.mxu0 0.0
    %5111 = vmatprep.subr.mxu0 0.0
    %5112 = vmatpush1.xpose.msra.mxu0 0.0
    %5113 = vmatprep.subr.mxu0 0.0
    %5114 = vmatpush1.xpose.msra.mxu0 0.0
    %5115 = vmatprep.subr.mxu0 0.0
    %5116 = vmatpush1.xpose.msra.mxu0 0.0
    %5117 = vmatprep.subr.mxu0 0.0
    %5118 = vmatpush1.xpose.msra.mxu0 0.0
    %5119 = vmatprep.subr.mxu0 0.0
    %5120 = vmatpush1.xpose.msra.mxu0 0.0
    %5121 = vmatprep.subr.mxu0 0.0
    %5122 = vmatpush1.xpose.msra.mxu0 0.0
    %5123 = vmatprep.subr.mxu0 0.0
    %5124 = vmatpush1.xpose.msra.mxu0 0.0
    %5125 = vmatprep.subr.mxu0 0.0
    %5126 = vmatpush1.xpose.msra.mxu0 0.0
    %5127 = vmatprep.subr.mxu0 0.0
    %5128 = vmatpush1.xpose.msra.mxu0 0.0
    %5129 = vmatprep.subr.mxu0 0.0
    %5130 = vmatpush1.xpose.msra.mxu0 0.0
    %5131 = vmatprep.subr.mxu0 0.0
    %5132 = vmatpush1.xpose.msra.mxu0 0.0
    %5133 = vmatprep.subr.mxu0 0.0
    %5134 = vmatpush1.xpose.msra.mxu0 %v5107
    %5135 = vmatprep.subr.mxu0 0.0
    %5136 = vmatpush1.xpose.msra.mxu0 %v5105
    %5137 = vmatprep.subr.mxu0 0.0
    %5138 = vmatpush1.xpose.msra.mxu0 %v5103
    %5139 = vmatprep.subr.mxu0 0.0
    %5140 = vmatpush1.xpose.msra.mxu0 %v5101
    %5141 = vmatprep.subr.mxu0 0.0
    %5142 = vmatpush2.xpose.msra.mxu0 0.0
    %5143 = vmatprep.subr.mxu0 0.0
    %5144 = vmatpush2.xpose.msra.mxu0 0.0
    %5145 = vmatprep.subr.mxu0 0.0
    %5146 = vmatpush2.xpose.msra.mxu0 0.0
    %5147 = vmatprep.subr.mxu0 0.0
    %5148 = vmatpush2.xpose.msra.mxu0 0.0
    %5149 = vmatprep.subr.mxu0 0.0
    %5150 = vmatpush2.xpose.msra.mxu0 0.0
    %5151 = vmatprep.subr.mxu0 0.0
    %5152 = vmatpush2.xpose.msra.mxu0 0.0
    %5153 = vmatprep.subr.mxu0 0.0
    %5154 = vmatpush2.xpose.msra.mxu0 0.0
    %5155 = vmatprep.subr.mxu0 0.0
    %5156 = vmatpush2.xpose.msra.mxu0 0.0
    %5157 = vmatprep.subr.mxu0 0.0
    %5158 = vmatpush2.xpose.msra.mxu0 0.0
    %5159 = vmatprep.subr.mxu0 0.0
    %5160 = vmatpush2.xpose.msra.mxu0 0.0
    %5161 = vmatprep.subr.mxu0 0.0
    %5162 = vmatpush2.xpose.msra.mxu0 0.0
    %5163 = vmatprep.subr.mxu0 0.0
    %5164 = vmatpush2.xpose.msra.mxu0 0.0
    %5165 = vmatprep.subr.mxu0 0.0
    %5166 = vmatpush2.xpose.msra.mxu0 0.0
    %5167 = vmatprep.subr.mxu0 0.0
    %5168 = vmatpush2.xpose.msra.mxu0 0.0
    %5169 = vmatprep.subr.mxu0 0.0
    %5170 = vmatpush2.xpose.msra.mxu0 0.0
    %5171 = vmatprep.subr.mxu0 0.0
    %5172 = vmatpush2.xpose.msra.mxu0 0.0
    %5173 = vmatprep.mubr.f32.mxu0 0.0
    %5174 = vmatmul.mubr.f32.gmra.mxu0 %v5093
    %v5175 = vpop.f32.mrf.mxu0
    %v5176 = vadd.f32 0.0, %v5175
    %v5177 = vpop.f32.mrf.mxu0
    %5178 = vmatprep.mubr.f32.mxu0 0.0
    %5179 = vmatmul.mubr.f32.gmra.mxu0 %v5095
    %v5180 = vpop.f32.mrf.mxu0
    %v5181 = vadd.f32 0.0, %v5180
    %v5182 = vpop.f32.mrf.mxu0
    %5183 = vmatprep.mubr.f32.mxu0 0.0
    %5184 = vmatmul.mubr.f32.gmra.mxu0 %v5097
    %v5185 = vpop.f32.mrf.mxu0
    %v5186 = vadd.f32 0.0, %v5185
    %v5187 = vpop.f32.mrf.mxu0
    %5188 = vmatprep.mubr.f32.mxu0 0.0
    %5189 = vmatmul.mubr.f32.gmra.mxu0 %v5099
    %v5190 = vpop.f32.mrf.mxu0
    %v5191 = vadd.f32 0.0, %v5190
    %v5192 = vpop.f32.mrf.mxu0
    %5193 = vdwg.mxu0
    %v5194 = vsel %vm216, %v5176, -inf
    %5195 = vmax.xlane.f32.xlu0 %v5194
    %v5196 = vpop.xlane.xlu0 %5195
    %v5197 = vsel %vm216, %v5181, -inf
    %5198 = vmax.xlane.f32.xlu0 %v5197
    %v5199 = vpop.xlane.xlu0 %5198
    %v5200 = vsel %vm216, %v5186, -inf
    %5201 = vmax.xlane.f32.xlu0 %v5200
    %v5202 = vpop.xlane.xlu0 %5201
    %v5203 = vsel %vm216, %v5191, -inf
    %5204 = vmax.xlane.f32.xlu0 %v5203
    %v5205 = vpop.xlane.xlu0 %5204
    %v5206 = vsub.f32 %v5176, %v5196
    %v5207 = vsub.f32 %v5181, %v5199
    %v5208 = vsub.f32 %v5186, %v5202
    %v5209 = vsub.f32 %v5191, %v5205
    %v5210 = vmul.f32 %v5206, 1.442695
    %v5211 = vpow.pop %v5210
    %v5212 = vmul.f32 %v5207, 1.442695
    %v5213 = vpow.pop %v5212
    %v5214 = vmul.f32 %v5208, 1.442695
    %v5215 = vpow.pop %v5214
    %v5216 = vmul.f32 %v5209, 1.442695
    %v5217 = vpow.pop %v5216
    %5218 = vrot.lane.b32.xlu0 %v3435, 48
    %v5219 = vpop.permute.xlu0 %5218
    %5220 = vrot.lane.b32.xlu0 %v3438, 48
    %v5221 = vpop.permute.xlu0 %5220
    %5222 = vrot.lane.b32.xlu0 %v3443, 48
    %v5223 = vpop.permute.xlu0 %5222
    %5224 = vrot.lane.b32.xlu0 %v3446, 48
    %v5225 = vpop.permute.xlu0 %5224
    %v5231 = vsel %vm216, %v5211, 0
    %v5234 = vsel %vm216, %v5213, 0
    %v5237 = vsel %vm216, %v5215, 0
    %v5240 = vsel %vm216, %v5217, 0
    %5242 = vmatprep.subr.mxu0 0.0
    %5243 = vmatpush1.msra.mxu0 0.0
    %5244 = vmatprep.subr.mxu0 0.0
    %5245 = vmatpush1.msra.mxu0 0.0
    %5246 = vmatprep.subr.mxu0 0.0
    %5247 = vmatpush1.msra.mxu0 0.0
    %5248 = vmatprep.subr.mxu0 0.0
    %5249 = vmatpush1.msra.mxu0 0.0
    %5250 = vmatprep.subr.mxu0 0.0
    %5251 = vmatpush1.msra.mxu0 0.0
    %5252 = vmatprep.subr.mxu0 0.0
    %5253 = vmatpush1.msra.mxu0 0.0
    %5254 = vmatprep.subr.mxu0 0.0
    %5255 = vmatpush1.msra.mxu0 0.0
    %5256 = vmatprep.subr.mxu0 0.0
    %5257 = vmatpush1.msra.mxu0 0.0
    %5258 = vmatprep.subr.mxu0 0.0
    %5259 = vmatpush1.msra.mxu0 0.0
    %5260 = vmatprep.subr.mxu0 0.0
    %5261 = vmatpush1.msra.mxu0 0.0
    %5262 = vmatprep.subr.mxu0 0.0
    %5263 = vmatpush1.msra.mxu0 0.0
    %5264 = vmatprep.subr.mxu0 0.0
    %5265 = vmatpush1.msra.mxu0 0.0
    %5266 = vmatprep.subr.mxu0 0.0
    %5267 = vmatpush1.msra.mxu0 %v5225
    %5268 = vmatprep.subr.mxu0 0.0
    %5269 = vmatpush1.msra.mxu0 %v5223
    %5270 = vmatprep.subr.mxu0 0.0
    %5271 = vmatpush1.msra.mxu0 %v5221
    %5272 = vmatprep.subr.mxu0 0.0
    %5273 = vmatpush1.msra.mxu0 %v5219
    %5274 = vmatprep.subr.mxu0 0.0
    %5275 = vmatpush2.msra.mxu0 0.0
    %5276 = vmatprep.subr.mxu0 0.0
    %5277 = vmatpush2.msra.mxu0 0.0
    %5278 = vmatprep.subr.mxu0 0.0
    %5279 = vmatpush2.msra.mxu0 0.0
    %5280 = vmatprep.subr.mxu0 0.0
    %5281 = vmatpush2.msra.mxu0 0.0
    %5282 = vmatprep.subr.mxu0 0.0
    %5283 = vmatpush2.msra.mxu0 0.0
    %5284 = vmatprep.subr.mxu0 0.0
    %5285 = vmatpush2.msra.mxu0 0.0
    %5286 = vmatprep.subr.mxu0 0.0
    %5287 = vmatpush2.msra.mxu0 0.0
    %5288 = vmatprep.subr.mxu0 0.0
    %5289 = vmatpush2.msra.mxu0 0.0
    %5290 = vmatprep.subr.mxu0 0.0
    %5291 = vmatpush2.msra.mxu0 0.0
    %5292 = vmatprep.subr.mxu0 0.0
    %5293 = vmatpush2.msra.mxu0 0.0
    %5294 = vmatprep.subr.mxu0 0.0
    %5295 = vmatpush2.msra.mxu0 0.0
    %5296 = vmatprep.subr.mxu0 0.0
    %5297 = vmatpush2.msra.mxu0 0.0
    %5298 = vmatprep.subr.mxu0 0.0
    %5299 = vmatpush2.msra.mxu0 0.0
    %5300 = vmatprep.subr.mxu0 0.0
    %5301 = vmatpush2.msra.mxu0 0.0
    %5302 = vmatprep.subr.mxu0 0.0
    %5303 = vmatpush2.msra.mxu0 0.0
    %5304 = vmatprep.subr.mxu0 0.0
    %5305 = vmatpush2.msra.mxu0 0.0
    %5306 = vmatprep.mubr.f32.mxu0 0.0
    %5307 = vmatmul.mubr.f32.gmra.mxu0 %v5231
    %v5308 = vpop.f32.mrf.mxu0
    %v5309 = vadd.f32 0.0, %v5308
    %v5310 = vpop.f32.mrf.mxu0
    %5311 = vmatprep.mubr.f32.mxu0 0.0
    %5312 = vmatmul.mubr.f32.gmra.mxu0 %v5234
    %v5313 = vpop.f32.mrf.mxu0
    %v5314 = vadd.f32 0.0, %v5313
    %v5315 = vpop.f32.mrf.mxu0
    %5316 = vmatprep.mubr.f32.mxu0 0.0
    %5317 = vmatmul.mubr.f32.gmra.mxu0 %v5237
    %v5318 = vpop.f32.mrf.mxu0
    %v5319 = vadd.f32 0.0, %v5318
    %v5320 = vpop.f32.mrf.mxu0
    %5321 = vmatprep.mubr.f32.mxu0 0.0
    %5322 = vmatmul.mubr.f32.gmra.mxu0 %v5240
    %v5323 = vpop.f32.mrf.mxu0
    %v5324 = vadd.f32 0.0, %v5323
    %v5325 = vpop.f32.mrf.mxu0
    %5326 = vdwg.mxu0
    %v5327 = vsel %vm216, %v5211, 0.0
    %5328 = vadd.xlane.f32.xlu0 %v5327
    %v5329 = vpop.xlane.xlu0 %5328
    %v5330 = vsel %vm216, %v5213, 0.0
    %5331 = vadd.xlane.f32.xlu0 %v5330
    %v5332 = vpop.xlane.xlu0 %5331
    %v5333 = vsel %vm216, %v5215, 0.0
    %5334 = vadd.xlane.f32.xlu0 %v5333
    %v5335 = vpop.xlane.xlu0 %5334
    %v5336 = vsel %vm216, %v5217, 0.0
    %5337 = vadd.xlane.f32.xlu0 %v5336
    %v5338 = vpop.xlane.xlu0 %5337
    %v5339 = vrcp.pop %v5329
    %v5340 = vmul.f32 %v5309, %v5339
    %v5341 = vrcp.pop %v5332
    %v5342 = vmul.f32 %v5314, %v5341
    %v5343 = vrcp.pop %v5335
    %v5344 = vmul.f32 %v5319, %v5343
    %v5345 = vrcp.pop %v5338
    %v5346 = vmul.f32 %v5324, %v5345
    %5347 = vrot.lane.b32.xlu0 %v4533, 104
    %v5348 = vpop.permute.xlu0 %5347
    %5349 = vrot.lane.b32.xlu0 %v4534, 104
    %v5350 = vpop.permute.xlu0 %5349
    %5351 = vrot.lane.b32.xlu0 %v4535, 104
    %v5352 = vpop.permute.xlu0 %5351
    %5353 = vrot.lane.b32.xlu0 %v4536, 104
    %v5354 = vpop.permute.xlu0 %5353
    %5355 = vrot.lane.b32.xlu0 %v3435, 72
    %v5356 = vpop.permute.xlu0 %5355
    %5357 = vrot.lane.b32.xlu0 %v3438, 72
    %v5358 = vpop.permute.xlu0 %5357
    %5359 = vrot.lane.b32.xlu0 %v3443, 72
    %v5360 = vpop.permute.xlu0 %5359
    %5361 = vrot.lane.b32.xlu0 %v3446, 72
    %v5362 = vpop.permute.xlu0 %5361
    %v5363 = vsel %vm464, %v5348, 0
    %v5365 = vsel %vm464, %v5350, 0
    %v5367 = vsel %vm464, %v5352, 0
    %v5369 = vsel %vm464, %v5354, 0
    %v5371 = vsel %vm464, %v5356, 0
    %v5373 = vsel %vm464, %v5358, 0
    %v5375 = vsel %vm464, %v5360, 0
    %v5377 = vsel %vm464, %v5362, 0
    %5379 = vmatprep.subr.mxu0 0.0
    %5380 = vmatpush1.xpose.msra.mxu0 0.0
    %5381 = vmatprep.subr.mxu0 0.0
    %5382 = vmatpush1.xpose.msra.mxu0 0.0
    %5383 = vmatprep.subr.mxu0 0.0
    %5384 = vmatpush1.xpose.msra.mxu0 0.0
    %5385 = vmatprep.subr.mxu0 0.0
    %5386 = vmatpush1.xpose.msra.mxu0 0.0
    %5387 = vmatprep.subr.mxu0 0.0
    %5388 = vmatpush1.xpose.msra.mxu0 0.0
    %5389 = vmatprep.subr.mxu0 0.0
    %5390 = vmatpush1.xpose.msra.mxu0 0.0
    %5391 = vmatprep.subr.mxu0 0.0
    %5392 = vmatpush1.xpose.msra.mxu0 0.0
    %5393 = vmatprep.subr.mxu0 0.0
    %5394 = vmatpush1.xpose.msra.mxu0 0.0
    %5395 = vmatprep.subr.mxu0 0.0
    %5396 = vmatpush1.xpose.msra.mxu0 0.0
    %5397 = vmatprep.subr.mxu0 0.0
    %5398 = vmatpush1.xpose.msra.mxu0 0.0
    %5399 = vmatprep.subr.mxu0 0.0
    %5400 = vmatpush1.xpose.msra.mxu0 0.0
    %5401 = vmatprep.subr.mxu0 0.0
    %5402 = vmatpush1.xpose.msra.mxu0 0.0
    %5403 = vmatprep.subr.mxu0 0.0
    %5404 = vmatpush1.xpose.msra.mxu0 %v5377
    %5405 = vmatprep.subr.mxu0 0.0
    %5406 = vmatpush1.xpose.msra.mxu0 %v5375
    %5407 = vmatprep.subr.mxu0 0.0
    %5408 = vmatpush1.xpose.msra.mxu0 %v5373
    %5409 = vmatprep.subr.mxu0 0.0
    %5410 = vmatpush1.xpose.msra.mxu0 %v5371
    %5411 = vmatprep.subr.mxu0 0.0
    %5412 = vmatpush2.xpose.msra.mxu0 0.0
    %5413 = vmatprep.subr.mxu0 0.0
    %5414 = vmatpush2.xpose.msra.mxu0 0.0
    %5415 = vmatprep.subr.mxu0 0.0
    %5416 = vmatpush2.xpose.msra.mxu0 0.0
    %5417 = vmatprep.subr.mxu0 0.0
    %5418 = vmatpush2.xpose.msra.mxu0 0.0
    %5419 = vmatprep.subr.mxu0 0.0
    %5420 = vmatpush2.xpose.msra.mxu0 0.0
    %5421 = vmatprep.subr.mxu0 0.0
    %5422 = vmatpush2.xpose.msra.mxu0 0.0
    %5423 = vmatprep.subr.mxu0 0.0
    %5424 = vmatpush2.xpose.msra.mxu0 0.0
    %5425 = vmatprep.subr.mxu0 0.0
    %5426 = vmatpush2.xpose.msra.mxu0 0.0
    %5427 = vmatprep.subr.mxu0 0.0
    %5428 = vmatpush2.xpose.msra.mxu0 0.0
    %5429 = vmatprep.subr.mxu0 0.0
    %5430 = vmatpush2.xpose.msra.mxu0 0.0
    %5431 = vmatprep.subr.mxu0 0.0
    %5432 = vmatpush2.xpose.msra.mxu0 0.0
    %5433 = vmatprep.subr.mxu0 0.0
    %5434 = vmatpush2.xpose.msra.mxu0 0.0
    %5435 = vmatprep.subr.mxu0 0.0
    %5436 = vmatpush2.xpose.msra.mxu0 0.0
    %5437 = vmatprep.subr.mxu0 0.0
    %5438 = vmatpush2.xpose.msra.mxu0 0.0
    %5439 = vmatprep.subr.mxu0 0.0
    %5440 = vmatpush2.xpose.msra.mxu0 0.0
    %5441 = vmatprep.subr.mxu0 0.0
    %5442 = vmatpush2.xpose.msra.mxu0 0.0
    %5443 = vmatprep.mubr.f32.mxu0 0.0
    %5444 = vmatmul.mubr.f32.gmra.mxu0 %v5363
    %v5445 = vpop.f32.mrf.mxu0
    %v5446 = vadd.f32 0.0, %v5445
    %v5447 = vpop.f32.mrf.mxu0
    %5448 = vmatprep.mubr.f32.mxu0 0.0
    %5449 = vmatmul.mubr.f32.gmra.mxu0 %v5365
    %v5450 = vpop.f32.mrf.mxu0
    %v5451 = vadd.f32 0.0, %v5450
    %v5452 = vpop.f32.mrf.mxu0
    %5453 = vmatprep.mubr.f32.mxu0 0.0
    %5454 = vmatmul.mubr.f32.gmra.mxu0 %v5367
    %v5455 = vpop.f32.mrf.mxu0
    %v5456 = vadd.f32 0.0, %v5455
    %v5457 = vpop.f32.mrf.mxu0
    %5458 = vmatprep.mubr.f32.mxu0 0.0
    %5459 = vmatmul.mubr.f32.gmra.mxu0 %v5369
    %v5460 = vpop.f32.mrf.mxu0
    %v5461 = vadd.f32 0.0, %v5460
    %v5462 = vpop.f32.mrf.mxu0
    %5463 = vdwg.mxu0
    %v5464 = vsel %vm216, %v5446, -inf
    %5465 = vmax.xlane.f32.xlu0 %v5464
    %v5466 = vpop.xlane.xlu0 %5465
    %v5467 = vsel %vm216, %v5451, -inf
    %5468 = vmax.xlane.f32.xlu0 %v5467
    %v5469 = vpop.xlane.xlu0 %5468
    %v5470 = vsel %vm216, %v5456, -inf
    %5471 = vmax.xlane.f32.xlu0 %v5470
    %v5472 = vpop.xlane.xlu0 %5471
    %v5473 = vsel %vm216, %v5461, -inf
    %5474 = vmax.xlane.f32.xlu0 %v5473
    %v5475 = vpop.xlane.xlu0 %5474
    %v5476 = vsub.f32 %v5446, %v5466
    %v5477 = vsub.f32 %v5451, %v5469
    %v5478 = vsub.f32 %v5456, %v5472
    %v5479 = vsub.f32 %v5461, %v5475
    %v5480 = vmul.f32 %v5476, 1.442695
    %v5481 = vpow.pop %v5480
    %v5482 = vmul.f32 %v5477, 1.442695
    %v5483 = vpow.pop %v5482
    %v5484 = vmul.f32 %v5478, 1.442695
    %v5485 = vpow.pop %v5484
    %v5486 = vmul.f32 %v5479, 1.442695
    %v5487 = vpow.pop %v5486
    %5488 = vrot.lane.b32.xlu0 %v3435, 40
    %v5489 = vpop.permute.xlu0 %5488
    %5490 = vrot.lane.b32.xlu0 %v3438, 40
    %v5491 = vpop.permute.xlu0 %5490
    %5492 = vrot.lane.b32.xlu0 %v3443, 40
    %v5493 = vpop.permute.xlu0 %5492
    %5494 = vrot.lane.b32.xlu0 %v3446, 40
    %v5495 = vpop.permute.xlu0 %5494
    %v5501 = vsel %vm216, %v5481, 0
    %v5504 = vsel %vm216, %v5483, 0
    %v5507 = vsel %vm216, %v5485, 0
    %v5510 = vsel %vm216, %v5487, 0
    %5512 = vmatprep.subr.mxu0 0.0
    %5513 = vmatpush1.msra.mxu0 0.0
    %5514 = vmatprep.subr.mxu0 0.0
    %5515 = vmatpush1.msra.mxu0 0.0
    %5516 = vmatprep.subr.mxu0 0.0
    %5517 = vmatpush1.msra.mxu0 0.0
    %5518 = vmatprep.subr.mxu0 0.0
    %5519 = vmatpush1.msra.mxu0 0.0
    %5520 = vmatprep.subr.mxu0 0.0
    %5521 = vmatpush1.msra.mxu0 0.0
    %5522 = vmatprep.subr.mxu0 0.0
    %5523 = vmatpush1.msra.mxu0 0.0
    %5524 = vmatprep.subr.mxu0 0.0
    %5525 = vmatpush1.msra.mxu0 0.0
    %5526 = vmatprep.subr.mxu0 0.0
    %5527 = vmatpush1.msra.mxu0 0.0
    %5528 = vmatprep.subr.mxu0 0.0
    %5529 = vmatpush1.msra.mxu0 0.0
    %5530 = vmatprep.subr.mxu0 0.0
    %5531 = vmatpush1.msra.mxu0 0.0
    %5532 = vmatprep.subr.mxu0 0.0
    %5533 = vmatpush1.msra.mxu0 0.0
    %5534 = vmatprep.subr.mxu0 0.0
    %5535 = vmatpush1.msra.mxu0 0.0
    %5536 = vmatprep.subr.mxu0 0.0
    %5537 = vmatpush1.msra.mxu0 %v5495
    %5538 = vmatprep.subr.mxu0 0.0
    %5539 = vmatpush1.msra.mxu0 %v5493
    %5540 = vmatprep.subr.mxu0 0.0
    %5541 = vmatpush1.msra.mxu0 %v5491
    %5542 = vmatprep.subr.mxu0 0.0
    %5543 = vmatpush1.msra.mxu0 %v5489
    %5544 = vmatprep.subr.mxu0 0.0
    %5545 = vmatpush2.msra.mxu0 0.0
    %5546 = vmatprep.subr.mxu0 0.0
    %5547 = vmatpush2.msra.mxu0 0.0
    %5548 = vmatprep.subr.mxu0 0.0
    %5549 = vmatpush2.msra.mxu0 0.0
    %5550 = vmatprep.subr.mxu0 0.0
    %5551 = vmatpush2.msra.mxu0 0.0
    %5552 = vmatprep.subr.mxu0 0.0
    %5553 = vmatpush2.msra.mxu0 0.0
    %5554 = vmatprep.subr.mxu0 0.0
    %5555 = vmatpush2.msra.mxu0 0.0
    %5556 = vmatprep.subr.mxu0 0.0
    %5557 = vmatpush2.msra.mxu0 0.0
    %5558 = vmatprep.subr.mxu0 0.0
    %5559 = vmatpush2.msra.mxu0 0.0
    %5560 = vmatprep.subr.mxu0 0.0
    %5561 = vmatpush2.msra.mxu0 0.0
    %5562 = vmatprep.subr.mxu0 0.0
    %5563 = vmatpush2.msra.mxu0 0.0
    %5564 = vmatprep.subr.mxu0 0.0
    %5565 = vmatpush2.msra.mxu0 0.0
    %5566 = vmatprep.subr.mxu0 0.0
    %5567 = vmatpush2.msra.mxu0 0.0
    %5568 = vmatprep.subr.mxu0 0.0
    %5569 = vmatpush2.msra.mxu0 0.0
    %5570 = vmatprep.subr.mxu0 0.0
    %5571 = vmatpush2.msra.mxu0 0.0
    %5572 = vmatprep.subr.mxu0 0.0
    %5573 = vmatpush2.msra.mxu0 0.0
    %5574 = vmatprep.subr.mxu0 0.0
    %5575 = vmatpush2.msra.mxu0 0.0
    %5576 = vmatprep.mubr.f32.mxu0 0.0
    %5577 = vmatmul.mubr.f32.gmra.mxu0 %v5501
    %v5578 = vpop.f32.mrf.mxu0
    %v5579 = vadd.f32 0.0, %v5578
    %v5580 = vpop.f32.mrf.mxu0
    %5581 = vmatprep.mubr.f32.mxu0 0.0
    %5582 = vmatmul.mubr.f32.gmra.mxu0 %v5504
    %v5583 = vpop.f32.mrf.mxu0
    %v5584 = vadd.f32 0.0, %v5583
    %v5585 = vpop.f32.mrf.mxu0
    %5586 = vmatprep.mubr.f32.mxu0 0.0
    %5587 = vmatmul.mubr.f32.gmra.mxu0 %v5507
    %v5588 = vpop.f32.mrf.mxu0
    %v5589 = vadd.f32 0.0, %v5588
    %v5590 = vpop.f32.mrf.mxu0
    %5591 = vmatprep.mubr.f32.mxu0 0.0
    %5592 = vmatmul.mubr.f32.gmra.mxu0 %v5510
    %v5593 = vpop.f32.mrf.mxu0
    %v5594 = vadd.f32 0.0, %v5593
    %v5595 = vpop.f32.mrf.mxu0
    %5596 = vdwg.mxu0
    %v5597 = vsel %vm216, %v5481, 0.0
    %5598 = vadd.xlane.f32.xlu0 %v5597
    %v5599 = vpop.xlane.xlu0 %5598
    %v5600 = vsel %vm216, %v5483, 0.0
    %5601 = vadd.xlane.f32.xlu0 %v5600
    %v5602 = vpop.xlane.xlu0 %5601
    %v5603 = vsel %vm216, %v5485, 0.0
    %5604 = vadd.xlane.f32.xlu0 %v5603
    %v5605 = vpop.xlane.xlu0 %5604
    %v5606 = vsel %vm216, %v5487, 0.0
    %5607 = vadd.xlane.f32.xlu0 %v5606
    %v5608 = vpop.xlane.xlu0 %5607
    %v5609 = vrcp.pop %v5599
    %v5610 = vmul.f32 %v5579, %v5609
    %v5611 = vrcp.pop %v5602
    %v5612 = vmul.f32 %v5584, %v5611
    %v5613 = vrcp.pop %v5605
    %v5614 = vmul.f32 %v5589, %v5613
    %v5615 = vrcp.pop %v5608
    %v5616 = vmul.f32 %v5594, %v5615
    %5621 = vrot.lane.b32.xlu0 %v3986, 8
    %v5622 = vpop.permute.xlu0 %5621
    %5623 = vrot.lane.b32.xlu0 %v3988, 8
    %v5624 = vpop.permute.xlu0 %5623
    %5625 = vrot.lane.b32.xlu0 %v3990, 8
    %v5626 = vpop.permute.xlu0 %5625
    %5627 = vrot.lane.b32.xlu0 %v3992, 8
    %v5628 = vpop.permute.xlu0 %5627
    %5637 = vrot.lane.b32.xlu0 %v4256, 16
    %v5638 = vpop.permute.xlu0 %5637
    %5639 = vrot.lane.b32.xlu0 %v4258, 16
    %v5640 = vpop.permute.xlu0 %5639
    %5641 = vrot.lane.b32.xlu0 %v4260, 16
    %v5642 = vpop.permute.xlu0 %5641
    %5643 = vrot.lane.b32.xlu0 %v4262, 16
    %v5644 = vpop.permute.xlu0 %5643
    %5653 = vrot.lane.b32.xlu0 %v4526, 24
    %v5654 = vpop.permute.xlu0 %5653
    %5655 = vrot.lane.b32.xlu0 %v4528, 24
    %v5656 = vpop.permute.xlu0 %5655
    %5657 = vrot.lane.b32.xlu0 %v4530, 24
    %v5658 = vpop.permute.xlu0 %5657
    %5659 = vrot.lane.b32.xlu0 %v4532, 24
    %v5660 = vpop.permute.xlu0 %5659
    %v5665 = vsel %vm464, %v3716, %v5622
    %v5666 = vsel %vm464, %v3718, %v5624
    %v5667 = vsel %vm464, %v3720, %v5626
    %v5668 = vsel %vm464, %v3722, %v5628
    %v5669 = vsel %vm2669, %v5665, %v5638
    %v5670 = vsel %vm2669, %v5666, %v5640
    %v5671 = vsel %vm2669, %v5667, %v5642
    %v5672 = vsel %vm2669, %v5668, %v5644
    %v5673 = vsel %vm2674, %v5669, %v5654
    %v5674 = vsel %vm2674, %v5670, %v5656
    %v5675 = vsel %vm2674, %v5671, %v5658
    %v5676 = vsel %vm2674, %v5672, %v5660
    %5681 = vrot.lane.b32.xlu0 %v5070, 8
    %v5682 = vpop.permute.xlu0 %5681
    %5683 = vrot.lane.b32.xlu0 %v5072, 8
    %v5684 = vpop.permute.xlu0 %5683
    %5685 = vrot.lane.b32.xlu0 %v5074, 8
    %v5686 = vpop.permute.xlu0 %5685
    %5687 = vrot.lane.b32.xlu0 %v5076, 8
    %v5688 = vpop.permute.xlu0 %5687
    %5697 = vrot.lane.b32.xlu0 %v5340, 16
    %v5698 = vpop.permute.xlu0 %5697
    %5699 = vrot.lane.b32.xlu0 %v5342, 16
    %v5700 = vpop.permute.xlu0 %5699
    %5701 = vrot.lane.b32.xlu0 %v5344, 16
    %v5702 = vpop.permute.xlu0 %5701
    %5703 = vrot.lane.b32.xlu0 %v5346, 16
    %v5704 = vpop.permute.xlu0 %5703
    %5713 = vrot.lane.b32.xlu0 %v5610, 24
    %v5714 = vpop.permute.xlu0 %5713
    %5715 = vrot.lane.b32.xlu0 %v5612, 24
    %v5716 = vpop.permute.xlu0 %5715
    %5717 = vrot.lane.b32.xlu0 %v5614, 24
    %v5718 = vpop.permute.xlu0 %5717
    %5719 = vrot.lane.b32.xlu0 %v5616, 24
    %v5720 = vpop.permute.xlu0 %5719
    %v5725 = vsel %vm464, %v4800, %v5682
    %v5726 = vsel %vm464, %v4802, %v5684
    %v5727 = vsel %vm464, %v4804, %v5686
    %v5728 = vsel %vm464, %v4806, %v5688
    %v5729 = vsel %vm2669, %v5725, %v5698
    %v5730 = vsel %vm2669, %v5726, %v5700
    %v5731 = vsel %vm2669, %v5727, %v5702
    %v5732 = vsel %vm2669, %v5728, %v5704
    %v5733 = vsel %vm2674, %v5729, %v5714
    %v5734 = vsel %vm2674, %v5730, %v5716
    %v5735 = vsel %vm2674, %v5731, %v5718
    %v5736 = vsel %vm2674, %v5732, %v5720
    %v5737 = vpack.c.bf16 %v5674, %v5673
    %v5738 = vpack.c.bf16 %v5676, %v5675
    %v5739 = vpack.c.bf16 %v5734, %v5733
    %v5740 = vpack.c.bf16 %v5736, %v5735
    %s5741 = scalar_lea.vmem %s7, 16
    %v5742 = vld [vmem:[%s5741] sm:$0xf]
    %v5743 = vld [vmem:[%s5741 + $0x4] sm:$0xf]
    %v5744 = vld [vmem:[%s5741 + $0x8] sm:$0xf]
    %v5745 = vld [vmem:[%s5741 + $0xc] sm:$0xf]
    %v5746 = vld [vmem:[%s8 + $0x1] sm:$0x1]
    %v5747 = vlaneseq
    %v5748 = vshrl.u32 %v5747, 7
    %v5749 = vsub.s32 0, %v5748
    %v5750 = vrot.slane %v5746, %v5749
    %v5755 = vunpack.c.l.b16 %v5742
    %v5756 = vunpack.c.l.b16 %v5743
    %v5757 = vunpack.c.l.b16 %v5744
    %v5758 = vunpack.c.l.b16 %v5745
    %v5759 = vpack.c.b16 %v5756, %v5755
    %v5760 = vpack.c.b16 %v5758, %v5757
    %v5764 = vsel %vm216, %v5737, 0
    %v5767 = vsel %vm216, %v5738, 0
    %v5770 = vsel %vm216, %v5739, 0
    %v5773 = vsel %vm216, %v5740, 0
    %5775 = vmatprep.subr.bf16.mxu0 0
    %5776 = vmatpush1.bf16.msra.mxu0 0
    %5777 = vmatprep.subr.bf16.mxu0 0
    %5778 = vmatpush1.bf16.msra.mxu0 0
    %5779 = vmatprep.subr.bf16.mxu0 0
    %5780 = vmatpush1.bf16.msra.mxu0 0
    %5781 = vmatprep.subr.bf16.mxu0 0
    %5782 = vmatpush1.bf16.msra.mxu0 0
    %5783 = vmatprep.subr.bf16.mxu0 0
    %5784 = vmatpush1.bf16.msra.mxu0 0
    %5785 = vmatprep.subr.bf16.mxu0 0
    %5786 = vmatpush1.bf16.msra.mxu0 0
    %5787 = vmatprep.subr.bf16.mxu0 0
    %5788 = vmatpush1.bf16.msra.mxu0 %v5760
    %5789 = vmatprep.subr.bf16.mxu0 0
    %5790 = vmatpush1.bf16.msra.mxu0 %v5759
    %5791 = vmatprep.subr.bf16.mxu0 0
    %5792 = vmatpush2.bf16.msra.mxu0 0
    %5793 = vmatprep.subr.bf16.mxu0 0
    %5794 = vmatpush2.bf16.msra.mxu0 0
    %5795 = vmatprep.subr.bf16.mxu0 0
    %5796 = vmatpush2.bf16.msra.mxu0 0
    %5797 = vmatprep.subr.bf16.mxu0 0
    %5798 = vmatpush2.bf16.msra.mxu0 0
    %5799 = vmatprep.subr.bf16.mxu0 0
    %5800 = vmatpush2.bf16.msra.mxu0 0
    %5801 = vmatprep.subr.bf16.mxu0 0
    %5802 = vmatpush2.bf16.msra.mxu0 0
    %5803 = vmatprep.subr.bf16.mxu0 0
    %5804 = vmatpush2.bf16.msra.mxu0 0
    %5805 = vmatprep.subr.bf16.mxu0 0
    %5806 = vmatpush2.bf16.msra.mxu0 0
    %5807 = vmatprep.mubr.bf16.mxu0 0
    %5808 = vmatmul.mubr.bf16.gmra.mxu0 %v5764
    %v5809 = vpop.f32.mrf.mxu0
    %v5810 = vadd.f32 %v5750, %v5809
    %v5811 = vpop.f32.mrf.mxu0
    %v5812 = vpop.f32.mrf.mxu0
    %v5813 = vadd.f32 %v5750, %v5812
    %v5814 = vpop.f32.mrf.mxu0
    %5815 = vmatprep.mubr.bf16.mxu0 0
    %5816 = vmatmul.mubr.bf16.gmra.mxu0 %v5767
    %v5817 = vpop.f32.mrf.mxu0
    %v5818 = vadd.f32 %v5750, %v5817
    %v5819 = vpop.f32.mrf.mxu0
    %v5820 = vpop.f32.mrf.mxu0
    %v5821 = vadd.f32 %v5750, %v5820
    %v5822 = vpop.f32.mrf.mxu0
    %5823 = vmatprep.mubr.bf16.mxu0 0
    %5824 = vmatmul.mubr.bf16.gmra.mxu0 %v5770
    %v5825 = vpop.f32.mrf.mxu0
    %v5826 = vadd.f32 %v5750, %v5825
    %v5827 = vpop.f32.mrf.mxu0
    %v5828 = vpop.f32.mrf.mxu0
    %v5829 = vadd.f32 %v5750, %v5828
    %v5830 = vpop.f32.mrf.mxu0
    %5831 = vmatprep.mubr.bf16.mxu0 0
    %5832 = vmatmul.mubr.bf16.gmra.mxu0 %v5773
    %v5833 = vpop.f32.mrf.mxu0
    %v5834 = vadd.f32 %v5750, %v5833
    %v5835 = vpop.f32.mrf.mxu0
    %v5836 = vpop.f32.mrf.mxu0
    %v5837 = vadd.f32 %v5750, %v5836
    %v5838 = vpop.f32.mrf.mxu0
    %5839 = vdwg.mxu0
    %v5840 = vadd.f32 %v3208, %v5810
    %v5841 = vadd.f32 %v3209, %v5813
    %v5842 = vadd.f32 %v3210, %v5818
    %v5843 = vadd.f32 %v3211, %v5821
    %v5844 = vadd.f32 %v3212, %v5826
    %v5845 = vadd.f32 %v3213, %v5829
    %v5846 = vadd.f32 %v3214, %v5834
    %v5847 = vadd.f32 %v3215, %v5837
    %v5848 = vld [vmem:[%s9 + $0x1] sm:$0x1]
    %v5849 = vld [vmem:[%s10 + $0x1] sm:$0x1]
    %v5850 = vsel %vm216, %v5840, 0.0
    %5851 = vadd.xlane.f32.xlu0 %v5850
    %v5852 = vpop.xlane.xlu0 %5851
    %v5853 = vsel %vm216, %v5841, 0.0
    %5854 = vadd.xlane.f32.xlu0 %v5853
    %v5855 = vpop.xlane.xlu0 %5854
    %v5856 = vsel %vm216, %v5842, 0.0
    %5857 = vadd.xlane.f32.xlu0 %v5856
    %v5858 = vpop.xlane.xlu0 %5857
    %v5859 = vsel %vm216, %v5843, 0.0
    %5860 = vadd.xlane.f32.xlu0 %v5859
    %v5861 = vpop.xlane.xlu0 %5860
    %v5862 = vsel %vm216, %v5844, 0.0
    %5863 = vadd.xlane.f32.xlu0 %v5862
    %v5864 = vpop.xlane.xlu0 %5863
    %v5865 = vsel %vm216, %v5845, 0.0
    %5866 = vadd.xlane.f32.xlu0 %v5865
    %v5867 = vpop.xlane.xlu0 %5866
    %v5868 = vsel %vm216, %v5846, 0.0
    %5869 = vadd.xlane.f32.xlu0 %v5868
    %v5870 = vpop.xlane.xlu0 %5869
    %v5871 = vsel %vm216, %v5847, 0.0
    %5872 = vadd.xlane.f32.xlu0 %v5871
    %v5873 = vpop.xlane.xlu0 %5872
    %v5874 = vmul.f32 %v5852, %v241
    %v5875 = vmul.f32 %v5855, %v241
    %v5876 = vmul.f32 %v5858, %v241
    %v5877 = vmul.f32 %v5861, %v241
    %v5878 = vmul.f32 %v5864, %v241
    %v5879 = vmul.f32 %v5867, %v241
    %v5880 = vmul.f32 %v5870, %v241
    %v5881 = vmul.f32 %v5873, %v241
    %v5882 = vsub.f32 %v5840, %v5874
    %v5883 = vsub.f32 %v5841, %v5875
    %v5884 = vsub.f32 %v5842, %v5876
    %v5885 = vsub.f32 %v5843, %v5877
    %v5886 = vsub.f32 %v5844, %v5878
    %v5887 = vsub.f32 %v5845, %v5879
    %v5888 = vsub.f32 %v5846, %v5880
    %v5889 = vsub.f32 %v5847, %v5881
    %v5890 = vmul.f32 %v5882, %v5882
    %v5891 = vmul.f32 %v5883, %v5883
    %v5892 = vmul.f32 %v5884, %v5884
    %v5893 = vmul.f32 %v5885, %v5885
    %v5894 = vmul.f32 %v5886, %v5886
    %v5895 = vmul.f32 %v5887, %v5887
    %v5896 = vmul.f32 %v5888, %v5888
    %v5897 = vmul.f32 %v5889, %v5889
    %v5898 = vsel %vm216, %v5890, 0.0
    %5899 = vadd.xlane.f32.xlu0 %v5898
    %v5900 = vpop.xlane.xlu0 %5899
    %v5901 = vsel %vm216, %v5891, 0.0
    %5902 = vadd.xlane.f32.xlu0 %v5901
    %v5903 = vpop.xlane.xlu0 %5902
    %v5904 = vsel %vm216, %v5892, 0.0
    %5905 = vadd.xlane.f32.xlu0 %v5904
    %v5906 = vpop.xlane.xlu0 %5905
    %v5907 = vsel %vm216, %v5893, 0.0
    %5908 = vadd.xlane.f32.xlu0 %v5907
    %v5909 = vpop.xlane.xlu0 %5908
    %v5910 = vsel %vm216, %v5894, 0.0
    %5911 = vadd.xlane.f32.xlu0 %v5910
    %v5912 = vpop.xlane.xlu0 %5911
    %v5913 = vsel %vm216, %v5895, 0.0
    %5914 = vadd.xlane.f32.xlu0 %v5913
    %v5915 = vpop.xlane.xlu0 %5914
    %v5916 = vsel %vm216, %v5896, 0.0
    %5917 = vadd.xlane.f32.xlu0 %v5916
    %v5918 = vpop.xlane.xlu0 %5917
    %v5919 = vsel %vm216, %v5897, 0.0
    %5920 = vadd.xlane.f32.xlu0 %v5919
    %v5921 = vpop.xlane.xlu0 %5920
    %v5922 = vmul.f32 %v5900, %v241
    %v5923 = vmul.f32 %v5903, %v241
    %v5924 = vmul.f32 %v5906, %v241
    %v5925 = vmul.f32 %v5909, %v241
    %v5926 = vmul.f32 %v5912, %v241
    %v5927 = vmul.f32 %v5915, %v241
    %v5928 = vmul.f32 %v5918, %v241
    %v5929 = vmul.f32 %v5921, %v241
    %v5930 = vadd.f32 %v5922, 1e-06
    %v5931 = vadd.f32 %v5923, 1e-06
    %v5932 = vadd.f32 %v5924, 1e-06
    %v5933 = vadd.f32 %v5925, 1e-06
    %v5934 = vadd.f32 %v5926, 1e-06
    %v5935 = vadd.f32 %v5927, 1e-06
    %v5936 = vadd.f32 %v5928, 1e-06
    %v5937 = vadd.f32 %v5929, 1e-06
    %v5938 = vrsqrt.pop %v5930
    %v5939 = vrsqrt.pop %v5931
    %v5940 = vrsqrt.pop %v5932
    %v5941 = vrsqrt.pop %v5933
    %v5942 = vrsqrt.pop %v5934
    %v5943 = vrsqrt.pop %v5935
    %v5944 = vrsqrt.pop %v5936
    %v5945 = vrsqrt.pop %v5937
    %v5946 = vmul.f32 %v5882, %v5938
    %v5947 = vmul.f32 %v5883, %v5939
    %v5948 = vmul.f32 %v5884, %v5940
    %v5949 = vmul.f32 %v5885, %v5941
    %v5950 = vmul.f32 %v5886, %v5942
    %v5951 = vmul.f32 %v5887, %v5943
    %v5952 = vmul.f32 %v5888, %v5944
    %v5953 = vmul.f32 %v5889, %v5945
    %v5954 = vlaneseq
    %v5955 = vshrl.u32 %v5954, 7
    %v5956 = vsub.s32 0, %v5955
    %v5957 = vrot.slane %v5848, %v5956
    %v5958 = vmul.f32 %v5946, %v5957
    %v5959 = vmul.f32 %v5947, %v5957
    %v5960 = vmul.f32 %v5948, %v5957
    %v5961 = vmul.f32 %v5949, %v5957
    %v5962 = vmul.f32 %v5950, %v5957
    %v5963 = vmul.f32 %v5951, %v5957
    %v5964 = vmul.f32 %v5952, %v5957
    %v5965 = vmul.f32 %v5953, %v5957
    %v5966 = vlaneseq
    %v5967 = vshrl.u32 %v5966, 7
    %v5968 = vsub.s32 0, %v5967
    %v5969 = vrot.slane %v5849, %v5968
    %v5970 = vadd.f32 %v5958, %v5969
    %v5971 = vadd.f32 %v5959, %v5969
    %v5972 = vadd.f32 %v5960, %v5969
    %v5973 = vadd.f32 %v5961, %v5969
    %v5974 = vadd.f32 %v5962, %v5969
    %v5975 = vadd.f32 %v5963, %v5969
    %v5976 = vadd.f32 %v5964, %v5969
    %v5977 = vadd.f32 %v5965, %v5969
    %v5978 = vpack.c.bf16 %v5971, %v5970
    %v5979 = vpack.c.bf16 %v5973, %v5972
    %v5980 = vpack.c.bf16 %v5975, %v5974
    %v5981 = vpack.c.bf16 %v5977, %v5976
    %s5982 = scalar_lea.vmem %s11, 16
    %v5983 = vld [vmem:[%s5982] sm:$0xf]
    %v5984 = vld [vmem:[%s5982 + $0x4] sm:$0xf]
    %v5985 = vld [vmem:[%s5982 + $0x8] sm:$0xf]
    %v5986 = vld [vmem:[%s5982 + $0xc] sm:$0xf]
    %v5987 = vld [vmem:[%s12 + $0x1] sm:$0x1]
    %v5988 = vlaneseq
    %v5989 = vshrl.u32 %v5988, 7
    %v5990 = vsub.s32 0, %v5989
    %v5991 = vrot.slane %v5987, %v5990
    %v5996 = vunpack.c.l.b16 %v5983
    %v5997 = vunpack.c.l.b16 %v5984
    %v5998 = vunpack.c.l.b16 %v5985
    %v5999 = vunpack.c.l.b16 %v5986
    %v6000 = vpack.c.b16 %v5997, %v5996
    %v6001 = vpack.c.b16 %v5999, %v5998
    %v6005 = vsel %vm216, %v5978, 0
    %v6008 = vsel %vm216, %v5979, 0
    %v6011 = vsel %vm216, %v5980, 0
    %v6014 = vsel %vm216, %v5981, 0
    %6016 = vmatprep.subr.bf16.mxu0 0
    %6017 = vmatpush1.bf16.msra.mxu0 0
    %6018 = vmatprep.subr.bf16.mxu0 0
    %6019 = vmatpush1.bf16.msra.mxu0 0
    %6020 = vmatprep.subr.bf16.mxu0 0
    %6021 = vmatpush1.bf16.msra.mxu0 0
    %6022 = vmatprep.subr.bf16.mxu0 0
    %6023 = vmatpush1.bf16.msra.mxu0 0
    %6024 = vmatprep.subr.bf16.mxu0 0
    %6025 = vmatpush1.bf16.msra.mxu0 0
    %6026 = vmatprep.subr.bf16.mxu0 0
    %6027 = vmatpush1.bf16.msra.mxu0 0
    %6028 = vmatprep.subr.bf16.mxu0 0
    %6029 = vmatpush1.bf16.msra.mxu0 %v6001
    %6030 = vmatprep.subr.bf16.mxu0 0
    %6031 = vmatpush1.bf16.msra.mxu0 %v6000
    %6032 = vmatprep.subr.bf16.mxu0 0
    %6033 = vmatpush2.bf16.msra.mxu0 0
    %6034 = vmatprep.subr.bf16.mxu0 0
    %6035 = vmatpush2.bf16.msra.mxu0 0
    %6036 = vmatprep.subr.bf16.mxu0 0
    %6037 = vmatpush2.bf16.msra.mxu0 0
    %6038 = vmatprep.subr.bf16.mxu0 0
    %6039 = vmatpush2.bf16.msra.mxu0 0
    %6040 = vmatprep.subr.bf16.mxu0 0
    %6041 = vmatpush2.bf16.msra.mxu0 0
    %6042 = vmatprep.subr.bf16.mxu0 0
    %6043 = vmatpush2.bf16.msra.mxu0 0
    %6044 = vmatprep.subr.bf16.mxu0 0
    %6045 = vmatpush2.bf16.msra.mxu0 0
    %6046 = vmatprep.subr.bf16.mxu0 0
    %6047 = vmatpush2.bf16.msra.mxu0 0
    %6048 = vmatprep.mubr.bf16.mxu0 0
    %6049 = vmatmul.mubr.bf16.gmra.mxu0 %v6005
    %v6050 = vpop.f32.mrf.mxu0
    %v6051 = vadd.f32 %v5991, %v6050
    %v6052 = vpop.f32.mrf.mxu0
    %v6053 = vpop.f32.mrf.mxu0
    %v6054 = vadd.f32 %v5991, %v6053
    %v6055 = vpop.f32.mrf.mxu0
    %6056 = vmatprep.mubr.bf16.mxu0 0
    %6057 = vmatmul.mubr.bf16.gmra.mxu0 %v6008
    %v6058 = vpop.f32.mrf.mxu0
    %v6059 = vadd.f32 %v5991, %v6058
    %v6060 = vpop.f32.mrf.mxu0
    %v6061 = vpop.f32.mrf.mxu0
    %v6062 = vadd.f32 %v5991, %v6061
    %v6063 = vpop.f32.mrf.mxu0
    %6064 = vmatprep.mubr.bf16.mxu0 0
    %6065 = vmatmul.mubr.bf16.gmra.mxu0 %v6011
    %v6066 = vpop.f32.mrf.mxu0
    %v6067 = vadd.f32 %v5991, %v6066
    %v6068 = vpop.f32.mrf.mxu0
    %v6069 = vpop.f32.mrf.mxu0
    %v6070 = vadd.f32 %v5991, %v6069
    %v6071 = vpop.f32.mrf.mxu0
    %6072 = vmatprep.mubr.bf16.mxu0 0
    %6073 = vmatmul.mubr.bf16.gmra.mxu0 %v6014
    %v6074 = vpop.f32.mrf.mxu0
    %v6075 = vadd.f32 %v5991, %v6074
    %v6076 = vpop.f32.mrf.mxu0
    %v6077 = vpop.f32.mrf.mxu0
    %v6078 = vadd.f32 %v5991, %v6077
    %v6079 = vpop.f32.mrf.mxu0
    %6080 = vdwg.mxu0
    %v6081 = vmax.f32 %v6051, 0.0
    %v6082 = vmax.f32 %v6054, 0.0
    %v6083 = vmax.f32 %v6059, 0.0
    %v6084 = vmax.f32 %v6062, 0.0
    %v6085 = vmax.f32 %v6067, 0.0
    %v6086 = vmax.f32 %v6070, 0.0
    %v6087 = vmax.f32 %v6075, 0.0
    %v6088 = vmax.f32 %v6078, 0.0
    %v6089 = vpack.c.bf16 %v6082, %v6081
    %v6090 = vpack.c.bf16 %v6084, %v6083
    %v6091 = vpack.c.bf16 %v6086, %v6085
    %v6092 = vpack.c.bf16 %v6088, %v6087
    %s6093 = scalar_lea.vmem %s13, 32
    %v6094 = vld [vmem:[%s6093] sm:$0xf]
    %v6095 = vld [vmem:[%s6093 + $0x4] sm:$0xf]
    %v6096 = vld [vmem:[%s6093 + $0x8] sm:$0xf]
    %v6097 = vld [vmem:[%s6093 + $0xc] sm:$0xf]
    %v6098 = vld [vmem:[%s6093 + $0x10] sm:$0xf]
    %v6099 = vld [vmem:[%s6093 + $0x14] sm:$0xf]
    %v6100 = vld [vmem:[%s6093 + $0x18] sm:$0xf]
    %v6101 = vld [vmem:[%s6093 + $0x1c] sm:$0xf]
    %v6102 = vld [vmem:[%s14 + $0x1] sm:$0x1]
    %v6103 = vlaneseq
    %v6104 = vshrl.u32 %v6103, 7
    %v6105 = vsub.s32 0, %v6104
    %v6106 = vrot.slane %v6102, %v6105
    %v6115 = vunpack.c.l.b16 %v6094
    %v6116 = vunpack.c.l.b16 %v6095
    %v6117 = vunpack.c.l.b16 %v6096
    %v6118 = vunpack.c.l.b16 %v6097
    %v6119 = vunpack.c.l.b16 %v6098
    %v6120 = vunpack.c.l.b16 %v6099
    %v6121 = vunpack.c.l.b16 %v6100
    %v6122 = vunpack.c.l.b16 %v6101
    %v6123 = vpack.c.b16 %v6116, %v6115
    %v6124 = vpack.c.b16 %v6118, %v6117
    %v6125 = vpack.c.b16 %v6120, %v6119
    %v6126 = vpack.c.b16 %v6122, %v6121
    %v6132 = vsel %vm3130, %v6089, 0
    %v6135 = vsel %vm3130, %v6090, 0
    %v6138 = vsel %vm3130, %v6091, 0
    %v6141 = vsel %vm3130, %v6092, 0
    %6143 = vmatprep.subr.bf16.mxu0 0
    %6144 = vmatpush1.bf16.msra.mxu0 0
    %6145 = vmatprep.subr.bf16.mxu0 0
    %6146 = vmatpush1.bf16.msra.mxu0 0
    %6147 = vmatprep.subr.bf16.mxu0 0
    %6148 = vmatpush1.bf16.msra.mxu0 0
    %6149 = vmatprep.subr.bf16.mxu0 0
    %6150 = vmatpush1.bf16.msra.mxu0 0
    %6151 = vmatprep.subr.bf16.mxu0 0
    %6152 = vmatpush1.bf16.msra.mxu0 %v6126
    %6153 = vmatprep.subr.bf16.mxu0 0
    %6154 = vmatpush1.bf16.msra.mxu0 %v6125
    %6155 = vmatprep.subr.bf16.mxu0 0
    %6156 = vmatpush1.bf16.msra.mxu0 %v6124
    %6157 = vmatprep.subr.bf16.mxu0 0
    %6158 = vmatpush1.bf16.msra.mxu0 %v6123
    %6159 = vmatprep.subr.bf16.mxu0 0
    %6160 = vmatpush2.bf16.msra.mxu0 0
    %6161 = vmatprep.subr.bf16.mxu0 0
    %6162 = vmatpush2.bf16.msra.mxu0 0
    %6163 = vmatprep.subr.bf16.mxu0 0
    %6164 = vmatpush2.bf16.msra.mxu0 0
    %6165 = vmatprep.subr.bf16.mxu0 0
    %6166 = vmatpush2.bf16.msra.mxu0 0
    %6167 = vmatprep.subr.bf16.mxu0 0
    %6168 = vmatpush2.bf16.msra.mxu0 0
    %6169 = vmatprep.subr.bf16.mxu0 0
    %6170 = vmatpush2.bf16.msra.mxu0 0
    %6171 = vmatprep.subr.bf16.mxu0 0
    %6172 = vmatpush2.bf16.msra.mxu0 0
    %6173 = vmatprep.subr.bf16.mxu0 0
    %6174 = vmatpush2.bf16.msra.mxu0 0
    %6175 = vmatprep.mubr.bf16.mxu0 0
    %6176 = vmatmul.mubr.bf16.gmra.mxu0 %v6132
    %v6177 = vpop.f32.mrf.mxu0
    %v6178 = vadd.f32 %v6106, %v6177
    %v6179 = vpop.f32.mrf.mxu0
    %v6180 = vpop.f32.mrf.mxu0
    %v6181 = vadd.f32 %v6106, %v6180
    %v6182 = vpop.f32.mrf.mxu0
    %6183 = vmatprep.mubr.bf16.mxu0 0
    %6184 = vmatmul.mubr.bf16.gmra.mxu0 %v6135
    %v6185 = vpop.f32.mrf.mxu0
    %v6186 = vadd.f32 %v6106, %v6185
    %v6187 = vpop.f32.mrf.mxu0
    %v6188 = vpop.f32.mrf.mxu0
    %v6189 = vadd.f32 %v6106, %v6188
    %v6190 = vpop.f32.mrf.mxu0
    %6191 = vmatprep.mubr.bf16.mxu0 0
    %6192 = vmatmul.mubr.bf16.gmra.mxu0 %v6138
    %v6193 = vpop.f32.mrf.mxu0
    %v6194 = vadd.f32 %v6106, %v6193
    %v6195 = vpop.f32.mrf.mxu0
    %v6196 = vpop.f32.mrf.mxu0
    %v6197 = vadd.f32 %v6106, %v6196
    %v6198 = vpop.f32.mrf.mxu0
    %6199 = vmatprep.mubr.bf16.mxu0 0
    %6200 = vmatmul.mubr.bf16.gmra.mxu0 %v6141
    %v6201 = vpop.f32.mrf.mxu0
    %v6202 = vadd.f32 %v6106, %v6201
    %v6203 = vpop.f32.mrf.mxu0
    %v6204 = vpop.f32.mrf.mxu0
    %v6205 = vadd.f32 %v6106, %v6204
    %v6206 = vpop.f32.mrf.mxu0
    %6207 = vdwg.mxu0
    %v6208 = vadd.f32 %v5840, %v6178
    %v6209 = vadd.f32 %v5841, %v6181
    %v6210 = vadd.f32 %v5842, %v6186
    %v6211 = vadd.f32 %v5843, %v6189
    %v6212 = vadd.f32 %v5844, %v6194
    %v6213 = vadd.f32 %v5845, %v6197
    %v6214 = vadd.f32 %v5846, %v6202
    %v6215 = vadd.f32 %v5847, %v6205
    %v6216 = vld [vmem:[%s15] sm:$0x1]
    %v6217 = vld [vmem:[%s16] sm:$0x1]
    %v6218 = vsel %vm216, %v6208, 0.0
    %6219 = vadd.xlane.f32.xlu0 %v6218
    %v6220 = vpop.xlane.xlu0 %6219
    %v6221 = vsel %vm216, %v6209, 0.0
    %6222 = vadd.xlane.f32.xlu0 %v6221
    %v6223 = vpop.xlane.xlu0 %6222
    %v6224 = vsel %vm216, %v6210, 0.0
    %6225 = vadd.xlane.f32.xlu0 %v6224
    %v6226 = vpop.xlane.xlu0 %6225
    %v6227 = vsel %vm216, %v6211, 0.0
    %6228 = vadd.xlane.f32.xlu0 %v6227
    %v6229 = vpop.xlane.xlu0 %6228
    %v6230 = vsel %vm216, %v6212, 0.0
    %6231 = vadd.xlane.f32.xlu0 %v6230
    %v6232 = vpop.xlane.xlu0 %6231
    %v6233 = vsel %vm216, %v6213, 0.0
    %6234 = vadd.xlane.f32.xlu0 %v6233
    %v6235 = vpop.xlane.xlu0 %6234
    %v6236 = vsel %vm216, %v6214, 0.0
    %6237 = vadd.xlane.f32.xlu0 %v6236
    %v6238 = vpop.xlane.xlu0 %6237
    %v6239 = vsel %vm216, %v6215, 0.0
    %6240 = vadd.xlane.f32.xlu0 %v6239
    %v6241 = vpop.xlane.xlu0 %6240
    %v6242 = vmul.f32 %v6220, %v241
    %v6243 = vmul.f32 %v6223, %v241
    %v6244 = vmul.f32 %v6226, %v241
    %v6245 = vmul.f32 %v6229, %v241
    %v6246 = vmul.f32 %v6232, %v241
    %v6247 = vmul.f32 %v6235, %v241
    %v6248 = vmul.f32 %v6238, %v241
    %v6249 = vmul.f32 %v6241, %v241
    %v6250 = vsub.f32 %v6208, %v6242
    %v6251 = vsub.f32 %v6209, %v6243
    %v6252 = vsub.f32 %v6210, %v6244
    %v6253 = vsub.f32 %v6211, %v6245
    %v6254 = vsub.f32 %v6212, %v6246
    %v6255 = vsub.f32 %v6213, %v6247
    %v6256 = vsub.f32 %v6214, %v6248
    %v6257 = vsub.f32 %v6215, %v6249
    %v6258 = vmul.f32 %v6250, %v6250
    %v6259 = vmul.f32 %v6251, %v6251
    %v6260 = vmul.f32 %v6252, %v6252
    %v6261 = vmul.f32 %v6253, %v6253
    %v6262 = vmul.f32 %v6254, %v6254
    %v6263 = vmul.f32 %v6255, %v6255
    %v6264 = vmul.f32 %v6256, %v6256
    %v6265 = vmul.f32 %v6257, %v6257
    %v6266 = vsel %vm216, %v6258, 0.0
    %6267 = vadd.xlane.f32.xlu0 %v6266
    %v6268 = vpop.xlane.xlu0 %6267
    %v6269 = vsel %vm216, %v6259, 0.0
    %6270 = vadd.xlane.f32.xlu0 %v6269
    %v6271 = vpop.xlane.xlu0 %6270
    %v6272 = vsel %vm216, %v6260, 0.0
    %6273 = vadd.xlane.f32.xlu0 %v6272
    %v6274 = vpop.xlane.xlu0 %6273
    %v6275 = vsel %vm216, %v6261, 0.0
    %6276 = vadd.xlane.f32.xlu0 %v6275
    %v6277 = vpop.xlane.xlu0 %6276
    %v6278 = vsel %vm216, %v6262, 0.0
    %6279 = vadd.xlane.f32.xlu0 %v6278
    %v6280 = vpop.xlane.xlu0 %6279
    %v6281 = vsel %vm216, %v6263, 0.0
    %6282 = vadd.xlane.f32.xlu0 %v6281
    %v6283 = vpop.xlane.xlu0 %6282
    %v6284 = vsel %vm216, %v6264, 0.0
    %6285 = vadd.xlane.f32.xlu0 %v6284
    %v6286 = vpop.xlane.xlu0 %6285
    %v6287 = vsel %vm216, %v6265, 0.0
    %6288 = vadd.xlane.f32.xlu0 %v6287
    %v6289 = vpop.xlane.xlu0 %6288
    %v6290 = vmul.f32 %v6268, %v241
    %v6291 = vmul.f32 %v6271, %v241
    %v6292 = vmul.f32 %v6274, %v241
    %v6293 = vmul.f32 %v6277, %v241
    %v6294 = vmul.f32 %v6280, %v241
    %v6295 = vmul.f32 %v6283, %v241
    %v6296 = vmul.f32 %v6286, %v241
    %v6297 = vmul.f32 %v6289, %v241
    %v6298 = vadd.f32 %v6290, 1e-06
    %v6299 = vadd.f32 %v6291, 1e-06
    %v6300 = vadd.f32 %v6292, 1e-06
    %v6301 = vadd.f32 %v6293, 1e-06
    %v6302 = vadd.f32 %v6294, 1e-06
    %v6303 = vadd.f32 %v6295, 1e-06
    %v6304 = vadd.f32 %v6296, 1e-06
    %v6305 = vadd.f32 %v6297, 1e-06
    %v6306 = vrsqrt.pop %v6298
    %v6307 = vrsqrt.pop %v6299
    %v6308 = vrsqrt.pop %v6300
    %v6309 = vrsqrt.pop %v6301
    %v6310 = vrsqrt.pop %v6302
    %v6311 = vrsqrt.pop %v6303
    %v6312 = vrsqrt.pop %v6304
    %v6313 = vrsqrt.pop %v6305
    %v6314 = vmul.f32 %v6250, %v6306
    %v6315 = vmul.f32 %v6251, %v6307
    %v6316 = vmul.f32 %v6252, %v6308
    %v6317 = vmul.f32 %v6253, %v6309
    %v6318 = vmul.f32 %v6254, %v6310
    %v6319 = vmul.f32 %v6255, %v6311
    %v6320 = vmul.f32 %v6256, %v6312
    %v6321 = vmul.f32 %v6257, %v6313
    %v6323 = vlaneseq
    %v6324 = vshrl.u32 %v6323, 7
    %v6325 = vsub.s32 0, %v6324
    %v6326 = vrot.slane %v6216, %v6325
    %v6328 = vmul.f32 %v6314, %v6326
    %v6329 = vmul.f32 %v6315, %v6326
    %v6330 = vmul.f32 %v6316, %v6326
    %v6331 = vmul.f32 %v6317, %v6326
    %v6332 = vmul.f32 %v6318, %v6326
    %v6333 = vmul.f32 %v6319, %v6326
    %v6334 = vmul.f32 %v6320, %v6326
    %v6335 = vmul.f32 %v6321, %v6326
    %v6337 = vlaneseq
    %v6338 = vshrl.u32 %v6337, 7
    %v6339 = vsub.s32 0, %v6338
    %v6340 = vrot.slane %v6217, %v6339
    %v6342 = vadd.f32 %v6328, %v6340
    %v6343 = vadd.f32 %v6329, %v6340
    %v6344 = vadd.f32 %v6330, %v6340
    %v6345 = vadd.f32 %v6331, %v6340
    %v6346 = vadd.f32 %v6332, %v6340
    %v6347 = vadd.f32 %v6333, %v6340
    %v6348 = vadd.f32 %v6334, %v6340
    %v6349 = vadd.f32 %v6335, %v6340
    %v6350 = vadd.f32 %v82, %v6342
    %v6351 = vadd.f32 %v83, %v6343
    %v6352 = vadd.f32 %v154, %v6344
    %v6353 = vadd.f32 %v155, %v6345
    %v6354 = vadd.f32 %v114, %v6346
    %v6355 = vadd.f32 %v115, %v6347
    %v6356 = vadd.f32 %v186, %v6348
    %v6357 = vadd.f32 %v187, %v6349
    %v6358 = vmax.f32 %v6350, 0.0
    %v6359 = vmax.f32 %v6351, 0.0
    %v6360 = vmax.f32 %v6352, 0.0
    %v6361 = vmax.f32 %v6353, 0.0
    %v6362 = vmax.f32 %v6354, 0.0
    %v6363 = vmax.f32 %v6355, 0.0
    %v6364 = vmax.f32 %v6356, 0.0
    %v6365 = vmax.f32 %v6357, 0.0
    %v6366 = vsel %vm216, %v6358, 0.0
    %v6367 = vsel %vm216, %v6359, 0.0
    %v6368 = vadd.f32 %v6366, %v6367
    %v6369 = vsel %vm216, %v6360, 0.0
    %v6370 = vadd.f32 %v6368, %v6369
    %v6371 = vsel %vm216, %v6361, 0.0
    %v6372 = vadd.f32 %v6370, %v6371
    %v6373 = vrot.slane %v6372, 4
    %v6374 = vadd.f32 %v6372, %v6373
    %v6375 = vrot.slane %v6374, 2
    %v6376 = vadd.f32 %v6374, %v6375
    %v6377 = vrot.slane %v6376, 1
    %v6378 = vadd.f32 %v6376, %v6377
    %v6379 = vsel %vm216, %v6362, 0.0
    %v6380 = vsel %vm216, %v6363, 0.0
    %v6381 = vadd.f32 %v6379, %v6380
    %v6382 = vsel %vm216, %v6364, 0.0
    %v6383 = vadd.f32 %v6381, %v6382
    %v6384 = vsel %vm216, %v6365, 0.0
    %v6385 = vadd.f32 %v6383, %v6384
    %v6386 = vrot.slane %v6385, 4
    %v6387 = vadd.f32 %v6385, %v6386
    %v6388 = vrot.slane %v6387, 2
    %v6389 = vadd.f32 %v6387, %v6388
    %v6390 = vrot.slane %v6389, 1
    %v6391 = vadd.f32 %v6389, %v6390
    %v6392 = vmul.f32 %v6378, 0.0625
    %v6393 = vmul.f32 %v6391, 0.0625
    %vm6396 = vcmask 1041409
    %v6397 = vsel %vm6396, %v6393, %v6392
    %vm6399 = vcmask 254976
    %6400 = vst.msk [vmem:[#allocation2] sm:$0x3] %vm6399, %v6397
    // Predicated region
    $region70: #{tpu_custom_call.1} parent=1 // pred_check
      _
    $region71: #{tpu_custom_call.1} parent=1 // pred_check_branch
      %6402 = sbr.rel (0) target = $region73
    $region72: #{tpu_custom_call.1} parent=1 // pred_region
      %s6404 = ssub.s32 32, 32
      %6405 = vsyncadd [#allocation3], %s6404
      %s6407 = sshll.u32 [#allocation2], 4
      %s6408 = int_to_ptr.vmem [resolvable:$true] %s6407
      %6410 = dma.vmem_to_hbm [thread:$0]  %s6408, 32, %s17, [#allocation3]
    $region73: #{tpu_custom_call.1} parent=1 // pred_fallthru
      _
    // Predicated region
    $region74: #{tpu_custom_call.1} parent=1 // pred_check
      _
    $region75: #{tpu_custom_call.1} parent=1 // pred_check_branch
      %6412 = sbr.rel (0) target = $region77
    $region76: #{tpu_custom_call.1} parent=1 // pred_region
      %6413 = dma.done [#allocation3], 32
    $region77: #{tpu_custom_call.1} parent=1 // pred_fallthru
      _
    %6414 = vsyncpa [#allocation3], 1

</llo_original>
